<compile_context>
chip_gen: v5e
topology: v5e:2x2
jax: 0.10.0
libtpu: 0.0.40
codegen_flags: <defaults>
</compile_context>

<pallas_src>
import functools

import jax
import jax.numpy as jnp
from jax import lax
from jax.experimental import pallas as pl
from jax.experimental.pallas import tpu as pltpu


def _round_up(x, m):
    return ((x + m - 1) // m) * m


def _fold_bn(gamma, beta, running_mean, running_var, eps=1e-5):
    scale = gamma / jnp.sqrt(running_var + eps)
    bias = beta - running_mean * scale
    return scale, bias


# ---------------------------------------------------------------------------
# Fused kernel
# ---------------------------------------------------------------------------
def _double_conv_kernel(x_ref, m_ref, w1_ref, b1_ref, w2_ref, b2_ref,
                        w3_ref, b3_ref, o_ref,
                        col2_ref, acc_ref,
                        *, H, W, WS, cin, cp, cout, io_dtype):
    """One batch element.

    Anchor-flat layout: flat index a = y*WS + x, WS = round_up(W+2, 8), with
    S = (H+2)*WS rows.  Rows with y >= H or x >= W are zero (SAME padding).

    x_ref   : (1, S, cin)      input, already in zero-padded anchor layout
    m_ref   : (S, 1) f32       validity mask (1 at valid anchors, else 0)
    w1_ref  : (9*cin, cp)      conv1 weights (BN1 scale folded), tap-major
    w2_ref  : (9*cp, cp)       conv2 weights (BN2 scale folded), tap-major
    w3_ref  : (cp, cp)         1x1 weights (BN3 scale folded)
    b*_ref  : (1, cp) f32      folded biases
    o_ref   : (1, H, W, cout)  output (true channels only)
    col2_ref: (S, 9*cp)        conv2 im2col scratch
    acc_ref : (S, cp) f32      conv2+BN2 output (residual branch h)
    """
    f32 = jnp.float32
    S = (H + 2) * WS

    # Tap (ky, kx) of the 3x3 stencil at anchor a needs src[a + ky*WS+kx - WS-1]
    # (out-of-range wraps land on the all-zero padding rows by construction).
    # pltpu.roll follows jnp.roll semantics: rolled[i] = src[(i - shift) mod S].
    def shifted(src, ky, kx):
        sh = (WS + 1 - (ky * WS + kx)) % S
        return src if sh == 0 else pltpu.roll(src, sh, axis=0)

    taps = [(ky, kx) for ky in range(3) for kx in range(3)]

    # ---- conv1: 3x3 (cin -> cp) as ONE im2col matmul, K = 9*cin -------------
    xa = x_ref[0].astype(f32)                                    # (S, cin)
    patches1 = jnp.concatenate([shifted(xa, ky, kx) for ky, kx in taps],
                               axis=-1)                          # (S, 9*cin)
    acc1 = jnp.dot(patches1, w1_ref[...], preferred_element_type=f32)
    # BN1 (scale folded into w1) + ReLU, zeroed on the halo so it acts as the
    # SAME padding for conv2.  No buffer zero-fill needed anywhere.
    h1 = jnp.maximum(acc1 + b1_ref[...], 0.0) * m_ref[...]       # (S, cp) f32

    # ---- conv2: 3x3 (cp -> cp) as ONE im2col matmul, K = 9*cp ---------------
    # Build the im2col with 9 lane-aligned shifted copies (XLU rolls + plain
    # unmasked stores; no unaligned slice/reshape relayouts).
    for t, (ky, kx) in enumerate(taps):
        col2_ref[:, t * cp:(t + 1) * cp] = shifted(h1, ky, kx).astype(io_dtype)
    h2 = jnp.dot(col2_ref[...], w2_ref[...], preferred_element_type=f32)
    acc_ref[...] = h2 + b2_ref[...]          # BN2 (scale folded), no activation

    # ---- 1x1 conv + BN3 + residual + ReLU -----------------------------------
    h = acc_ref[...]                                             # residual branch
    y = jnp.dot(h.astype(io_dtype), w3_ref[...], preferred_element_type=f32)
    out = jnp.maximum(h + y + b3_ref[...], 0.0)                  # (S, cp) f32

    # Store only the true (H, W, cout) window; every row slice starts at a
    # sublane-aligned offset (WS is a multiple of 8).
    for r in range(H):
        o_ref[0, r] = out[r * WS:r * WS + W, :cout].astype(o_ref.dtype)


# ---------------------------------------------------------------------------
# Wrapper
# ---------------------------------------------------------------------------
def double_conv_pallas(x_nhwc, p, *, use_bf16=False):
    """Fused DoubleConv on NHWC input. Returns NHWC output with true Cout."""
    N, H, W, Cin = x_nhwc.shape
    Cout = p["w1"].shape[-1]
    Cp = _round_up(Cout, 128)
    pad_c = Cp - Cout
    Hp = H + 2
    WS = _round_up(W + 2, 8)           # anchor row stride (sublane aligned)
    S = Hp * WS
    f32 = jnp.float32
    io_dtype = jnp.bfloat16 if use_bf16 else f32

    s1, b1 = _fold_bn(*p["bn1"])
    s2, b2 = _fold_bn(*p["bn2"])
    s3, b3 = _fold_bn(*p["bn3"])

    # Fold BN scales into the conv weights (per-output-channel column scale);
    # biases stay in f32 and are applied in the kernel epilogues.
    w1f = (p["w1"] * s1).astype(f32)                    # (3,3,Cin,Cout)
    w2f = (p["w2"] * s2).astype(f32)                    # (3,3,Cout,Cout)
    w3f = (p["w3"] * s3[None, :]).astype(f32)           # (Cout,Cout) in,out
    b3f = p["b3"] * s3 + b3                             # conv1x1 bias through BN3

    # Channel padding to the 128-lane boundary.  Padded channels can never
    # leak into valid ones: the padded *input* rows of w2/w3 are zero.
    w1k = jnp.pad(w1f, ((0, 0), (0, 0), (0, 0), (0, pad_c))).reshape(9 * Cin, Cp)
    w2k = jnp.pad(w2f, ((0, 0), (0, 0), (0, pad_c), (0, pad_c))
                  ).reshape(9 * Cp, Cp).astype(io_dtype)
    w3k = jnp.pad(w3f, ((0, pad_c), (0, pad_c))).astype(io_dtype)

    def vec(v):
        return jnp.pad(v, (0, pad_c)).reshape(1, Cp).astype(f32)

    b1k, b2k, b3k = vec(b1), vec(b2), vec(b3f)

    # Input in zero-padded anchor-flat layout: (N, S, Cin) with row stride WS,
    # two all-zero rows below the image and zero columns to the right.  This
    # makes every in-kernel access aligned and removes all in-kernel zeroing.
    xf = jnp.pad(x_nhwc, ((0, 0), (0, 2), (0, WS - W), (0, 0))).reshape(N, S, Cin)

    # Validity mask over anchors (a = y*WS + x valid iff y < H and x < W).
    ar = jnp.arange(S, dtype=jnp.int32)
    mask = ((ar // WS < H) & (ar % WS < W)).astype(f32).reshape(S, 1)

    kernel = functools.partial(_double_conv_kernel, H=H, W=W, WS=WS,
                               cin=Cin, cp=Cp, cout=Cout, io_dtype=io_dtype)
    const2 = lambda n: (0, 0)

    # --- VMEM budget: actual scratch + 2x double-buffered blocks + slack -----
    def tile_bytes(shape, dtype):
        it = jnp.dtype(dtype).itemsize
        d = list(shape)
        d[-1] = _round_up(d[-1], 128)
        if len(d) >= 2:
            d[-2] = _round_up(d[-2], 8 * max(1, 4 // it))
        n = 1
        for v in d:
            n *= v
        return n * it

    dbuf = [((1, S, Cin), xf.dtype), ((S, 1), f32),
            ((9 * Cin, Cp), f32), ((1, Cp), f32),
            ((9 * Cp, Cp), io_dtype), ((1, Cp), f32),
            ((Cp, Cp), io_dtype), ((1, Cp), f32),
            ((1, H, W, Cout), x_nhwc.dtype)]
    scratch = [((S, 9 * Cp), io_dtype), ((S, Cp), f32)]
    vmem_needed = (2 * sum(tile_bytes(s, d) for s, d in dbuf)
                   + sum(tile_bytes(s, d) for s, d in scratch))
    # Leave headroom; never request the whole physical VMEM (64 MiB on v7x).
    vmem_limit = int(min(max(int(vmem_needed * 1.5) + (4 << 20), 32 << 20),
                         96 << 20))

    out = pl.pallas_call(
        kernel,
        out_shape=jax.ShapeDtypeStruct((N, H, W, Cout), x_nhwc.dtype),
        grid=(N,),
        in_specs=[
            pl.BlockSpec((1, S, Cin), lambda n: (n, 0, 0)),   # x (anchor layout)
            pl.BlockSpec((S, 1), const2),                     # validity mask
            pl.BlockSpec((9 * Cin, Cp), const2),              # w1 (BN1 folded)
            pl.BlockSpec((1, Cp), const2),                    # b1
            pl.BlockSpec((9 * Cp, Cp), const2),               # w2 (BN2 folded)
            pl.BlockSpec((1, Cp), const2),                    # b2
            pl.BlockSpec((Cp, Cp), const2),                   # w3 (BN3 folded)
            pl.BlockSpec((1, Cp), const2),                    # b3 (incl. conv bias)
        ],
        out_specs=pl.BlockSpec((1, H, W, Cout), lambda n: (n, 0, 0, 0)),
        scratch_shapes=[
            pltpu.VMEM((S, 9 * Cp), io_dtype),    # conv2 im2col
            pltpu.VMEM((S, Cp), jnp.float32),     # conv2+BN2 output / residual h
        ],
        compiler_params=pltpu.CompilerParams(
            dimension_semantics=("parallel",),
            vmem_limit_bytes=vmem_limit,
        ),
    )(xf, mask, w1k, b1k, w2k, b2k, w3k, b3k)

    return out


def double_conv_forward(x_nchw, p, *, use_bf16=False):
    """DoubleConv forward, PyTorch NCHW in/out (layout plumbing left to XLA)."""
    x = jnp.transpose(x_nchw, (0, 2, 3, 1))          # NCHW -> NHWC
    y = double_conv_pallas(x, p, use_bf16=use_bf16)
    return jnp.transpose(y, (0, 3, 1, 2))            # NHWC -> NCHW


# ---------------------------------------------------------------------------
# Parameter construction (deterministic)
# ---------------------------------------------------------------------------
def make_params(key, cin, cout):
    ks = jax.random.split(key, 10)
    p = {}
    p["w1"] = jax.random.normal(ks[0], (3, 3, cin, cout), jnp.float32) * 0.2
    p["bn1"] = (1.0 + 0.1 * jax.random.normal(ks[1], (cout,), jnp.float32),
                0.1 * jax.random.normal(ks[2], (cout,), jnp.float32),
                0.05 * jax.random.normal(ks[3], (cout,), jnp.float32),
                1.0 + 0.1 * jnp.abs(jax.random.normal(ks[4], (cout,), jnp.float32)))
    p["w2"] = jax.random.normal(ks[5], (3, 3, cout, cout), jnp.float32) * 0.2
    p["bn2"] = (1.0 + 0.1 * jax.random.normal(ks[6], (cout,), jnp.float32),
                0.1 * jax.random.normal(ks[7], (cout,), jnp.float32),
                0.05 * jax.random.normal(ks[8], (cout,), jnp.float32),
                1.0 + 0.1 * jnp.abs(jax.random.normal(ks[9], (cout,), jnp.float32)))
    kk = jax.random.split(jax.random.fold_in(key, 123), 6)
    p["w3"] = jax.random.normal(kk[0], (cout, cout), jnp.float32) * 0.2  # (in,out)
    p["b3"] = 0.1 * jax.random.normal(kk[1], (cout,), jnp.float32)
    p["bn3"] = (1.0 + 0.1 * jax.random.normal(kk[2], (cout,), jnp.float32),
                0.1 * jax.random.normal(kk[3], (cout,), jnp.float32),
                0.05 * jax.random.normal(kk[4], (cout,), jnp.float32),
                1.0 + 0.1 * jnp.abs(jax.random.normal(kk[5], (cout,), jnp.float32)))
    return p


# ---------------------------------------------------------------------------
# Pure-JAX reference (unfolded math, highest precision)
# ---------------------------------------------------------------------------
def _ref_conv3x3(x_nhwc, w_hwio):
    return lax.conv_general_dilated(
        x_nhwc, w_hwio, window_strides=(1, 1), padding="SAME",
        dimension_numbers=("NHWC", "HWIO", "NHWC"),
        precision=lax.Precision.HIGHEST)


def reference_forward(x_nchw, p):
    x = jnp.transpose(x_nchw, (0, 2, 3, 1))
    s1, b1 = _fold_bn(*p["bn1"])
    s2, b2 = _fold_bn(*p["bn2"])
    s3, b3 = _fold_bn(*p["bn3"])
    x = jnp.maximum(_ref_conv3x3(x, p["w1"]) * s1 + b1, 0.0)
    h = _ref_conv3x3(x, p["w2"]) * s2 + b2
    y = jnp.einsum("nhwc,cd->nhwd", h, p["w3"],
                   precision=lax.Precision.HIGHEST) + p["b3"]
    y = y * s3 + b3
    return jnp.transpose(jnp.maximum(h + y, 0.0), (0, 3, 1, 2))


# ---------------------------------------------------------------------------
if __name__ == "__main__":
    # NOTE: tiny shapes for the correctness check only; perf tuning should be
    # done at representative UNet shapes (H=W=64..256, C=64..512).
    key = jax.random.PRNGKey(0)
    N, CIN, COUT, H, W = 2, 4, 8, 16, 16

    kx, kp = jax.random.split(key)
    x = jax.random.normal(kx, (N, CIN, H, W), jnp.float32)   # NCHW like PyTorch
    params = make_params(kp, CIN, COUT)

    fwd = jax.jit(double_conv_forward)
    out = jax.block_until_ready(fwd(x, params))

    ref = reference_forward(x, params)
    assert out.shape == (N, COUT, H, W), out.shape
    assert jnp.allclose(out, ref, atol=5e-4, rtol=5e-4), "mismatch vs reference"

    print("KERNEL_OK")
</pallas_src>

<mosaic_0001>
module attributes {stable_mosaic.version = 11 : i64} {
  func.func @_double_conv_kernel(%arg0: i32, %arg1: memref<1x432x4xf32, #tpu.memory_space<vmem>>, %arg2: memref<432x1xf32, #tpu.memory_space<vmem>>, %arg3: memref<36x128xf32, #tpu.memory_space<vmem>>, %arg4: memref<1x128xf32, #tpu.memory_space<vmem>>, %arg5: memref<1152x128xf32, #tpu.memory_space<vmem>>, %arg6: memref<1x128xf32, #tpu.memory_space<vmem>>, %arg7: memref<128x128xf32, #tpu.memory_space<vmem>>, %arg8: memref<1x128xf32, #tpu.memory_space<vmem>>, %arg9: memref<1x16x16x8xf32, #tpu.memory_space<vmem>>, %arg10: memref<432x1152xf32, #tpu.memory_space<vmem>>, %arg11: memref<432x128xf32, #tpu.memory_space<vmem>>) attributes {dimension_semantics = [#tpu.dimension_semantics<parallel>], iteration_bounds = array<i64: 2>, scalar_prefetch = 0 : i64, scratch_operands = 2 : i64, tpu.core_type = #tpu.core_type<tc>, window_params = [{transform_indices = @transform_0, window_bounds = array<i64: 1, 432, 4>}, {pipeline_mode = #tpu.pipeline_mode<synchronous>, transform_indices = @transform_1, window_bounds = array<i64: 432, 1>}, {pipeline_mode = #tpu.pipeline_mode<synchronous>, transform_indices = @transform_2, window_bounds = array<i64: 36, 128>}, {pipeline_mode = #tpu.pipeline_mode<synchronous>, transform_indices = @transform_3, window_bounds = array<i64: 1, 128>}, {pipeline_mode = #tpu.pipeline_mode<synchronous>, transform_indices = @transform_4, window_bounds = array<i64: 1152, 128>}, {pipeline_mode = #tpu.pipeline_mode<synchronous>, transform_indices = @transform_5, window_bounds = array<i64: 1, 128>}, {pipeline_mode = #tpu.pipeline_mode<synchronous>, transform_indices = @transform_6, window_bounds = array<i64: 128, 128>}, {pipeline_mode = #tpu.pipeline_mode<synchronous>, transform_indices = @transform_7, window_bounds = array<i64: 1, 128>}, {transform_indices = @transform_8, window_bounds = array<i64: 1, 16, 16, 8>}]} {
    %c0 = arith.constant 0 : index
    %c0_0 = arith.constant 0 : index
    %c0_1 = arith.constant 0 : index
    %0 = vector.load %arg1[%c0, %c0_0, %c0_1] : memref<1x432x4xf32, #tpu.memory_space<vmem>>, vector<1x432x4xf32>
    %1 = vector.shape_cast %0 : vector<1x432x4xf32> to vector<432x4xf32>
    %c25_i32 = arith.constant 25 : i32
    %2 = tpu.dynamic_rotate %1 by %c25_i32 dim 0 : vector<432x4xf32>, i32 -> vector<432x4xf32>
    %c24_i32 = arith.constant 24 : i32
    %3 = tpu.dynamic_rotate %1 by %c24_i32 dim 0 : vector<432x4xf32>, i32 -> vector<432x4xf32>
    %c23_i32 = arith.constant 23 : i32
    %4 = tpu.dynamic_rotate %1 by %c23_i32 dim 0 : vector<432x4xf32>, i32 -> vector<432x4xf32>
    %c1_i32 = arith.constant 1 : i32
    %5 = tpu.dynamic_rotate %1 by %c1_i32 dim 0 : vector<432x4xf32>, i32 -> vector<432x4xf32>
    %c431_i32 = arith.constant 431 : i32
    %6 = tpu.dynamic_rotate %1 by %c431_i32 dim 0 : vector<432x4xf32>, i32 -> vector<432x4xf32>
    %c409_i32 = arith.constant 409 : i32
    %7 = tpu.dynamic_rotate %1 by %c409_i32 dim 0 : vector<432x4xf32>, i32 -> vector<432x4xf32>
    %c408_i32 = arith.constant 408 : i32
    %8 = tpu.dynamic_rotate %1 by %c408_i32 dim 0 : vector<432x4xf32>, i32 -> vector<432x4xf32>
    %c407_i32 = arith.constant 407 : i32
    %9 = tpu.dynamic_rotate %1 by %c407_i32 dim 0 : vector<432x4xf32>, i32 -> vector<432x4xf32>
    %10 = tpu.concatenate %2, %3, %4, %5, %1, %6, %7, %8, %9 in 1 : vector<432x4xf32>, vector<432x4xf32>, vector<432x4xf32>, vector<432x4xf32>, vector<432x4xf32>, vector<432x4xf32>, vector<432x4xf32>, vector<432x4xf32>, vector<432x4xf32> -> vector<432x36xf32>
    %c0_2 = arith.constant 0 : index
    %c0_3 = arith.constant 0 : index
    %11 = vector.load %arg3[%c0_2, %c0_3] : memref<36x128xf32, #tpu.memory_space<vmem>>, vector<36x128xf32>
    %cst = arith.constant dense<0.000000e+00> : vector<432x128xf32>
    %12 = tpu.matmul %10, %11, %cst {dimension_numbers = #tpu.dot_dimension_numbers<[1], [0], [0], [1], [0, 0, 1, 1], [], []>} : vector<432x36xf32>, vector<36x128xf32>, vector<432x128xf32> -> vector<432x128xf32>
    %c0_4 = arith.constant 0 : index
    %c0_5 = arith.constant 0 : index
    %13 = vector.load %arg4[%c0_4, %c0_5] : memref<1x128xf32, #tpu.memory_space<vmem>>, vector<1x128xf32>
    %14 = vector.broadcast %13 : vector<1x128xf32> to vector<432x128xf32>
    %15 = arith.addf %12, %14 : vector<432x128xf32>
    %cst_6 = arith.constant 0.000000e+00 : f32
    %16 = vector.broadcast %cst_6 : f32 to vector<432x128xf32>
    %17 = arith.maximumf %15, %16 : vector<432x128xf32>
    %c0_7 = arith.constant 0 : index
    %c0_8 = arith.constant 0 : index
    %18 = vector.load %arg2[%c0_7, %c0_8] : memref<432x1xf32, #tpu.memory_space<vmem>>, vector<432x1xf32>
    %19 = vector.broadcast %18 : vector<432x1xf32> to vector<432x128xf32>
    %20 = arith.mulf %17, %19 : vector<432x128xf32>
    %c25_i32_9 = arith.constant 25 : i32
    %21 = tpu.dynamic_rotate %20 by %c25_i32_9 dim 0 : vector<432x128xf32>, i32 -> vector<432x128xf32>
    %c0_10 = arith.constant 0 : index
    %c0_11 = arith.constant 0 : index
    %22 = vector.load %arg10[%c0_10, %c0_11] : memref<432x1152xf32, #tpu.memory_space<vmem>>, vector<432x128xf32>
    tpu.vector_store %arg10[%c0_10, %c0_11], %21 {strides = array<i32>} : memref<432x1152xf32, #tpu.memory_space<vmem>>, vector<432x128xf32>,
    %c24_i32_12 = arith.constant 24 : i32
    %23 = tpu.dynamic_rotate %20 by %c24_i32_12 dim 0 : vector<432x128xf32>, i32 -> vector<432x128xf32>
    %c0_13 = arith.constant 0 : index
    %c128 = arith.constant 128 : index
    %24 = vector.load %arg10[%c0_13, %c128] : memref<432x1152xf32, #tpu.memory_space<vmem>>, vector<432x128xf32>
    tpu.vector_store %arg10[%c0_13, %c128], %23 {strides = array<i32>} : memref<432x1152xf32, #tpu.memory_space<vmem>>, vector<432x128xf32>,
    %c23_i32_14 = arith.constant 23 : i32
    %25 = tpu.dynamic_rotate %20 by %c23_i32_14 dim 0 : vector<432x128xf32>, i32 -> vector<432x128xf32>
    %c0_15 = arith.constant 0 : index
    %c256 = arith.constant 256 : index
    %26 = vector.load %arg10[%c0_15, %c256] : memref<432x1152xf32, #tpu.memory_space<vmem>>, vector<432x128xf32>
    tpu.vector_store %arg10[%c0_15, %c256], %25 {strides = array<i32>} : memref<432x1152xf32, #tpu.memory_space<vmem>>, vector<432x128xf32>,
    %c1_i32_16 = arith.constant 1 : i32
    %27 = tpu.dynamic_rotate %20 by %c1_i32_16 dim 0 : vector<432x128xf32>, i32 -> vector<432x128xf32>
    %c0_17 = arith.constant 0 : index
    %c384 = arith.constant 384 : index
    %28 = vector.load %arg10[%c0_17, %c384] : memref<432x1152xf32, #tpu.memory_space<vmem>>, vector<432x128xf32>
    tpu.vector_store %arg10[%c0_17, %c384], %27 {strides = array<i32>} : memref<432x1152xf32, #tpu.memory_space<vmem>>, vector<432x128xf32>,
    %c0_18 = arith.constant 0 : index
    %c512 = arith.constant 512 : index
    %29 = vector.load %arg10[%c0_18, %c512] : memref<432x1152xf32, #tpu.memory_space<vmem>>, vector<432x128xf32>
    tpu.vector_store %arg10[%c0_18, %c512], %20 {strides = array<i32>} : memref<432x1152xf32, #tpu.memory_space<vmem>>, vector<432x128xf32>,
    %c431_i32_19 = arith.constant 431 : i32
    %30 = tpu.dynamic_rotate %20 by %c431_i32_19 dim 0 : vector<432x128xf32>, i32 -> vector<432x128xf32>
    %c0_20 = arith.constant 0 : index
    %c640 = arith.constant 640 : index
    %31 = vector.load %arg10[%c0_20, %c640] : memref<432x1152xf32, #tpu.memory_space<vmem>>, vector<432x128xf32>
    tpu.vector_store %arg10[%c0_20, %c640], %30 {strides = array<i32>} : memref<432x1152xf32, #tpu.memory_space<vmem>>, vector<432x128xf32>,
    %c409_i32_21 = arith.constant 409 : i32
    %32 = tpu.dynamic_rotate %20 by %c409_i32_21 dim 0 : vector<432x128xf32>, i32 -> vector<432x128xf32>
    %c0_22 = arith.constant 0 : index
    %c768 = arith.constant 768 : index
    %33 = vector.load %arg10[%c0_22, %c768] : memref<432x1152xf32, #tpu.memory_space<vmem>>, vector<432x128xf32>
    tpu.vector_store %arg10[%c0_22, %c768], %32 {strides = array<i32>} : memref<432x1152xf32, #tpu.memory_space<vmem>>, vector<432x128xf32>,
    %c408_i32_23 = arith.constant 408 : i32
    %34 = tpu.dynamic_rotate %20 by %c408_i32_23 dim 0 : vector<432x128xf32>, i32 -> vector<432x128xf32>
    %c0_24 = arith.constant 0 : index
    %c896 = arith.constant 896 : index
    %35 = vector.load %arg10[%c0_24, %c896] : memref<432x1152xf32, #tpu.memory_space<vmem>>, vector<432x128xf32>
    tpu.vector_store %arg10[%c0_24, %c896], %34 {strides = array<i32>} : memref<432x1152xf32, #tpu.memory_space<vmem>>, vector<432x128xf32>,
    %c407_i32_25 = arith.constant 407 : i32
    %36 = tpu.dynamic_rotate %20 by %c407_i32_25 dim 0 : vector<432x128xf32>, i32 -> vector<432x128xf32>
    %c0_26 = arith.constant 0 : index
    %c1024 = arith.constant 1024 : index
    %37 = vector.load %arg10[%c0_26, %c1024] : memref<432x1152xf32, #tpu.memory_space<vmem>>, vector<432x128xf32>
    tpu.vector_store %arg10[%c0_26, %c1024], %36 {strides = array<i32>} : memref<432x1152xf32, #tpu.memory_space<vmem>>, vector<432x128xf32>,
    %c0_27 = arith.constant 0 : index
    %c0_28 = arith.constant 0 : index
    %38 = vector.load %arg10[%c0_27, %c0_28] : memref<432x1152xf32, #tpu.memory_space<vmem>>, vector<432x1152xf32>
    %c0_29 = arith.constant 0 : index
    %c0_30 = arith.constant 0 : index
    %39 = vector.load %arg5[%c0_29, %c0_30] : memref<1152x128xf32, #tpu.memory_space<vmem>>, vector<1152x128xf32>
    %cst_31 = arith.constant dense<0.000000e+00> : vector<432x128xf32>
    %40 = tpu.matmul %38, %39, %cst_31 {dimension_numbers = #tpu.dot_dimension_numbers<[1], [0], [0], [1], [0, 0, 1, 1], [], []>} : vector<432x1152xf32>, vector<1152x128xf32>, vector<432x128xf32> -> vector<432x128xf32>
    %c0_32 = arith.constant 0 : index
    %c0_33 = arith.constant 0 : index
    %41 = vector.load %arg6[%c0_32, %c0_33] : memref<1x128xf32, #tpu.memory_space<vmem>>, vector<1x128xf32>
    %42 = vector.broadcast %41 : vector<1x128xf32> to vector<432x128xf32>
    %43 = arith.addf %40, %42 : vector<432x128xf32>
    %c0_34 = arith.constant 0 : index
    %c0_35 = arith.constant 0 : index
    %44 = vector.load %arg11[%c0_34, %c0_35] : memref<432x128xf32, #tpu.memory_space<vmem>>, vector<432x128xf32>
    tpu.vector_store %arg11[%c0_34, %c0_35], %43 {strides = array<i32>} : memref<432x128xf32, #tpu.memory_space<vmem>>, vector<432x128xf32>,
    %c0_36 = arith.constant 0 : index
    %c0_37 = arith.constant 0 : index
    %45 = vector.load %arg11[%c0_36, %c0_37] : memref<432x128xf32, #tpu.memory_space<vmem>>, vector<432x128xf32>
    %c0_38 = arith.constant 0 : index
    %c0_39 = arith.constant 0 : index
    %46 = vector.load %arg7[%c0_38, %c0_39] : memref<128x128xf32, #tpu.memory_space<vmem>>, vector<128x128xf32>
    %cst_40 = arith.constant dense<0.000000e+00> : vector<432x128xf32>
    %47 = tpu.matmul %45, %46, %cst_40 {dimension_numbers = #tpu.dot_dimension_numbers<[1], [0], [0], [1], [0, 0, 1, 1], [], []>} : vector<432x128xf32>, vector<128x128xf32>, vector<432x128xf32> -> vector<432x128xf32>
    %48 = arith.addf %45, %47 : vector<432x128xf32>
    %c0_41 = arith.constant 0 : index
    %c0_42 = arith.constant 0 : index
    %49 = vector.load %arg8[%c0_41, %c0_42] : memref<1x128xf32, #tpu.memory_space<vmem>>, vector<1x128xf32>
    %50 = vector.broadcast %49 : vector<1x128xf32> to vector<432x128xf32>
    %51 = arith.addf %48, %50 : vector<432x128xf32>
    %cst_43 = arith.constant 0.000000e+00 : f32
    %52 = vector.broadcast %cst_43 : f32 to vector<432x128xf32>
    %53 = arith.maximumf %51, %52 : vector<432x128xf32>
    %54 = vector.extract_strided_slice %53 {offsets = [0, 0], sizes = [16, 8], strides = [1, 1]} : vector<432x128xf32> to vector<16x8xf32>
    %c0_44 = arith.constant 0 : index
    %c0_45 = arith.constant 0 : index
    %c0_46 = arith.constant 0 : index
    %c0_47 = arith.constant 0 : index
    %55 = vector.load %arg9[%c0_44, %c0_45, %c0_46, %c0_47] : memref<1x16x16x8xf32, #tpu.memory_space<vmem>>, vector<1x1x16x8xf32>
    %56 = vector.shape_cast %55 : vector<1x1x16x8xf32> to vector<16x8xf32>
    %57 = vector.shape_cast %54 : vector<16x8xf32> to vector<1x1x16x8xf32>
    tpu.vector_store %arg9[%c0_44, %c0_45, %c0_46, %c0_47], %57 {strides = array<i32>} : memref<1x16x16x8xf32, #tpu.memory_space<vmem>>, vector<1x1x16x8xf32>,
    %58 = vector.extract_strided_slice %53 {offsets = [24, 0], sizes = [16, 8], strides = [1, 1]} : vector<432x128xf32> to vector<16x8xf32>
    %c0_48 = arith.constant 0 : index
    %c1 = arith.constant 1 : index
    %c0_49 = arith.constant 0 : index
    %c0_50 = arith.constant 0 : index
    %59 = vector.load %arg9[%c0_48, %c1, %c0_49, %c0_50] : memref<1x16x16x8xf32, #tpu.memory_space<vmem>>, vector<1x1x16x8xf32>
    %60 = vector.shape_cast %59 : vector<1x1x16x8xf32> to vector<16x8xf32>
    %61 = vector.shape_cast %58 : vector<16x8xf32> to vector<1x1x16x8xf32>
    tpu.vector_store %arg9[%c0_48, %c1, %c0_49, %c0_50], %61 {strides = array<i32>} : memref<1x16x16x8xf32, #tpu.memory_space<vmem>>, vector<1x1x16x8xf32>,
    %62 = vector.extract_strided_slice %53 {offsets = [48, 0], sizes = [16, 8], strides = [1, 1]} : vector<432x128xf32> to vector<16x8xf32>
    %c0_51 = arith.constant 0 : index
    %c2 = arith.constant 2 : index
    %c0_52 = arith.constant 0 : index
    %c0_53 = arith.constant 0 : index
    %63 = vector.load %arg9[%c0_51, %c2, %c0_52, %c0_53] : memref<1x16x16x8xf32, #tpu.memory_space<vmem>>, vector<1x1x16x8xf32>
    %64 = vector.shape_cast %63 : vector<1x1x16x8xf32> to vector<16x8xf32>
    %65 = vector.shape_cast %62 : vector<16x8xf32> to vector<1x1x16x8xf32>
    tpu.vector_store %arg9[%c0_51, %c2, %c0_52, %c0_53], %65 {strides = array<i32>} : memref<1x16x16x8xf32, #tpu.memory_space<vmem>>, vector<1x1x16x8xf32>,
    %66 = vector.extract_strided_slice %53 {offsets = [72, 0], sizes = [16, 8], strides = [1, 1]} : vector<432x128xf32> to vector<16x8xf32>
    %c0_54 = arith.constant 0 : index
    %c3 = arith.constant 3 : index
    %c0_55 = arith.constant 0 : index
    %c0_56 = arith.constant 0 : index
    %67 = vector.load %arg9[%c0_54, %c3, %c0_55, %c0_56] : memref<1x16x16x8xf32, #tpu.memory_space<vmem>>, vector<1x1x16x8xf32>
    %68 = vector.shape_cast %67 : vector<1x1x16x8xf32> to vector<16x8xf32>
    %69 = vector.shape_cast %66 : vector<16x8xf32> to vector<1x1x16x8xf32>
    tpu.vector_store %arg9[%c0_54, %c3, %c0_55, %c0_56], %69 {strides = array<i32>} : memref<1x16x16x8xf32, #tpu.memory_space<vmem>>, vector<1x1x16x8xf32>,
    %70 = vector.extract_strided_slice %53 {offsets = [96, 0], sizes = [16, 8], strides = [1, 1]} : vector<432x128xf32> to vector<16x8xf32>
    %c0_57 = arith.constant 0 : index
    %c4 = arith.constant 4 : index
    %c0_58 = arith.constant 0 : index
    %c0_59 = arith.constant 0 : index
    %71 = vector.load %arg9[%c0_57, %c4, %c0_58, %c0_59] : memref<1x16x16x8xf32, #tpu.memory_space<vmem>>, vector<1x1x16x8xf32>
    %72 = vector.shape_cast %71 : vector<1x1x16x8xf32> to vector<16x8xf32>
    %73 = vector.shape_cast %70 : vector<16x8xf32> to vector<1x1x16x8xf32>
    tpu.vector_store %arg9[%c0_57, %c4, %c0_58, %c0_59], %73 {strides = array<i32>} : memref<1x16x16x8xf32, #tpu.memory_space<vmem>>, vector<1x1x16x8xf32>,
    %74 = vector.extract_strided_slice %53 {offsets = [120, 0], sizes = [16, 8], strides = [1, 1]} : vector<432x128xf32> to vector<16x8xf32>
    %c0_60 = arith.constant 0 : index
    %c5 = arith.constant 5 : index
    %c0_61 = arith.constant 0 : index
    %c0_62 = arith.constant 0 : index
    %75 = vector.load %arg9[%c0_60, %c5, %c0_61, %c0_62] : memref<1x16x16x8xf32, #tpu.memory_space<vmem>>, vector<1x1x16x8xf32>
    %76 = vector.shape_cast %75 : vector<1x1x16x8xf32> to vector<16x8xf32>
    %77 = vector.shape_cast %74 : vector<16x8xf32> to vector<1x1x16x8xf32>
    tpu.vector_store %arg9[%c0_60, %c5, %c0_61, %c0_62], %77 {strides = array<i32>} : memref<1x16x16x8xf32, #tpu.memory_space<vmem>>, vector<1x1x16x8xf32>,
    %78 = vector.extract_strided_slice %53 {offsets = [144, 0], sizes = [16, 8], strides = [1, 1]} : vector<432x128xf32> to vector<16x8xf32>
    %c0_63 = arith.constant 0 : index
    %c6 = arith.constant 6 : index
    %c0_64 = arith.constant 0 : index
    %c0_65 = arith.constant 0 : index
    %79 = vector.load %arg9[%c0_63, %c6, %c0_64, %c0_65] : memref<1x16x16x8xf32, #tpu.memory_space<vmem>>, vector<1x1x16x8xf32>
    %80 = vector.shape_cast %79 : vector<1x1x16x8xf32> to vector<16x8xf32>
    %81 = vector.shape_cast %78 : vector<16x8xf32> to vector<1x1x16x8xf32>
    tpu.vector_store %arg9[%c0_63, %c6, %c0_64, %c0_65], %81 {strides = array<i32>} : memref<1x16x16x8xf32, #tpu.memory_space<vmem>>, vector<1x1x16x8xf32>,
    %82 = vector.extract_strided_slice %53 {offsets = [168, 0], sizes = [16, 8], strides = [1, 1]} : vector<432x128xf32> to vector<16x8xf32>
    %c0_66 = arith.constant 0 : index
    %c7 = arith.constant 7 : index
    %c0_67 = arith.constant 0 : index
    %c0_68 = arith.constant 0 : index
    %83 = vector.load %arg9[%c0_66, %c7, %c0_67, %c0_68] : memref<1x16x16x8xf32, #tpu.memory_space<vmem>>, vector<1x1x16x8xf32>
    %84 = vector.shape_cast %83 : vector<1x1x16x8xf32> to vector<16x8xf32>
    %85 = vector.shape_cast %82 : vector<16x8xf32> to vector<1x1x16x8xf32>
    tpu.vector_store %arg9[%c0_66, %c7, %c0_67, %c0_68], %85 {strides = array<i32>} : memref<1x16x16x8xf32, #tpu.memory_space<vmem>>, vector<1x1x16x8xf32>,
    %86 = vector.extract_strided_slice %53 {offsets = [192, 0], sizes = [16, 8], strides = [1, 1]} : vector<432x128xf32> to vector<16x8xf32>
    %c0_69 = arith.constant 0 : index
    %c8 = arith.constant 8 : index
    %c0_70 = arith.constant 0 : index
    %c0_71 = arith.constant 0 : index
    %87 = vector.load %arg9[%c0_69, %c8, %c0_70, %c0_71] : memref<1x16x16x8xf32, #tpu.memory_space<vmem>>, vector<1x1x16x8xf32>
    %88 = vector.shape_cast %87 : vector<1x1x16x8xf32> to vector<16x8xf32>
    %89 = vector.shape_cast %86 : vector<16x8xf32> to vector<1x1x16x8xf32>
    tpu.vector_store %arg9[%c0_69, %c8, %c0_70, %c0_71], %89 {strides = array<i32>} : memref<1x16x16x8xf32, #tpu.memory_space<vmem>>, vector<1x1x16x8xf32>,
    %90 = vector.extract_strided_slice %53 {offsets = [216, 0], sizes = [16, 8], strides = [1, 1]} : vector<432x128xf32> to vector<16x8xf32>
    %c0_72 = arith.constant 0 : index
    %c9 = arith.constant 9 : index
    %c0_73 = arith.constant 0 : index
    %c0_74 = arith.constant 0 : index
    %91 = vector.load %arg9[%c0_72, %c9, %c0_73, %c0_74] : memref<1x16x16x8xf32, #tpu.memory_space<vmem>>, vector<1x1x16x8xf32>
    %92 = vector.shape_cast %91 : vector<1x1x16x8xf32> to vector<16x8xf32>
    %93 = vector.shape_cast %90 : vector<16x8xf32> to vector<1x1x16x8xf32>
    tpu.vector_store %arg9[%c0_72, %c9, %c0_73, %c0_74], %93 {strides = array<i32>} : memref<1x16x16x8xf32, #tpu.memory_space<vmem>>, vector<1x1x16x8xf32>,
    %94 = vector.extract_strided_slice %53 {offsets = [240, 0], sizes = [16, 8], strides = [1, 1]} : vector<432x128xf32> to vector<16x8xf32>
    %c0_75 = arith.constant 0 : index
    %c10 = arith.constant 10 : index
    %c0_76 = arith.constant 0 : index
    %c0_77 = arith.constant 0 : index
    %95 = vector.load %arg9[%c0_75, %c10, %c0_76, %c0_77] : memref<1x16x16x8xf32, #tpu.memory_space<vmem>>, vector<1x1x16x8xf32>
    %96 = vector.shape_cast %95 : vector<1x1x16x8xf32> to vector<16x8xf32>
    %97 = vector.shape_cast %94 : vector<16x8xf32> to vector<1x1x16x8xf32>
    tpu.vector_store %arg9[%c0_75, %c10, %c0_76, %c0_77], %97 {strides = array<i32>} : memref<1x16x16x8xf32, #tpu.memory_space<vmem>>, vector<1x1x16x8xf32>,
    %98 = vector.extract_strided_slice %53 {offsets = [264, 0], sizes = [16, 8], strides = [1, 1]} : vector<432x128xf32> to vector<16x8xf32>
    %c0_78 = arith.constant 0 : index
    %c11 = arith.constant 11 : index
    %c0_79 = arith.constant 0 : index
    %c0_80 = arith.constant 0 : index
    %99 = vector.load %arg9[%c0_78, %c11, %c0_79, %c0_80] : memref<1x16x16x8xf32, #tpu.memory_space<vmem>>, vector<1x1x16x8xf32>
    %100 = vector.shape_cast %99 : vector<1x1x16x8xf32> to vector<16x8xf32>
    %101 = vector.shape_cast %98 : vector<16x8xf32> to vector<1x1x16x8xf32>
    tpu.vector_store %arg9[%c0_78, %c11, %c0_79, %c0_80], %101 {strides = array<i32>} : memref<1x16x16x8xf32, #tpu.memory_space<vmem>>, vector<1x1x16x8xf32>,
    %102 = vector.extract_strided_slice %53 {offsets = [288, 0], sizes = [16, 8], strides = [1, 1]} : vector<432x128xf32> to vector<16x8xf32>
    %c0_81 = arith.constant 0 : index
    %c12 = arith.constant 12 : index
    %c0_82 = arith.constant 0 : index
    %c0_83 = arith.constant 0 : index
    %103 = vector.load %arg9[%c0_81, %c12, %c0_82, %c0_83] : memref<1x16x16x8xf32, #tpu.memory_space<vmem>>, vector<1x1x16x8xf32>
    %104 = vector.shape_cast %103 : vector<1x1x16x8xf32> to vector<16x8xf32>
    %105 = vector.shape_cast %102 : vector<16x8xf32> to vector<1x1x16x8xf32>
    tpu.vector_store %arg9[%c0_81, %c12, %c0_82, %c0_83], %105 {strides = array<i32>} : memref<1x16x16x8xf32, #tpu.memory_space<vmem>>, vector<1x1x16x8xf32>,
    %106 = vector.extract_strided_slice %53 {offsets = [312, 0], sizes = [16, 8], strides = [1, 1]} : vector<432x128xf32> to vector<16x8xf32>
    %c0_84 = arith.constant 0 : index
    %c13 = arith.constant 13 : index
    %c0_85 = arith.constant 0 : index
    %c0_86 = arith.constant 0 : index
    %107 = vector.load %arg9[%c0_84, %c13, %c0_85, %c0_86] : memref<1x16x16x8xf32, #tpu.memory_space<vmem>>, vector<1x1x16x8xf32>
    %108 = vector.shape_cast %107 : vector<1x1x16x8xf32> to vector<16x8xf32>
    %109 = vector.shape_cast %106 : vector<16x8xf32> to vector<1x1x16x8xf32>
    tpu.vector_store %arg9[%c0_84, %c13, %c0_85, %c0_86], %109 {strides = array<i32>} : memref<1x16x16x8xf32, #tpu.memory_space<vmem>>, vector<1x1x16x8xf32>,
    %110 = vector.extract_strided_slice %53 {offsets = [336, 0], sizes = [16, 8], strides = [1, 1]} : vector<432x128xf32> to vector<16x8xf32>
    %c0_87 = arith.constant 0 : index
    %c14 = arith.constant 14 : index
    %c0_88 = arith.constant 0 : index
    %c0_89 = arith.constant 0 : index
    %111 = vector.load %arg9[%c0_87, %c14, %c0_88, %c0_89] : memref<1x16x16x8xf32, #tpu.memory_space<vmem>>, vector<1x1x16x8xf32>
    %112 = vector.shape_cast %111 : vector<1x1x16x8xf32> to vector<16x8xf32>
    %113 = vector.shape_cast %110 : vector<16x8xf32> to vector<1x1x16x8xf32>
    tpu.vector_store %arg9[%c0_87, %c14, %c0_88, %c0_89], %113 {strides = array<i32>} : memref<1x16x16x8xf32, #tpu.memory_space<vmem>>, vector<1x1x16x8xf32>,
    %114 = vector.extract_strided_slice %53 {offsets = [360, 0], sizes = [16, 8], strides = [1, 1]} : vector<432x128xf32> to vector<16x8xf32>
    %c0_90 = arith.constant 0 : index
    %c15 = arith.constant 15 : index
    %c0_91 = arith.constant 0 : index
    %c0_92 = arith.constant 0 : index
    %115 = vector.load %arg9[%c0_90, %c15, %c0_91, %c0_92] : memref<1x16x16x8xf32, #tpu.memory_space<vmem>>, vector<1x1x16x8xf32>
    %116 = vector.shape_cast %115 : vector<1x1x16x8xf32> to vector<16x8xf32>
    %117 = vector.shape_cast %114 : vector<16x8xf32> to vector<1x1x16x8xf32>
    tpu.vector_store %arg9[%c0_90, %c15, %c0_91, %c0_92], %117 {strides = array<i32>} : memref<1x16x16x8xf32, #tpu.memory_space<vmem>>, vector<1x1x16x8xf32>,
    return
  }
  func.func @transform_0(%arg0: i32) -> (i32, i32, i32) {
    %c0_i32 = arith.constant 0 : i32
    %c0_i32_0 = arith.constant 0 : i32
    %c0_i32_1 = arith.constant 0 : i32
    return %arg0, %c0_i32, %c0_i32_0 : i32, i32, i32
  }
  func.func @transform_1(%arg0: i32) -> (i32, i32) {
    %c0_i32 = arith.constant 0 : i32
    %c0_i32_0 = arith.constant 0 : i32
    %c0_i32_1 = arith.constant 0 : i32
    return %c0_i32, %c0_i32_0 : i32, i32
  }
  func.func @transform_2(%arg0: i32) -> (i32, i32) {
    %c0_i32 = arith.constant 0 : i32
    %c0_i32_0 = arith.constant 0 : i32
    %c0_i32_1 = arith.constant 0 : i32
    return %c0_i32, %c0_i32_0 : i32, i32
  }
  func.func @transform_3(%arg0: i32) -> (i32, i32) {
    %c0_i32 = arith.constant 0 : i32
    %c0_i32_0 = arith.constant 0 : i32
    %c0_i32_1 = arith.constant 0 : i32
    return %c0_i32, %c0_i32_0 : i32, i32
  }
  func.func @transform_4(%arg0: i32) -> (i32, i32) {
    %c0_i32 = arith.constant 0 : i32
    %c0_i32_0 = arith.constant 0 : i32
    %c0_i32_1 = arith.constant 0 : i32
    return %c0_i32, %c0_i32_0 : i32, i32
  }
  func.func @transform_5(%arg0: i32) -> (i32, i32) {
    %c0_i32 = arith.constant 0 : i32
    %c0_i32_0 = arith.constant 0 : i32
    %c0_i32_1 = arith.constant 0 : i32
    return %c0_i32, %c0_i32_0 : i32, i32
  }
  func.func @transform_6(%arg0: i32) -> (i32, i32) {
    %c0_i32 = arith.constant 0 : i32
    %c0_i32_0 = arith.constant 0 : i32
    %c0_i32_1 = arith.constant 0 : i32
    return %c0_i32, %c0_i32_0 : i32, i32
  }
  func.func @transform_7(%arg0: i32) -> (i32, i32) {
    %c0_i32 = arith.constant 0 : i32
    %c0_i32_0 = arith.constant 0 : i32
    %c0_i32_1 = arith.constant 0 : i32
    return %c0_i32, %c0_i32_0 : i32, i32
  }
  func.func @transform_8(%arg0: i32) -> (i32, i32, i32, i32) {
    %c0_i32 = arith.constant 0 : i32
    %c0_i32_0 = arith.constant 0 : i32
    %c0_i32_1 = arith.constant 0 : i32
    %c0_i32_2 = arith.constant 0 : i32
    return %arg0, %c0_i32, %c0_i32_0, %c0_i32_1 : i32, i32, i32, i32
  }
}

</mosaic_0001>

<llo_original>
// kernel: double_conv_forward.1
$region0: #{double_conv_forward.1}
  #allocation0 [shape = 'u32[]', space=smem, size = 0x4, offset = 0x4, fixed_abs, tag = 'smem constant byte address 0x4 - core index']
  #allocation1 [shape = 'u32[72,128]{1,0:T(1,128)}', space=vmem, size = 0x9000, scoped, tag = 'internal scratch']
  #allocation2 [shape = 'f32[432,1152]{1,0:T(8,128)}', space=vmem, size = 0x1e6000, scoped, tag = 'scratch operand']
  #allocation3 [shape = 'f32[432,128]{1,0:T(8,128)}', space=vmem, size = 0x36000, scoped, tag = 'scratch operand']
  %s0 = inlined_call_operand.vmem [shape: f32[2,432,4], index: 0, kind: input, shape index: {}]
  %s1 = inlined_call_operand.vmem [shape: f32[432,1], index: 1, kind: input, shape index: {}]
  %s2 = inlined_call_operand.vmem [shape: f32[36,128], index: 2, kind: input, shape index: {}]
  %s3 = inlined_call_operand.vmem [shape: f32[1,128], index: 3, kind: input, shape index: {}]
  %s4 = inlined_call_operand.vmem [shape: f32[1152,128], index: 4, kind: input, shape index: {}]
  %s5 = inlined_call_operand.vmem [shape: f32[1,128], index: 5, kind: input, shape index: {}]
  %s6 = inlined_call_operand.vmem [shape: f32[128,128], index: 6, kind: input, shape index: {}]
  %s7 = inlined_call_operand.vmem [shape: f32[1,128], index: 7, kind: input, shape index: {}]
  %s8 = inlined_call_operand.vmem [shape: f32[2,16,16,8], index: 8, kind: output, shape index: {}]
  %s9 = sld [smem:[#allocation0]]
  $region65: #{double_conv_forward.1} parent=0
    _
  %s11 = ssub.s32 1, %s9
  %s12 = scalar_select 0, %s11, %s9
  loop: start=0, step=1, limit=4
  $region2: #{double_conv_forward.1} parent=0 // loop_pre_header
    _
  $region3: #{double_conv_forward.1} parent=0 // loop_header
    %s14 = sphi 0, %s18
    %p15 = scmp.ge.s32.totalorder %s14, 4
    %s24 = sphi 0, %s26
    %s27 = sphi 0, %s24
    %s28 = sphi 0, %s27
    %s44 = sphi 0, %s28
    %s48 = sphi 0, %s48
    %s50 = sphi 0, %s48
    %s51 = sphi 0, %s50
    %s65 = sphi 0, %s51
    %s69 = sphi 0, %s69
    %s71 = sphi 0, %s69
    %s72 = sphi 0, %s71
    %s86 = sphi 0, %s72
    %s90 = sphi 0, %s90
    %s92 = sphi 0, %s90
    %s93 = sphi 0, %s92
    %s107 = sphi 0, %s93
    %s111 = sphi 0, %s111
    %s113 = sphi 0, %s111
    %s114 = sphi 0, %s113
    %s128 = sphi 0, %s114
    %s132 = sphi 0, %s132
    %s134 = sphi 0, %s132
    %s135 = sphi 0, %s134
    %s149 = sphi 0, %s135
    %s153 = sphi 0, %s153
    %s155 = sphi 0, %s153
    %s156 = sphi 0, %s155
    %s170 = sphi 0, %s156
    %s174 = sphi 0, %s174
    %s176 = sphi 0, %s174
    %s177 = sphi 0, %s176
    %s191 = sphi 0, %s177
    %s197 = sphi 0, %s199
    %s200 = sphi 0, %s197
    %s201 = sphi 0, %s200
    %s217 = sphi 0, %s201
  $region4: #{double_conv_forward.1} parent=0 // loop_header_branch
    %17 = sbr.rel (%p15) target = $region8
  $region5: #{double_conv_forward.1} parent=0 // loop_body
    %s19 = ssub.s32 %s14, 1
    %s20 = ssub.s32 %s14, 2
    %s21 = sadd.s32 %s14, 1
    %s22 = ssub.s32 %s14, %s21
    %p23 = scmp.eq.s32.totalorder %s22, 0
    %s25 = sadd.s32 %s24, 1
    %s26 = scalar_select %p23, %s24, %s25
    %p29 = pneg %p23
    %p30 = scmp.eq.s32.totalorder %s14, 1
    %p31 = por %p29, %p30
    %p32 = scmp.ne.s32.totalorder %s24, %s27
    %p33 = scmp.eq.s32.totalorder %s14, 0
    %p34 = por %p32, %p33
    %p35 = scmp.ne.s32.totalorder %s24, %s27
    %p36 = scmp.eq.s32.totalorder %s19, 1
    %p37 = por %p35, %p36
    %p38 = scmp.ne.s32.totalorder %s27, %s28
    %p39 = scmp.eq.s32.totalorder %s19, 0
    %p40 = por %p38, %p39
    %p41 = scmp.ne.s32.totalorder %s27, %s28
    %p42 = scmp.eq.s32.totalorder %s20, 1
    %p43 = por %p41, %p42
    %p45 = scmp.ne.s32.totalorder %s28, %s44
    %p46 = scmp.eq.s32.totalorder %s20, 0
    %p47 = por %p45, %p46
    %s49 = sadd.s32 %s48, 1
    %p52 = scmp.eq.s32.totalorder %s14, 1
    %p53 = scmp.ne.s32.totalorder %s48, %s50
    %p54 = scmp.eq.s32.totalorder %s14, 0
    %p55 = por %p53, %p54
    %p56 = scmp.ne.s32.totalorder %s48, %s50
    %p57 = scmp.eq.s32.totalorder %s19, 1
    %p58 = por %p56, %p57
    %p59 = scmp.ne.s32.totalorder %s50, %s51
    %p60 = scmp.eq.s32.totalorder %s19, 0
    %p61 = por %p59, %p60
    %p62 = scmp.ne.s32.totalorder %s50, %s51
    %p63 = scmp.eq.s32.totalorder %s20, 1
    %p64 = por %p62, %p63
    %p66 = scmp.ne.s32.totalorder %s51, %s65
    %p67 = scmp.eq.s32.totalorder %s20, 0
    %p68 = por %p66, %p67
    %s70 = sadd.s32 %s69, 1
    %p73 = scmp.eq.s32.totalorder %s14, 1
    %p74 = scmp.ne.s32.totalorder %s69, %s71
    %p75 = scmp.eq.s32.totalorder %s14, 0
    %p76 = por %p74, %p75
    %p77 = scmp.ne.s32.totalorder %s69, %s71
    %p78 = scmp.eq.s32.totalorder %s19, 1
    %p79 = por %p77, %p78
    %p80 = scmp.ne.s32.totalorder %s71, %s72
    %p81 = scmp.eq.s32.totalorder %s19, 0
    %p82 = por %p80, %p81
    %p83 = scmp.ne.s32.totalorder %s71, %s72
    %p84 = scmp.eq.s32.totalorder %s20, 1
    %p85 = por %p83, %p84
    %p87 = scmp.ne.s32.totalorder %s72, %s86
    %p88 = scmp.eq.s32.totalorder %s20, 0
    %p89 = por %p87, %p88
    %s91 = sadd.s32 %s90, 1
    %p94 = scmp.eq.s32.totalorder %s14, 1
    %p95 = scmp.ne.s32.totalorder %s90, %s92
    %p96 = scmp.eq.s32.totalorder %s14, 0
    %p97 = por %p95, %p96
    %p98 = scmp.ne.s32.totalorder %s90, %s92
    %p99 = scmp.eq.s32.totalorder %s19, 1
    %p100 = por %p98, %p99
    %p101 = scmp.ne.s32.totalorder %s92, %s93
    %p102 = scmp.eq.s32.totalorder %s19, 0
    %p103 = por %p101, %p102
    %p104 = scmp.ne.s32.totalorder %s92, %s93
    %p105 = scmp.eq.s32.totalorder %s20, 1
    %p106 = por %p104, %p105
    %p108 = scmp.ne.s32.totalorder %s93, %s107
    %p109 = scmp.eq.s32.totalorder %s20, 0
    %p110 = por %p108, %p109
    %s112 = sadd.s32 %s111, 1
    %p115 = scmp.eq.s32.totalorder %s14, 1
    %p116 = scmp.ne.s32.totalorder %s111, %s113
    %p117 = scmp.eq.s32.totalorder %s14, 0
    %p118 = por %p116, %p117
    %p119 = scmp.ne.s32.totalorder %s111, %s113
    %p120 = scmp.eq.s32.totalorder %s19, 1
    %p121 = por %p119, %p120
    %p122 = scmp.ne.s32.totalorder %s113, %s114
    %p123 = scmp.eq.s32.totalorder %s19, 0
    %p124 = por %p122, %p123
    %p125 = scmp.ne.s32.totalorder %s113, %s114
    %p126 = scmp.eq.s32.totalorder %s20, 1
    %p127 = por %p125, %p126
    %p129 = scmp.ne.s32.totalorder %s114, %s128
    %p130 = scmp.eq.s32.totalorder %s20, 0
    %p131 = por %p129, %p130
    %s133 = sadd.s32 %s132, 1
    %p136 = scmp.eq.s32.totalorder %s14, 1
    %p137 = scmp.ne.s32.totalorder %s132, %s134
    %p138 = scmp.eq.s32.totalorder %s14, 0
    %p139 = por %p137, %p138
    %p140 = scmp.ne.s32.totalorder %s132, %s134
    %p141 = scmp.eq.s32.totalorder %s19, 1
    %p142 = por %p140, %p141
    %p143 = scmp.ne.s32.totalorder %s134, %s135
    %p144 = scmp.eq.s32.totalorder %s19, 0
    %p145 = por %p143, %p144
    %p146 = scmp.ne.s32.totalorder %s134, %s135
    %p147 = scmp.eq.s32.totalorder %s20, 1
    %p148 = por %p146, %p147
    %p150 = scmp.ne.s32.totalorder %s135, %s149
    %p151 = scmp.eq.s32.totalorder %s20, 0
    %p152 = por %p150, %p151
    %s154 = sadd.s32 %s153, 1
    %p157 = scmp.eq.s32.totalorder %s14, 1
    %p158 = scmp.ne.s32.totalorder %s153, %s155
    %p159 = scmp.eq.s32.totalorder %s14, 0
    %p160 = por %p158, %p159
    %p161 = scmp.ne.s32.totalorder %s153, %s155
    %p162 = scmp.eq.s32.totalorder %s19, 1
    %p163 = por %p161, %p162
    %p164 = scmp.ne.s32.totalorder %s155, %s156
    %p165 = scmp.eq.s32.totalorder %s19, 0
    %p166 = por %p164, %p165
    %p167 = scmp.ne.s32.totalorder %s155, %s156
    %p168 = scmp.eq.s32.totalorder %s20, 1
    %p169 = por %p167, %p168
    %p171 = scmp.ne.s32.totalorder %s156, %s170
    %p172 = scmp.eq.s32.totalorder %s20, 0
    %p173 = por %p171, %p172
    %s175 = sadd.s32 %s174, 1
    %p178 = scmp.eq.s32.totalorder %s14, 1
    %p179 = scmp.ne.s32.totalorder %s174, %s176
    %p180 = scmp.eq.s32.totalorder %s14, 0
    %p181 = por %p179, %p180
    %p182 = scmp.ne.s32.totalorder %s174, %s176
    %p183 = scmp.eq.s32.totalorder %s19, 1
    %p184 = por %p182, %p183
    %p185 = scmp.ne.s32.totalorder %s176, %s177
    %p186 = scmp.eq.s32.totalorder %s19, 0
    %p187 = por %p185, %p186
    %p188 = scmp.ne.s32.totalorder %s176, %s177
    %p189 = scmp.eq.s32.totalorder %s20, 1
    %p190 = por %p188, %p189
    %p192 = scmp.ne.s32.totalorder %s177, %s191
    %p193 = scmp.eq.s32.totalorder %s20, 0
    %p194 = por %p192, %p193
    %s195 = ssub.s32 %s14, %s21
    %p196 = scmp.eq.s32.totalorder %s195, 0
    %s198 = sadd.s32 %s197, 1
    %s199 = scalar_select %p196, %s197, %s198
    %p202 = pneg %p196
    %p203 = scmp.eq.s32.totalorder %s14, 1
    %p204 = por %p202, %p203
    %p205 = scmp.ne.s32.totalorder %s197, %s200
    %p206 = scmp.eq.s32.totalorder %s14, 0
    %p207 = por %p205, %p206
    %p208 = scmp.ne.s32.totalorder %s197, %s200
    %p209 = scmp.eq.s32.totalorder %s19, 1
    %p210 = por %p208, %p209
    %p211 = scmp.ne.s32.totalorder %s200, %s201
    %p212 = scmp.eq.s32.totalorder %s19, 0
    %p213 = por %p211, %p212
    %p214 = scmp.ne.s32.totalorder %s200, %s201
    %p215 = scmp.eq.s32.totalorder %s20, 1
    %p216 = por %p214, %p215
    %p218 = scmp.ne.s32.totalorder %s201, %s217
    %p219 = scmp.eq.s32.totalorder %s20, 0
    %p220 = por %p218, %p219
    %p221 = scmp.le.s32.totalorder 1, %s14
    %p222 = scmp.lt.s32.totalorder %s14, 3
    %p223 = pnand %p221, %p222
    %p224 = pneg %p223
    // Predicated region
    $region9: #{double_conv_forward.1} parent=5 // pred_check
      _
    $region10: #{double_conv_forward.1} parent=5 // pred_check_branch
      %226 = sbr.rel (%p223) target = $region12
    $region11: #{double_conv_forward.1} parent=5 // pred_region
      %s227 = ssub.s32 %s14, 1
      // Predicated region
      $region13: #{double_conv_forward.1} parent=11 // pred_check
        %p228 = pneg %p61
      $region14: #{double_conv_forward.1} parent=11 // pred_check_branch
        %230 = sbr.rel (%p228) target = $region16
      $region15: #{double_conv_forward.1} parent=11 // pred_region
        _
      $region16: #{double_conv_forward.1} parent=11 // pred_fallthru
        _
      // Predicated region
      $region17: #{double_conv_forward.1} parent=11 // pred_check
        %p231 = pneg %p82
      $region18: #{double_conv_forward.1} parent=11 // pred_check_branch
        %233 = sbr.rel (%p231) target = $region20
      $region19: #{double_conv_forward.1} parent=11 // pred_region
        _
      $region20: #{double_conv_forward.1} parent=11 // pred_fallthru
        _
      // Predicated region
      $region21: #{double_conv_forward.1} parent=11 // pred_check
        %p234 = pneg %p103
      $region22: #{double_conv_forward.1} parent=11 // pred_check_branch
        %236 = sbr.rel (%p234) target = $region24
      $region23: #{double_conv_forward.1} parent=11 // pred_region
        _
      $region24: #{double_conv_forward.1} parent=11 // pred_fallthru
        _
      // Predicated region
      $region25: #{double_conv_forward.1} parent=11 // pred_check
        %p237 = pneg %p124
      $region26: #{double_conv_forward.1} parent=11 // pred_check_branch
        %239 = sbr.rel (%p237) target = $region28
      $region27: #{double_conv_forward.1} parent=11 // pred_region
        _
      $region28: #{double_conv_forward.1} parent=11 // pred_fallthru
        _
      // Predicated region
      $region29: #{double_conv_forward.1} parent=11 // pred_check
        %p240 = pneg %p145
      $region30: #{double_conv_forward.1} parent=11 // pred_check_branch
        %242 = sbr.rel (%p240) target = $region32
      $region31: #{double_conv_forward.1} parent=11 // pred_region
        _
      $region32: #{double_conv_forward.1} parent=11 // pred_fallthru
        _
      // Predicated region
      $region33: #{double_conv_forward.1} parent=11 // pred_check
        %p243 = pneg %p166
      $region34: #{double_conv_forward.1} parent=11 // pred_check_branch
        %245 = sbr.rel (%p243) target = $region36
      $region35: #{double_conv_forward.1} parent=11 // pred_region
        _
      $region36: #{double_conv_forward.1} parent=11 // pred_fallthru
        _
      // Predicated region
      $region37: #{double_conv_forward.1} parent=11 // pred_check
        %p246 = pneg %p187
      $region38: #{double_conv_forward.1} parent=11 // pred_check_branch
        %248 = sbr.rel (%p246) target = $region40
      $region39: #{double_conv_forward.1} parent=11 // pred_region
        _
      $region40: #{double_conv_forward.1} parent=11 // pred_fallthru
        _
    $region12: #{double_conv_forward.1} parent=5 // pred_fallthru
      _
    %p249 = scmp.lt.s32.totalorder %s14, 2
    // Predicated region
    $region41: #{double_conv_forward.1} parent=5 // pred_check
      %p250 = pneg %p249
    $region42: #{double_conv_forward.1} parent=5 // pred_check_branch
      %252 = sbr.rel (%p250) target = $region44
    $region43: #{double_conv_forward.1} parent=5 // pred_region
      // Predicated region
      $region45: #{double_conv_forward.1} parent=43 // pred_check
        %p253 = pneg %p34
      $region46: #{double_conv_forward.1} parent=43 // pred_check_branch
        %255 = sbr.rel (%p253) target = $region48
      $region47: #{double_conv_forward.1} parent=43 // pred_region
        %p256 = scmp.lt.s32.totalorder %s14, 1
        %s257 = scalar_select %p256, %s14, 1
        %s258 = smul.addr %s257, 54
        %s259 = smul.addr %s258, 8
        %s260 = scalar_lea.vmem %s0, %s259
      $region48: #{double_conv_forward.1} parent=43 // pred_fallthru
        _
    $region44: #{double_conv_forward.1} parent=5 // pred_fallthru
      _
    %p261 = scmp.le.s32.totalorder 1, %s14
    %p262 = scmp.lt.s32.totalorder %s14, 3
    %p263 = pnand %p261, %p262
    %p264 = pneg %p263
    // Predicated region
    $region49: #{double_conv_forward.1} parent=5 // pred_check
      _
    $region50: #{double_conv_forward.1} parent=5 // pred_check_branch
      %266 = sbr.rel (%p263) target = $region52
    $region51: #{double_conv_forward.1} parent=5 // pred_region
      %s267 = ssub.s32 %s14, 1
      %p268 = scmp.lt.s32.totalorder %s19, 1
      %s269 = scalar_select %p268, %s19, 1
      %s270 = smul.addr %s269, 54
      %s271 = smul.addr %s270, 8
      %s272 = scalar_lea.vmem %s0, %s271
      %p273 = pneg %p40
      %p274 = pneg %p37
      %p275 = pneg %p61
      %p276 = pneg %p58
      %p277 = pneg %p82
      %p278 = pneg %p79
      %p279 = pneg %p103
      %p280 = pneg %p100
      %p281 = pneg %p124
      %p282 = pneg %p121
      %p283 = pneg %p145
      %p284 = pneg %p142
      %p285 = pneg %p166
      %p286 = pneg %p163
      %p287 = pneg %p187
      %p288 = pneg %p184
      %p289 = pneg %p213
      %p290 = pneg %p210
      %p291 = scmp.lt.s32.totalorder %s19, 1
      %s292 = scalar_select %p291, %s19, 1
      %s293 = smul.addr %s292, 32
      %s294 = smul.addr %s293, 8
      %s295 = scalar_lea.vmem %s8, %s294
      %p296 = scmp.lt.s32.totalorder %s19, 1
      %s297 = scalar_select %p296, %s19, 1
      %s298 = smul.addr %s297, 54
      %s299 = smul.addr %s298, 8
      %s300 = scalar_lea.vmem %s0, %s299
      %p301 = scmp.lt.s32.totalorder %s19, 1
      %s302 = scalar_select %p301, %s19, 1
      %s303 = smul.addr %s302, 32
      %s304 = smul.addr %s303, 8
      %s305 = scalar_lea.vmem %s8, %s304
      %v306 = vld [vmem:[%s300] sm:$0xff]
      %v307 = vld [vmem:[%s300 + $0x8] sm:$0xff]
      %v308 = vld [vmem:[%s300 + $0x10] sm:$0xff]
      %v309 = vld [vmem:[%s300 + $0x18] sm:$0xff]
      %v310 = vld [vmem:[%s300 + $0x20] sm:$0xff]
      %v311 = vld [vmem:[%s300 + $0x28] sm:$0xff]
      %v312 = vld [vmem:[%s300 + $0x30] sm:$0xff]
      %v313 = vld [vmem:[%s300 + $0x38] sm:$0xff]
      %v314 = vld [vmem:[%s300 + $0x40] sm:$0xff]
      %v315 = vld [vmem:[%s300 + $0x48] sm:$0xff]
      %v316 = vld [vmem:[%s300 + $0x50] sm:$0xff]
      %v317 = vld [vmem:[%s300 + $0x58] sm:$0xff]
      %v318 = vld [vmem:[%s300 + $0x60] sm:$0xff]
      %v319 = vld [vmem:[%s300 + $0x68] sm:$0xff]
      %v320 = vld [vmem:[%s300 + $0x70] sm:$0xff]
      %v321 = vld [vmem:[%s300 + $0x78] sm:$0xff]
      %v322 = vld [vmem:[%s300 + $0x80] sm:$0xff]
      %v323 = vld [vmem:[%s300 + $0x88] sm:$0xff]
      %v324 = vld [vmem:[%s300 + $0x90] sm:$0xff]
      %v325 = vld [vmem:[%s300 + $0x98] sm:$0xff]
      %v326 = vld [vmem:[%s300 + $0xa0] sm:$0xff]
      %v327 = vld [vmem:[%s300 + $0xa8] sm:$0xff]
      %v328 = vld [vmem:[%s300 + $0xb0] sm:$0xff]
      %v329 = vld [vmem:[%s300 + $0xb8] sm:$0xff]
      %v330 = vld [vmem:[%s300 + $0xc0] sm:$0xff]
      %v331 = vld [vmem:[%s300 + $0xc8] sm:$0xff]
      %v332 = vld [vmem:[%s300 + $0xd0] sm:$0xff]
      %v333 = vld [vmem:[%s300 + $0xd8] sm:$0xff]
      %v334 = vld [vmem:[%s300 + $0xe0] sm:$0xff]
      %v335 = vld [vmem:[%s300 + $0xe8] sm:$0xff]
      %v336 = vld [vmem:[%s300 + $0xf0] sm:$0xff]
      %v337 = vld [vmem:[%s300 + $0xf8] sm:$0xff]
      %v338 = vld [vmem:[%s300 + $0x100] sm:$0xff]
      %v339 = vld [vmem:[%s300 + $0x108] sm:$0xff]
      %v340 = vld [vmem:[%s300 + $0x110] sm:$0xff]
      %v341 = vld [vmem:[%s300 + $0x118] sm:$0xff]
      %v342 = vld [vmem:[%s300 + $0x120] sm:$0xff]
      %v343 = vld [vmem:[%s300 + $0x128] sm:$0xff]
      %v344 = vld [vmem:[%s300 + $0x130] sm:$0xff]
      %v345 = vld [vmem:[%s300 + $0x138] sm:$0xff]
      %v346 = vld [vmem:[%s300 + $0x140] sm:$0xff]
      %v347 = vld [vmem:[%s300 + $0x148] sm:$0xff]
      %v348 = vld [vmem:[%s300 + $0x150] sm:$0xff]
      %v349 = vld [vmem:[%s300 + $0x158] sm:$0xff]
      %v350 = vld [vmem:[%s300 + $0x160] sm:$0xff]
      %v351 = vld [vmem:[%s300 + $0x168] sm:$0xff]
      %v352 = vld [vmem:[%s300 + $0x170] sm:$0xff]
      %v353 = vld [vmem:[%s300 + $0x178] sm:$0xff]
      %v354 = vld [vmem:[%s300 + $0x180] sm:$0xff]
      %v355 = vld [vmem:[%s300 + $0x188] sm:$0xff]
      %v356 = vld [vmem:[%s300 + $0x190] sm:$0xff]
      %v357 = vld [vmem:[%s300 + $0x198] sm:$0xff]
      %v358 = vld [vmem:[%s300 + $0x1a0] sm:$0xff]
      %v359 = vld [vmem:[%s300 + $0x1a8] sm:$0xff]
      %v360 = vrot.slane %v306, 7
      %v361 = vrot.slane %v307, 7
      %v362 = vrot.slane %v308, 7
      %v363 = vrot.slane %v309, 7
      %v364 = vrot.slane %v310, 7
      %v365 = vrot.slane %v311, 7
      %v366 = vrot.slane %v312, 7
      %v367 = vrot.slane %v313, 7
      %v368 = vrot.slane %v314, 7
      %v369 = vrot.slane %v315, 7
      %v370 = vrot.slane %v316, 7
      %v371 = vrot.slane %v317, 7
      %v372 = vrot.slane %v318, 7
      %v373 = vrot.slane %v319, 7
      %v374 = vrot.slane %v320, 7
      %v375 = vrot.slane %v321, 7
      %v376 = vrot.slane %v322, 7
      %v377 = vrot.slane %v323, 7
      %v378 = vrot.slane %v324, 7
      %v379 = vrot.slane %v325, 7
      %v380 = vrot.slane %v326, 7
      %v381 = vrot.slane %v327, 7
      %v382 = vrot.slane %v328, 7
      %v383 = vrot.slane %v329, 7
      %v384 = vrot.slane %v330, 7
      %v385 = vrot.slane %v331, 7
      %v386 = vrot.slane %v332, 7
      %v387 = vrot.slane %v333, 7
      %v388 = vrot.slane %v334, 7
      %v389 = vrot.slane %v335, 7
      %v390 = vrot.slane %v336, 7
      %v391 = vrot.slane %v337, 7
      %v392 = vrot.slane %v338, 7
      %v393 = vrot.slane %v339, 7
      %v394 = vrot.slane %v340, 7
      %v395 = vrot.slane %v341, 7
      %v396 = vrot.slane %v342, 7
      %v397 = vrot.slane %v343, 7
      %v398 = vrot.slane %v344, 7
      %v399 = vrot.slane %v345, 7
      %v400 = vrot.slane %v346, 7
      %v401 = vrot.slane %v347, 7
      %v402 = vrot.slane %v348, 7
      %v403 = vrot.slane %v349, 7
      %v404 = vrot.slane %v350, 7
      %v405 = vrot.slane %v351, 7
      %v406 = vrot.slane %v352, 7
      %v407 = vrot.slane %v353, 7
      %v408 = vrot.slane %v354, 7
      %v409 = vrot.slane %v355, 7
      %v410 = vrot.slane %v356, 7
      %v411 = vrot.slane %v357, 7
      %v412 = vrot.slane %v358, 7
      %v413 = vrot.slane %v359, 7
      %v414 = vlaneseq
      %v415 = vshrl.u32 %v414, 7
      %vm416 = vcmp.lt.s32.totalorder %v415, 1
      %v417 = vsel %vm416, %v412, %v413
      %v418 = vsel %vm416, %v411, %v412
      %v419 = vsel %vm416, %v410, %v411
      %v420 = vsel %vm416, %v409, %v410
      %v421 = vsel %vm416, %v408, %v409
      %v422 = vsel %vm416, %v407, %v408
      %v423 = vsel %vm416, %v406, %v407
      %v424 = vsel %vm416, %v405, %v406
      %v425 = vsel %vm416, %v404, %v405
      %v426 = vsel %vm416, %v403, %v404
      %v427 = vsel %vm416, %v402, %v403
      %v428 = vsel %vm416, %v401, %v402
      %v429 = vsel %vm416, %v400, %v401
      %v430 = vsel %vm416, %v399, %v400
      %v431 = vsel %vm416, %v398, %v399
      %v432 = vsel %vm416, %v397, %v398
      %v433 = vsel %vm416, %v396, %v397
      %v434 = vsel %vm416, %v395, %v396
      %v435 = vsel %vm416, %v394, %v395
      %v436 = vsel %vm416, %v393, %v394
      %v437 = vsel %vm416, %v392, %v393
      %v438 = vsel %vm416, %v391, %v392
      %v439 = vsel %vm416, %v390, %v391
      %v440 = vsel %vm416, %v389, %v390
      %v441 = vsel %vm416, %v388, %v389
      %v442 = vsel %vm416, %v387, %v388
      %v443 = vsel %vm416, %v386, %v387
      %v444 = vsel %vm416, %v385, %v386
      %v445 = vsel %vm416, %v384, %v385
      %v446 = vsel %vm416, %v383, %v384
      %v447 = vsel %vm416, %v382, %v383
      %v448 = vsel %vm416, %v381, %v382
      %v449 = vsel %vm416, %v380, %v381
      %v450 = vsel %vm416, %v379, %v380
      %v451 = vsel %vm416, %v378, %v379
      %v452 = vsel %vm416, %v377, %v378
      %v453 = vsel %vm416, %v376, %v377
      %v454 = vsel %vm416, %v375, %v376
      %v455 = vsel %vm416, %v374, %v375
      %v456 = vsel %vm416, %v373, %v374
      %v457 = vsel %vm416, %v372, %v373
      %v458 = vsel %vm416, %v371, %v372
      %v459 = vsel %vm416, %v370, %v371
      %v460 = vsel %vm416, %v369, %v370
      %v461 = vsel %vm416, %v368, %v369
      %v462 = vsel %vm416, %v367, %v368
      %v463 = vsel %vm416, %v366, %v367
      %v464 = vsel %vm416, %v365, %v366
      %v465 = vsel %vm416, %v364, %v365
      %v466 = vsel %vm416, %v363, %v364
      %v467 = vsel %vm416, %v362, %v363
      %v468 = vsel %vm416, %v361, %v362
      %v469 = vsel %vm416, %v360, %v361
      %v470 = vsel %vm416, %v413, %v360
      %v471 = vrot.slane %v306, 1
      %v472 = vrot.slane %v307, 1
      %v473 = vrot.slane %v308, 1
      %v474 = vrot.slane %v309, 1
      %v475 = vrot.slane %v310, 1
      %v476 = vrot.slane %v311, 1
      %v477 = vrot.slane %v312, 1
      %v478 = vrot.slane %v313, 1
      %v479 = vrot.slane %v314, 1
      %v480 = vrot.slane %v315, 1
      %v481 = vrot.slane %v316, 1
      %v482 = vrot.slane %v317, 1
      %v483 = vrot.slane %v318, 1
      %v484 = vrot.slane %v319, 1
      %v485 = vrot.slane %v320, 1
      %v486 = vrot.slane %v321, 1
      %v487 = vrot.slane %v322, 1
      %v488 = vrot.slane %v323, 1
      %v489 = vrot.slane %v324, 1
      %v490 = vrot.slane %v325, 1
      %v491 = vrot.slane %v326, 1
      %v492 = vrot.slane %v327, 1
      %v493 = vrot.slane %v328, 1
      %v494 = vrot.slane %v329, 1
      %v495 = vrot.slane %v330, 1
      %v496 = vrot.slane %v331, 1
      %v497 = vrot.slane %v332, 1
      %v498 = vrot.slane %v333, 1
      %v499 = vrot.slane %v334, 1
      %v500 = vrot.slane %v335, 1
      %v501 = vrot.slane %v336, 1
      %v502 = vrot.slane %v337, 1
      %v503 = vrot.slane %v338, 1
      %v504 = vrot.slane %v339, 1
      %v505 = vrot.slane %v340, 1
      %v506 = vrot.slane %v341, 1
      %v507 = vrot.slane %v342, 1
      %v508 = vrot.slane %v343, 1
      %v509 = vrot.slane %v344, 1
      %v510 = vrot.slane %v345, 1
      %v511 = vrot.slane %v346, 1
      %v512 = vrot.slane %v347, 1
      %v513 = vrot.slane %v348, 1
      %v514 = vrot.slane %v349, 1
      %v515 = vrot.slane %v350, 1
      %v516 = vrot.slane %v351, 1
      %v517 = vrot.slane %v352, 1
      %v518 = vrot.slane %v353, 1
      %v519 = vrot.slane %v354, 1
      %v520 = vrot.slane %v355, 1
      %v521 = vrot.slane %v356, 1
      %v522 = vrot.slane %v357, 1
      %v523 = vrot.slane %v358, 1
      %v524 = vrot.slane %v359, 1
      %vm525 = vcmp.lt.s32.totalorder %v415, 7
      %v526 = vsel %vm525, %v523, %v524
      %v527 = vsel %vm525, %v522, %v523
      %v528 = vsel %vm525, %v521, %v522
      %v529 = vsel %vm525, %v520, %v521
      %v530 = vsel %vm525, %v519, %v520
      %v531 = vsel %vm525, %v518, %v519
      %v532 = vsel %vm525, %v517, %v518
      %v533 = vsel %vm525, %v516, %v517
      %v534 = vsel %vm525, %v515, %v516
      %v535 = vsel %vm525, %v514, %v515
      %v536 = vsel %vm525, %v513, %v514
      %v537 = vsel %vm525, %v512, %v513
      %v538 = vsel %vm525, %v511, %v512
      %v539 = vsel %vm525, %v510, %v511
      %v540 = vsel %vm525, %v509, %v510
      %v541 = vsel %vm525, %v508, %v509
      %v542 = vsel %vm525, %v507, %v508
      %v543 = vsel %vm525, %v506, %v507
      %v544 = vsel %vm525, %v505, %v506
      %v545 = vsel %vm525, %v504, %v505
      %v546 = vsel %vm525, %v503, %v504
      %v547 = vsel %vm525, %v502, %v503
      %v548 = vsel %vm525, %v501, %v502
      %v549 = vsel %vm525, %v500, %v501
      %v550 = vsel %vm525, %v499, %v500
      %v551 = vsel %vm525, %v498, %v499
      %v552 = vsel %vm525, %v497, %v498
      %v553 = vsel %vm525, %v496, %v497
      %v554 = vsel %vm525, %v495, %v496
      %v555 = vsel %vm525, %v494, %v495
      %v556 = vsel %vm525, %v493, %v494
      %v557 = vsel %vm525, %v492, %v493
      %v558 = vsel %vm525, %v491, %v492
      %v559 = vsel %vm525, %v490, %v491
      %v560 = vsel %vm525, %v489, %v490
      %v561 = vsel %vm525, %v488, %v489
      %v562 = vsel %vm525, %v487, %v488
      %v563 = vsel %vm525, %v486, %v487
      %v564 = vsel %vm525, %v485, %v486
      %v565 = vsel %vm525, %v484, %v485
      %v566 = vsel %vm525, %v483, %v484
      %v567 = vsel %vm525, %v482, %v483
      %v568 = vsel %vm525, %v481, %v482
      %v569 = vsel %vm525, %v480, %v481
      %v570 = vsel %vm525, %v479, %v480
      %v571 = vsel %vm525, %v478, %v479
      %v572 = vsel %vm525, %v477, %v478
      %v573 = vsel %vm525, %v476, %v477
      %v574 = vsel %vm525, %v475, %v476
      %v575 = vsel %vm525, %v474, %v475
      %v576 = vsel %vm525, %v473, %v474
      %v577 = vsel %vm525, %v472, %v473
      %v578 = vsel %vm525, %v471, %v472
      %v579 = vsel %vm525, %v524, %v471
      %634 = vrot.lane.b32.xlu0 %v357, 4
      %v635 = vpop.permute.xlu0 %634
      %636 = vrot.lane.b32.xlu0 %v358, 4
      %v637 = vpop.permute.xlu0 %636
      %638 = vrot.lane.b32.xlu0 %v359, 4
      %v639 = vpop.permute.xlu0 %638
      %640 = vrot.lane.b32.xlu0 %v306, 4
      %v641 = vpop.permute.xlu0 %640
      %642 = vrot.lane.b32.xlu0 %v307, 4
      %v643 = vpop.permute.xlu0 %642
      %644 = vrot.lane.b32.xlu0 %v308, 4
      %v645 = vpop.permute.xlu0 %644
      %646 = vrot.lane.b32.xlu0 %v309, 4
      %v647 = vpop.permute.xlu0 %646
      %648 = vrot.lane.b32.xlu0 %v310, 4
      %v649 = vpop.permute.xlu0 %648
      %650 = vrot.lane.b32.xlu0 %v311, 4
      %v651 = vpop.permute.xlu0 %650
      %652 = vrot.lane.b32.xlu0 %v312, 4
      %v653 = vpop.permute.xlu0 %652
      %654 = vrot.lane.b32.xlu0 %v313, 4
      %v655 = vpop.permute.xlu0 %654
      %656 = vrot.lane.b32.xlu0 %v314, 4
      %v657 = vpop.permute.xlu0 %656
      %658 = vrot.lane.b32.xlu0 %v315, 4
      %v659 = vpop.permute.xlu0 %658
      %660 = vrot.lane.b32.xlu0 %v316, 4
      %v661 = vpop.permute.xlu0 %660
      %662 = vrot.lane.b32.xlu0 %v317, 4
      %v663 = vpop.permute.xlu0 %662
      %664 = vrot.lane.b32.xlu0 %v318, 4
      %v665 = vpop.permute.xlu0 %664
      %666 = vrot.lane.b32.xlu0 %v319, 4
      %v667 = vpop.permute.xlu0 %666
      %668 = vrot.lane.b32.xlu0 %v320, 4
      %v669 = vpop.permute.xlu0 %668
      %670 = vrot.lane.b32.xlu0 %v321, 4
      %v671 = vpop.permute.xlu0 %670
      %672 = vrot.lane.b32.xlu0 %v322, 4
      %v673 = vpop.permute.xlu0 %672
      %674 = vrot.lane.b32.xlu0 %v323, 4
      %v675 = vpop.permute.xlu0 %674
      %676 = vrot.lane.b32.xlu0 %v324, 4
      %v677 = vpop.permute.xlu0 %676
      %678 = vrot.lane.b32.xlu0 %v325, 4
      %v679 = vpop.permute.xlu0 %678
      %680 = vrot.lane.b32.xlu0 %v326, 4
      %v681 = vpop.permute.xlu0 %680
      %682 = vrot.lane.b32.xlu0 %v327, 4
      %v683 = vpop.permute.xlu0 %682
      %684 = vrot.lane.b32.xlu0 %v328, 4
      %v685 = vpop.permute.xlu0 %684
      %686 = vrot.lane.b32.xlu0 %v329, 4
      %v687 = vpop.permute.xlu0 %686
      %688 = vrot.lane.b32.xlu0 %v330, 4
      %v689 = vpop.permute.xlu0 %688
      %690 = vrot.lane.b32.xlu0 %v331, 4
      %v691 = vpop.permute.xlu0 %690
      %692 = vrot.lane.b32.xlu0 %v332, 4
      %v693 = vpop.permute.xlu0 %692
      %694 = vrot.lane.b32.xlu0 %v333, 4
      %v695 = vpop.permute.xlu0 %694
      %696 = vrot.lane.b32.xlu0 %v334, 4
      %v697 = vpop.permute.xlu0 %696
      %698 = vrot.lane.b32.xlu0 %v335, 4
      %v699 = vpop.permute.xlu0 %698
      %700 = vrot.lane.b32.xlu0 %v336, 4
      %v701 = vpop.permute.xlu0 %700
      %702 = vrot.lane.b32.xlu0 %v337, 4
      %v703 = vpop.permute.xlu0 %702
      %704 = vrot.lane.b32.xlu0 %v338, 4
      %v705 = vpop.permute.xlu0 %704
      %706 = vrot.lane.b32.xlu0 %v339, 4
      %v707 = vpop.permute.xlu0 %706
      %708 = vrot.lane.b32.xlu0 %v340, 4
      %v709 = vpop.permute.xlu0 %708
      %710 = vrot.lane.b32.xlu0 %v341, 4
      %v711 = vpop.permute.xlu0 %710
      %712 = vrot.lane.b32.xlu0 %v342, 4
      %v713 = vpop.permute.xlu0 %712
      %714 = vrot.lane.b32.xlu0 %v343, 4
      %v715 = vpop.permute.xlu0 %714
      %716 = vrot.lane.b32.xlu0 %v344, 4
      %v717 = vpop.permute.xlu0 %716
      %718 = vrot.lane.b32.xlu0 %v345, 4
      %v719 = vpop.permute.xlu0 %718
      %720 = vrot.lane.b32.xlu0 %v346, 4
      %v721 = vpop.permute.xlu0 %720
      %722 = vrot.lane.b32.xlu0 %v347, 4
      %v723 = vpop.permute.xlu0 %722
      %724 = vrot.lane.b32.xlu0 %v348, 4
      %v725 = vpop.permute.xlu0 %724
      %726 = vrot.lane.b32.xlu0 %v349, 4
      %v727 = vpop.permute.xlu0 %726
      %728 = vrot.lane.b32.xlu0 %v350, 4
      %v729 = vpop.permute.xlu0 %728
      %730 = vrot.lane.b32.xlu0 %v351, 4
      %v731 = vpop.permute.xlu0 %730
      %732 = vrot.lane.b32.xlu0 %v352, 4
      %v733 = vpop.permute.xlu0 %732
      %734 = vrot.lane.b32.xlu0 %v353, 4
      %v735 = vpop.permute.xlu0 %734
      %736 = vrot.lane.b32.xlu0 %v354, 4
      %v737 = vpop.permute.xlu0 %736
      %738 = vrot.lane.b32.xlu0 %v355, 4
      %v739 = vpop.permute.xlu0 %738
      %740 = vrot.lane.b32.xlu0 %v356, 4
      %v741 = vpop.permute.xlu0 %740
      %850 = vrot.lane.b32.xlu0 %v527, 8
      %v851 = vpop.permute.xlu0 %850
      %852 = vrot.lane.b32.xlu0 %v526, 8
      %v853 = vpop.permute.xlu0 %852
      %854 = vrot.lane.b32.xlu0 %v579, 8
      %v855 = vpop.permute.xlu0 %854
      %856 = vrot.lane.b32.xlu0 %v578, 8
      %v857 = vpop.permute.xlu0 %856
      %858 = vrot.lane.b32.xlu0 %v577, 8
      %v859 = vpop.permute.xlu0 %858
      %860 = vrot.lane.b32.xlu0 %v576, 8
      %v861 = vpop.permute.xlu0 %860
      %862 = vrot.lane.b32.xlu0 %v575, 8
      %v863 = vpop.permute.xlu0 %862
      %864 = vrot.lane.b32.xlu0 %v574, 8
      %v865 = vpop.permute.xlu0 %864
      %866 = vrot.lane.b32.xlu0 %v573, 8
      %v867 = vpop.permute.xlu0 %866
      %868 = vrot.lane.b32.xlu0 %v572, 8
      %v869 = vpop.permute.xlu0 %868
      %870 = vrot.lane.b32.xlu0 %v571, 8
      %v871 = vpop.permute.xlu0 %870
      %872 = vrot.lane.b32.xlu0 %v570, 8
      %v873 = vpop.permute.xlu0 %872
      %874 = vrot.lane.b32.xlu0 %v569, 8
      %v875 = vpop.permute.xlu0 %874
      %876 = vrot.lane.b32.xlu0 %v568, 8
      %v877 = vpop.permute.xlu0 %876
      %878 = vrot.lane.b32.xlu0 %v567, 8
      %v879 = vpop.permute.xlu0 %878
      %880 = vrot.lane.b32.xlu0 %v566, 8
      %v881 = vpop.permute.xlu0 %880
      %882 = vrot.lane.b32.xlu0 %v565, 8
      %v883 = vpop.permute.xlu0 %882
      %884 = vrot.lane.b32.xlu0 %v564, 8
      %v885 = vpop.permute.xlu0 %884
      %886 = vrot.lane.b32.xlu0 %v563, 8
      %v887 = vpop.permute.xlu0 %886
      %888 = vrot.lane.b32.xlu0 %v562, 8
      %v889 = vpop.permute.xlu0 %888
      %890 = vrot.lane.b32.xlu0 %v561, 8
      %v891 = vpop.permute.xlu0 %890
      %892 = vrot.lane.b32.xlu0 %v560, 8
      %v893 = vpop.permute.xlu0 %892
      %894 = vrot.lane.b32.xlu0 %v559, 8
      %v895 = vpop.permute.xlu0 %894
      %896 = vrot.lane.b32.xlu0 %v558, 8
      %v897 = vpop.permute.xlu0 %896
      %898 = vrot.lane.b32.xlu0 %v557, 8
      %v899 = vpop.permute.xlu0 %898
      %900 = vrot.lane.b32.xlu0 %v556, 8
      %v901 = vpop.permute.xlu0 %900
      %902 = vrot.lane.b32.xlu0 %v555, 8
      %v903 = vpop.permute.xlu0 %902
      %904 = vrot.lane.b32.xlu0 %v554, 8
      %v905 = vpop.permute.xlu0 %904
      %906 = vrot.lane.b32.xlu0 %v553, 8
      %v907 = vpop.permute.xlu0 %906
      %908 = vrot.lane.b32.xlu0 %v552, 8
      %v909 = vpop.permute.xlu0 %908
      %910 = vrot.lane.b32.xlu0 %v551, 8
      %v911 = vpop.permute.xlu0 %910
      %912 = vrot.lane.b32.xlu0 %v550, 8
      %v913 = vpop.permute.xlu0 %912
      %914 = vrot.lane.b32.xlu0 %v549, 8
      %v915 = vpop.permute.xlu0 %914
      %916 = vrot.lane.b32.xlu0 %v548, 8
      %v917 = vpop.permute.xlu0 %916
      %918 = vrot.lane.b32.xlu0 %v547, 8
      %v919 = vpop.permute.xlu0 %918
      %920 = vrot.lane.b32.xlu0 %v546, 8
      %v921 = vpop.permute.xlu0 %920
      %922 = vrot.lane.b32.xlu0 %v545, 8
      %v923 = vpop.permute.xlu0 %922
      %924 = vrot.lane.b32.xlu0 %v544, 8
      %v925 = vpop.permute.xlu0 %924
      %926 = vrot.lane.b32.xlu0 %v543, 8
      %v927 = vpop.permute.xlu0 %926
      %928 = vrot.lane.b32.xlu0 %v542, 8
      %v929 = vpop.permute.xlu0 %928
      %930 = vrot.lane.b32.xlu0 %v541, 8
      %v931 = vpop.permute.xlu0 %930
      %932 = vrot.lane.b32.xlu0 %v540, 8
      %v933 = vpop.permute.xlu0 %932
      %934 = vrot.lane.b32.xlu0 %v539, 8
      %v935 = vpop.permute.xlu0 %934
      %936 = vrot.lane.b32.xlu0 %v538, 8
      %v937 = vpop.permute.xlu0 %936
      %938 = vrot.lane.b32.xlu0 %v537, 8
      %v939 = vpop.permute.xlu0 %938
      %940 = vrot.lane.b32.xlu0 %v536, 8
      %v941 = vpop.permute.xlu0 %940
      %942 = vrot.lane.b32.xlu0 %v535, 8
      %v943 = vpop.permute.xlu0 %942
      %944 = vrot.lane.b32.xlu0 %v534, 8
      %v945 = vpop.permute.xlu0 %944
      %946 = vrot.lane.b32.xlu0 %v533, 8
      %v947 = vpop.permute.xlu0 %946
      %948 = vrot.lane.b32.xlu0 %v532, 8
      %v949 = vpop.permute.xlu0 %948
      %950 = vrot.lane.b32.xlu0 %v531, 8
      %v951 = vpop.permute.xlu0 %950
      %952 = vrot.lane.b32.xlu0 %v530, 8
      %v953 = vpop.permute.xlu0 %952
      %954 = vrot.lane.b32.xlu0 %v529, 8
      %v955 = vpop.permute.xlu0 %954
      %956 = vrot.lane.b32.xlu0 %v528, 8
      %v957 = vpop.permute.xlu0 %956
      %1066 = vrot.lane.b32.xlu0 %v470, 12
      %v1067 = vpop.permute.xlu0 %1066
      %1068 = vrot.lane.b32.xlu0 %v469, 12
      %v1069 = vpop.permute.xlu0 %1068
      %1070 = vrot.lane.b32.xlu0 %v468, 12
      %v1071 = vpop.permute.xlu0 %1070
      %1072 = vrot.lane.b32.xlu0 %v467, 12
      %v1073 = vpop.permute.xlu0 %1072
      %1074 = vrot.lane.b32.xlu0 %v466, 12
      %v1075 = vpop.permute.xlu0 %1074
      %1076 = vrot.lane.b32.xlu0 %v465, 12
      %v1077 = vpop.permute.xlu0 %1076
      %1078 = vrot.lane.b32.xlu0 %v464, 12
      %v1079 = vpop.permute.xlu0 %1078
      %1080 = vrot.lane.b32.xlu0 %v463, 12
      %v1081 = vpop.permute.xlu0 %1080
      %1082 = vrot.lane.b32.xlu0 %v462, 12
      %v1083 = vpop.permute.xlu0 %1082
      %1084 = vrot.lane.b32.xlu0 %v461, 12
      %v1085 = vpop.permute.xlu0 %1084
      %1086 = vrot.lane.b32.xlu0 %v460, 12
      %v1087 = vpop.permute.xlu0 %1086
      %1088 = vrot.lane.b32.xlu0 %v459, 12
      %v1089 = vpop.permute.xlu0 %1088
      %1090 = vrot.lane.b32.xlu0 %v458, 12
      %v1091 = vpop.permute.xlu0 %1090
      %1092 = vrot.lane.b32.xlu0 %v457, 12
      %v1093 = vpop.permute.xlu0 %1092
      %1094 = vrot.lane.b32.xlu0 %v456, 12
      %v1095 = vpop.permute.xlu0 %1094
      %1096 = vrot.lane.b32.xlu0 %v455, 12
      %v1097 = vpop.permute.xlu0 %1096
      %1098 = vrot.lane.b32.xlu0 %v454, 12
      %v1099 = vpop.permute.xlu0 %1098
      %1100 = vrot.lane.b32.xlu0 %v453, 12
      %v1101 = vpop.permute.xlu0 %1100
      %1102 = vrot.lane.b32.xlu0 %v452, 12
      %v1103 = vpop.permute.xlu0 %1102
      %1104 = vrot.lane.b32.xlu0 %v451, 12
      %v1105 = vpop.permute.xlu0 %1104
      %1106 = vrot.lane.b32.xlu0 %v450, 12
      %v1107 = vpop.permute.xlu0 %1106
      %1108 = vrot.lane.b32.xlu0 %v449, 12
      %v1109 = vpop.permute.xlu0 %1108
      %1110 = vrot.lane.b32.xlu0 %v448, 12
      %v1111 = vpop.permute.xlu0 %1110
      %1112 = vrot.lane.b32.xlu0 %v447, 12
      %v1113 = vpop.permute.xlu0 %1112
      %1114 = vrot.lane.b32.xlu0 %v446, 12
      %v1115 = vpop.permute.xlu0 %1114
      %1116 = vrot.lane.b32.xlu0 %v445, 12
      %v1117 = vpop.permute.xlu0 %1116
      %1118 = vrot.lane.b32.xlu0 %v444, 12
      %v1119 = vpop.permute.xlu0 %1118
      %1120 = vrot.lane.b32.xlu0 %v443, 12
      %v1121 = vpop.permute.xlu0 %1120
      %1122 = vrot.lane.b32.xlu0 %v442, 12
      %v1123 = vpop.permute.xlu0 %1122
      %1124 = vrot.lane.b32.xlu0 %v441, 12
      %v1125 = vpop.permute.xlu0 %1124
      %1126 = vrot.lane.b32.xlu0 %v440, 12
      %v1127 = vpop.permute.xlu0 %1126
      %1128 = vrot.lane.b32.xlu0 %v439, 12
      %v1129 = vpop.permute.xlu0 %1128
      %1130 = vrot.lane.b32.xlu0 %v438, 12
      %v1131 = vpop.permute.xlu0 %1130
      %1132 = vrot.lane.b32.xlu0 %v437, 12
      %v1133 = vpop.permute.xlu0 %1132
      %1134 = vrot.lane.b32.xlu0 %v436, 12
      %v1135 = vpop.permute.xlu0 %1134
      %1136 = vrot.lane.b32.xlu0 %v435, 12
      %v1137 = vpop.permute.xlu0 %1136
      %1138 = vrot.lane.b32.xlu0 %v434, 12
      %v1139 = vpop.permute.xlu0 %1138
      %1140 = vrot.lane.b32.xlu0 %v433, 12
      %v1141 = vpop.permute.xlu0 %1140
      %1142 = vrot.lane.b32.xlu0 %v432, 12
      %v1143 = vpop.permute.xlu0 %1142
      %1144 = vrot.lane.b32.xlu0 %v431, 12
      %v1145 = vpop.permute.xlu0 %1144
      %1146 = vrot.lane.b32.xlu0 %v430, 12
      %v1147 = vpop.permute.xlu0 %1146
      %1148 = vrot.lane.b32.xlu0 %v429, 12
      %v1149 = vpop.permute.xlu0 %1148
      %1150 = vrot.lane.b32.xlu0 %v428, 12
      %v1151 = vpop.permute.xlu0 %1150
      %1152 = vrot.lane.b32.xlu0 %v427, 12
      %v1153 = vpop.permute.xlu0 %1152
      %1154 = vrot.lane.b32.xlu0 %v426, 12
      %v1155 = vpop.permute.xlu0 %1154
      %1156 = vrot.lane.b32.xlu0 %v425, 12
      %v1157 = vpop.permute.xlu0 %1156
      %1158 = vrot.lane.b32.xlu0 %v424, 12
      %v1159 = vpop.permute.xlu0 %1158
      %1160 = vrot.lane.b32.xlu0 %v423, 12
      %v1161 = vpop.permute.xlu0 %1160
      %1162 = vrot.lane.b32.xlu0 %v422, 12
      %v1163 = vpop.permute.xlu0 %1162
      %1164 = vrot.lane.b32.xlu0 %v421, 12
      %v1165 = vpop.permute.xlu0 %1164
      %1166 = vrot.lane.b32.xlu0 %v420, 12
      %v1167 = vpop.permute.xlu0 %1166
      %1168 = vrot.lane.b32.xlu0 %v419, 12
      %v1169 = vpop.permute.xlu0 %1168
      %1170 = vrot.lane.b32.xlu0 %v418, 12
      %v1171 = vpop.permute.xlu0 %1170
      %1172 = vrot.lane.b32.xlu0 %v417, 12
      %v1173 = vpop.permute.xlu0 %1172
      %1228 = vrot.lane.b32.xlu0 %v306, 16
      %v1229 = vpop.permute.xlu0 %1228
      %1230 = vrot.lane.b32.xlu0 %v307, 16
      %v1231 = vpop.permute.xlu0 %1230
      %1232 = vrot.lane.b32.xlu0 %v308, 16
      %v1233 = vpop.permute.xlu0 %1232
      %1234 = vrot.lane.b32.xlu0 %v309, 16
      %v1235 = vpop.permute.xlu0 %1234
      %1236 = vrot.lane.b32.xlu0 %v310, 16
      %v1237 = vpop.permute.xlu0 %1236
      %1238 = vrot.lane.b32.xlu0 %v311, 16
      %v1239 = vpop.permute.xlu0 %1238
      %1240 = vrot.lane.b32.xlu0 %v312, 16
      %v1241 = vpop.permute.xlu0 %1240
      %1242 = vrot.lane.b32.xlu0 %v313, 16
      %v1243 = vpop.permute.xlu0 %1242
      %1244 = vrot.lane.b32.xlu0 %v314, 16
      %v1245 = vpop.permute.xlu0 %1244
      %1246 = vrot.lane.b32.xlu0 %v315, 16
      %v1247 = vpop.permute.xlu0 %1246
      %1248 = vrot.lane.b32.xlu0 %v316, 16
      %v1249 = vpop.permute.xlu0 %1248
      %1250 = vrot.lane.b32.xlu0 %v317, 16
      %v1251 = vpop.permute.xlu0 %1250
      %1252 = vrot.lane.b32.xlu0 %v318, 16
      %v1253 = vpop.permute.xlu0 %1252
      %1254 = vrot.lane.b32.xlu0 %v319, 16
      %v1255 = vpop.permute.xlu0 %1254
      %1256 = vrot.lane.b32.xlu0 %v320, 16
      %v1257 = vpop.permute.xlu0 %1256
      %1258 = vrot.lane.b32.xlu0 %v321, 16
      %v1259 = vpop.permute.xlu0 %1258
      %1260 = vrot.lane.b32.xlu0 %v322, 16
      %v1261 = vpop.permute.xlu0 %1260
      %1262 = vrot.lane.b32.xlu0 %v323, 16
      %v1263 = vpop.permute.xlu0 %1262
      %1264 = vrot.lane.b32.xlu0 %v324, 16
      %v1265 = vpop.permute.xlu0 %1264
      %1266 = vrot.lane.b32.xlu0 %v325, 16
      %v1267 = vpop.permute.xlu0 %1266
      %1268 = vrot.lane.b32.xlu0 %v326, 16
      %v1269 = vpop.permute.xlu0 %1268
      %1270 = vrot.lane.b32.xlu0 %v327, 16
      %v1271 = vpop.permute.xlu0 %1270
      %1272 = vrot.lane.b32.xlu0 %v328, 16
      %v1273 = vpop.permute.xlu0 %1272
      %1274 = vrot.lane.b32.xlu0 %v329, 16
      %v1275 = vpop.permute.xlu0 %1274
      %1276 = vrot.lane.b32.xlu0 %v330, 16
      %v1277 = vpop.permute.xlu0 %1276
      %1278 = vrot.lane.b32.xlu0 %v331, 16
      %v1279 = vpop.permute.xlu0 %1278
      %1280 = vrot.lane.b32.xlu0 %v332, 16
      %v1281 = vpop.permute.xlu0 %1280
      %1282 = vrot.lane.b32.xlu0 %v333, 16
      %v1283 = vpop.permute.xlu0 %1282
      %1284 = vrot.lane.b32.xlu0 %v334, 16
      %v1285 = vpop.permute.xlu0 %1284
      %1286 = vrot.lane.b32.xlu0 %v335, 16
      %v1287 = vpop.permute.xlu0 %1286
      %1288 = vrot.lane.b32.xlu0 %v336, 16
      %v1289 = vpop.permute.xlu0 %1288
      %1290 = vrot.lane.b32.xlu0 %v337, 16
      %v1291 = vpop.permute.xlu0 %1290
      %1292 = vrot.lane.b32.xlu0 %v338, 16
      %v1293 = vpop.permute.xlu0 %1292
      %1294 = vrot.lane.b32.xlu0 %v339, 16
      %v1295 = vpop.permute.xlu0 %1294
      %1296 = vrot.lane.b32.xlu0 %v340, 16
      %v1297 = vpop.permute.xlu0 %1296
      %1298 = vrot.lane.b32.xlu0 %v341, 16
      %v1299 = vpop.permute.xlu0 %1298
      %1300 = vrot.lane.b32.xlu0 %v342, 16
      %v1301 = vpop.permute.xlu0 %1300
      %1302 = vrot.lane.b32.xlu0 %v343, 16
      %v1303 = vpop.permute.xlu0 %1302
      %1304 = vrot.lane.b32.xlu0 %v344, 16
      %v1305 = vpop.permute.xlu0 %1304
      %1306 = vrot.lane.b32.xlu0 %v345, 16
      %v1307 = vpop.permute.xlu0 %1306
      %1308 = vrot.lane.b32.xlu0 %v346, 16
      %v1309 = vpop.permute.xlu0 %1308
      %1310 = vrot.lane.b32.xlu0 %v347, 16
      %v1311 = vpop.permute.xlu0 %1310
      %1312 = vrot.lane.b32.xlu0 %v348, 16
      %v1313 = vpop.permute.xlu0 %1312
      %1314 = vrot.lane.b32.xlu0 %v349, 16
      %v1315 = vpop.permute.xlu0 %1314
      %1316 = vrot.lane.b32.xlu0 %v350, 16
      %v1317 = vpop.permute.xlu0 %1316
      %1318 = vrot.lane.b32.xlu0 %v351, 16
      %v1319 = vpop.permute.xlu0 %1318
      %1320 = vrot.lane.b32.xlu0 %v352, 16
      %v1321 = vpop.permute.xlu0 %1320
      %1322 = vrot.lane.b32.xlu0 %v353, 16
      %v1323 = vpop.permute.xlu0 %1322
      %1324 = vrot.lane.b32.xlu0 %v354, 16
      %v1325 = vpop.permute.xlu0 %1324
      %1326 = vrot.lane.b32.xlu0 %v355, 16
      %v1327 = vpop.permute.xlu0 %1326
      %1328 = vrot.lane.b32.xlu0 %v356, 16
      %v1329 = vpop.permute.xlu0 %1328
      %1330 = vrot.lane.b32.xlu0 %v357, 16
      %v1331 = vpop.permute.xlu0 %1330
      %1332 = vrot.lane.b32.xlu0 %v358, 16
      %v1333 = vpop.permute.xlu0 %1332
      %1334 = vrot.lane.b32.xlu0 %v359, 16
      %v1335 = vpop.permute.xlu0 %1334
      %1390 = vrot.lane.b32.xlu0 %v578, 20
      %v1391 = vpop.permute.xlu0 %1390
      %1392 = vrot.lane.b32.xlu0 %v577, 20
      %v1393 = vpop.permute.xlu0 %1392
      %1394 = vrot.lane.b32.xlu0 %v576, 20
      %v1395 = vpop.permute.xlu0 %1394
      %1396 = vrot.lane.b32.xlu0 %v575, 20
      %v1397 = vpop.permute.xlu0 %1396
      %1398 = vrot.lane.b32.xlu0 %v574, 20
      %v1399 = vpop.permute.xlu0 %1398
      %1400 = vrot.lane.b32.xlu0 %v573, 20
      %v1401 = vpop.permute.xlu0 %1400
      %1402 = vrot.lane.b32.xlu0 %v572, 20
      %v1403 = vpop.permute.xlu0 %1402
      %1404 = vrot.lane.b32.xlu0 %v571, 20
      %v1405 = vpop.permute.xlu0 %1404
      %1406 = vrot.lane.b32.xlu0 %v570, 20
      %v1407 = vpop.permute.xlu0 %1406
      %1408 = vrot.lane.b32.xlu0 %v569, 20
      %v1409 = vpop.permute.xlu0 %1408
      %1410 = vrot.lane.b32.xlu0 %v568, 20
      %v1411 = vpop.permute.xlu0 %1410
      %1412 = vrot.lane.b32.xlu0 %v567, 20
      %v1413 = vpop.permute.xlu0 %1412
      %1414 = vrot.lane.b32.xlu0 %v566, 20
      %v1415 = vpop.permute.xlu0 %1414
      %1416 = vrot.lane.b32.xlu0 %v565, 20
      %v1417 = vpop.permute.xlu0 %1416
      %1418 = vrot.lane.b32.xlu0 %v564, 20
      %v1419 = vpop.permute.xlu0 %1418
      %1420 = vrot.lane.b32.xlu0 %v563, 20
      %v1421 = vpop.permute.xlu0 %1420
      %1422 = vrot.lane.b32.xlu0 %v562, 20
      %v1423 = vpop.permute.xlu0 %1422
      %1424 = vrot.lane.b32.xlu0 %v561, 20
      %v1425 = vpop.permute.xlu0 %1424
      %1426 = vrot.lane.b32.xlu0 %v560, 20
      %v1427 = vpop.permute.xlu0 %1426
      %1428 = vrot.lane.b32.xlu0 %v559, 20
      %v1429 = vpop.permute.xlu0 %1428
      %1430 = vrot.lane.b32.xlu0 %v558, 20
      %v1431 = vpop.permute.xlu0 %1430
      %1432 = vrot.lane.b32.xlu0 %v557, 20
      %v1433 = vpop.permute.xlu0 %1432
      %1434 = vrot.lane.b32.xlu0 %v556, 20
      %v1435 = vpop.permute.xlu0 %1434
      %1436 = vrot.lane.b32.xlu0 %v555, 20
      %v1437 = vpop.permute.xlu0 %1436
      %1438 = vrot.lane.b32.xlu0 %v554, 20
      %v1439 = vpop.permute.xlu0 %1438
      %1440 = vrot.lane.b32.xlu0 %v553, 20
      %v1441 = vpop.permute.xlu0 %1440
      %1442 = vrot.lane.b32.xlu0 %v552, 20
      %v1443 = vpop.permute.xlu0 %1442
      %1444 = vrot.lane.b32.xlu0 %v551, 20
      %v1445 = vpop.permute.xlu0 %1444
      %1446 = vrot.lane.b32.xlu0 %v550, 20
      %v1447 = vpop.permute.xlu0 %1446
      %1448 = vrot.lane.b32.xlu0 %v549, 20
      %v1449 = vpop.permute.xlu0 %1448
      %1450 = vrot.lane.b32.xlu0 %v548, 20
      %v1451 = vpop.permute.xlu0 %1450
      %1452 = vrot.lane.b32.xlu0 %v547, 20
      %v1453 = vpop.permute.xlu0 %1452
      %1454 = vrot.lane.b32.xlu0 %v546, 20
      %v1455 = vpop.permute.xlu0 %1454
      %1456 = vrot.lane.b32.xlu0 %v545, 20
      %v1457 = vpop.permute.xlu0 %1456
      %1458 = vrot.lane.b32.xlu0 %v544, 20
      %v1459 = vpop.permute.xlu0 %1458
      %1460 = vrot.lane.b32.xlu0 %v543, 20
      %v1461 = vpop.permute.xlu0 %1460
      %1462 = vrot.lane.b32.xlu0 %v542, 20
      %v1463 = vpop.permute.xlu0 %1462
      %1464 = vrot.lane.b32.xlu0 %v541, 20
      %v1465 = vpop.permute.xlu0 %1464
      %1466 = vrot.lane.b32.xlu0 %v540, 20
      %v1467 = vpop.permute.xlu0 %1466
      %1468 = vrot.lane.b32.xlu0 %v539, 20
      %v1469 = vpop.permute.xlu0 %1468
      %1470 = vrot.lane.b32.xlu0 %v538, 20
      %v1471 = vpop.permute.xlu0 %1470
      %1472 = vrot.lane.b32.xlu0 %v537, 20
      %v1473 = vpop.permute.xlu0 %1472
      %1474 = vrot.lane.b32.xlu0 %v536, 20
      %v1475 = vpop.permute.xlu0 %1474
      %1476 = vrot.lane.b32.xlu0 %v535, 20
      %v1477 = vpop.permute.xlu0 %1476
      %1478 = vrot.lane.b32.xlu0 %v534, 20
      %v1479 = vpop.permute.xlu0 %1478
      %1480 = vrot.lane.b32.xlu0 %v533, 20
      %v1481 = vpop.permute.xlu0 %1480
      %1482 = vrot.lane.b32.xlu0 %v532, 20
      %v1483 = vpop.permute.xlu0 %1482
      %1484 = vrot.lane.b32.xlu0 %v531, 20
      %v1485 = vpop.permute.xlu0 %1484
      %1486 = vrot.lane.b32.xlu0 %v530, 20
      %v1487 = vpop.permute.xlu0 %1486
      %1488 = vrot.lane.b32.xlu0 %v529, 20
      %v1489 = vpop.permute.xlu0 %1488
      %1490 = vrot.lane.b32.xlu0 %v528, 20
      %v1491 = vpop.permute.xlu0 %1490
      %1492 = vrot.lane.b32.xlu0 %v527, 20
      %v1493 = vpop.permute.xlu0 %1492
      %1494 = vrot.lane.b32.xlu0 %v526, 20
      %v1495 = vpop.permute.xlu0 %1494
      %1496 = vrot.lane.b32.xlu0 %v579, 20
      %v1497 = vpop.permute.xlu0 %1496
      %1552 = vrot.lane.b32.xlu0 %v467, 24
      %v1553 = vpop.permute.xlu0 %1552
      %1554 = vrot.lane.b32.xlu0 %v466, 24
      %v1555 = vpop.permute.xlu0 %1554
      %1556 = vrot.lane.b32.xlu0 %v465, 24
      %v1557 = vpop.permute.xlu0 %1556
      %1558 = vrot.lane.b32.xlu0 %v464, 24
      %v1559 = vpop.permute.xlu0 %1558
      %1560 = vrot.lane.b32.xlu0 %v463, 24
      %v1561 = vpop.permute.xlu0 %1560
      %1562 = vrot.lane.b32.xlu0 %v462, 24
      %v1563 = vpop.permute.xlu0 %1562
      %1564 = vrot.lane.b32.xlu0 %v461, 24
      %v1565 = vpop.permute.xlu0 %1564
      %1566 = vrot.lane.b32.xlu0 %v460, 24
      %v1567 = vpop.permute.xlu0 %1566
      %1568 = vrot.lane.b32.xlu0 %v459, 24
      %v1569 = vpop.permute.xlu0 %1568
      %1570 = vrot.lane.b32.xlu0 %v458, 24
      %v1571 = vpop.permute.xlu0 %1570
      %1572 = vrot.lane.b32.xlu0 %v457, 24
      %v1573 = vpop.permute.xlu0 %1572
      %1574 = vrot.lane.b32.xlu0 %v456, 24
      %v1575 = vpop.permute.xlu0 %1574
      %1576 = vrot.lane.b32.xlu0 %v455, 24
      %v1577 = vpop.permute.xlu0 %1576
      %1578 = vrot.lane.b32.xlu0 %v454, 24
      %v1579 = vpop.permute.xlu0 %1578
      %1580 = vrot.lane.b32.xlu0 %v453, 24
      %v1581 = vpop.permute.xlu0 %1580
      %1582 = vrot.lane.b32.xlu0 %v452, 24
      %v1583 = vpop.permute.xlu0 %1582
      %1584 = vrot.lane.b32.xlu0 %v451, 24
      %v1585 = vpop.permute.xlu0 %1584
      %1586 = vrot.lane.b32.xlu0 %v450, 24
      %v1587 = vpop.permute.xlu0 %1586
      %1588 = vrot.lane.b32.xlu0 %v449, 24
      %v1589 = vpop.permute.xlu0 %1588
      %1590 = vrot.lane.b32.xlu0 %v448, 24
      %v1591 = vpop.permute.xlu0 %1590
      %1592 = vrot.lane.b32.xlu0 %v447, 24
      %v1593 = vpop.permute.xlu0 %1592
      %1594 = vrot.lane.b32.xlu0 %v446, 24
      %v1595 = vpop.permute.xlu0 %1594
      %1596 = vrot.lane.b32.xlu0 %v445, 24
      %v1597 = vpop.permute.xlu0 %1596
      %1598 = vrot.lane.b32.xlu0 %v444, 24
      %v1599 = vpop.permute.xlu0 %1598
      %1600 = vrot.lane.b32.xlu0 %v443, 24
      %v1601 = vpop.permute.xlu0 %1600
      %1602 = vrot.lane.b32.xlu0 %v442, 24
      %v1603 = vpop.permute.xlu0 %1602
      %1604 = vrot.lane.b32.xlu0 %v441, 24
      %v1605 = vpop.permute.xlu0 %1604
      %1606 = vrot.lane.b32.xlu0 %v440, 24
      %v1607 = vpop.permute.xlu0 %1606
      %1608 = vrot.lane.b32.xlu0 %v439, 24
      %v1609 = vpop.permute.xlu0 %1608
      %1610 = vrot.lane.b32.xlu0 %v438, 24
      %v1611 = vpop.permute.xlu0 %1610
      %1612 = vrot.lane.b32.xlu0 %v437, 24
      %v1613 = vpop.permute.xlu0 %1612
      %1614 = vrot.lane.b32.xlu0 %v436, 24
      %v1615 = vpop.permute.xlu0 %1614
      %1616 = vrot.lane.b32.xlu0 %v435, 24
      %v1617 = vpop.permute.xlu0 %1616
      %1618 = vrot.lane.b32.xlu0 %v434, 24
      %v1619 = vpop.permute.xlu0 %1618
      %1620 = vrot.lane.b32.xlu0 %v433, 24
      %v1621 = vpop.permute.xlu0 %1620
      %1622 = vrot.lane.b32.xlu0 %v432, 24
      %v1623 = vpop.permute.xlu0 %1622
      %1624 = vrot.lane.b32.xlu0 %v431, 24
      %v1625 = vpop.permute.xlu0 %1624
      %1626 = vrot.lane.b32.xlu0 %v430, 24
      %v1627 = vpop.permute.xlu0 %1626
      %1628 = vrot.lane.b32.xlu0 %v429, 24
      %v1629 = vpop.permute.xlu0 %1628
      %1630 = vrot.lane.b32.xlu0 %v428, 24
      %v1631 = vpop.permute.xlu0 %1630
      %1632 = vrot.lane.b32.xlu0 %v427, 24
      %v1633 = vpop.permute.xlu0 %1632
      %1634 = vrot.lane.b32.xlu0 %v426, 24
      %v1635 = vpop.permute.xlu0 %1634
      %1636 = vrot.lane.b32.xlu0 %v425, 24
      %v1637 = vpop.permute.xlu0 %1636
      %1638 = vrot.lane.b32.xlu0 %v424, 24
      %v1639 = vpop.permute.xlu0 %1638
      %1640 = vrot.lane.b32.xlu0 %v423, 24
      %v1641 = vpop.permute.xlu0 %1640
      %1642 = vrot.lane.b32.xlu0 %v422, 24
      %v1643 = vpop.permute.xlu0 %1642
      %1644 = vrot.lane.b32.xlu0 %v421, 24
      %v1645 = vpop.permute.xlu0 %1644
      %1646 = vrot.lane.b32.xlu0 %v420, 24
      %v1647 = vpop.permute.xlu0 %1646
      %1648 = vrot.lane.b32.xlu0 %v419, 24
      %v1649 = vpop.permute.xlu0 %1648
      %1650 = vrot.lane.b32.xlu0 %v418, 24
      %v1651 = vpop.permute.xlu0 %1650
      %1652 = vrot.lane.b32.xlu0 %v417, 24
      %v1653 = vpop.permute.xlu0 %1652
      %1654 = vrot.lane.b32.xlu0 %v470, 24
      %v1655 = vpop.permute.xlu0 %1654
      %1656 = vrot.lane.b32.xlu0 %v469, 24
      %v1657 = vpop.permute.xlu0 %1656
      %1658 = vrot.lane.b32.xlu0 %v468, 24
      %v1659 = vpop.permute.xlu0 %1658
      %1714 = vrot.lane.b32.xlu0 %v309, 28
      %v1715 = vpop.permute.xlu0 %1714
      %1716 = vrot.lane.b32.xlu0 %v310, 28
      %v1717 = vpop.permute.xlu0 %1716
      %1718 = vrot.lane.b32.xlu0 %v311, 28
      %v1719 = vpop.permute.xlu0 %1718
      %1720 = vrot.lane.b32.xlu0 %v312, 28
      %v1721 = vpop.permute.xlu0 %1720
      %1722 = vrot.lane.b32.xlu0 %v313, 28
      %v1723 = vpop.permute.xlu0 %1722
      %1724 = vrot.lane.b32.xlu0 %v314, 28
      %v1725 = vpop.permute.xlu0 %1724
      %1726 = vrot.lane.b32.xlu0 %v315, 28
      %v1727 = vpop.permute.xlu0 %1726
      %1728 = vrot.lane.b32.xlu0 %v316, 28
      %v1729 = vpop.permute.xlu0 %1728
      %1730 = vrot.lane.b32.xlu0 %v317, 28
      %v1731 = vpop.permute.xlu0 %1730
      %1732 = vrot.lane.b32.xlu0 %v318, 28
      %v1733 = vpop.permute.xlu0 %1732
      %1734 = vrot.lane.b32.xlu0 %v319, 28
      %v1735 = vpop.permute.xlu0 %1734
      %1736 = vrot.lane.b32.xlu0 %v320, 28
      %v1737 = vpop.permute.xlu0 %1736
      %1738 = vrot.lane.b32.xlu0 %v321, 28
      %v1739 = vpop.permute.xlu0 %1738
      %1740 = vrot.lane.b32.xlu0 %v322, 28
      %v1741 = vpop.permute.xlu0 %1740
      %1742 = vrot.lane.b32.xlu0 %v323, 28
      %v1743 = vpop.permute.xlu0 %1742
      %1744 = vrot.lane.b32.xlu0 %v324, 28
      %v1745 = vpop.permute.xlu0 %1744
      %1746 = vrot.lane.b32.xlu0 %v325, 28
      %v1747 = vpop.permute.xlu0 %1746
      %1748 = vrot.lane.b32.xlu0 %v326, 28
      %v1749 = vpop.permute.xlu0 %1748
      %1750 = vrot.lane.b32.xlu0 %v327, 28
      %v1751 = vpop.permute.xlu0 %1750
      %1752 = vrot.lane.b32.xlu0 %v328, 28
      %v1753 = vpop.permute.xlu0 %1752
      %1754 = vrot.lane.b32.xlu0 %v329, 28
      %v1755 = vpop.permute.xlu0 %1754
      %1756 = vrot.lane.b32.xlu0 %v330, 28
      %v1757 = vpop.permute.xlu0 %1756
      %1758 = vrot.lane.b32.xlu0 %v331, 28
      %v1759 = vpop.permute.xlu0 %1758
      %1760 = vrot.lane.b32.xlu0 %v332, 28
      %v1761 = vpop.permute.xlu0 %1760
      %1762 = vrot.lane.b32.xlu0 %v333, 28
      %v1763 = vpop.permute.xlu0 %1762
      %1764 = vrot.lane.b32.xlu0 %v334, 28
      %v1765 = vpop.permute.xlu0 %1764
      %1766 = vrot.lane.b32.xlu0 %v335, 28
      %v1767 = vpop.permute.xlu0 %1766
      %1768 = vrot.lane.b32.xlu0 %v336, 28
      %v1769 = vpop.permute.xlu0 %1768
      %1770 = vrot.lane.b32.xlu0 %v337, 28
      %v1771 = vpop.permute.xlu0 %1770
      %1772 = vrot.lane.b32.xlu0 %v338, 28
      %v1773 = vpop.permute.xlu0 %1772
      %1774 = vrot.lane.b32.xlu0 %v339, 28
      %v1775 = vpop.permute.xlu0 %1774
      %1776 = vrot.lane.b32.xlu0 %v340, 28
      %v1777 = vpop.permute.xlu0 %1776
      %1778 = vrot.lane.b32.xlu0 %v341, 28
      %v1779 = vpop.permute.xlu0 %1778
      %1780 = vrot.lane.b32.xlu0 %v342, 28
      %v1781 = vpop.permute.xlu0 %1780
      %1782 = vrot.lane.b32.xlu0 %v343, 28
      %v1783 = vpop.permute.xlu0 %1782
      %1784 = vrot.lane.b32.xlu0 %v344, 28
      %v1785 = vpop.permute.xlu0 %1784
      %1786 = vrot.lane.b32.xlu0 %v345, 28
      %v1787 = vpop.permute.xlu0 %1786
      %1788 = vrot.lane.b32.xlu0 %v346, 28
      %v1789 = vpop.permute.xlu0 %1788
      %1790 = vrot.lane.b32.xlu0 %v347, 28
      %v1791 = vpop.permute.xlu0 %1790
      %1792 = vrot.lane.b32.xlu0 %v348, 28
      %v1793 = vpop.permute.xlu0 %1792
      %1794 = vrot.lane.b32.xlu0 %v349, 28
      %v1795 = vpop.permute.xlu0 %1794
      %1796 = vrot.lane.b32.xlu0 %v350, 28
      %v1797 = vpop.permute.xlu0 %1796
      %1798 = vrot.lane.b32.xlu0 %v351, 28
      %v1799 = vpop.permute.xlu0 %1798
      %1800 = vrot.lane.b32.xlu0 %v352, 28
      %v1801 = vpop.permute.xlu0 %1800
      %1802 = vrot.lane.b32.xlu0 %v353, 28
      %v1803 = vpop.permute.xlu0 %1802
      %1804 = vrot.lane.b32.xlu0 %v354, 28
      %v1805 = vpop.permute.xlu0 %1804
      %1806 = vrot.lane.b32.xlu0 %v355, 28
      %v1807 = vpop.permute.xlu0 %1806
      %1808 = vrot.lane.b32.xlu0 %v356, 28
      %v1809 = vpop.permute.xlu0 %1808
      %1810 = vrot.lane.b32.xlu0 %v357, 28
      %v1811 = vpop.permute.xlu0 %1810
      %1812 = vrot.lane.b32.xlu0 %v358, 28
      %v1813 = vpop.permute.xlu0 %1812
      %1814 = vrot.lane.b32.xlu0 %v359, 28
      %v1815 = vpop.permute.xlu0 %1814
      %1816 = vrot.lane.b32.xlu0 %v306, 28
      %v1817 = vpop.permute.xlu0 %1816
      %1818 = vrot.lane.b32.xlu0 %v307, 28
      %v1819 = vpop.permute.xlu0 %1818
      %1820 = vrot.lane.b32.xlu0 %v308, 28
      %v1821 = vpop.permute.xlu0 %1820
      %1876 = vrot.lane.b32.xlu0 %v575, 32
      %v1877 = vpop.permute.xlu0 %1876
      %1878 = vrot.lane.b32.xlu0 %v574, 32
      %v1879 = vpop.permute.xlu0 %1878
      %1880 = vrot.lane.b32.xlu0 %v573, 32
      %v1881 = vpop.permute.xlu0 %1880
      %1882 = vrot.lane.b32.xlu0 %v572, 32
      %v1883 = vpop.permute.xlu0 %1882
      %1884 = vrot.lane.b32.xlu0 %v571, 32
      %v1885 = vpop.permute.xlu0 %1884
      %1886 = vrot.lane.b32.xlu0 %v570, 32
      %v1887 = vpop.permute.xlu0 %1886
      %1888 = vrot.lane.b32.xlu0 %v569, 32
      %v1889 = vpop.permute.xlu0 %1888
      %1890 = vrot.lane.b32.xlu0 %v568, 32
      %v1891 = vpop.permute.xlu0 %1890
      %1892 = vrot.lane.b32.xlu0 %v567, 32
      %v1893 = vpop.permute.xlu0 %1892
      %1894 = vrot.lane.b32.xlu0 %v566, 32
      %v1895 = vpop.permute.xlu0 %1894
      %1896 = vrot.lane.b32.xlu0 %v565, 32
      %v1897 = vpop.permute.xlu0 %1896
      %1898 = vrot.lane.b32.xlu0 %v564, 32
      %v1899 = vpop.permute.xlu0 %1898
      %1900 = vrot.lane.b32.xlu0 %v563, 32
      %v1901 = vpop.permute.xlu0 %1900
      %1902 = vrot.lane.b32.xlu0 %v562, 32
      %v1903 = vpop.permute.xlu0 %1902
      %1904 = vrot.lane.b32.xlu0 %v561, 32
      %v1905 = vpop.permute.xlu0 %1904
      %1906 = vrot.lane.b32.xlu0 %v560, 32
      %v1907 = vpop.permute.xlu0 %1906
      %1908 = vrot.lane.b32.xlu0 %v559, 32
      %v1909 = vpop.permute.xlu0 %1908
      %1910 = vrot.lane.b32.xlu0 %v558, 32
      %v1911 = vpop.permute.xlu0 %1910
      %1912 = vrot.lane.b32.xlu0 %v557, 32
      %v1913 = vpop.permute.xlu0 %1912
      %1914 = vrot.lane.b32.xlu0 %v556, 32
      %v1915 = vpop.permute.xlu0 %1914
      %1916 = vrot.lane.b32.xlu0 %v555, 32
      %v1917 = vpop.permute.xlu0 %1916
      %1918 = vrot.lane.b32.xlu0 %v554, 32
      %v1919 = vpop.permute.xlu0 %1918
      %1920 = vrot.lane.b32.xlu0 %v553, 32
      %v1921 = vpop.permute.xlu0 %1920
      %1922 = vrot.lane.b32.xlu0 %v552, 32
      %v1923 = vpop.permute.xlu0 %1922
      %1924 = vrot.lane.b32.xlu0 %v551, 32
      %v1925 = vpop.permute.xlu0 %1924
      %1926 = vrot.lane.b32.xlu0 %v550, 32
      %v1927 = vpop.permute.xlu0 %1926
      %1928 = vrot.lane.b32.xlu0 %v549, 32
      %v1929 = vpop.permute.xlu0 %1928
      %1930 = vrot.lane.b32.xlu0 %v548, 32
      %v1931 = vpop.permute.xlu0 %1930
      %1932 = vrot.lane.b32.xlu0 %v547, 32
      %v1933 = vpop.permute.xlu0 %1932
      %1934 = vrot.lane.b32.xlu0 %v546, 32
      %v1935 = vpop.permute.xlu0 %1934
      %1936 = vrot.lane.b32.xlu0 %v545, 32
      %v1937 = vpop.permute.xlu0 %1936
      %1938 = vrot.lane.b32.xlu0 %v544, 32
      %v1939 = vpop.permute.xlu0 %1938
      %1940 = vrot.lane.b32.xlu0 %v543, 32
      %v1941 = vpop.permute.xlu0 %1940
      %1942 = vrot.lane.b32.xlu0 %v542, 32
      %v1943 = vpop.permute.xlu0 %1942
      %1944 = vrot.lane.b32.xlu0 %v541, 32
      %v1945 = vpop.permute.xlu0 %1944
      %1946 = vrot.lane.b32.xlu0 %v540, 32
      %v1947 = vpop.permute.xlu0 %1946
      %1948 = vrot.lane.b32.xlu0 %v539, 32
      %v1949 = vpop.permute.xlu0 %1948
      %1950 = vrot.lane.b32.xlu0 %v538, 32
      %v1951 = vpop.permute.xlu0 %1950
      %1952 = vrot.lane.b32.xlu0 %v537, 32
      %v1953 = vpop.permute.xlu0 %1952
      %1954 = vrot.lane.b32.xlu0 %v536, 32
      %v1955 = vpop.permute.xlu0 %1954
      %1956 = vrot.lane.b32.xlu0 %v535, 32
      %v1957 = vpop.permute.xlu0 %1956
      %1958 = vrot.lane.b32.xlu0 %v534, 32
      %v1959 = vpop.permute.xlu0 %1958
      %1960 = vrot.lane.b32.xlu0 %v533, 32
      %v1961 = vpop.permute.xlu0 %1960
      %1962 = vrot.lane.b32.xlu0 %v532, 32
      %v1963 = vpop.permute.xlu0 %1962
      %1964 = vrot.lane.b32.xlu0 %v531, 32
      %v1965 = vpop.permute.xlu0 %1964
      %1966 = vrot.lane.b32.xlu0 %v530, 32
      %v1967 = vpop.permute.xlu0 %1966
      %1968 = vrot.lane.b32.xlu0 %v529, 32
      %v1969 = vpop.permute.xlu0 %1968
      %1970 = vrot.lane.b32.xlu0 %v528, 32
      %v1971 = vpop.permute.xlu0 %1970
      %1972 = vrot.lane.b32.xlu0 %v527, 32
      %v1973 = vpop.permute.xlu0 %1972
      %1974 = vrot.lane.b32.xlu0 %v526, 32
      %v1975 = vpop.permute.xlu0 %1974
      %1976 = vrot.lane.b32.xlu0 %v579, 32
      %v1977 = vpop.permute.xlu0 %1976
      %1978 = vrot.lane.b32.xlu0 %v578, 32
      %v1979 = vpop.permute.xlu0 %1978
      %1980 = vrot.lane.b32.xlu0 %v577, 32
      %v1981 = vpop.permute.xlu0 %1980
      %1982 = vrot.lane.b32.xlu0 %v576, 32
      %v1983 = vpop.permute.xlu0 %1982
      %vm2038 = vcmask 31744
      %v2039 = vsel %vm2038, %v419, %v635
      %v2040 = vsel %vm2038, %v418, %v637
      %v2041 = vsel %vm2038, %v417, %v639
      %v2042 = vsel %vm2038, %v470, %v641
      %v2043 = vsel %vm2038, %v469, %v643
      %v2044 = vsel %vm2038, %v468, %v645
      %v2045 = vsel %vm2038, %v467, %v647
      %v2046 = vsel %vm2038, %v466, %v649
      %v2047 = vsel %vm2038, %v465, %v651
      %v2048 = vsel %vm2038, %v464, %v653
      %v2049 = vsel %vm2038, %v463, %v655
      %v2050 = vsel %vm2038, %v462, %v657
      %v2051 = vsel %vm2038, %v461, %v659
      %v2052 = vsel %vm2038, %v460, %v661
      %v2053 = vsel %vm2038, %v459, %v663
      %v2054 = vsel %vm2038, %v458, %v665
      %v2055 = vsel %vm2038, %v457, %v667
      %v2056 = vsel %vm2038, %v456, %v669
      %v2057 = vsel %vm2038, %v455, %v671
      %v2058 = vsel %vm2038, %v454, %v673
      %v2059 = vsel %vm2038, %v453, %v675
      %v2060 = vsel %vm2038, %v452, %v677
      %v2061 = vsel %vm2038, %v451, %v679
      %v2062 = vsel %vm2038, %v450, %v681
      %v2063 = vsel %vm2038, %v449, %v683
      %v2064 = vsel %vm2038, %v448, %v685
      %v2065 = vsel %vm2038, %v447, %v687
      %v2066 = vsel %vm2038, %v446, %v689
      %v2067 = vsel %vm2038, %v445, %v691
      %v2068 = vsel %vm2038, %v444, %v693
      %v2069 = vsel %vm2038, %v443, %v695
      %v2070 = vsel %vm2038, %v442, %v697
      %v2071 = vsel %vm2038, %v441, %v699
      %v2072 = vsel %vm2038, %v440, %v701
      %v2073 = vsel %vm2038, %v439, %v703
      %v2074 = vsel %vm2038, %v438, %v705
      %v2075 = vsel %vm2038, %v437, %v707
      %v2076 = vsel %vm2038, %v436, %v709
      %v2077 = vsel %vm2038, %v435, %v711
      %v2078 = vsel %vm2038, %v434, %v713
      %v2079 = vsel %vm2038, %v433, %v715
      %v2080 = vsel %vm2038, %v432, %v717
      %v2081 = vsel %vm2038, %v431, %v719
      %v2082 = vsel %vm2038, %v430, %v721
      %v2083 = vsel %vm2038, %v429, %v723
      %v2084 = vsel %vm2038, %v428, %v725
      %v2085 = vsel %vm2038, %v427, %v727
      %v2086 = vsel %vm2038, %v426, %v729
      %v2087 = vsel %vm2038, %v425, %v731
      %v2088 = vsel %vm2038, %v424, %v733
      %v2089 = vsel %vm2038, %v423, %v735
      %v2090 = vsel %vm2038, %v422, %v737
      %v2091 = vsel %vm2038, %v421, %v739
      %v2092 = vsel %vm2038, %v420, %v741
      %vm2093 = vcmask 64512
      %v2094 = vsel %vm2093, %v2039, %v851
      %v2095 = vsel %vm2093, %v2040, %v853
      %v2096 = vsel %vm2093, %v2041, %v855
      %v2097 = vsel %vm2093, %v2042, %v857
      %v2098 = vsel %vm2093, %v2043, %v859
      %v2099 = vsel %vm2093, %v2044, %v861
      %v2100 = vsel %vm2093, %v2045, %v863
      %v2101 = vsel %vm2093, %v2046, %v865
      %v2102 = vsel %vm2093, %v2047, %v867
      %v2103 = vsel %vm2093, %v2048, %v869
      %v2104 = vsel %vm2093, %v2049, %v871
      %v2105 = vsel %vm2093, %v2050, %v873
      %v2106 = vsel %vm2093, %v2051, %v875
      %v2107 = vsel %vm2093, %v2052, %v877
      %v2108 = vsel %vm2093, %v2053, %v879
      %v2109 = vsel %vm2093, %v2054, %v881
      %v2110 = vsel %vm2093, %v2055, %v883
      %v2111 = vsel %vm2093, %v2056, %v885
      %v2112 = vsel %vm2093, %v2057, %v887
      %v2113 = vsel %vm2093, %v2058, %v889
      %v2114 = vsel %vm2093, %v2059, %v891
      %v2115 = vsel %vm2093, %v2060, %v893
      %v2116 = vsel %vm2093, %v2061, %v895
      %v2117 = vsel %vm2093, %v2062, %v897
      %v2118 = vsel %vm2093, %v2063, %v899
      %v2119 = vsel %vm2093, %v2064, %v901
      %v2120 = vsel %vm2093, %v2065, %v903
      %v2121 = vsel %vm2093, %v2066, %v905
      %v2122 = vsel %vm2093, %v2067, %v907
      %v2123 = vsel %vm2093, %v2068, %v909
      %v2124 = vsel %vm2093, %v2069, %v911
      %v2125 = vsel %vm2093, %v2070, %v913
      %v2126 = vsel %vm2093, %v2071, %v915
      %v2127 = vsel %vm2093, %v2072, %v917
      %v2128 = vsel %vm2093, %v2073, %v919
      %v2129 = vsel %vm2093, %v2074, %v921
      %v2130 = vsel %vm2093, %v2075, %v923
      %v2131 = vsel %vm2093, %v2076, %v925
      %v2132 = vsel %vm2093, %v2077, %v927
      %v2133 = vsel %vm2093, %v2078, %v929
      %v2134 = vsel %vm2093, %v2079, %v931
      %v2135 = vsel %vm2093, %v2080, %v933
      %v2136 = vsel %vm2093, %v2081, %v935
      %v2137 = vsel %vm2093, %v2082, %v937
      %v2138 = vsel %vm2093, %v2083, %v939
      %v2139 = vsel %vm2093, %v2084, %v941
      %v2140 = vsel %vm2093, %v2085, %v943
      %v2141 = vsel %vm2093, %v2086, %v945
      %v2142 = vsel %vm2093, %v2087, %v947
      %v2143 = vsel %vm2093, %v2088, %v949
      %v2144 = vsel %vm2093, %v2089, %v951
      %v2145 = vsel %vm2093, %v2090, %v953
      %v2146 = vsel %vm2093, %v2091, %v955
      %v2147 = vsel %vm2093, %v2092, %v957
      %vm2148 = vcmask 97280
      %v2149 = vsel %vm2148, %v2094, %v1067
      %v2150 = vsel %vm2148, %v2095, %v1069
      %v2151 = vsel %vm2148, %v2096, %v1071
      %v2152 = vsel %vm2148, %v2097, %v1073
      %v2153 = vsel %vm2148, %v2098, %v1075
      %v2154 = vsel %vm2148, %v2099, %v1077
      %v2155 = vsel %vm2148, %v2100, %v1079
      %v2156 = vsel %vm2148, %v2101, %v1081
      %v2157 = vsel %vm2148, %v2102, %v1083
      %v2158 = vsel %vm2148, %v2103, %v1085
      %v2159 = vsel %vm2148, %v2104, %v1087
      %v2160 = vsel %vm2148, %v2105, %v1089
      %v2161 = vsel %vm2148, %v2106, %v1091
      %v2162 = vsel %vm2148, %v2107, %v1093
      %v2163 = vsel %vm2148, %v2108, %v1095
      %v2164 = vsel %vm2148, %v2109, %v1097
      %v2165 = vsel %vm2148, %v2110, %v1099
      %v2166 = vsel %vm2148, %v2111, %v1101
      %v2167 = vsel %vm2148, %v2112, %v1103
      %v2168 = vsel %vm2148, %v2113, %v1105
      %v2169 = vsel %vm2148, %v2114, %v1107
      %v2170 = vsel %vm2148, %v2115, %v1109
      %v2171 = vsel %vm2148, %v2116, %v1111
      %v2172 = vsel %vm2148, %v2117, %v1113
      %v2173 = vsel %vm2148, %v2118, %v1115
      %v2174 = vsel %vm2148, %v2119, %v1117
      %v2175 = vsel %vm2148, %v2120, %v1119
      %v2176 = vsel %vm2148, %v2121, %v1121
      %v2177 = vsel %vm2148, %v2122, %v1123
      %v2178 = vsel %vm2148, %v2123, %v1125
      %v2179 = vsel %vm2148, %v2124, %v1127
      %v2180 = vsel %vm2148, %v2125, %v1129
      %v2181 = vsel %vm2148, %v2126, %v1131
      %v2182 = vsel %vm2148, %v2127, %v1133
      %v2183 = vsel %vm2148, %v2128, %v1135
      %v2184 = vsel %vm2148, %v2129, %v1137
      %v2185 = vsel %vm2148, %v2130, %v1139
      %v2186 = vsel %vm2148, %v2131, %v1141
      %v2187 = vsel %vm2148, %v2132, %v1143
      %v2188 = vsel %vm2148, %v2133, %v1145
      %v2189 = vsel %vm2148, %v2134, %v1147
      %v2190 = vsel %vm2148, %v2135, %v1149
      %v2191 = vsel %vm2148, %v2136, %v1151
      %v2192 = vsel %vm2148, %v2137, %v1153
      %v2193 = vsel %vm2148, %v2138, %v1155
      %v2194 = vsel %vm2148, %v2139, %v1157
      %v2195 = vsel %vm2148, %v2140, %v1159
      %v2196 = vsel %vm2148, %v2141, %v1161
      %v2197 = vsel %vm2148, %v2142, %v1163
      %v2198 = vsel %vm2148, %v2143, %v1165
      %v2199 = vsel %vm2148, %v2144, %v1167
      %v2200 = vsel %vm2148, %v2145, %v1169
      %v2201 = vsel %vm2148, %v2146, %v1171
      %v2202 = vsel %vm2148, %v2147, %v1173
      %vm2203 = vcmask 130048
      %v2204 = vsel %vm2203, %v2149, %v1229
      %v2205 = vsel %vm2203, %v2150, %v1231
      %v2206 = vsel %vm2203, %v2151, %v1233
      %v2207 = vsel %vm2203, %v2152, %v1235
      %v2208 = vsel %vm2203, %v2153, %v1237
      %v2209 = vsel %vm2203, %v2154, %v1239
      %v2210 = vsel %vm2203, %v2155, %v1241
      %v2211 = vsel %vm2203, %v2156, %v1243
      %v2212 = vsel %vm2203, %v2157, %v1245
      %v2213 = vsel %vm2203, %v2158, %v1247
      %v2214 = vsel %vm2203, %v2159, %v1249
      %v2215 = vsel %vm2203, %v2160, %v1251
      %v2216 = vsel %vm2203, %v2161, %v1253
      %v2217 = vsel %vm2203, %v2162, %v1255
      %v2218 = vsel %vm2203, %v2163, %v1257
      %v2219 = vsel %vm2203, %v2164, %v1259
      %v2220 = vsel %vm2203, %v2165, %v1261
      %v2221 = vsel %vm2203, %v2166, %v1263
      %v2222 = vsel %vm2203, %v2167, %v1265
      %v2223 = vsel %vm2203, %v2168, %v1267
      %v2224 = vsel %vm2203, %v2169, %v1269
      %v2225 = vsel %vm2203, %v2170, %v1271
      %v2226 = vsel %vm2203, %v2171, %v1273
      %v2227 = vsel %vm2203, %v2172, %v1275
      %v2228 = vsel %vm2203, %v2173, %v1277
      %v2229 = vsel %vm2203, %v2174, %v1279
      %v2230 = vsel %vm2203, %v2175, %v1281
      %v2231 = vsel %vm2203, %v2176, %v1283
      %v2232 = vsel %vm2203, %v2177, %v1285
      %v2233 = vsel %vm2203, %v2178, %v1287
      %v2234 = vsel %vm2203, %v2179, %v1289
      %v2235 = vsel %vm2203, %v2180, %v1291
      %v2236 = vsel %vm2203, %v2181, %v1293
      %v2237 = vsel %vm2203, %v2182, %v1295
      %v2238 = vsel %vm2203, %v2183, %v1297
      %v2239 = vsel %vm2203, %v2184, %v1299
      %v2240 = vsel %vm2203, %v2185, %v1301
      %v2241 = vsel %vm2203, %v2186, %v1303
      %v2242 = vsel %vm2203, %v2187, %v1305
      %v2243 = vsel %vm2203, %v2188, %v1307
      %v2244 = vsel %vm2203, %v2189, %v1309
      %v2245 = vsel %vm2203, %v2190, %v1311
      %v2246 = vsel %vm2203, %v2191, %v1313
      %v2247 = vsel %vm2203, %v2192, %v1315
      %v2248 = vsel %vm2203, %v2193, %v1317
      %v2249 = vsel %vm2203, %v2194, %v1319
      %v2250 = vsel %vm2203, %v2195, %v1321
      %v2251 = vsel %vm2203, %v2196, %v1323
      %v2252 = vsel %vm2203, %v2197, %v1325
      %v2253 = vsel %vm2203, %v2198, %v1327
      %v2254 = vsel %vm2203, %v2199, %v1329
      %v2255 = vsel %vm2203, %v2200, %v1331
      %v2256 = vsel %vm2203, %v2201, %v1333
      %v2257 = vsel %vm2203, %v2202, %v1335
      %vm2258 = vcmask 162816
      %v2259 = vsel %vm2258, %v2204, %v1391
      %v2260 = vsel %vm2258, %v2205, %v1393
      %v2261 = vsel %vm2258, %v2206, %v1395
      %v2262 = vsel %vm2258, %v2207, %v1397
      %v2263 = vsel %vm2258, %v2208, %v1399
      %v2264 = vsel %vm2258, %v2209, %v1401
      %v2265 = vsel %vm2258, %v2210, %v1403
      %v2266 = vsel %vm2258, %v2211, %v1405
      %v2267 = vsel %vm2258, %v2212, %v1407
      %v2268 = vsel %vm2258, %v2213, %v1409
      %v2269 = vsel %vm2258, %v2214, %v1411
      %v2270 = vsel %vm2258, %v2215, %v1413
      %v2271 = vsel %vm2258, %v2216, %v1415
      %v2272 = vsel %vm2258, %v2217, %v1417
      %v2273 = vsel %vm2258, %v2218, %v1419
      %v2274 = vsel %vm2258, %v2219, %v1421
      %v2275 = vsel %vm2258, %v2220, %v1423
      %v2276 = vsel %vm2258, %v2221, %v1425
      %v2277 = vsel %vm2258, %v2222, %v1427
      %v2278 = vsel %vm2258, %v2223, %v1429
      %v2279 = vsel %vm2258, %v2224, %v1431
      %v2280 = vsel %vm2258, %v2225, %v1433
      %v2281 = vsel %vm2258, %v2226, %v1435
      %v2282 = vsel %vm2258, %v2227, %v1437
      %v2283 = vsel %vm2258, %v2228, %v1439
      %v2284 = vsel %vm2258, %v2229, %v1441
      %v2285 = vsel %vm2258, %v2230, %v1443
      %v2286 = vsel %vm2258, %v2231, %v1445
      %v2287 = vsel %vm2258, %v2232, %v1447
      %v2288 = vsel %vm2258, %v2233, %v1449
      %v2289 = vsel %vm2258, %v2234, %v1451
      %v2290 = vsel %vm2258, %v2235, %v1453
      %v2291 = vsel %vm2258, %v2236, %v1455
      %v2292 = vsel %vm2258, %v2237, %v1457
      %v2293 = vsel %vm2258, %v2238, %v1459
      %v2294 = vsel %vm2258, %v2239, %v1461
      %v2295 = vsel %vm2258, %v2240, %v1463
      %v2296 = vsel %vm2258, %v2241, %v1465
      %v2297 = vsel %vm2258, %v2242, %v1467
      %v2298 = vsel %vm2258, %v2243, %v1469
      %v2299 = vsel %vm2258, %v2244, %v1471
      %v2300 = vsel %vm2258, %v2245, %v1473
      %v2301 = vsel %vm2258, %v2246, %v1475
      %v2302 = vsel %vm2258, %v2247, %v1477
      %v2303 = vsel %vm2258, %v2248, %v1479
      %v2304 = vsel %vm2258, %v2249, %v1481
      %v2305 = vsel %vm2258, %v2250, %v1483
      %v2306 = vsel %vm2258, %v2251, %v1485
      %v2307 = vsel %vm2258, %v2252, %v1487
      %v2308 = vsel %vm2258, %v2253, %v1489
      %v2309 = vsel %vm2258, %v2254, %v1491
      %v2310 = vsel %vm2258, %v2255, %v1493
      %v2311 = vsel %vm2258, %v2256, %v1495
      %v2312 = vsel %vm2258, %v2257, %v1497
      %vm2313 = vcmask 195584
      %v2314 = vsel %vm2313, %v2259, %v1553
      %v2315 = vsel %vm2313, %v2260, %v1555
      %v2316 = vsel %vm2313, %v2261, %v1557
      %v2317 = vsel %vm2313, %v2262, %v1559
      %v2318 = vsel %vm2313, %v2263, %v1561
      %v2319 = vsel %vm2313, %v2264, %v1563
      %v2320 = vsel %vm2313, %v2265, %v1565
      %v2321 = vsel %vm2313, %v2266, %v1567
      %v2322 = vsel %vm2313, %v2267, %v1569
      %v2323 = vsel %vm2313, %v2268, %v1571
      %v2324 = vsel %vm2313, %v2269, %v1573
      %v2325 = vsel %vm2313, %v2270, %v1575
      %v2326 = vsel %vm2313, %v2271, %v1577
      %v2327 = vsel %vm2313, %v2272, %v1579
      %v2328 = vsel %vm2313, %v2273, %v1581
      %v2329 = vsel %vm2313, %v2274, %v1583
      %v2330 = vsel %vm2313, %v2275, %v1585
      %v2331 = vsel %vm2313, %v2276, %v1587
      %v2332 = vsel %vm2313, %v2277, %v1589
      %v2333 = vsel %vm2313, %v2278, %v1591
      %v2334 = vsel %vm2313, %v2279, %v1593
      %v2335 = vsel %vm2313, %v2280, %v1595
      %v2336 = vsel %vm2313, %v2281, %v1597
      %v2337 = vsel %vm2313, %v2282, %v1599
      %v2338 = vsel %vm2313, %v2283, %v1601
      %v2339 = vsel %vm2313, %v2284, %v1603
      %v2340 = vsel %vm2313, %v2285, %v1605
      %v2341 = vsel %vm2313, %v2286, %v1607
      %v2342 = vsel %vm2313, %v2287, %v1609
      %v2343 = vsel %vm2313, %v2288, %v1611
      %v2344 = vsel %vm2313, %v2289, %v1613
      %v2345 = vsel %vm2313, %v2290, %v1615
      %v2346 = vsel %vm2313, %v2291, %v1617
      %v2347 = vsel %vm2313, %v2292, %v1619
      %v2348 = vsel %vm2313, %v2293, %v1621
      %v2349 = vsel %vm2313, %v2294, %v1623
      %v2350 = vsel %vm2313, %v2295, %v1625
      %v2351 = vsel %vm2313, %v2296, %v1627
      %v2352 = vsel %vm2313, %v2297, %v1629
      %v2353 = vsel %vm2313, %v2298, %v1631
      %v2354 = vsel %vm2313, %v2299, %v1633
      %v2355 = vsel %vm2313, %v2300, %v1635
      %v2356 = vsel %vm2313, %v2301, %v1637
      %v2357 = vsel %vm2313, %v2302, %v1639
      %v2358 = vsel %vm2313, %v2303, %v1641
      %v2359 = vsel %vm2313, %v2304, %v1643
      %v2360 = vsel %vm2313, %v2305, %v1645
      %v2361 = vsel %vm2313, %v2306, %v1647
      %v2362 = vsel %vm2313, %v2307, %v1649
      %v2363 = vsel %vm2313, %v2308, %v1651
      %v2364 = vsel %vm2313, %v2309, %v1653
      %v2365 = vsel %vm2313, %v2310, %v1655
      %v2366 = vsel %vm2313, %v2311, %v1657
      %v2367 = vsel %vm2313, %v2312, %v1659
      %vm2368 = vcmask 228352
      %v2369 = vsel %vm2368, %v2314, %v1715
      %v2370 = vsel %vm2368, %v2315, %v1717
      %v2371 = vsel %vm2368, %v2316, %v1719
      %v2372 = vsel %vm2368, %v2317, %v1721
      %v2373 = vsel %vm2368, %v2318, %v1723
      %v2374 = vsel %vm2368, %v2319, %v1725
      %v2375 = vsel %vm2368, %v2320, %v1727
      %v2376 = vsel %vm2368, %v2321, %v1729
      %v2377 = vsel %vm2368, %v2322, %v1731
      %v2378 = vsel %vm2368, %v2323, %v1733
      %v2379 = vsel %vm2368, %v2324, %v1735
      %v2380 = vsel %vm2368, %v2325, %v1737
      %v2381 = vsel %vm2368, %v2326, %v1739
      %v2382 = vsel %vm2368, %v2327, %v1741
      %v2383 = vsel %vm2368, %v2328, %v1743
      %v2384 = vsel %vm2368, %v2329, %v1745
      %v2385 = vsel %vm2368, %v2330, %v1747
      %v2386 = vsel %vm2368, %v2331, %v1749
      %v2387 = vsel %vm2368, %v2332, %v1751
      %v2388 = vsel %vm2368, %v2333, %v1753
      %v2389 = vsel %vm2368, %v2334, %v1755
      %v2390 = vsel %vm2368, %v2335, %v1757
      %v2391 = vsel %vm2368, %v2336, %v1759
      %v2392 = vsel %vm2368, %v2337, %v1761
      %v2393 = vsel %vm2368, %v2338, %v1763
      %v2394 = vsel %vm2368, %v2339, %v1765
      %v2395 = vsel %vm2368, %v2340, %v1767
      %v2396 = vsel %vm2368, %v2341, %v1769
      %v2397 = vsel %vm2368, %v2342, %v1771
      %v2398 = vsel %vm2368, %v2343, %v1773
      %v2399 = vsel %vm2368, %v2344, %v1775
      %v2400 = vsel %vm2368, %v2345, %v1777
      %v2401 = vsel %vm2368, %v2346, %v1779
      %v2402 = vsel %vm2368, %v2347, %v1781
      %v2403 = vsel %vm2368, %v2348, %v1783
      %v2404 = vsel %vm2368, %v2349, %v1785
      %v2405 = vsel %vm2368, %v2350, %v1787
      %v2406 = vsel %vm2368, %v2351, %v1789
      %v2407 = vsel %vm2368, %v2352, %v1791
      %v2408 = vsel %vm2368, %v2353, %v1793
      %v2409 = vsel %vm2368, %v2354, %v1795
      %v2410 = vsel %vm2368, %v2355, %v1797
      %v2411 = vsel %vm2368, %v2356, %v1799
      %v2412 = vsel %vm2368, %v2357, %v1801
      %v2413 = vsel %vm2368, %v2358, %v1803
      %v2414 = vsel %vm2368, %v2359, %v1805
      %v2415 = vsel %vm2368, %v2360, %v1807
      %v2416 = vsel %vm2368, %v2361, %v1809
      %v2417 = vsel %vm2368, %v2362, %v1811
      %v2418 = vsel %vm2368, %v2363, %v1813
      %v2419 = vsel %vm2368, %v2364, %v1815
      %v2420 = vsel %vm2368, %v2365, %v1817
      %v2421 = vsel %vm2368, %v2366, %v1819
      %v2422 = vsel %vm2368, %v2367, %v1821
      %vm2423 = vcmask 261120
      %v2424 = vsel %vm2423, %v2369, %v1877
      %v2425 = vsel %vm2423, %v2370, %v1879
      %v2426 = vsel %vm2423, %v2371, %v1881
      %v2427 = vsel %vm2423, %v2372, %v1883
      %v2428 = vsel %vm2423, %v2373, %v1885
      %v2429 = vsel %vm2423, %v2374, %v1887
      %v2430 = vsel %vm2423, %v2375, %v1889
      %v2431 = vsel %vm2423, %v2376, %v1891
      %v2432 = vsel %vm2423, %v2377, %v1893
      %v2433 = vsel %vm2423, %v2378, %v1895
      %v2434 = vsel %vm2423, %v2379, %v1897
      %v2435 = vsel %vm2423, %v2380, %v1899
      %v2436 = vsel %vm2423, %v2381, %v1901
      %v2437 = vsel %vm2423, %v2382, %v1903
      %v2438 = vsel %vm2423, %v2383, %v1905
      %v2439 = vsel %vm2423, %v2384, %v1907
      %v2440 = vsel %vm2423, %v2385, %v1909
      %v2441 = vsel %vm2423, %v2386, %v1911
      %v2442 = vsel %vm2423, %v2387, %v1913
      %v2443 = vsel %vm2423, %v2388, %v1915
      %v2444 = vsel %vm2423, %v2389, %v1917
      %v2445 = vsel %vm2423, %v2390, %v1919
      %v2446 = vsel %vm2423, %v2391, %v1921
      %v2447 = vsel %vm2423, %v2392, %v1923
      %v2448 = vsel %vm2423, %v2393, %v1925
      %v2449 = vsel %vm2423, %v2394, %v1927
      %v2450 = vsel %vm2423, %v2395, %v1929
      %v2451 = vsel %vm2423, %v2396, %v1931
      %v2452 = vsel %vm2423, %v2397, %v1933
      %v2453 = vsel %vm2423, %v2398, %v1935
      %v2454 = vsel %vm2423, %v2399, %v1937
      %v2455 = vsel %vm2423, %v2400, %v1939
      %v2456 = vsel %vm2423, %v2401, %v1941
      %v2457 = vsel %vm2423, %v2402, %v1943
      %v2458 = vsel %vm2423, %v2403, %v1945
      %v2459 = vsel %vm2423, %v2404, %v1947
      %v2460 = vsel %vm2423, %v2405, %v1949
      %v2461 = vsel %vm2423, %v2406, %v1951
      %v2462 = vsel %vm2423, %v2407, %v1953
      %v2463 = vsel %vm2423, %v2408, %v1955
      %v2464 = vsel %vm2423, %v2409, %v1957
      %v2465 = vsel %vm2423, %v2410, %v1959
      %v2466 = vsel %vm2423, %v2411, %v1961
      %v2467 = vsel %vm2423, %v2412, %v1963
      %v2468 = vsel %vm2423, %v2413, %v1965
      %v2469 = vsel %vm2423, %v2414, %v1967
      %v2470 = vsel %vm2423, %v2415, %v1969
      %v2471 = vsel %vm2423, %v2416, %v1971
      %v2472 = vsel %vm2423, %v2417, %v1973
      %v2473 = vsel %vm2423, %v2418, %v1975
      %v2474 = vsel %vm2423, %v2419, %v1977
      %v2475 = vsel %vm2423, %v2420, %v1979
      %v2476 = vsel %vm2423, %v2421, %v1981
      %v2477 = vsel %vm2423, %v2422, %v1983
      %v2478 = vld [vmem:[%s2] sm:$0xff]
      %v2479 = vld [vmem:[%s2 + $0x8] sm:$0xff]
      %v2480 = vld [vmem:[%s2 + $0x10] sm:$0xff]
      %v2481 = vld [vmem:[%s2 + $0x18] sm:$0xff]
      %v2482 = vld [vmem:[%s2 + $0x20] sm:$0xf]
      %v2483 = vld [vmem:[%s3] sm:$0x1]
      %v2485 = vperm.slane %v2483, 0
      %vm2487 = vcmask 293888
      %v2489 = vsel %vm2487, %v2424, 0
      %v2492 = vsel %vm2487, %v2425, 0
      %v2495 = vsel %vm2487, %v2426, 0
      %v2498 = vsel %vm2487, %v2427, 0
      %v2501 = vsel %vm2487, %v2428, 0
      %v2504 = vsel %vm2487, %v2429, 0
      %v2507 = vsel %vm2487, %v2430, 0
      %v2510 = vsel %vm2487, %v2431, 0
      %v2513 = vsel %vm2487, %v2432, 0
      %v2516 = vsel %vm2487, %v2433, 0
      %v2519 = vsel %vm2487, %v2434, 0
      %v2522 = vsel %vm2487, %v2435, 0
      %v2525 = vsel %vm2487, %v2436, 0
      %v2528 = vsel %vm2487, %v2437, 0
      %v2531 = vsel %vm2487, %v2438, 0
      %v2534 = vsel %vm2487, %v2439, 0
      %v2537 = vsel %vm2487, %v2440, 0
      %v2540 = vsel %vm2487, %v2441, 0
      %v2543 = vsel %vm2487, %v2442, 0
      %v2546 = vsel %vm2487, %v2443, 0
      %v2549 = vsel %vm2487, %v2444, 0
      %v2552 = vsel %vm2487, %v2445, 0
      %v2555 = vsel %vm2487, %v2446, 0
      %v2558 = vsel %vm2487, %v2447, 0
      %v2561 = vsel %vm2487, %v2448, 0
      %v2564 = vsel %vm2487, %v2449, 0
      %v2567 = vsel %vm2487, %v2450, 0
      %v2570 = vsel %vm2487, %v2451, 0
      %v2573 = vsel %vm2487, %v2452, 0
      %v2576 = vsel %vm2487, %v2453, 0
      %v2579 = vsel %vm2487, %v2454, 0
      %v2582 = vsel %vm2487, %v2455, 0
      %v2585 = vsel %vm2487, %v2456, 0
      %v2588 = vsel %vm2487, %v2457, 0
      %v2591 = vsel %vm2487, %v2458, 0
      %v2594 = vsel %vm2487, %v2459, 0
      %v2597 = vsel %vm2487, %v2460, 0
      %v2600 = vsel %vm2487, %v2461, 0
      %v2603 = vsel %vm2487, %v2462, 0
      %v2606 = vsel %vm2487, %v2463, 0
      %v2609 = vsel %vm2487, %v2464, 0
      %v2612 = vsel %vm2487, %v2465, 0
      %v2615 = vsel %vm2487, %v2466, 0
      %v2618 = vsel %vm2487, %v2467, 0
      %v2621 = vsel %vm2487, %v2468, 0
      %v2624 = vsel %vm2487, %v2469, 0
      %v2627 = vsel %vm2487, %v2470, 0
      %v2630 = vsel %vm2487, %v2471, 0
      %v2633 = vsel %vm2487, %v2472, 0
      %v2636 = vsel %vm2487, %v2473, 0
      %v2639 = vsel %vm2487, %v2474, 0
      %v2642 = vsel %vm2487, %v2475, 0
      %v2645 = vsel %vm2487, %v2476, 0
      %v2648 = vsel %vm2487, %v2477, 0
      %vm2650 = vcmask 1043456
      %v2652 = vsel %vm2650, %v2482, 0
      %2654 = vmatpush.msra.mxu0 0.0
      %2655 = vmatpush.msra.mxu0 0.0
      %2656 = vmatpush.msra.mxu0 0.0
      %2657 = vmatpush.msra.mxu0 0.0
      %2658 = vmatpush.msra.mxu0 0.0
      %2659 = vmatpush.msra.mxu0 0.0
      %2660 = vmatpush.msra.mxu0 0.0
      %2661 = vmatpush.msra.mxu0 0.0
      %2662 = vmatpush.msra.mxu0 0.0
      %2663 = vmatpush.msra.mxu0 0.0
      %2664 = vmatpush.msra.mxu0 0.0
      %2665 = vmatpush.msra.mxu0 %v2652
      %2666 = vmatpush.msra.mxu0 %v2481
      %2667 = vmatpush.msra.mxu0 %v2480
      %2668 = vmatpush.msra.mxu0 %v2479
      %2669 = vmatpush.msra.mxu0 %v2478
      %2670 = vmatmul.f32.gmra.mxu0 %v2489
      %v2671 = vpop.f32.mrf.mxu0
      %v2672 = vadd.f32 %v2485, %v2671
      %2673 = vmatmul.f32.gmra.mxu0 %v2492
      %v2674 = vpop.f32.mrf.mxu0
      %v2675 = vadd.f32 %v2485, %v2674
      %2676 = vmatmul.f32.gmra.mxu0 %v2495
      %v2677 = vpop.f32.mrf.mxu0
      %v2678 = vadd.f32 %v2485, %v2677
      %2679 = vmatmul.f32.gmra.mxu0 %v2498
      %v2680 = vpop.f32.mrf.mxu0
      %v2681 = vadd.f32 %v2485, %v2680
      %2682 = vmatmul.f32.gmra.mxu0 %v2501
      %v2683 = vpop.f32.mrf.mxu0
      %v2684 = vadd.f32 %v2485, %v2683
      %2685 = vmatmul.f32.gmra.mxu0 %v2504
      %v2686 = vpop.f32.mrf.mxu0
      %v2687 = vadd.f32 %v2485, %v2686
      %2688 = vmatmul.f32.gmra.mxu0 %v2507
      %v2689 = vpop.f32.mrf.mxu0
      %v2690 = vadd.f32 %v2485, %v2689
      %2691 = vmatmul.f32.gmra.mxu0 %v2510
      %v2692 = vpop.f32.mrf.mxu0
      %v2693 = vadd.f32 %v2485, %v2692
      %2694 = vmatmul.f32.gmra.mxu0 %v2513
      %v2695 = vpop.f32.mrf.mxu0
      %v2696 = vadd.f32 %v2485, %v2695
      %2697 = vmatmul.f32.gmra.mxu0 %v2516
      %v2698 = vpop.f32.mrf.mxu0
      %v2699 = vadd.f32 %v2485, %v2698
      %2700 = vmatmul.f32.gmra.mxu0 %v2519
      %v2701 = vpop.f32.mrf.mxu0
      %v2702 = vadd.f32 %v2485, %v2701
      %2703 = vmatmul.f32.gmra.mxu0 %v2522
      %v2704 = vpop.f32.mrf.mxu0
      %v2705 = vadd.f32 %v2485, %v2704
      %2706 = vmatmul.f32.gmra.mxu0 %v2525
      %v2707 = vpop.f32.mrf.mxu0
      %v2708 = vadd.f32 %v2485, %v2707
      %2709 = vmatmul.f32.gmra.mxu0 %v2528
      %v2710 = vpop.f32.mrf.mxu0
      %v2711 = vadd.f32 %v2485, %v2710
      %2712 = vmatmul.f32.gmra.mxu0 %v2531
      %v2713 = vpop.f32.mrf.mxu0
      %v2714 = vadd.f32 %v2485, %v2713
      %2715 = vmatmul.f32.gmra.mxu0 %v2534
      %v2716 = vpop.f32.mrf.mxu0
      %v2717 = vadd.f32 %v2485, %v2716
      %2718 = vmatmul.f32.gmra.mxu0 %v2537
      %v2719 = vpop.f32.mrf.mxu0
      %v2720 = vadd.f32 %v2485, %v2719
      %2721 = vmatmul.f32.gmra.mxu0 %v2540
      %v2722 = vpop.f32.mrf.mxu0
      %v2723 = vadd.f32 %v2485, %v2722
      %2724 = vmatmul.f32.gmra.mxu0 %v2543
      %v2725 = vpop.f32.mrf.mxu0
      %v2726 = vadd.f32 %v2485, %v2725
      %2727 = vmatmul.f32.gmra.mxu0 %v2546
      %v2728 = vpop.f32.mrf.mxu0
      %v2729 = vadd.f32 %v2485, %v2728
      %2730 = vmatmul.f32.gmra.mxu0 %v2549
      %v2731 = vpop.f32.mrf.mxu0
      %v2732 = vadd.f32 %v2485, %v2731
      %2733 = vmatmul.f32.gmra.mxu0 %v2552
      %v2734 = vpop.f32.mrf.mxu0
      %v2735 = vadd.f32 %v2485, %v2734
      %2736 = vmatmul.f32.gmra.mxu0 %v2555
      %v2737 = vpop.f32.mrf.mxu0
      %v2738 = vadd.f32 %v2485, %v2737
      %2739 = vmatmul.f32.gmra.mxu0 %v2558
      %v2740 = vpop.f32.mrf.mxu0
      %v2741 = vadd.f32 %v2485, %v2740
      %2742 = vmatmul.f32.gmra.mxu0 %v2561
      %v2743 = vpop.f32.mrf.mxu0
      %v2744 = vadd.f32 %v2485, %v2743
      %2745 = vmatmul.f32.gmra.mxu0 %v2564
      %v2746 = vpop.f32.mrf.mxu0
      %v2747 = vadd.f32 %v2485, %v2746
      %2748 = vmatmul.f32.gmra.mxu0 %v2567
      %v2749 = vpop.f32.mrf.mxu0
      %v2750 = vadd.f32 %v2485, %v2749
      %2751 = vmatmul.f32.gmra.mxu0 %v2570
      %v2752 = vpop.f32.mrf.mxu0
      %v2753 = vadd.f32 %v2485, %v2752
      %2754 = vmatmul.f32.gmra.mxu0 %v2573
      %v2755 = vpop.f32.mrf.mxu0
      %v2756 = vadd.f32 %v2485, %v2755
      %2757 = vmatmul.f32.gmra.mxu0 %v2576
      %v2758 = vpop.f32.mrf.mxu0
      %v2759 = vadd.f32 %v2485, %v2758
      %2760 = vmatmul.f32.gmra.mxu0 %v2579
      %v2761 = vpop.f32.mrf.mxu0
      %v2762 = vadd.f32 %v2485, %v2761
      %2763 = vmatmul.f32.gmra.mxu0 %v2582
      %v2764 = vpop.f32.mrf.mxu0
      %v2765 = vadd.f32 %v2485, %v2764
      %2766 = vmatmul.f32.gmra.mxu0 %v2585
      %v2767 = vpop.f32.mrf.mxu0
      %v2768 = vadd.f32 %v2485, %v2767
      %2769 = vmatmul.f32.gmra.mxu0 %v2588
      %v2770 = vpop.f32.mrf.mxu0
      %v2771 = vadd.f32 %v2485, %v2770
      %2772 = vmatmul.f32.gmra.mxu0 %v2591
      %v2773 = vpop.f32.mrf.mxu0
      %v2774 = vadd.f32 %v2485, %v2773
      %2775 = vmatmul.f32.gmra.mxu0 %v2594
      %v2776 = vpop.f32.mrf.mxu0
      %v2777 = vadd.f32 %v2485, %v2776
      %2778 = vmatmul.f32.gmra.mxu0 %v2597
      %v2779 = vpop.f32.mrf.mxu0
      %v2780 = vadd.f32 %v2485, %v2779
      %2781 = vmatmul.f32.gmra.mxu0 %v2600
      %v2782 = vpop.f32.mrf.mxu0
      %v2783 = vadd.f32 %v2485, %v2782
      %2784 = vmatmul.f32.gmra.mxu0 %v2603
      %v2785 = vpop.f32.mrf.mxu0
      %v2786 = vadd.f32 %v2485, %v2785
      %2787 = vmatmul.f32.gmra.mxu0 %v2606
      %v2788 = vpop.f32.mrf.mxu0
      %v2789 = vadd.f32 %v2485, %v2788
      %2790 = vmatmul.f32.gmra.mxu0 %v2609
      %v2791 = vpop.f32.mrf.mxu0
      %v2792 = vadd.f32 %v2485, %v2791
      %2793 = vmatmul.f32.gmra.mxu0 %v2612
      %v2794 = vpop.f32.mrf.mxu0
      %v2795 = vadd.f32 %v2485, %v2794
      %2796 = vmatmul.f32.gmra.mxu0 %v2615
      %v2797 = vpop.f32.mrf.mxu0
      %v2798 = vadd.f32 %v2485, %v2797
      %2799 = vmatmul.f32.gmra.mxu0 %v2618
      %v2800 = vpop.f32.mrf.mxu0
      %v2801 = vadd.f32 %v2485, %v2800
      %2802 = vmatmul.f32.gmra.mxu0 %v2621
      %v2803 = vpop.f32.mrf.mxu0
      %v2804 = vadd.f32 %v2485, %v2803
      %2805 = vmatmul.f32.gmra.mxu0 %v2624
      %v2806 = vpop.f32.mrf.mxu0
      %v2807 = vadd.f32 %v2485, %v2806
      %2808 = vmatmul.f32.gmra.mxu0 %v2627
      %v2809 = vpop.f32.mrf.mxu0
      %v2810 = vadd.f32 %v2485, %v2809
      %2811 = vmatmul.f32.gmra.mxu0 %v2630
      %v2812 = vpop.f32.mrf.mxu0
      %v2813 = vadd.f32 %v2485, %v2812
      %2814 = vmatmul.f32.gmra.mxu0 %v2633
      %v2815 = vpop.f32.mrf.mxu0
      %v2816 = vadd.f32 %v2485, %v2815
      %2817 = vmatmul.f32.gmra.mxu0 %v2636
      %v2818 = vpop.f32.mrf.mxu0
      %v2819 = vadd.f32 %v2485, %v2818
      %2820 = vmatmul.f32.gmra.mxu0 %v2639
      %v2821 = vpop.f32.mrf.mxu0
      %v2822 = vadd.f32 %v2485, %v2821
      %2823 = vmatmul.f32.gmra.mxu0 %v2642
      %v2824 = vpop.f32.mrf.mxu0
      %v2825 = vadd.f32 %v2485, %v2824
      %2826 = vmatmul.f32.gmra.mxu0 %v2645
      %v2827 = vpop.f32.mrf.mxu0
      %v2828 = vadd.f32 %v2485, %v2827
      %2829 = vmatmul.f32.gmra.mxu0 %v2648
      %v2830 = vpop.f32.mrf.mxu0
      %v2831 = vadd.f32 %v2485, %v2830
      %2832 = vdwg.mxu0
      %v2833 = vmax.f32 %v2672, 0.0
      %v2834 = vmax.f32 %v2675, 0.0
      %v2835 = vmax.f32 %v2678, 0.0
      %v2836 = vmax.f32 %v2681, 0.0
      %v2837 = vmax.f32 %v2684, 0.0
      %v2838 = vmax.f32 %v2687, 0.0
      %v2839 = vmax.f32 %v2690, 0.0
      %v2840 = vmax.f32 %v2693, 0.0
      %v2841 = vmax.f32 %v2696, 0.0
      %v2842 = vmax.f32 %v2699, 0.0
      %v2843 = vmax.f32 %v2702, 0.0
      %v2844 = vmax.f32 %v2705, 0.0
      %v2845 = vmax.f32 %v2708, 0.0
      %v2846 = vmax.f32 %v2711, 0.0
      %v2847 = vmax.f32 %v2714, 0.0
      %v2848 = vmax.f32 %v2717, 0.0
      %v2849 = vmax.f32 %v2720, 0.0
      %v2850 = vmax.f32 %v2723, 0.0
      %v2851 = vmax.f32 %v2726, 0.0
      %v2852 = vmax.f32 %v2729, 0.0
      %v2853 = vmax.f32 %v2732, 0.0
      %v2854 = vmax.f32 %v2735, 0.0
      %v2855 = vmax.f32 %v2738, 0.0
      %v2856 = vmax.f32 %v2741, 0.0
      %v2857 = vmax.f32 %v2744, 0.0
      %v2858 = vmax.f32 %v2747, 0.0
      %v2859 = vmax.f32 %v2750, 0.0
      %v2860 = vmax.f32 %v2753, 0.0
      %v2861 = vmax.f32 %v2756, 0.0
      %v2862 = vmax.f32 %v2759, 0.0
      %v2863 = vmax.f32 %v2762, 0.0
      %v2864 = vmax.f32 %v2765, 0.0
      %v2865 = vmax.f32 %v2768, 0.0
      %v2866 = vmax.f32 %v2771, 0.0
      %v2867 = vmax.f32 %v2774, 0.0
      %v2868 = vmax.f32 %v2777, 0.0
      %v2869 = vmax.f32 %v2780, 0.0
      %v2870 = vmax.f32 %v2783, 0.0
      %v2871 = vmax.f32 %v2786, 0.0
      %v2872 = vmax.f32 %v2789, 0.0
      %v2873 = vmax.f32 %v2792, 0.0
      %v2874 = vmax.f32 %v2795, 0.0
      %v2875 = vmax.f32 %v2798, 0.0
      %v2876 = vmax.f32 %v2801, 0.0
      %v2877 = vmax.f32 %v2804, 0.0
      %v2878 = vmax.f32 %v2807, 0.0
      %v2879 = vmax.f32 %v2810, 0.0
      %v2880 = vmax.f32 %v2813, 0.0
      %v2881 = vmax.f32 %v2816, 0.0
      %v2882 = vmax.f32 %v2819, 0.0
      %v2883 = vmax.f32 %v2822, 0.0
      %v2884 = vmax.f32 %v2825, 0.0
      %v2885 = vmax.f32 %v2828, 0.0
      %v2886 = vmax.f32 %v2831, 0.0
      %v2887 = vld [vmem:[%s1] sm:$0xff]
      %v2888 = vld [vmem:[%s1 + $0x8] sm:$0xff]
      %v2889 = vld [vmem:[%s1 + $0x10] sm:$0xff]
      %v2890 = vld [vmem:[%s1 + $0x18] sm:$0xff]
      %v2891 = vld [vmem:[%s1 + $0x20] sm:$0xff]
      %v2892 = vld [vmem:[%s1 + $0x28] sm:$0xff]
      %v2893 = vld [vmem:[%s1 + $0x30] sm:$0xff]
      %v2894 = vld [vmem:[%s1 + $0x38] sm:$0xff]
      %v2895 = vld [vmem:[%s1 + $0x40] sm:$0xff]
      %v2896 = vld [vmem:[%s1 + $0x48] sm:$0xff]
      %v2897 = vld [vmem:[%s1 + $0x50] sm:$0xff]
      %v2898 = vld [vmem:[%s1 + $0x58] sm:$0xff]
      %v2899 = vld [vmem:[%s1 + $0x60] sm:$0xff]
      %v2900 = vld [vmem:[%s1 + $0x68] sm:$0xff]
      %v2901 = vld [vmem:[%s1 + $0x70] sm:$0xff]
      %v2902 = vld [vmem:[%s1 + $0x78] sm:$0xff]
      %v2903 = vld [vmem:[%s1 + $0x80] sm:$0xff]
      %v2904 = vld [vmem:[%s1 + $0x88] sm:$0xff]
      %v2905 = vld [vmem:[%s1 + $0x90] sm:$0xff]
      %v2906 = vld [vmem:[%s1 + $0x98] sm:$0xff]
      %v2907 = vld [vmem:[%s1 + $0xa0] sm:$0xff]
      %v2908 = vld [vmem:[%s1 + $0xa8] sm:$0xff]
      %v2909 = vld [vmem:[%s1 + $0xb0] sm:$0xff]
      %v2910 = vld [vmem:[%s1 + $0xb8] sm:$0xff]
      %v2911 = vld [vmem:[%s1 + $0xc0] sm:$0xff]
      %v2912 = vld [vmem:[%s1 + $0xc8] sm:$0xff]
      %v2913 = vld [vmem:[%s1 + $0xd0] sm:$0xff]
      %v2914 = vld [vmem:[%s1 + $0xd8] sm:$0xff]
      %v2915 = vld [vmem:[%s1 + $0xe0] sm:$0xff]
      %v2916 = vld [vmem:[%s1 + $0xe8] sm:$0xff]
      %v2917 = vld [vmem:[%s1 + $0xf0] sm:$0xff]
      %v2918 = vld [vmem:[%s1 + $0xf8] sm:$0xff]
      %v2919 = vld [vmem:[%s1 + $0x100] sm:$0xff]
      %v2920 = vld [vmem:[%s1 + $0x108] sm:$0xff]
      %v2921 = vld [vmem:[%s1 + $0x110] sm:$0xff]
      %v2922 = vld [vmem:[%s1 + $0x118] sm:$0xff]
      %v2923 = vld [vmem:[%s1 + $0x120] sm:$0xff]
      %v2924 = vld [vmem:[%s1 + $0x128] sm:$0xff]
      %v2925 = vld [vmem:[%s1 + $0x130] sm:$0xff]
      %v2926 = vld [vmem:[%s1 + $0x138] sm:$0xff]
      %v2927 = vld [vmem:[%s1 + $0x140] sm:$0xff]
      %v2928 = vld [vmem:[%s1 + $0x148] sm:$0xff]
      %v2929 = vld [vmem:[%s1 + $0x150] sm:$0xff]
      %v2930 = vld [vmem:[%s1 + $0x158] sm:$0xff]
      %v2931 = vld [vmem:[%s1 + $0x160] sm:$0xff]
      %v2932 = vld [vmem:[%s1 + $0x168] sm:$0xff]
      %v2933 = vld [vmem:[%s1 + $0x170] sm:$0xff]
      %v2934 = vld [vmem:[%s1 + $0x178] sm:$0xff]
      %v2935 = vld [vmem:[%s1 + $0x180] sm:$0xff]
      %v2936 = vld [vmem:[%s1 + $0x188] sm:$0xff]
      %v2937 = vld [vmem:[%s1 + $0x190] sm:$0xff]
      %v2938 = vld [vmem:[%s1 + $0x198] sm:$0xff]
      %v2939 = vld [vmem:[%s1 + $0x1a0] sm:$0xff]
      %v2940 = vld [vmem:[%s1 + $0x1a8] sm:$0xff]
      %2942 = vset.pattern.permute.xlu0 0
      %2943 = vperm.xlu0 %2942, %v2887
      %v2944 = vpop.permute.xlu0 %2943
      %2947 = vset.pattern.permute.xlu0 0
      %2948 = vperm.xlu0 %2947, %v2888
      %v2949 = vpop.permute.xlu0 %2948
      %2952 = vset.pattern.permute.xlu0 0
      %2953 = vperm.xlu0 %2952, %v2889
      %v2954 = vpop.permute.xlu0 %2953
      %2957 = vset.pattern.permute.xlu0 0
      %2958 = vperm.xlu0 %2957, %v2890
      %v2959 = vpop.permute.xlu0 %2958
      %2962 = vset.pattern.permute.xlu0 0
      %2963 = vperm.xlu0 %2962, %v2891
      %v2964 = vpop.permute.xlu0 %2963
      %2967 = vset.pattern.permute.xlu0 0
      %2968 = vperm.xlu0 %2967, %v2892
      %v2969 = vpop.permute.xlu0 %2968
      %2972 = vset.pattern.permute.xlu0 0
      %2973 = vperm.xlu0 %2972, %v2893
      %v2974 = vpop.permute.xlu0 %2973
      %2977 = vset.pattern.permute.xlu0 0
      %2978 = vperm.xlu0 %2977, %v2894
      %v2979 = vpop.permute.xlu0 %2978
      %2982 = vset.pattern.permute.xlu0 0
      %2983 = vperm.xlu0 %2982, %v2895
      %v2984 = vpop.permute.xlu0 %2983
      %2987 = vset.pattern.permute.xlu0 0
      %2988 = vperm.xlu0 %2987, %v2896
      %v2989 = vpop.permute.xlu0 %2988
      %2992 = vset.pattern.permute.xlu0 0
      %2993 = vperm.xlu0 %2992, %v2897
      %v2994 = vpop.permute.xlu0 %2993
      %2997 = vset.pattern.permute.xlu0 0
      %2998 = vperm.xlu0 %2997, %v2898
      %v2999 = vpop.permute.xlu0 %2998
      %3002 = vset.pattern.permute.xlu0 0
      %3003 = vperm.xlu0 %3002, %v2899
      %v3004 = vpop.permute.xlu0 %3003
      %3007 = vset.pattern.permute.xlu0 0
      %3008 = vperm.xlu0 %3007, %v2900
      %v3009 = vpop.permute.xlu0 %3008
      %3012 = vset.pattern.permute.xlu0 0
      %3013 = vperm.xlu0 %3012, %v2901
      %v3014 = vpop.permute.xlu0 %3013
      %3017 = vset.pattern.permute.xlu0 0
      %3018 = vperm.xlu0 %3017, %v2902
      %v3019 = vpop.permute.xlu0 %3018
      %3022 = vset.pattern.permute.xlu0 0
      %3023 = vperm.xlu0 %3022, %v2903
      %v3024 = vpop.permute.xlu0 %3023
      %3027 = vset.pattern.permute.xlu0 0
      %3028 = vperm.xlu0 %3027, %v2904
      %v3029 = vpop.permute.xlu0 %3028
      %3032 = vset.pattern.permute.xlu0 0
      %3033 = vperm.xlu0 %3032, %v2905
      %v3034 = vpop.permute.xlu0 %3033
      %3037 = vset.pattern.permute.xlu0 0
      %3038 = vperm.xlu0 %3037, %v2906
      %v3039 = vpop.permute.xlu0 %3038
      %3042 = vset.pattern.permute.xlu0 0
      %3043 = vperm.xlu0 %3042, %v2907
      %v3044 = vpop.permute.xlu0 %3043
      %3047 = vset.pattern.permute.xlu0 0
      %3048 = vperm.xlu0 %3047, %v2908
      %v3049 = vpop.permute.xlu0 %3048
      %3052 = vset.pattern.permute.xlu0 0
      %3053 = vperm.xlu0 %3052, %v2909
      %v3054 = vpop.permute.xlu0 %3053
      %3057 = vset.pattern.permute.xlu0 0
      %3058 = vperm.xlu0 %3057, %v2910
      %v3059 = vpop.permute.xlu0 %3058
      %3062 = vset.pattern.permute.xlu0 0
      %3063 = vperm.xlu0 %3062, %v2911
      %v3064 = vpop.permute.xlu0 %3063
      %3067 = vset.pattern.permute.xlu0 0
      %3068 = vperm.xlu0 %3067, %v2912
      %v3069 = vpop.permute.xlu0 %3068
      %3072 = vset.pattern.permute.xlu0 0
      %3073 = vperm.xlu0 %3072, %v2913
      %v3074 = vpop.permute.xlu0 %3073
      %3077 = vset.pattern.permute.xlu0 0
      %3078 = vperm.xlu0 %3077, %v2914
      %v3079 = vpop.permute.xlu0 %3078
      %3082 = vset.pattern.permute.xlu0 0
      %3083 = vperm.xlu0 %3082, %v2915
      %v3084 = vpop.permute.xlu0 %3083
      %3087 = vset.pattern.permute.xlu0 0
      %3088 = vperm.xlu0 %3087, %v2916
      %v3089 = vpop.permute.xlu0 %3088
      %3092 = vset.pattern.permute.xlu0 0
      %3093 = vperm.xlu0 %3092, %v2917
      %v3094 = vpop.permute.xlu0 %3093
      %3097 = vset.pattern.permute.xlu0 0
      %3098 = vperm.xlu0 %3097, %v2918
      %v3099 = vpop.permute.xlu0 %3098
      %3102 = vset.pattern.permute.xlu0 0
      %3103 = vperm.xlu0 %3102, %v2919
      %v3104 = vpop.permute.xlu0 %3103
      %3107 = vset.pattern.permute.xlu0 0
      %3108 = vperm.xlu0 %3107, %v2920
      %v3109 = vpop.permute.xlu0 %3108
      %3112 = vset.pattern.permute.xlu0 0
      %3113 = vperm.xlu0 %3112, %v2921
      %v3114 = vpop.permute.xlu0 %3113
      %3117 = vset.pattern.permute.xlu0 0
      %3118 = vperm.xlu0 %3117, %v2922
      %v3119 = vpop.permute.xlu0 %3118
      %3122 = vset.pattern.permute.xlu0 0
      %3123 = vperm.xlu0 %3122, %v2923
      %v3124 = vpop.permute.xlu0 %3123
      %3127 = vset.pattern.permute.xlu0 0
      %3128 = vperm.xlu0 %3127, %v2924
      %v3129 = vpop.permute.xlu0 %3128
      %3132 = vset.pattern.permute.xlu0 0
      %3133 = vperm.xlu0 %3132, %v2925
      %v3134 = vpop.permute.xlu0 %3133
      %3137 = vset.pattern.permute.xlu0 0
      %3138 = vperm.xlu0 %3137, %v2926
      %v3139 = vpop.permute.xlu0 %3138
      %3142 = vset.pattern.permute.xlu0 0
      %3143 = vperm.xlu0 %3142, %v2927
      %v3144 = vpop.permute.xlu0 %3143
      %3147 = vset.pattern.permute.xlu0 0
      %3148 = vperm.xlu0 %3147, %v2928
      %v3149 = vpop.permute.xlu0 %3148
      %3152 = vset.pattern.permute.xlu0 0
      %3153 = vperm.xlu0 %3152, %v2929
      %v3154 = vpop.permute.xlu0 %3153
      %3157 = vset.pattern.permute.xlu0 0
      %3158 = vperm.xlu0 %3157, %v2930
      %v3159 = vpop.permute.xlu0 %3158
      %3162 = vset.pattern.permute.xlu0 0
      %3163 = vperm.xlu0 %3162, %v2931
      %v3164 = vpop.permute.xlu0 %3163
      %3167 = vset.pattern.permute.xlu0 0
      %3168 = vperm.xlu0 %3167, %v2932
      %v3169 = vpop.permute.xlu0 %3168
      %3172 = vset.pattern.permute.xlu0 0
      %3173 = vperm.xlu0 %3172, %v2933
      %v3174 = vpop.permute.xlu0 %3173
      %3177 = vset.pattern.permute.xlu0 0
      %3178 = vperm.xlu0 %3177, %v2934
      %v3179 = vpop.permute.xlu0 %3178
      %3182 = vset.pattern.permute.xlu0 0
      %3183 = vperm.xlu0 %3182, %v2935
      %v3184 = vpop.permute.xlu0 %3183
      %3187 = vset.pattern.permute.xlu0 0
      %3188 = vperm.xlu0 %3187, %v2936
      %v3189 = vpop.permute.xlu0 %3188
      %3192 = vset.pattern.permute.xlu0 0
      %3193 = vperm.xlu0 %3192, %v2937
      %v3194 = vpop.permute.xlu0 %3193
      %3197 = vset.pattern.permute.xlu0 0
      %3198 = vperm.xlu0 %3197, %v2938
      %v3199 = vpop.permute.xlu0 %3198
      %3202 = vset.pattern.permute.xlu0 0
      %3203 = vperm.xlu0 %3202, %v2939
      %v3204 = vpop.permute.xlu0 %3203
      %3207 = vset.pattern.permute.xlu0 0
      %3208 = vperm.xlu0 %3207, %v2940
      %v3209 = vpop.permute.xlu0 %3208
      %v3211 = vmul.f32 %v2833, %v2944
      %v3212 = vmul.f32 %v2834, %v2949
      %v3213 = vmul.f32 %v2835, %v2954
      %v3214 = vmul.f32 %v2836, %v2959
      %v3215 = vmul.f32 %v2837, %v2964
      %v3216 = vmul.f32 %v2838, %v2969
      %v3217 = vmul.f32 %v2839, %v2974
      %v3218 = vmul.f32 %v2840, %v2979
      %v3219 = vmul.f32 %v2841, %v2984
      %v3220 = vmul.f32 %v2842, %v2989
      %v3221 = vmul.f32 %v2843, %v2994
      %v3222 = vmul.f32 %v2844, %v2999
      %v3223 = vmul.f32 %v2845, %v3004
      %v3224 = vmul.f32 %v2846, %v3009
      %v3225 = vmul.f32 %v2847, %v3014
      %v3226 = vmul.f32 %v2848, %v3019
      %v3227 = vmul.f32 %v2849, %v3024
      %v3228 = vmul.f32 %v2850, %v3029
      %v3229 = vmul.f32 %v2851, %v3034
      %v3230 = vmul.f32 %v2852, %v3039
      %v3231 = vmul.f32 %v2853, %v3044
      %v3232 = vmul.f32 %v2854, %v3049
      %v3233 = vmul.f32 %v2855, %v3054
      %v3234 = vmul.f32 %v2856, %v3059
      %v3235 = vmul.f32 %v2857, %v3064
      %v3236 = vmul.f32 %v2858, %v3069
      %v3237 = vmul.f32 %v2859, %v3074
      %v3238 = vmul.f32 %v2860, %v3079
      %v3239 = vmul.f32 %v2861, %v3084
      %v3240 = vmul.f32 %v2862, %v3089
      %v3241 = vmul.f32 %v2863, %v3094
      %v3242 = vmul.f32 %v2864, %v3099
      %v3243 = vmul.f32 %v2865, %v3104
      %v3244 = vmul.f32 %v2866, %v3109
      %v3245 = vmul.f32 %v2867, %v3114
      %v3246 = vmul.f32 %v2868, %v3119
      %v3247 = vmul.f32 %v2869, %v3124
      %v3248 = vmul.f32 %v2870, %v3129
      %v3249 = vmul.f32 %v2871, %v3134
      %v3250 = vmul.f32 %v2872, %v3139
      %v3251 = vmul.f32 %v2873, %v3144
      %v3252 = vmul.f32 %v2874, %v3149
      %v3253 = vmul.f32 %v2875, %v3154
      %v3254 = vmul.f32 %v2876, %v3159
      %v3255 = vmul.f32 %v2877, %v3164
      %v3256 = vmul.f32 %v2878, %v3169
      %v3257 = vmul.f32 %v2879, %v3174
      %v3258 = vmul.f32 %v2880, %v3179
      %v3259 = vmul.f32 %v2881, %v3184
      %v3260 = vmul.f32 %v2882, %v3189
      %v3261 = vmul.f32 %v2883, %v3194
      %v3262 = vmul.f32 %v2884, %v3199
      %v3263 = vmul.f32 %v2885, %v3204
      %v3264 = vmul.f32 %v2886, %v3209
      %v3265 = vrot.slane %v3211, 7
      %v3266 = vrot.slane %v3212, 7
      %v3267 = vrot.slane %v3213, 7
      %v3268 = vrot.slane %v3214, 7
      %v3269 = vrot.slane %v3215, 7
      %v3270 = vrot.slane %v3216, 7
      %v3271 = vrot.slane %v3217, 7
      %v3272 = vrot.slane %v3218, 7
      %v3273 = vrot.slane %v3219, 7
      %v3274 = vrot.slane %v3220, 7
      %v3275 = vrot.slane %v3221, 7
      %v3276 = vrot.slane %v3222, 7
      %v3277 = vrot.slane %v3223, 7
      %v3278 = vrot.slane %v3224, 7
      %v3279 = vrot.slane %v3225, 7
      %v3280 = vrot.slane %v3226, 7
      %v3281 = vrot.slane %v3227, 7
      %v3282 = vrot.slane %v3228, 7
      %v3283 = vrot.slane %v3229, 7
      %v3284 = vrot.slane %v3230, 7
      %v3285 = vrot.slane %v3231, 7
      %v3286 = vrot.slane %v3232, 7
      %v3287 = vrot.slane %v3233, 7
      %v3288 = vrot.slane %v3234, 7
      %v3289 = vrot.slane %v3235, 7
      %v3290 = vrot.slane %v3236, 7
      %v3291 = vrot.slane %v3237, 7
      %v3292 = vrot.slane %v3238, 7
      %v3293 = vrot.slane %v3239, 7
      %v3294 = vrot.slane %v3240, 7
      %v3295 = vrot.slane %v3241, 7
      %v3296 = vrot.slane %v3242, 7
      %v3297 = vrot.slane %v3243, 7
      %v3298 = vrot.slane %v3244, 7
      %v3299 = vrot.slane %v3245, 7
      %v3300 = vrot.slane %v3246, 7
      %v3301 = vrot.slane %v3247, 7
      %v3302 = vrot.slane %v3248, 7
      %v3303 = vrot.slane %v3249, 7
      %v3304 = vrot.slane %v3250, 7
      %v3305 = vrot.slane %v3251, 7
      %v3306 = vrot.slane %v3252, 7
      %v3307 = vrot.slane %v3253, 7
      %v3308 = vrot.slane %v3254, 7
      %v3309 = vrot.slane %v3255, 7
      %v3310 = vrot.slane %v3256, 7
      %v3311 = vrot.slane %v3257, 7
      %v3312 = vrot.slane %v3258, 7
      %v3313 = vrot.slane %v3259, 7
      %v3314 = vrot.slane %v3260, 7
      %v3315 = vrot.slane %v3261, 7
      %v3316 = vrot.slane %v3262, 7
      %v3317 = vrot.slane %v3263, 7
      %v3318 = vrot.slane %v3264, 7
      %v3319 = vsel %vm416, %v3317, %v3318
      %v3320 = vsel %vm416, %v3316, %v3317
      %v3321 = vsel %vm416, %v3315, %v3316
      %v3322 = vsel %vm416, %v3314, %v3315
      %v3323 = vsel %vm416, %v3313, %v3314
      %v3324 = vsel %vm416, %v3312, %v3313
      %v3325 = vsel %vm416, %v3311, %v3312
      %v3326 = vsel %vm416, %v3310, %v3311
      %v3327 = vsel %vm416, %v3309, %v3310
      %v3328 = vsel %vm416, %v3308, %v3309
      %v3329 = vsel %vm416, %v3307, %v3308
      %v3330 = vsel %vm416, %v3306, %v3307
      %v3331 = vsel %vm416, %v3305, %v3306
      %v3332 = vsel %vm416, %v3304, %v3305
      %v3333 = vsel %vm416, %v3303, %v3304
      %v3334 = vsel %vm416, %v3302, %v3303
      %v3335 = vsel %vm416, %v3301, %v3302
      %v3336 = vsel %vm416, %v3300, %v3301
      %v3337 = vsel %vm416, %v3299, %v3300
      %v3338 = vsel %vm416, %v3298, %v3299
      %v3339 = vsel %vm416, %v3297, %v3298
      %v3340 = vsel %vm416, %v3296, %v3297
      %v3341 = vsel %vm416, %v3295, %v3296
      %v3342 = vsel %vm416, %v3294, %v3295
      %v3343 = vsel %vm416, %v3293, %v3294
      %v3344 = vsel %vm416, %v3292, %v3293
      %v3345 = vsel %vm416, %v3291, %v3292
      %v3346 = vsel %vm416, %v3290, %v3291
      %v3347 = vsel %vm416, %v3289, %v3290
      %v3348 = vsel %vm416, %v3288, %v3289
      %v3349 = vsel %vm416, %v3287, %v3288
      %v3350 = vsel %vm416, %v3286, %v3287
      %v3351 = vsel %vm416, %v3285, %v3286
      %v3352 = vsel %vm416, %v3284, %v3285
      %v3353 = vsel %vm416, %v3283, %v3284
      %v3354 = vsel %vm416, %v3282, %v3283
      %v3355 = vsel %vm416, %v3281, %v3282
      %v3356 = vsel %vm416, %v3280, %v3281
      %v3357 = vsel %vm416, %v3279, %v3280
      %v3358 = vsel %vm416, %v3278, %v3279
      %v3359 = vsel %vm416, %v3277, %v3278
      %v3360 = vsel %vm416, %v3276, %v3277
      %v3361 = vsel %vm416, %v3275, %v3276
      %v3362 = vsel %vm416, %v3274, %v3275
      %v3363 = vsel %vm416, %v3273, %v3274
      %v3364 = vsel %vm416, %v3272, %v3273
      %v3365 = vsel %vm416, %v3271, %v3272
      %v3366 = vsel %vm416, %v3270, %v3271
      %v3367 = vsel %vm416, %v3269, %v3270
      %v3368 = vsel %vm416, %v3268, %v3269
      %v3369 = vsel %vm416, %v3267, %v3268
      %v3370 = vsel %vm416, %v3266, %v3267
      %v3371 = vsel %vm416, %v3265, %v3266
      %v3372 = vsel %vm416, %v3318, %v3265
      %3373 = vst [vmem:[#allocation2] sm:$0xff] %v3321
      %3374 = vst [vmem:[#allocation2 + $0x48] sm:$0xff] %v3320
      %3375 = vst [vmem:[#allocation2 + $0x90] sm:$0xff] %v3319
      %3376 = vst [vmem:[#allocation2 + $0xd8] sm:$0xff] %v3372
      %3377 = vst [vmem:[#allocation2 + $0x120] sm:$0xff] %v3371
      %3378 = vst [vmem:[#allocation2 + $0x168] sm:$0xff] %v3370
      %3379 = vst [vmem:[#allocation2 + $0x1b0] sm:$0xff] %v3369
      %3380 = vst [vmem:[#allocation2 + $0x1f8] sm:$0xff] %v3368
      %3381 = vst [vmem:[#allocation2 + $0x240] sm:$0xff] %v3367
      %3382 = vst [vmem:[#allocation2 + $0x288] sm:$0xff] %v3366
      %3383 = vst [vmem:[#allocation2 + $0x2d0] sm:$0xff] %v3365
      %3384 = vst [vmem:[#allocation2 + $0x318] sm:$0xff] %v3364
      %3385 = vst [vmem:[#allocation2 + $0x360] sm:$0xff] %v3363
      %3386 = vst [vmem:[#allocation2 + $0x3a8] sm:$0xff] %v3362
      %3387 = vst [vmem:[#allocation2 + $0x3f0] sm:$0xff] %v3361
      %3388 = vst [vmem:[#allocation2 + $0x438] sm:$0xff] %v3360
      %3389 = vst [vmem:[#allocation2 + $0x480] sm:$0xff] %v3359
      %3390 = vst [vmem:[#allocation2 + $0x4c8] sm:$0xff] %v3358
      %3391 = vst [vmem:[#allocation2 + $0x510] sm:$0xff] %v3357
      %3392 = vst [vmem:[#allocation2 + $0x558] sm:$0xff] %v3356
      %3393 = vst [vmem:[#allocation2 + $0x5a0] sm:$0xff] %v3355
      %3394 = vst [vmem:[#allocation2 + $0x5e8] sm:$0xff] %v3354
      %3395 = vst [vmem:[#allocation2 + $0x630] sm:$0xff] %v3353
      %3396 = vst [vmem:[#allocation2 + $0x678] sm:$0xff] %v3352
      %3397 = vst [vmem:[#allocation2 + $0x6c0] sm:$0xff] %v3351
      %3398 = vst [vmem:[#allocation2 + $0x708] sm:$0xff] %v3350
      %3399 = vst [vmem:[#allocation2 + $0x750] sm:$0xff] %v3349
      %3400 = vst [vmem:[#allocation2 + $0x798] sm:$0xff] %v3348
      %3401 = vst [vmem:[#allocation2 + $0x7e0] sm:$0xff] %v3347
      %3402 = vst [vmem:[#allocation2 + $0x828] sm:$0xff] %v3346
      %3403 = vst [vmem:[#allocation2 + $0x870] sm:$0xff] %v3345
      %3404 = vst [vmem:[#allocation2 + $0x8b8] sm:$0xff] %v3344
      %3405 = vst [vmem:[#allocation2 + $0x900] sm:$0xff] %v3343
      %3406 = vst [vmem:[#allocation2 + $0x948] sm:$0xff] %v3342
      %3407 = vst [vmem:[#allocation2 + $0x990] sm:$0xff] %v3341
      %3408 = vst [vmem:[#allocation2 + $0x9d8] sm:$0xff] %v3340
      %3409 = vst [vmem:[#allocation2 + $0xa20] sm:$0xff] %v3339
      %3410 = vst [vmem:[#allocation2 + $0xa68] sm:$0xff] %v3338
      %3411 = vst [vmem:[#allocation2 + $0xab0] sm:$0xff] %v3337
      %3412 = vst [vmem:[#allocation2 + $0xaf8] sm:$0xff] %v3336
      %3413 = vst [vmem:[#allocation2 + $0xb40] sm:$0xff] %v3335
      %3414 = vst [vmem:[#allocation2 + $0xb88] sm:$0xff] %v3334
      %3415 = vst [vmem:[#allocation2 + $0xbd0] sm:$0xff] %v3333
      %3416 = vst [vmem:[#allocation2 + $0xc18] sm:$0xff] %v3332
      %3417 = vst [vmem:[#allocation2 + $0xc60] sm:$0xff] %v3331
      %3418 = vst [vmem:[#allocation2 + $0xca8] sm:$0xff] %v3330
      %3419 = vst [vmem:[#allocation2 + $0xcf0] sm:$0xff] %v3329
      %3420 = vst [vmem:[#allocation2 + $0xd38] sm:$0xff] %v3328
      %3421 = vst [vmem:[#allocation2 + $0xd80] sm:$0xff] %v3327
      %3422 = vst [vmem:[#allocation2 + $0xdc8] sm:$0xff] %v3326
      %3423 = vst [vmem:[#allocation2 + $0xe10] sm:$0xff] %v3325
      %3424 = vst [vmem:[#allocation2 + $0xe58] sm:$0xff] %v3324
      %3425 = vst [vmem:[#allocation2 + $0xea0] sm:$0xff] %v3323
      %3426 = vst [vmem:[#allocation2 + $0xee8] sm:$0xff] %v3322
      %3427 = vst [vmem:[#allocation2 + $0x8] sm:$0xff] %v3262
      %3428 = vst [vmem:[#allocation2 + $0x50] sm:$0xff] %v3263
      %3429 = vst [vmem:[#allocation2 + $0x98] sm:$0xff] %v3264
      %3430 = vst [vmem:[#allocation2 + $0xe0] sm:$0xff] %v3211
      %3431 = vst [vmem:[#allocation2 + $0x128] sm:$0xff] %v3212
      %3432 = vst [vmem:[#allocation2 + $0x170] sm:$0xff] %v3213
      %3433 = vst [vmem:[#allocation2 + $0x1b8] sm:$0xff] %v3214
      %3434 = vst [vmem:[#allocation2 + $0x200] sm:$0xff] %v3215
      %3435 = vst [vmem:[#allocation2 + $0x248] sm:$0xff] %v3216
      %3436 = vst [vmem:[#allocation2 + $0x290] sm:$0xff] %v3217
      %3437 = vst [vmem:[#allocation2 + $0x2d8] sm:$0xff] %v3218
      %3438 = vst [vmem:[#allocation2 + $0x320] sm:$0xff] %v3219
      %3439 = vst [vmem:[#allocation2 + $0x368] sm:$0xff] %v3220
      %3440 = vst [vmem:[#allocation2 + $0x3b0] sm:$0xff] %v3221
      %3441 = vst [vmem:[#allocation2 + $0x3f8] sm:$0xff] %v3222
      %3442 = vst [vmem:[#allocation2 + $0x440] sm:$0xff] %v3223
      %3443 = vst [vmem:[#allocation2 + $0x488] sm:$0xff] %v3224
      %3444 = vst [vmem:[#allocation2 + $0x4d0] sm:$0xff] %v3225
      %3445 = vst [vmem:[#allocation2 + $0x518] sm:$0xff] %v3226
      %3446 = vst [vmem:[#allocation2 + $0x560] sm:$0xff] %v3227
      %3447 = vst [vmem:[#allocation2 + $0x5a8] sm:$0xff] %v3228
      %3448 = vst [vmem:[#allocation2 + $0x5f0] sm:$0xff] %v3229
      %3449 = vst [vmem:[#allocation2 + $0x638] sm:$0xff] %v3230
      %3450 = vst [vmem:[#allocation2 + $0x680] sm:$0xff] %v3231
      %3451 = vst [vmem:[#allocation2 + $0x6c8] sm:$0xff] %v3232
      %3452 = vst [vmem:[#allocation2 + $0x710] sm:$0xff] %v3233
      %3453 = vst [vmem:[#allocation2 + $0x758] sm:$0xff] %v3234
      %3454 = vst [vmem:[#allocation2 + $0x7a0] sm:$0xff] %v3235
      %3455 = vst [vmem:[#allocation2 + $0x7e8] sm:$0xff] %v3236
      %3456 = vst [vmem:[#allocation2 + $0x830] sm:$0xff] %v3237
      %3457 = vst [vmem:[#allocation2 + $0x878] sm:$0xff] %v3238
      %3458 = vst [vmem:[#allocation2 + $0x8c0] sm:$0xff] %v3239
      %3459 = vst [vmem:[#allocation2 + $0x908] sm:$0xff] %v3240
      %3460 = vst [vmem:[#allocation2 + $0x950] sm:$0xff] %v3241
      %3461 = vst [vmem:[#allocation2 + $0x998] sm:$0xff] %v3242
      %3462 = vst [vmem:[#allocation2 + $0x9e0] sm:$0xff] %v3243
      %3463 = vst [vmem:[#allocation2 + $0xa28] sm:$0xff] %v3244
      %3464 = vst [vmem:[#allocation2 + $0xa70] sm:$0xff] %v3245
      %3465 = vst [vmem:[#allocation2 + $0xab8] sm:$0xff] %v3246
      %3466 = vst [vmem:[#allocation2 + $0xb00] sm:$0xff] %v3247
      %3467 = vst [vmem:[#allocation2 + $0xb48] sm:$0xff] %v3248
      %3468 = vst [vmem:[#allocation2 + $0xb90] sm:$0xff] %v3249
      %3469 = vst [vmem:[#allocation2 + $0xbd8] sm:$0xff] %v3250
      %3470 = vst [vmem:[#allocation2 + $0xc20] sm:$0xff] %v3251
      %3471 = vst [vmem:[#allocation2 + $0xc68] sm:$0xff] %v3252
      %3472 = vst [vmem:[#allocation2 + $0xcb0] sm:$0xff] %v3253
      %3473 = vst [vmem:[#allocation2 + $0xcf8] sm:$0xff] %v3254
      %3474 = vst [vmem:[#allocation2 + $0xd40] sm:$0xff] %v3255
      %3475 = vst [vmem:[#allocation2 + $0xd88] sm:$0xff] %v3256
      %3476 = vst [vmem:[#allocation2 + $0xdd0] sm:$0xff] %v3257
      %3477 = vst [vmem:[#allocation2 + $0xe18] sm:$0xff] %v3258
      %3478 = vst [vmem:[#allocation2 + $0xe60] sm:$0xff] %v3259
      %3479 = vst [vmem:[#allocation2 + $0xea8] sm:$0xff] %v3260
      %3480 = vst [vmem:[#allocation2 + $0xef0] sm:$0xff] %v3261
      %v3481 = vrot.slane %v3211, 1
      %v3482 = vrot.slane %v3212, 1
      %v3483 = vrot.slane %v3213, 1
      %v3484 = vrot.slane %v3214, 1
      %v3485 = vrot.slane %v3215, 1
      %v3486 = vrot.slane %v3216, 1
      %v3487 = vrot.slane %v3217, 1
      %v3488 = vrot.slane %v3218, 1
      %v3489 = vrot.slane %v3219, 1
      %v3490 = vrot.slane %v3220, 1
      %v3491 = vrot.slane %v3221, 1
      %v3492 = vrot.slane %v3222, 1
      %v3493 = vrot.slane %v3223, 1
      %v3494 = vrot.slane %v3224, 1
      %v3495 = vrot.slane %v3225, 1
      %v3496 = vrot.slane %v3226, 1
      %v3497 = vrot.slane %v3227, 1
      %v3498 = vrot.slane %v3228, 1
      %v3499 = vrot.slane %v3229, 1
      %v3500 = vrot.slane %v3230, 1
      %v3501 = vrot.slane %v3231, 1
      %v3502 = vrot.slane %v3232, 1
      %v3503 = vrot.slane %v3233, 1
      %v3504 = vrot.slane %v3234, 1
      %v3505 = vrot.slane %v3235, 1
      %v3506 = vrot.slane %v3236, 1
      %v3507 = vrot.slane %v3237, 1
      %v3508 = vrot.slane %v3238, 1
      %v3509 = vrot.slane %v3239, 1
      %v3510 = vrot.slane %v3240, 1
      %v3511 = vrot.slane %v3241, 1
      %v3512 = vrot.slane %v3242, 1
      %v3513 = vrot.slane %v3243, 1
      %v3514 = vrot.slane %v3244, 1
      %v3515 = vrot.slane %v3245, 1
      %v3516 = vrot.slane %v3246, 1
      %v3517 = vrot.slane %v3247, 1
      %v3518 = vrot.slane %v3248, 1
      %v3519 = vrot.slane %v3249, 1
      %v3520 = vrot.slane %v3250, 1
      %v3521 = vrot.slane %v3251, 1
      %v3522 = vrot.slane %v3252, 1
      %v3523 = vrot.slane %v3253, 1
      %v3524 = vrot.slane %v3254, 1
      %v3525 = vrot.slane %v3255, 1
      %v3526 = vrot.slane %v3256, 1
      %v3527 = vrot.slane %v3257, 1
      %v3528 = vrot.slane %v3258, 1
      %v3529 = vrot.slane %v3259, 1
      %v3530 = vrot.slane %v3260, 1
      %v3531 = vrot.slane %v3261, 1
      %v3532 = vrot.slane %v3262, 1
      %v3533 = vrot.slane %v3263, 1
      %v3534 = vrot.slane %v3264, 1
      %v3535 = vsel %vm525, %v3533, %v3534
      %v3536 = vsel %vm525, %v3532, %v3533
      %v3537 = vsel %vm525, %v3531, %v3532
      %v3538 = vsel %vm525, %v3530, %v3531
      %v3539 = vsel %vm525, %v3529, %v3530
      %v3540 = vsel %vm525, %v3528, %v3529
      %v3541 = vsel %vm525, %v3527, %v3528
      %v3542 = vsel %vm525, %v3526, %v3527
      %v3543 = vsel %vm525, %v3525, %v3526
      %v3544 = vsel %vm525, %v3524, %v3525
      %v3545 = vsel %vm525, %v3523, %v3524
      %v3546 = vsel %vm525, %v3522, %v3523
      %v3547 = vsel %vm525, %v3521, %v3522
      %v3548 = vsel %vm525, %v3520, %v3521
      %v3549 = vsel %vm525, %v3519, %v3520
      %v3550 = vsel %vm525, %v3518, %v3519
      %v3551 = vsel %vm525, %v3517, %v3518
      %v3552 = vsel %vm525, %v3516, %v3517
      %v3553 = vsel %vm525, %v3515, %v3516
      %v3554 = vsel %vm525, %v3514, %v3515
      %v3555 = vsel %vm525, %v3513, %v3514
      %v3556 = vsel %vm525, %v3512, %v3513
      %v3557 = vsel %vm525, %v3511, %v3512
      %v3558 = vsel %vm525, %v3510, %v3511
      %v3559 = vsel %vm525, %v3509, %v3510
      %v3560 = vsel %vm525, %v3508, %v3509
      %v3561 = vsel %vm525, %v3507, %v3508
      %v3562 = vsel %vm525, %v3506, %v3507
      %v3563 = vsel %vm525, %v3505, %v3506
      %v3564 = vsel %vm525, %v3504, %v3505
      %v3565 = vsel %vm525, %v3503, %v3504
      %v3566 = vsel %vm525, %v3502, %v3503
      %v3567 = vsel %vm525, %v3501, %v3502
      %v3568 = vsel %vm525, %v3500, %v3501
      %v3569 = vsel %vm525, %v3499, %v3500
      %v3570 = vsel %vm525, %v3498, %v3499
      %v3571 = vsel %vm525, %v3497, %v3498
      %v3572 = vsel %vm525, %v3496, %v3497
      %v3573 = vsel %vm525, %v3495, %v3496
      %v3574 = vsel %vm525, %v3494, %v3495
      %v3575 = vsel %vm525, %v3493, %v3494
      %v3576 = vsel %vm525, %v3492, %v3493
      %v3577 = vsel %vm525, %v3491, %v3492
      %v3578 = vsel %vm525, %v3490, %v3491
      %v3579 = vsel %vm525, %v3489, %v3490
      %v3580 = vsel %vm525, %v3488, %v3489
      %v3581 = vsel %vm525, %v3487, %v3488
      %v3582 = vsel %vm525, %v3486, %v3487
      %v3583 = vsel %vm525, %v3485, %v3486
      %v3584 = vsel %vm525, %v3484, %v3485
      %v3585 = vsel %vm525, %v3483, %v3484
      %v3586 = vsel %vm525, %v3482, %v3483
      %v3587 = vsel %vm525, %v3481, %v3482
      %v3588 = vsel %vm525, %v3534, %v3481
      %3589 = vst [vmem:[#allocation2 + $0x10] sm:$0xff] %v3536
      %3590 = vst [vmem:[#allocation2 + $0x58] sm:$0xff] %v3535
      %3591 = vst [vmem:[#allocation2 + $0xa0] sm:$0xff] %v3588
      %3592 = vst [vmem:[#allocation2 + $0xe8] sm:$0xff] %v3587
      %3593 = vst [vmem:[#allocation2 + $0x130] sm:$0xff] %v3586
      %3594 = vst [vmem:[#allocation2 + $0x178] sm:$0xff] %v3585
      %3595 = vst [vmem:[#allocation2 + $0x1c0] sm:$0xff] %v3584
      %3596 = vst [vmem:[#allocation2 + $0x208] sm:$0xff] %v3583
      %3597 = vst [vmem:[#allocation2 + $0x250] sm:$0xff] %v3582
      %3598 = vst [vmem:[#allocation2 + $0x298] sm:$0xff] %v3581
      %3599 = vst [vmem:[#allocation2 + $0x2e0] sm:$0xff] %v3580
      %3600 = vst [vmem:[#allocation2 + $0x328] sm:$0xff] %v3579
      %3601 = vst [vmem:[#allocation2 + $0x370] sm:$0xff] %v3578
      %3602 = vst [vmem:[#allocation2 + $0x3b8] sm:$0xff] %v3577
      %3603 = vst [vmem:[#allocation2 + $0x400] sm:$0xff] %v3576
      %3604 = vst [vmem:[#allocation2 + $0x448] sm:$0xff] %v3575
      %3605 = vst [vmem:[#allocation2 + $0x490] sm:$0xff] %v3574
      %3606 = vst [vmem:[#allocation2 + $0x4d8] sm:$0xff] %v3573
      %3607 = vst [vmem:[#allocation2 + $0x520] sm:$0xff] %v3572
      %3608 = vst [vmem:[#allocation2 + $0x568] sm:$0xff] %v3571
      %3609 = vst [vmem:[#allocation2 + $0x5b0] sm:$0xff] %v3570
      %3610 = vst [vmem:[#allocation2 + $0x5f8] sm:$0xff] %v3569
      %3611 = vst [vmem:[#allocation2 + $0x640] sm:$0xff] %v3568
      %3612 = vst [vmem:[#allocation2 + $0x688] sm:$0xff] %v3567
      %3613 = vst [vmem:[#allocation2 + $0x6d0] sm:$0xff] %v3566
      %3614 = vst [vmem:[#allocation2 + $0x718] sm:$0xff] %v3565
      %3615 = vst [vmem:[#allocation2 + $0x760] sm:$0xff] %v3564
      %3616 = vst [vmem:[#allocation2 + $0x7a8] sm:$0xff] %v3563
      %3617 = vst [vmem:[#allocation2 + $0x7f0] sm:$0xff] %v3562
      %3618 = vst [vmem:[#allocation2 + $0x838] sm:$0xff] %v3561
      %3619 = vst [vmem:[#allocation2 + $0x880] sm:$0xff] %v3560
      %3620 = vst [vmem:[#allocation2 + $0x8c8] sm:$0xff] %v3559
      %3621 = vst [vmem:[#allocation2 + $0x910] sm:$0xff] %v3558
      %3622 = vst [vmem:[#allocation2 + $0x958] sm:$0xff] %v3557
      %3623 = vst [vmem:[#allocation2 + $0x9a0] sm:$0xff] %v3556
      %3624 = vst [vmem:[#allocation2 + $0x9e8] sm:$0xff] %v3555
      %3625 = vst [vmem:[#allocation2 + $0xa30] sm:$0xff] %v3554
      %3626 = vst [vmem:[#allocation2 + $0xa78] sm:$0xff] %v3553
      %3627 = vst [vmem:[#allocation2 + $0xac0] sm:$0xff] %v3552
      %3628 = vst [vmem:[#allocation2 + $0xb08] sm:$0xff] %v3551
      %3629 = vst [vmem:[#allocation2 + $0xb50] sm:$0xff] %v3550
      %3630 = vst [vmem:[#allocation2 + $0xb98] sm:$0xff] %v3549
      %3631 = vst [vmem:[#allocation2 + $0xbe0] sm:$0xff] %v3548
      %3632 = vst [vmem:[#allocation2 + $0xc28] sm:$0xff] %v3547
      %3633 = vst [vmem:[#allocation2 + $0xc70] sm:$0xff] %v3546
      %3634 = vst [vmem:[#allocation2 + $0xcb8] sm:$0xff] %v3545
      %3635 = vst [vmem:[#allocation2 + $0xd00] sm:$0xff] %v3544
      %3636 = vst [vmem:[#allocation2 + $0xd48] sm:$0xff] %v3543
      %3637 = vst [vmem:[#allocation2 + $0xd90] sm:$0xff] %v3542
      %3638 = vst [vmem:[#allocation2 + $0xdd8] sm:$0xff] %v3541
      %3639 = vst [vmem:[#allocation2 + $0xe20] sm:$0xff] %v3540
      %3640 = vst [vmem:[#allocation2 + $0xe68] sm:$0xff] %v3539
      %3641 = vst [vmem:[#allocation2 + $0xeb0] sm:$0xff] %v3538
      %3642 = vst [vmem:[#allocation2 + $0xef8] sm:$0xff] %v3537
      %3643 = vst [vmem:[#allocation2 + $0x18] sm:$0xff] %v3372
      %3644 = vst [vmem:[#allocation2 + $0x60] sm:$0xff] %v3371
      %3645 = vst [vmem:[#allocation2 + $0xa8] sm:$0xff] %v3370
      %3646 = vst [vmem:[#allocation2 + $0xf0] sm:$0xff] %v3369
      %3647 = vst [vmem:[#allocation2 + $0x138] sm:$0xff] %v3368
      %3648 = vst [vmem:[#allocation2 + $0x180] sm:$0xff] %v3367
      %3649 = vst [vmem:[#allocation2 + $0x1c8] sm:$0xff] %v3366
      %3650 = vst [vmem:[#allocation2 + $0x210] sm:$0xff] %v3365
      %3651 = vst [vmem:[#allocation2 + $0x258] sm:$0xff] %v3364
      %3652 = vst [vmem:[#allocation2 + $0x2a0] sm:$0xff] %v3363
      %3653 = vst [vmem:[#allocation2 + $0x2e8] sm:$0xff] %v3362
      %3654 = vst [vmem:[#allocation2 + $0x330] sm:$0xff] %v3361
      %3655 = vst [vmem:[#allocation2 + $0x378] sm:$0xff] %v3360
      %3656 = vst [vmem:[#allocation2 + $0x3c0] sm:$0xff] %v3359
      %3657 = vst [vmem:[#allocation2 + $0x408] sm:$0xff] %v3358
      %3658 = vst [vmem:[#allocation2 + $0x450] sm:$0xff] %v3357
      %3659 = vst [vmem:[#allocation2 + $0x498] sm:$0xff] %v3356
      %3660 = vst [vmem:[#allocation2 + $0x4e0] sm:$0xff] %v3355
      %3661 = vst [vmem:[#allocation2 + $0x528] sm:$0xff] %v3354
      %3662 = vst [vmem:[#allocation2 + $0x570] sm:$0xff] %v3353
      %3663 = vst [vmem:[#allocation2 + $0x5b8] sm:$0xff] %v3352
      %3664 = vst [vmem:[#allocation2 + $0x600] sm:$0xff] %v3351
      %3665 = vst [vmem:[#allocation2 + $0x648] sm:$0xff] %v3350
      %3666 = vst [vmem:[#allocation2 + $0x690] sm:$0xff] %v3349
      %3667 = vst [vmem:[#allocation2 + $0x6d8] sm:$0xff] %v3348
      %3668 = vst [vmem:[#allocation2 + $0x720] sm:$0xff] %v3347
      %3669 = vst [vmem:[#allocation2 + $0x768] sm:$0xff] %v3346
      %3670 = vst [vmem:[#allocation2 + $0x7b0] sm:$0xff] %v3345
      %3671 = vst [vmem:[#allocation2 + $0x7f8] sm:$0xff] %v3344
      %3672 = vst [vmem:[#allocation2 + $0x840] sm:$0xff] %v3343
      %3673 = vst [vmem:[#allocation2 + $0x888] sm:$0xff] %v3342
      %3674 = vst [vmem:[#allocation2 + $0x8d0] sm:$0xff] %v3341
      %3675 = vst [vmem:[#allocation2 + $0x918] sm:$0xff] %v3340
      %3676 = vst [vmem:[#allocation2 + $0x960] sm:$0xff] %v3339
      %3677 = vst [vmem:[#allocation2 + $0x9a8] sm:$0xff] %v3338
      %3678 = vst [vmem:[#allocation2 + $0x9f0] sm:$0xff] %v3337
      %3679 = vst [vmem:[#allocation2 + $0xa38] sm:$0xff] %v3336
      %3680 = vst [vmem:[#allocation2 + $0xa80] sm:$0xff] %v3335
      %3681 = vst [vmem:[#allocation2 + $0xac8] sm:$0xff] %v3334
      %3682 = vst [vmem:[#allocation2 + $0xb10] sm:$0xff] %v3333
      %3683 = vst [vmem:[#allocation2 + $0xb58] sm:$0xff] %v3332
      %3684 = vst [vmem:[#allocation2 + $0xba0] sm:$0xff] %v3331
      %3685 = vst [vmem:[#allocation2 + $0xbe8] sm:$0xff] %v3330
      %3686 = vst [vmem:[#allocation2 + $0xc30] sm:$0xff] %v3329
      %3687 = vst [vmem:[#allocation2 + $0xc78] sm:$0xff] %v3328
      %3688 = vst [vmem:[#allocation2 + $0xcc0] sm:$0xff] %v3327
      %3689 = vst [vmem:[#allocation2 + $0xd08] sm:$0xff] %v3326
      %3690 = vst [vmem:[#allocation2 + $0xd50] sm:$0xff] %v3325
      %3691 = vst [vmem:[#allocation2 + $0xd98] sm:$0xff] %v3324
      %3692 = vst [vmem:[#allocation2 + $0xde0] sm:$0xff] %v3323
      %3693 = vst [vmem:[#allocation2 + $0xe28] sm:$0xff] %v3322
      %3694 = vst [vmem:[#allocation2 + $0xe70] sm:$0xff] %v3321
      %3695 = vst [vmem:[#allocation2 + $0xeb8] sm:$0xff] %v3320
      %3696 = vst [vmem:[#allocation2 + $0xf00] sm:$0xff] %v3319
      %3697 = vst [vmem:[#allocation2 + $0x20] sm:$0xff] %v3211
      %3698 = vst [vmem:[#allocation2 + $0x68] sm:$0xff] %v3212
      %3699 = vst [vmem:[#allocation2 + $0xb0] sm:$0xff] %v3213
      %3700 = vst [vmem:[#allocation2 + $0xf8] sm:$0xff] %v3214
      %3701 = vst [vmem:[#allocation2 + $0x140] sm:$0xff] %v3215
      %3702 = vst [vmem:[#allocation2 + $0x188] sm:$0xff] %v3216
      %3703 = vst [vmem:[#allocation2 + $0x1d0] sm:$0xff] %v3217
      %3704 = vst [vmem:[#allocation2 + $0x218] sm:$0xff] %v3218
      %3705 = vst [vmem:[#allocation2 + $0x260] sm:$0xff] %v3219
      %3706 = vst [vmem:[#allocation2 + $0x2a8] sm:$0xff] %v3220
      %3707 = vst [vmem:[#allocation2 + $0x2f0] sm:$0xff] %v3221
      %3708 = vst [vmem:[#allocation2 + $0x338] sm:$0xff] %v3222
      %3709 = vst [vmem:[#allocation2 + $0x380] sm:$0xff] %v3223
      %3710 = vst [vmem:[#allocation2 + $0x3c8] sm:$0xff] %v3224
      %3711 = vst [vmem:[#allocation2 + $0x410] sm:$0xff] %v3225
      %3712 = vst [vmem:[#allocation2 + $0x458] sm:$0xff] %v3226
      %3713 = vst [vmem:[#allocation2 + $0x4a0] sm:$0xff] %v3227
      %3714 = vst [vmem:[#allocation2 + $0x4e8] sm:$0xff] %v3228
      %3715 = vst [vmem:[#allocation2 + $0x530] sm:$0xff] %v3229
      %3716 = vst [vmem:[#allocation2 + $0x578] sm:$0xff] %v3230
      %3717 = vst [vmem:[#allocation2 + $0x5c0] sm:$0xff] %v3231
      %3718 = vst [vmem:[#allocation2 + $0x608] sm:$0xff] %v3232
      %3719 = vst [vmem:[#allocation2 + $0x650] sm:$0xff] %v3233
      %3720 = vst [vmem:[#allocation2 + $0x698] sm:$0xff] %v3234
      %3721 = vst [vmem:[#allocation2 + $0x6e0] sm:$0xff] %v3235
      %3722 = vst [vmem:[#allocation2 + $0x728] sm:$0xff] %v3236
      %3723 = vst [vmem:[#allocation2 + $0x770] sm:$0xff] %v3237
      %3724 = vst [vmem:[#allocation2 + $0x7b8] sm:$0xff] %v3238
      %3725 = vst [vmem:[#allocation2 + $0x800] sm:$0xff] %v3239
      %3726 = vst [vmem:[#allocation2 + $0x848] sm:$0xff] %v3240
      %3727 = vst [vmem:[#allocation2 + $0x890] sm:$0xff] %v3241
      %3728 = vst [vmem:[#allocation2 + $0x8d8] sm:$0xff] %v3242
      %3729 = vst [vmem:[#allocation2 + $0x920] sm:$0xff] %v3243
      %3730 = vst [vmem:[#allocation2 + $0x968] sm:$0xff] %v3244
      %3731 = vst [vmem:[#allocation2 + $0x9b0] sm:$0xff] %v3245
      %3732 = vst [vmem:[#allocation2 + $0x9f8] sm:$0xff] %v3246
      %3733 = vst [vmem:[#allocation2 + $0xa40] sm:$0xff] %v3247
      %3734 = vst [vmem:[#allocation2 + $0xa88] sm:$0xff] %v3248
      %3735 = vst [vmem:[#allocation2 + $0xad0] sm:$0xff] %v3249
      %3736 = vst [vmem:[#allocation2 + $0xb18] sm:$0xff] %v3250
      %3737 = vst [vmem:[#allocation2 + $0xb60] sm:$0xff] %v3251
      %3738 = vst [vmem:[#allocation2 + $0xba8] sm:$0xff] %v3252
      %3739 = vst [vmem:[#allocation2 + $0xbf0] sm:$0xff] %v3253
      %3740 = vst [vmem:[#allocation2 + $0xc38] sm:$0xff] %v3254
      %3741 = vst [vmem:[#allocation2 + $0xc80] sm:$0xff] %v3255
      %3742 = vst [vmem:[#allocation2 + $0xcc8] sm:$0xff] %v3256
      %3743 = vst [vmem:[#allocation2 + $0xd10] sm:$0xff] %v3257
      %3744 = vst [vmem:[#allocation2 + $0xd58] sm:$0xff] %v3258
      %3745 = vst [vmem:[#allocation2 + $0xda0] sm:$0xff] %v3259
      %3746 = vst [vmem:[#allocation2 + $0xde8] sm:$0xff] %v3260
      %3747 = vst [vmem:[#allocation2 + $0xe30] sm:$0xff] %v3261
      %3748 = vst [vmem:[#allocation2 + $0xe78] sm:$0xff] %v3262
      %3749 = vst [vmem:[#allocation2 + $0xec0] sm:$0xff] %v3263
      %3750 = vst [vmem:[#allocation2 + $0xf08] sm:$0xff] %v3264
      %3751 = vst [vmem:[#allocation2 + $0x28] sm:$0xff] %v3587
      %3752 = vst [vmem:[#allocation2 + $0x70] sm:$0xff] %v3586
      %3753 = vst [vmem:[#allocation2 + $0xb8] sm:$0xff] %v3585
      %3754 = vst [vmem:[#allocation2 + $0x100] sm:$0xff] %v3584
      %3755 = vst [vmem:[#allocation2 + $0x148] sm:$0xff] %v3583
      %3756 = vst [vmem:[#allocation2 + $0x190] sm:$0xff] %v3582
      %3757 = vst [vmem:[#allocation2 + $0x1d8] sm:$0xff] %v3581
      %3758 = vst [vmem:[#allocation2 + $0x220] sm:$0xff] %v3580
      %3759 = vst [vmem:[#allocation2 + $0x268] sm:$0xff] %v3579
      %3760 = vst [vmem:[#allocation2 + $0x2b0] sm:$0xff] %v3578
      %3761 = vst [vmem:[#allocation2 + $0x2f8] sm:$0xff] %v3577
      %3762 = vst [vmem:[#allocation2 + $0x340] sm:$0xff] %v3576
      %3763 = vst [vmem:[#allocation2 + $0x388] sm:$0xff] %v3575
      %3764 = vst [vmem:[#allocation2 + $0x3d0] sm:$0xff] %v3574
      %3765 = vst [vmem:[#allocation2 + $0x418] sm:$0xff] %v3573
      %3766 = vst [vmem:[#allocation2 + $0x460] sm:$0xff] %v3572
      %3767 = vst [vmem:[#allocation2 + $0x4a8] sm:$0xff] %v3571
      %3768 = vst [vmem:[#allocation2 + $0x4f0] sm:$0xff] %v3570
      %3769 = vst [vmem:[#allocation2 + $0x538] sm:$0xff] %v3569
      %3770 = vst [vmem:[#allocation2 + $0x580] sm:$0xff] %v3568
      %3771 = vst [vmem:[#allocation2 + $0x5c8] sm:$0xff] %v3567
      %3772 = vst [vmem:[#allocation2 + $0x610] sm:$0xff] %v3566
      %3773 = vst [vmem:[#allocation2 + $0x658] sm:$0xff] %v3565
      %3774 = vst [vmem:[#allocation2 + $0x6a0] sm:$0xff] %v3564
      %3775 = vst [vmem:[#allocation2 + $0x6e8] sm:$0xff] %v3563
      %3776 = vst [vmem:[#allocation2 + $0x730] sm:$0xff] %v3562
      %3777 = vst [vmem:[#allocation2 + $0x778] sm:$0xff] %v3561
      %3778 = vst [vmem:[#allocation2 + $0x7c0] sm:$0xff] %v3560
      %3779 = vst [vmem:[#allocation2 + $0x808] sm:$0xff] %v3559
      %3780 = vst [vmem:[#allocation2 + $0x850] sm:$0xff] %v3558
      %3781 = vst [vmem:[#allocation2 + $0x898] sm:$0xff] %v3557
      %3782 = vst [vmem:[#allocation2 + $0x8e0] sm:$0xff] %v3556
      %3783 = vst [vmem:[#allocation2 + $0x928] sm:$0xff] %v3555
      %3784 = vst [vmem:[#allocation2 + $0x970] sm:$0xff] %v3554
      %3785 = vst [vmem:[#allocation2 + $0x9b8] sm:$0xff] %v3553
      %3786 = vst [vmem:[#allocation2 + $0xa00] sm:$0xff] %v3552
      %3787 = vst [vmem:[#allocation2 + $0xa48] sm:$0xff] %v3551
      %3788 = vst [vmem:[#allocation2 + $0xa90] sm:$0xff] %v3550
      %3789 = vst [vmem:[#allocation2 + $0xad8] sm:$0xff] %v3549
      %3790 = vst [vmem:[#allocation2 + $0xb20] sm:$0xff] %v3548
      %3791 = vst [vmem:[#allocation2 + $0xb68] sm:$0xff] %v3547
      %3792 = vst [vmem:[#allocation2 + $0xbb0] sm:$0xff] %v3546
      %3793 = vst [vmem:[#allocation2 + $0xbf8] sm:$0xff] %v3545
      %3794 = vst [vmem:[#allocation2 + $0xc40] sm:$0xff] %v3544
      %3795 = vst [vmem:[#allocation2 + $0xc88] sm:$0xff] %v3543
      %3796 = vst [vmem:[#allocation2 + $0xcd0] sm:$0xff] %v3542
      %3797 = vst [vmem:[#allocation2 + $0xd18] sm:$0xff] %v3541
      %3798 = vst [vmem:[#allocation2 + $0xd60] sm:$0xff] %v3540
      %3799 = vst [vmem:[#allocation2 + $0xda8] sm:$0xff] %v3539
      %3800 = vst [vmem:[#allocation2 + $0xdf0] sm:$0xff] %v3538
      %3801 = vst [vmem:[#allocation2 + $0xe38] sm:$0xff] %v3537
      %3802 = vst [vmem:[#allocation2 + $0xe80] sm:$0xff] %v3536
      %3803 = vst [vmem:[#allocation2 + $0xec8] sm:$0xff] %v3535
      %3804 = vst [vmem:[#allocation2 + $0xf10] sm:$0xff] %v3588
      %3805 = vst [vmem:[#allocation2 + $0x30] sm:$0xff] %v3369
      %3806 = vst [vmem:[#allocation2 + $0x78] sm:$0xff] %v3368
      %3807 = vst [vmem:[#allocation2 + $0xc0] sm:$0xff] %v3367
      %3808 = vst [vmem:[#allocation2 + $0x108] sm:$0xff] %v3366
      %3809 = vst [vmem:[#allocation2 + $0x150] sm:$0xff] %v3365
      %3810 = vst [vmem:[#allocation2 + $0x198] sm:$0xff] %v3364
      %3811 = vst [vmem:[#allocation2 + $0x1e0] sm:$0xff] %v3363
      %3812 = vst [vmem:[#allocation2 + $0x228] sm:$0xff] %v3362
      %3813 = vst [vmem:[#allocation2 + $0x270] sm:$0xff] %v3361
      %3814 = vst [vmem:[#allocation2 + $0x2b8] sm:$0xff] %v3360
      %3815 = vst [vmem:[#allocation2 + $0x300] sm:$0xff] %v3359
      %3816 = vst [vmem:[#allocation2 + $0x348] sm:$0xff] %v3358
      %3817 = vst [vmem:[#allocation2 + $0x390] sm:$0xff] %v3357
      %3818 = vst [vmem:[#allocation2 + $0x3d8] sm:$0xff] %v3356
      %3819 = vst [vmem:[#allocation2 + $0x420] sm:$0xff] %v3355
      %3820 = vst [vmem:[#allocation2 + $0x468] sm:$0xff] %v3354
      %3821 = vst [vmem:[#allocation2 + $0x4b0] sm:$0xff] %v3353
      %3822 = vst [vmem:[#allocation2 + $0x4f8] sm:$0xff] %v3352
      %3823 = vst [vmem:[#allocation2 + $0x540] sm:$0xff] %v3351
      %3824 = vst [vmem:[#allocation2 + $0x588] sm:$0xff] %v3350
      %3825 = vst [vmem:[#allocation2 + $0x5d0] sm:$0xff] %v3349
      %3826 = vst [vmem:[#allocation2 + $0x618] sm:$0xff] %v3348
      %3827 = vst [vmem:[#allocation2 + $0x660] sm:$0xff] %v3347
      %3828 = vst [vmem:[#allocation2 + $0x6a8] sm:$0xff] %v3346
      %3829 = vst [vmem:[#allocation2 + $0x6f0] sm:$0xff] %v3345
      %3830 = vst [vmem:[#allocation2 + $0x738] sm:$0xff] %v3344
      %3831 = vst [vmem:[#allocation2 + $0x780] sm:$0xff] %v3343
      %3832 = vst [vmem:[#allocation2 + $0x7c8] sm:$0xff] %v3342
      %3833 = vst [vmem:[#allocation2 + $0x810] sm:$0xff] %v3341
      %3834 = vst [vmem:[#allocation2 + $0x858] sm:$0xff] %v3340
      %3835 = vst [vmem:[#allocation2 + $0x8a0] sm:$0xff] %v3339
      %3836 = vst [vmem:[#allocation2 + $0x8e8] sm:$0xff] %v3338
      %3837 = vst [vmem:[#allocation2 + $0x930] sm:$0xff] %v3337
      %3838 = vst [vmem:[#allocation2 + $0x978] sm:$0xff] %v3336
      %3839 = vst [vmem:[#allocation2 + $0x9c0] sm:$0xff] %v3335
      %3840 = vst [vmem:[#allocation2 + $0xa08] sm:$0xff] %v3334
      %3841 = vst [vmem:[#allocation2 + $0xa50] sm:$0xff] %v3333
      %3842 = vst [vmem:[#allocation2 + $0xa98] sm:$0xff] %v3332
      %3843 = vst [vmem:[#allocation2 + $0xae0] sm:$0xff] %v3331
      %3844 = vst [vmem:[#allocation2 + $0xb28] sm:$0xff] %v3330
      %3845 = vst [vmem:[#allocation2 + $0xb70] sm:$0xff] %v3329
      %3846 = vst [vmem:[#allocation2 + $0xbb8] sm:$0xff] %v3328
      %3847 = vst [vmem:[#allocation2 + $0xc00] sm:$0xff] %v3327
      %3848 = vst [vmem:[#allocation2 + $0xc48] sm:$0xff] %v3326
      %3849 = vst [vmem:[#allocation2 + $0xc90] sm:$0xff] %v3325
      %3850 = vst [vmem:[#allocation2 + $0xcd8] sm:$0xff] %v3324
      %3851 = vst [vmem:[#allocation2 + $0xd20] sm:$0xff] %v3323
      %3852 = vst [vmem:[#allocation2 + $0xd68] sm:$0xff] %v3322
      %3853 = vst [vmem:[#allocation2 + $0xdb0] sm:$0xff] %v3321
      %3854 = vst [vmem:[#allocation2 + $0xdf8] sm:$0xff] %v3320
      %3855 = vst [vmem:[#allocation2 + $0xe40] sm:$0xff] %v3319
      %3856 = vst [vmem:[#allocation2 + $0xe88] sm:$0xff] %v3372
      %3857 = vst [vmem:[#allocation2 + $0xed0] sm:$0xff] %v3371
      %3858 = vst [vmem:[#allocation2 + $0xf18] sm:$0xff] %v3370
      %3859 = vst [vmem:[#allocation2 + $0x38] sm:$0xff] %v3214
      %3860 = vst [vmem:[#allocation2 + $0x80] sm:$0xff] %v3215
      %3861 = vst [vmem:[#allocation2 + $0xc8] sm:$0xff] %v3216
      %3862 = vst [vmem:[#allocation2 + $0x110] sm:$0xff] %v3217
      %3863 = vst [vmem:[#allocation2 + $0x158] sm:$0xff] %v3218
      %3864 = vst [vmem:[#allocation2 + $0x1a0] sm:$0xff] %v3219
      %3865 = vst [vmem:[#allocation2 + $0x1e8] sm:$0xff] %v3220
      %3866 = vst [vmem:[#allocation2 + $0x230] sm:$0xff] %v3221
      %3867 = vst [vmem:[#allocation2 + $0x278] sm:$0xff] %v3222
      %3868 = vst [vmem:[#allocation2 + $0x2c0] sm:$0xff] %v3223
      %3869 = vst [vmem:[#allocation2 + $0x308] sm:$0xff] %v3224
      %3870 = vst [vmem:[#allocation2 + $0x350] sm:$0xff] %v3225
      %3871 = vst [vmem:[#allocation2 + $0x398] sm:$0xff] %v3226
      %3872 = vst [vmem:[#allocation2 + $0x3e0] sm:$0xff] %v3227
      %3873 = vst [vmem:[#allocation2 + $0x428] sm:$0xff] %v3228
      %3874 = vst [vmem:[#allocation2 + $0x470] sm:$0xff] %v3229
      %3875 = vst [vmem:[#allocation2 + $0x4b8] sm:$0xff] %v3230
      %3876 = vst [vmem:[#allocation2 + $0x500] sm:$0xff] %v3231
      %3877 = vst [vmem:[#allocation2 + $0x548] sm:$0xff] %v3232
      %3878 = vst [vmem:[#allocation2 + $0x590] sm:$0xff] %v3233
      %3879 = vst [vmem:[#allocation2 + $0x5d8] sm:$0xff] %v3234
      %3880 = vst [vmem:[#allocation2 + $0x620] sm:$0xff] %v3235
      %3881 = vst [vmem:[#allocation2 + $0x668] sm:$0xff] %v3236
      %3882 = vst [vmem:[#allocation2 + $0x6b0] sm:$0xff] %v3237
      %3883 = vst [vmem:[#allocation2 + $0x6f8] sm:$0xff] %v3238
      %3884 = vst [vmem:[#allocation2 + $0x740] sm:$0xff] %v3239
      %3885 = vst [vmem:[#allocation2 + $0x788] sm:$0xff] %v3240
      %3886 = vst [vmem:[#allocation2 + $0x7d0] sm:$0xff] %v3241
      %3887 = vst [vmem:[#allocation2 + $0x818] sm:$0xff] %v3242
      %3888 = vst [vmem:[#allocation2 + $0x860] sm:$0xff] %v3243
      %3889 = vst [vmem:[#allocation2 + $0x8a8] sm:$0xff] %v3244
      %3890 = vst [vmem:[#allocation2 + $0x8f0] sm:$0xff] %v3245
      %3891 = vst [vmem:[#allocation2 + $0x938] sm:$0xff] %v3246
      %3892 = vst [vmem:[#allocation2 + $0x980] sm:$0xff] %v3247
      %3893 = vst [vmem:[#allocation2 + $0x9c8] sm:$0xff] %v3248
      %3894 = vst [vmem:[#allocation2 + $0xa10] sm:$0xff] %v3249
      %3895 = vst [vmem:[#allocation2 + $0xa58] sm:$0xff] %v3250
      %3896 = vst [vmem:[#allocation2 + $0xaa0] sm:$0xff] %v3251
      %3897 = vst [vmem:[#allocation2 + $0xae8] sm:$0xff] %v3252
      %3898 = vst [vmem:[#allocation2 + $0xb30] sm:$0xff] %v3253
      %3899 = vst [vmem:[#allocation2 + $0xb78] sm:$0xff] %v3254
      %3900 = vst [vmem:[#allocation2 + $0xbc0] sm:$0xff] %v3255
      %3901 = vst [vmem:[#allocation2 + $0xc08] sm:$0xff] %v3256
      %3902 = vst [vmem:[#allocation2 + $0xc50] sm:$0xff] %v3257
      %3903 = vst [vmem:[#allocation2 + $0xc98] sm:$0xff] %v3258
      %3904 = vst [vmem:[#allocation2 + $0xce0] sm:$0xff] %v3259
      %3905 = vst [vmem:[#allocation2 + $0xd28] sm:$0xff] %v3260
      %3906 = vst [vmem:[#allocation2 + $0xd70] sm:$0xff] %v3261
      %3907 = vst [vmem:[#allocation2 + $0xdb8] sm:$0xff] %v3262
      %3908 = vst [vmem:[#allocation2 + $0xe00] sm:$0xff] %v3263
      %3909 = vst [vmem:[#allocation2 + $0xe48] sm:$0xff] %v3264
      %3910 = vst [vmem:[#allocation2 + $0xe90] sm:$0xff] %v3211
      %3911 = vst [vmem:[#allocation2 + $0xed8] sm:$0xff] %v3212
      %3912 = vst [vmem:[#allocation2 + $0xf20] sm:$0xff] %v3213
      %3913 = vst [vmem:[#allocation2 + $0x40] sm:$0xff] %v3584
      %3914 = vst [vmem:[#allocation2 + $0x88] sm:$0xff] %v3583
      %3915 = vst [vmem:[#allocation2 + $0xd0] sm:$0xff] %v3582
      %3916 = vst [vmem:[#allocation2 + $0x118] sm:$0xff] %v3581
      %3917 = vst [vmem:[#allocation2 + $0x160] sm:$0xff] %v3580
      %3918 = vst [vmem:[#allocation2 + $0x1a8] sm:$0xff] %v3579
      %3919 = vst [vmem:[#allocation2 + $0x1f0] sm:$0xff] %v3578
      %3920 = vst [vmem:[#allocation2 + $0x238] sm:$0xff] %v3577
      %3921 = vst [vmem:[#allocation2 + $0x280] sm:$0xff] %v3576
      %3922 = vst [vmem:[#allocation2 + $0x2c8] sm:$0xff] %v3575
      %3923 = vst [vmem:[#allocation2 + $0x310] sm:$0xff] %v3574
      %3924 = vst [vmem:[#allocation2 + $0x358] sm:$0xff] %v3573
      %3925 = vst [vmem:[#allocation2 + $0x3a0] sm:$0xff] %v3572
      %3926 = vst [vmem:[#allocation2 + $0x3e8] sm:$0xff] %v3571
      %3927 = vst [vmem:[#allocation2 + $0x430] sm:$0xff] %v3570
      %3928 = vst [vmem:[#allocation2 + $0x478] sm:$0xff] %v3569
      %3929 = vst [vmem:[#allocation2 + $0x4c0] sm:$0xff] %v3568
      %3930 = vst [vmem:[#allocation2 + $0x508] sm:$0xff] %v3567
      %3931 = vst [vmem:[#allocation2 + $0x550] sm:$0xff] %v3566
      %3932 = vst [vmem:[#allocation2 + $0x598] sm:$0xff] %v3565
      %3933 = vst [vmem:[#allocation2 + $0x5e0] sm:$0xff] %v3564
      %3934 = vst [vmem:[#allocation2 + $0x628] sm:$0xff] %v3563
      %3935 = vst [vmem:[#allocation2 + $0x670] sm:$0xff] %v3562
      %3936 = vst [vmem:[#allocation2 + $0x6b8] sm:$0xff] %v3561
      %3937 = vst [vmem:[#allocation2 + $0x700] sm:$0xff] %v3560
      %3938 = vst [vmem:[#allocation2 + $0x748] sm:$0xff] %v3559
      %3939 = vst [vmem:[#allocation2 + $0x790] sm:$0xff] %v3558
      %3940 = vst [vmem:[#allocation2 + $0x7d8] sm:$0xff] %v3557
      %3941 = vst [vmem:[#allocation2 + $0x820] sm:$0xff] %v3556
      %3942 = vst [vmem:[#allocation2 + $0x868] sm:$0xff] %v3555
      %3943 = vst [vmem:[#allocation2 + $0x8b0] sm:$0xff] %v3554
      %3944 = vst [vmem:[#allocation2 + $0x8f8] sm:$0xff] %v3553
      %3945 = vst [vmem:[#allocation2 + $0x940] sm:$0xff] %v3552
      %3946 = vst [vmem:[#allocation2 + $0x988] sm:$0xff] %v3551
      %3947 = vst [vmem:[#allocation2 + $0x9d0] sm:$0xff] %v3550
      %3948 = vst [vmem:[#allocation2 + $0xa18] sm:$0xff] %v3549
      %3949 = vst [vmem:[#allocation2 + $0xa60] sm:$0xff] %v3548
      %3950 = vst [vmem:[#allocation2 + $0xaa8] sm:$0xff] %v3547
      %3951 = vst [vmem:[#allocation2 + $0xaf0] sm:$0xff] %v3546
      %3952 = vst [vmem:[#allocation2 + $0xb38] sm:$0xff] %v3545
      %3953 = vst [vmem:[#allocation2 + $0xb80] sm:$0xff] %v3544
      %3954 = vst [vmem:[#allocation2 + $0xbc8] sm:$0xff] %v3543
      %3955 = vst [vmem:[#allocation2 + $0xc10] sm:$0xff] %v3542
      %3956 = vst [vmem:[#allocation2 + $0xc58] sm:$0xff] %v3541
      %3957 = vst [vmem:[#allocation2 + $0xca0] sm:$0xff] %v3540
      %3958 = vst [vmem:[#allocation2 + $0xce8] sm:$0xff] %v3539
      %3959 = vst [vmem:[#allocation2 + $0xd30] sm:$0xff] %v3538
      %3960 = vst [vmem:[#allocation2 + $0xd78] sm:$0xff] %v3537
      %3961 = vst [vmem:[#allocation2 + $0xdc0] sm:$0xff] %v3536
      %3962 = vst [vmem:[#allocation2 + $0xe08] sm:$0xff] %v3535
      %3963 = vst [vmem:[#allocation2 + $0xe50] sm:$0xff] %v3588
      %3964 = vst [vmem:[#allocation2 + $0xe98] sm:$0xff] %v3587
      %3965 = vst [vmem:[#allocation2 + $0xee0] sm:$0xff] %v3586
      %3966 = vst [vmem:[#allocation2 + $0xf28] sm:$0xff] %v3585
      %v3967 = vld [vmem:[#allocation2] sm:$0xff]
      %v3968 = vld [vmem:[#allocation2 + $0x8] sm:$0xff]
      %v3969 = vld [vmem:[#allocation2 + $0x10] sm:$0xff]
      %v3970 = vld [vmem:[#allocation2 + $0x18] sm:$0xff]
      %v3971 = vld [vmem:[#allocation2 + $0x20] sm:$0xff]
      %v3972 = vld [vmem:[#allocation2 + $0x28] sm:$0xff]
      %v3973 = vld [vmem:[#allocation2 + $0x30] sm:$0xff]
      %v3974 = vld [vmem:[#allocation2 + $0x38] sm:$0xff]
      %v3975 = vld [vmem:[#allocation2 + $0x40] sm:$0xff]
      %v3976 = vld [vmem:[#allocation2 + $0x48] sm:$0xff]
      %v3977 = vld [vmem:[#allocation2 + $0x50] sm:$0xff]
      %v3978 = vld [vmem:[#allocation2 + $0x58] sm:$0xff]
      %v3979 = vld [vmem:[#allocation2 + $0x60] sm:$0xff]
      %v3980 = vld [vmem:[#allocation2 + $0x68] sm:$0xff]
      %v3981 = vld [vmem:[#allocation2 + $0x70] sm:$0xff]
      %v3982 = vld [vmem:[#allocation2 + $0x78] sm:$0xff]
      %v3983 = vld [vmem:[#allocation2 + $0x80] sm:$0xff]
      %v3984 = vld [vmem:[#allocation2 + $0x88] sm:$0xff]
      %v3985 = vld [vmem:[#allocation2 + $0x90] sm:$0xff]
      %v3986 = vld [vmem:[#allocation2 + $0x98] sm:$0xff]
      %v3987 = vld [vmem:[#allocation2 + $0xa0] sm:$0xff]
      %v3988 = vld [vmem:[#allocation2 + $0xa8] sm:$0xff]
      %v3989 = vld [vmem:[#allocation2 + $0xb0] sm:$0xff]
      %v3990 = vld [vmem:[#allocation2 + $0xb8] sm:$0xff]
      %v3991 = vld [vmem:[#allocation2 + $0xc0] sm:$0xff]
      %v3992 = vld [vmem:[#allocation2 + $0xc8] sm:$0xff]
      %v3993 = vld [vmem:[#allocation2 + $0xd0] sm:$0xff]
      %v3994 = vld [vmem:[#allocation2 + $0xd8] sm:$0xff]
      %v3995 = vld [vmem:[#allocation2 + $0xe0] sm:$0xff]
      %v3996 = vld [vmem:[#allocation2 + $0xe8] sm:$0xff]
      %v3997 = vld [vmem:[#allocation2 + $0xf0] sm:$0xff]
      %v3998 = vld [vmem:[#allocation2 + $0xf8] sm:$0xff]
      %v3999 = vld [vmem:[#allocation2 + $0x100] sm:$0xff]
      %v4000 = vld [vmem:[#allocation2 + $0x108] sm:$0xff]
      %v4001 = vld [vmem:[#allocation2 + $0x110] sm:$0xff]
      %v4002 = vld [vmem:[#allocation2 + $0x118] sm:$0xff]
      %v4003 = vld [vmem:[#allocation2 + $0x120] sm:$0xff]
      %v4004 = vld [vmem:[#allocation2 + $0x128] sm:$0xff]
      %v4005 = vld [vmem:[#allocation2 + $0x130] sm:$0xff]
      %v4006 = vld [vmem:[#allocation2 + $0x138] sm:$0xff]
      %v4007 = vld [vmem:[#allocation2 + $0x140] sm:$0xff]
      %v4008 = vld [vmem:[#allocation2 + $0x148] sm:$0xff]
      %v4009 = vld [vmem:[#allocation2 + $0x150] sm:$0xff]
      %v4010 = vld [vmem:[#allocation2 + $0x158] sm:$0xff]
      %v4011 = vld [vmem:[#allocation2 + $0x160] sm:$0xff]
      %v4012 = vld [vmem:[#allocation2 + $0x168] sm:$0xff]
      %v4013 = vld [vmem:[#allocation2 + $0x170] sm:$0xff]
      %v4014 = vld [vmem:[#allocation2 + $0x178] sm:$0xff]
      %v4015 = vld [vmem:[#allocation2 + $0x180] sm:$0xff]
      %v4016 = vld [vmem:[#allocation2 + $0x188] sm:$0xff]
      %v4017 = vld [vmem:[#allocation2 + $0x190] sm:$0xff]
      %v4018 = vld [vmem:[#allocation2 + $0x198] sm:$0xff]
      %v4019 = vld [vmem:[#allocation2 + $0x1a0] sm:$0xff]
      %v4020 = vld [vmem:[#allocation2 + $0x1a8] sm:$0xff]
      %v4021 = vld [vmem:[#allocation2 + $0x1b0] sm:$0xff]
      %v4022 = vld [vmem:[#allocation2 + $0x1b8] sm:$0xff]
      %v4023 = vld [vmem:[#allocation2 + $0x1c0] sm:$0xff]
      %v4024 = vld [vmem:[#allocation2 + $0x1c8] sm:$0xff]
      %v4025 = vld [vmem:[#allocation2 + $0x1d0] sm:$0xff]
      %v4026 = vld [vmem:[#allocation2 + $0x1d8] sm:$0xff]
      %v4027 = vld [vmem:[#allocation2 + $0x1e0] sm:$0xff]
      %v4028 = vld [vmem:[#allocation2 + $0x1e8] sm:$0xff]
      %v4029 = vld [vmem:[#allocation2 + $0x1f0] sm:$0xff]
      %v4030 = vld [vmem:[#allocation2 + $0x1f8] sm:$0xff]
      %v4031 = vld [vmem:[#allocation2 + $0x200] sm:$0xff]
      %v4032 = vld [vmem:[#allocation2 + $0x208] sm:$0xff]
      %v4033 = vld [vmem:[#allocation2 + $0x210] sm:$0xff]
      %v4034 = vld [vmem:[#allocation2 + $0x218] sm:$0xff]
      %v4035 = vld [vmem:[#allocation2 + $0x220] sm:$0xff]
      %v4036 = vld [vmem:[#allocation2 + $0x228] sm:$0xff]
      %v4037 = vld [vmem:[#allocation2 + $0x230] sm:$0xff]
      %v4038 = vld [vmem:[#allocation2 + $0x238] sm:$0xff]
      %v4039 = vld [vmem:[#allocation2 + $0x240] sm:$0xff]
      %v4040 = vld [vmem:[#allocation2 + $0x248] sm:$0xff]
      %v4041 = vld [vmem:[#allocation2 + $0x250] sm:$0xff]
      %v4042 = vld [vmem:[#allocation2 + $0x258] sm:$0xff]
      %v4043 = vld [vmem:[#allocation2 + $0x260] sm:$0xff]
      %v4044 = vld [vmem:[#allocation2 + $0x268] sm:$0xff]
      %v4045 = vld [vmem:[#allocation2 + $0x270] sm:$0xff]
      %v4046 = vld [vmem:[#allocation2 + $0x278] sm:$0xff]
      %v4047 = vld [vmem:[#allocation2 + $0x280] sm:$0xff]
      %v4048 = vld [vmem:[#allocation2 + $0x288] sm:$0xff]
      %v4049 = vld [vmem:[#allocation2 + $0x290] sm:$0xff]
      %v4050 = vld [vmem:[#allocation2 + $0x298] sm:$0xff]
      %v4051 = vld [vmem:[#allocation2 + $0x2a0] sm:$0xff]
      %v4052 = vld [vmem:[#allocation2 + $0x2a8] sm:$0xff]
      %v4053 = vld [vmem:[#allocation2 + $0x2b0] sm:$0xff]
      %v4054 = vld [vmem:[#allocation2 + $0x2b8] sm:$0xff]
      %v4055 = vld [vmem:[#allocation2 + $0x2c0] sm:$0xff]
      %v4056 = vld [vmem:[#allocation2 + $0x2c8] sm:$0xff]
      %v4057 = vld [vmem:[#allocation2 + $0x2d0] sm:$0xff]
      %v4058 = vld [vmem:[#allocation2 + $0x2d8] sm:$0xff]
      %v4059 = vld [vmem:[#allocation2 + $0x2e0] sm:$0xff]
      %v4060 = vld [vmem:[#allocation2 + $0x2e8] sm:$0xff]
      %v4061 = vld [vmem:[#allocation2 + $0x2f0] sm:$0xff]
      %v4062 = vld [vmem:[#allocation2 + $0x2f8] sm:$0xff]
      %v4063 = vld [vmem:[#allocation2 + $0x300] sm:$0xff]
      %v4064 = vld [vmem:[#allocation2 + $0x308] sm:$0xff]
      %v4065 = vld [vmem:[#allocation2 + $0x310] sm:$0xff]
      %v4066 = vld [vmem:[#allocation2 + $0x318] sm:$0xff]
      %v4067 = vld [vmem:[#allocation2 + $0x320] sm:$0xff]
      %v4068 = vld [vmem:[#allocation2 + $0x328] sm:$0xff]
      %v4069 = vld [vmem:[#allocation2 + $0x330] sm:$0xff]
      %v4070 = vld [vmem:[#allocation2 + $0x338] sm:$0xff]
      %v4071 = vld [vmem:[#allocation2 + $0x340] sm:$0xff]
      %v4072 = vld [vmem:[#allocation2 + $0x348] sm:$0xff]
      %v4073 = vld [vmem:[#allocation2 + $0x350] sm:$0xff]
      %v4074 = vld [vmem:[#allocation2 + $0x358] sm:$0xff]
      %v4075 = vld [vmem:[#allocation2 + $0x360] sm:$0xff]
      %v4076 = vld [vmem:[#allocation2 + $0x368] sm:$0xff]
      %v4077 = vld [vmem:[#allocation2 + $0x370] sm:$0xff]
      %v4078 = vld [vmem:[#allocation2 + $0x378] sm:$0xff]
      %v4079 = vld [vmem:[#allocation2 + $0x380] sm:$0xff]
      %v4080 = vld [vmem:[#allocation2 + $0x388] sm:$0xff]
      %v4081 = vld [vmem:[#allocation2 + $0x390] sm:$0xff]
      %v4082 = vld [vmem:[#allocation2 + $0x398] sm:$0xff]
      %v4083 = vld [vmem:[#allocation2 + $0x3a0] sm:$0xff]
      %v4084 = vld [vmem:[#allocation2 + $0x3a8] sm:$0xff]
      %v4085 = vld [vmem:[#allocation2 + $0x3b0] sm:$0xff]
      %v4086 = vld [vmem:[#allocation2 + $0x3b8] sm:$0xff]
      %v4087 = vld [vmem:[#allocation2 + $0x3c0] sm:$0xff]
      %v4088 = vld [vmem:[#allocation2 + $0x3c8] sm:$0xff]
      %v4089 = vld [vmem:[#allocation2 + $0x3d0] sm:$0xff]
      %v4090 = vld [vmem:[#allocation2 + $0x3d8] sm:$0xff]
      %v4091 = vld [vmem:[#allocation2 + $0x3e0] sm:$0xff]
      %v4092 = vld [vmem:[#allocation2 + $0x3e8] sm:$0xff]
      %v4093 = vld [vmem:[#allocation2 + $0x3f0] sm:$0xff]
      %v4094 = vld [vmem:[#allocation2 + $0x3f8] sm:$0xff]
      %v4095 = vld [vmem:[#allocation2 + $0x400] sm:$0xff]
      %v4096 = vld [vmem:[#allocation2 + $0x408] sm:$0xff]
      %v4097 = vld [vmem:[#allocation2 + $0x410] sm:$0xff]
      %v4098 = vld [vmem:[#allocation2 + $0x418] sm:$0xff]
      %v4099 = vld [vmem:[#allocation2 + $0x420] sm:$0xff]
      %v4100 = vld [vmem:[#allocation2 + $0x428] sm:$0xff]
      %v4101 = vld [vmem:[#allocation2 + $0x430] sm:$0xff]
      %v4102 = vld [vmem:[#allocation2 + $0x438] sm:$0xff]
      %v4103 = vld [vmem:[#allocation2 + $0x440] sm:$0xff]
      %v4104 = vld [vmem:[#allocation2 + $0x448] sm:$0xff]
      %v4105 = vld [vmem:[#allocation2 + $0x450] sm:$0xff]
      %v4106 = vld [vmem:[#allocation2 + $0x458] sm:$0xff]
      %v4107 = vld [vmem:[#allocation2 + $0x460] sm:$0xff]
      %v4108 = vld [vmem:[#allocation2 + $0x468] sm:$0xff]
      %v4109 = vld [vmem:[#allocation2 + $0x470] sm:$0xff]
      %v4110 = vld [vmem:[#allocation2 + $0x478] sm:$0xff]
      %v4111 = vld [vmem:[#allocation2 + $0x480] sm:$0xff]
      %v4112 = vld [vmem:[#allocation2 + $0x488] sm:$0xff]
      %v4113 = vld [vmem:[#allocation2 + $0x490] sm:$0xff]
      %v4114 = vld [vmem:[#allocation2 + $0x498] sm:$0xff]
      %v4115 = vld [vmem:[#allocation2 + $0x4a0] sm:$0xff]
      %v4116 = vld [vmem:[#allocation2 + $0x4a8] sm:$0xff]
      %v4117 = vld [vmem:[#allocation2 + $0x4b0] sm:$0xff]
      %v4118 = vld [vmem:[#allocation2 + $0x4b8] sm:$0xff]
      %v4119 = vld [vmem:[#allocation2 + $0x4c0] sm:$0xff]
      %v4120 = vld [vmem:[#allocation2 + $0x4c8] sm:$0xff]
      %v4121 = vld [vmem:[#allocation2 + $0x4d0] sm:$0xff]
      %v4122 = vld [vmem:[#allocation2 + $0x4d8] sm:$0xff]
      %v4123 = vld [vmem:[#allocation2 + $0x4e0] sm:$0xff]
      %v4124 = vld [vmem:[#allocation2 + $0x4e8] sm:$0xff]
      %v4125 = vld [vmem:[#allocation2 + $0x4f0] sm:$0xff]
      %v4126 = vld [vmem:[#allocation2 + $0x4f8] sm:$0xff]
      %v4127 = vld [vmem:[#allocation2 + $0x500] sm:$0xff]
      %v4128 = vld [vmem:[#allocation2 + $0x508] sm:$0xff]
      %v4129 = vld [vmem:[#allocation2 + $0x510] sm:$0xff]
      %v4130 = vld [vmem:[#allocation2 + $0x518] sm:$0xff]
      %v4131 = vld [vmem:[#allocation2 + $0x520] sm:$0xff]
      %v4132 = vld [vmem:[#allocation2 + $0x528] sm:$0xff]
      %v4133 = vld [vmem:[#allocation2 + $0x530] sm:$0xff]
      %v4134 = vld [vmem:[#allocation2 + $0x538] sm:$0xff]
      %v4135 = vld [vmem:[#allocation2 + $0x540] sm:$0xff]
      %v4136 = vld [vmem:[#allocation2 + $0x548] sm:$0xff]
      %v4137 = vld [vmem:[#allocation2 + $0x550] sm:$0xff]
      %v4138 = vld [vmem:[#allocation2 + $0x558] sm:$0xff]
      %v4139 = vld [vmem:[#allocation2 + $0x560] sm:$0xff]
      %v4140 = vld [vmem:[#allocation2 + $0x568] sm:$0xff]
      %v4141 = vld [vmem:[#allocation2 + $0x570] sm:$0xff]
      %v4142 = vld [vmem:[#allocation2 + $0x578] sm:$0xff]
      %v4143 = vld [vmem:[#allocation2 + $0x580] sm:$0xff]
      %v4144 = vld [vmem:[#allocation2 + $0x588] sm:$0xff]
      %v4145 = vld [vmem:[#allocation2 + $0x590] sm:$0xff]
      %v4146 = vld [vmem:[#allocation2 + $0x598] sm:$0xff]
      %v4147 = vld [vmem:[#allocation2 + $0x5a0] sm:$0xff]
      %v4148 = vld [vmem:[#allocation2 + $0x5a8] sm:$0xff]
      %v4149 = vld [vmem:[#allocation2 + $0x5b0] sm:$0xff]
      %v4150 = vld [vmem:[#allocation2 + $0x5b8] sm:$0xff]
      %v4151 = vld [vmem:[#allocation2 + $0x5c0] sm:$0xff]
      %v4152 = vld [vmem:[#allocation2 + $0x5c8] sm:$0xff]
      %v4153 = vld [vmem:[#allocation2 + $0x5d0] sm:$0xff]
      %v4154 = vld [vmem:[#allocation2 + $0x5d8] sm:$0xff]
      %v4155 = vld [vmem:[#allocation2 + $0x5e0] sm:$0xff]
      %v4156 = vld [vmem:[#allocation2 + $0x5e8] sm:$0xff]
      %v4157 = vld [vmem:[#allocation2 + $0x5f0] sm:$0xff]
      %v4158 = vld [vmem:[#allocation2 + $0x5f8] sm:$0xff]
      %v4159 = vld [vmem:[#allocation2 + $0x600] sm:$0xff]
      %v4160 = vld [vmem:[#allocation2 + $0x608] sm:$0xff]
      %v4161 = vld [vmem:[#allocation2 + $0x610] sm:$0xff]
      %v4162 = vld [vmem:[#allocation2 + $0x618] sm:$0xff]
      %v4163 = vld [vmem:[#allocation2 + $0x620] sm:$0xff]
      %v4164 = vld [vmem:[#allocation2 + $0x628] sm:$0xff]
      %v4165 = vld [vmem:[#allocation2 + $0x630] sm:$0xff]
      %v4166 = vld [vmem:[#allocation2 + $0x638] sm:$0xff]
      %v4167 = vld [vmem:[#allocation2 + $0x640] sm:$0xff]
      %v4168 = vld [vmem:[#allocation2 + $0x648] sm:$0xff]
      %v4169 = vld [vmem:[#allocation2 + $0x650] sm:$0xff]
      %v4170 = vld [vmem:[#allocation2 + $0x658] sm:$0xff]
      %v4171 = vld [vmem:[#allocation2 + $0x660] sm:$0xff]
      %v4172 = vld [vmem:[#allocation2 + $0x668] sm:$0xff]
      %v4173 = vld [vmem:[#allocation2 + $0x670] sm:$0xff]
      %v4174 = vld [vmem:[#allocation2 + $0x678] sm:$0xff]
      %v4175 = vld [vmem:[#allocation2 + $0x680] sm:$0xff]
      %v4176 = vld [vmem:[#allocation2 + $0x688] sm:$0xff]
      %v4177 = vld [vmem:[#allocation2 + $0x690] sm:$0xff]
      %v4178 = vld [vmem:[#allocation2 + $0x698] sm:$0xff]
      %v4179 = vld [vmem:[#allocation2 + $0x6a0] sm:$0xff]
      %v4180 = vld [vmem:[#allocation2 + $0x6a8] sm:$0xff]
      %v4181 = vld [vmem:[#allocation2 + $0x6b0] sm:$0xff]
      %v4182 = vld [vmem:[#allocation2 + $0x6b8] sm:$0xff]
      %v4183 = vld [vmem:[#allocation2 + $0x6c0] sm:$0xff]
      %v4184 = vld [vmem:[#allocation2 + $0x6c8] sm:$0xff]
      %v4185 = vld [vmem:[#allocation2 + $0x6d0] sm:$0xff]
      %v4186 = vld [vmem:[#allocation2 + $0x6d8] sm:$0xff]
      %v4187 = vld [vmem:[#allocation2 + $0x6e0] sm:$0xff]
      %v4188 = vld [vmem:[#allocation2 + $0x6e8] sm:$0xff]
      %v4189 = vld [vmem:[#allocation2 + $0x6f0] sm:$0xff]
      %v4190 = vld [vmem:[#allocation2 + $0x6f8] sm:$0xff]
      %v4191 = vld [vmem:[#allocation2 + $0x700] sm:$0xff]
      %v4192 = vld [vmem:[#allocation2 + $0x708] sm:$0xff]
      %v4193 = vld [vmem:[#allocation2 + $0x710] sm:$0xff]
      %v4194 = vld [vmem:[#allocation2 + $0x718] sm:$0xff]
      %v4195 = vld [vmem:[#allocation2 + $0x720] sm:$0xff]
      %v4196 = vld [vmem:[#allocation2 + $0x728] sm:$0xff]
      %v4197 = vld [vmem:[#allocation2 + $0x730] sm:$0xff]
      %v4198 = vld [vmem:[#allocation2 + $0x738] sm:$0xff]
      %v4199 = vld [vmem:[#allocation2 + $0x740] sm:$0xff]
      %v4200 = vld [vmem:[#allocation2 + $0x748] sm:$0xff]
      %v4201 = vld [vmem:[#allocation2 + $0x750] sm:$0xff]
      %v4202 = vld [vmem:[#allocation2 + $0x758] sm:$0xff]
      %v4203 = vld [vmem:[#allocation2 + $0x760] sm:$0xff]
      %v4204 = vld [vmem:[#allocation2 + $0x768] sm:$0xff]
      %v4205 = vld [vmem:[#allocation2 + $0x770] sm:$0xff]
      %v4206 = vld [vmem:[#allocation2 + $0x778] sm:$0xff]
      %v4207 = vld [vmem:[#allocation2 + $0x780] sm:$0xff]
      %v4208 = vld [vmem:[#allocation2 + $0x788] sm:$0xff]
      %v4209 = vld [vmem:[#allocation2 + $0x790] sm:$0xff]
      %v4210 = vld [vmem:[#allocation2 + $0x798] sm:$0xff]
      %v4211 = vld [vmem:[#allocation2 + $0x7a0] sm:$0xff]
      %v4212 = vld [vmem:[#allocation2 + $0x7a8] sm:$0xff]
      %v4213 = vld [vmem:[#allocation2 + $0x7b0] sm:$0xff]
      %v4214 = vld [vmem:[#allocation2 + $0x7b8] sm:$0xff]
      %v4215 = vld [vmem:[#allocation2 + $0x7c0] sm:$0xff]
      %v4216 = vld [vmem:[#allocation2 + $0x7c8] sm:$0xff]
      %v4217 = vld [vmem:[#allocation2 + $0x7d0] sm:$0xff]
      %v4218 = vld [vmem:[#allocation2 + $0x7d8] sm:$0xff]
      %v4219 = vld [vmem:[#allocation2 + $0x7e0] sm:$0xff]
      %v4220 = vld [vmem:[#allocation2 + $0x7e8] sm:$0xff]
      %v4221 = vld [vmem:[#allocation2 + $0x7f0] sm:$0xff]
      %v4222 = vld [vmem:[#allocation2 + $0x7f8] sm:$0xff]
      %v4223 = vld [vmem:[#allocation2 + $0x800] sm:$0xff]
      %v4224 = vld [vmem:[#allocation2 + $0x808] sm:$0xff]
      %v4225 = vld [vmem:[#allocation2 + $0x810] sm:$0xff]
      %v4226 = vld [vmem:[#allocation2 + $0x818] sm:$0xff]
      %v4227 = vld [vmem:[#allocation2 + $0x820] sm:$0xff]
      %v4228 = vld [vmem:[#allocation2 + $0x828] sm:$0xff]
      %v4229 = vld [vmem:[#allocation2 + $0x830] sm:$0xff]
      %v4230 = vld [vmem:[#allocation2 + $0x838] sm:$0xff]
      %v4231 = vld [vmem:[#allocation2 + $0x840] sm:$0xff]
      %v4232 = vld [vmem:[#allocation2 + $0x848] sm:$0xff]
      %v4233 = vld [vmem:[#allocation2 + $0x850] sm:$0xff]
      %v4234 = vld [vmem:[#allocation2 + $0x858] sm:$0xff]
      %v4235 = vld [vmem:[#allocation2 + $0x860] sm:$0xff]
      %v4236 = vld [vmem:[#allocation2 + $0x868] sm:$0xff]
      %v4237 = vld [vmem:[#allocation2 + $0x870] sm:$0xff]
      %v4238 = vld [vmem:[#allocation2 + $0x878] sm:$0xff]
      %v4239 = vld [vmem:[#allocation2 + $0x880] sm:$0xff]
      %v4240 = vld [vmem:[#allocation2 + $0x888] sm:$0xff]
      %v4241 = vld [vmem:[#allocation2 + $0x890] sm:$0xff]
      %v4242 = vld [vmem:[#allocation2 + $0x898] sm:$0xff]
      %v4243 = vld [vmem:[#allocation2 + $0x8a0] sm:$0xff]
      %v4244 = vld [vmem:[#allocation2 + $0x8a8] sm:$0xff]
      %v4245 = vld [vmem:[#allocation2 + $0x8b0] sm:$0xff]
      %v4246 = vld [vmem:[#allocation2 + $0x8b8] sm:$0xff]
      %v4247 = vld [vmem:[#allocation2 + $0x8c0] sm:$0xff]
      %v4248 = vld [vmem:[#allocation2 + $0x8c8] sm:$0xff]
      %v4249 = vld [vmem:[#allocation2 + $0x8d0] sm:$0xff]
      %v4250 = vld [vmem:[#allocation2 + $0x8d8] sm:$0xff]
      %v4251 = vld [vmem:[#allocation2 + $0x8e0] sm:$0xff]
      %v4252 = vld [vmem:[#allocation2 + $0x8e8] sm:$0xff]
      %v4253 = vld [vmem:[#allocation2 + $0x8f0] sm:$0xff]
      %v4254 = vld [vmem:[#allocation2 + $0x8f8] sm:$0xff]
      %v4255 = vld [vmem:[#allocation2 + $0x900] sm:$0xff]
      %v4256 = vld [vmem:[#allocation2 + $0x908] sm:$0xff]
      %v4257 = vld [vmem:[#allocation2 + $0x910] sm:$0xff]
      %v4258 = vld [vmem:[#allocation2 + $0x918] sm:$0xff]
      %v4259 = vld [vmem:[#allocation2 + $0x920] sm:$0xff]
      %v4260 = vld [vmem:[#allocation2 + $0x928] sm:$0xff]
      %v4261 = vld [vmem:[#allocation2 + $0x930] sm:$0xff]
      %v4262 = vld [vmem:[#allocation2 + $0x938] sm:$0xff]
      %v4263 = vld [vmem:[#allocation2 + $0x940] sm:$0xff]
      %v4264 = vld [vmem:[#allocation2 + $0x948] sm:$0xff]
      %v4265 = vld [vmem:[#allocation2 + $0x950] sm:$0xff]
      %v4266 = vld [vmem:[#allocation2 + $0x958] sm:$0xff]
      %v4267 = vld [vmem:[#allocation2 + $0x960] sm:$0xff]
      %v4268 = vld [vmem:[#allocation2 + $0x968] sm:$0xff]
      %v4269 = vld [vmem:[#allocation2 + $0x970] sm:$0xff]
      %v4270 = vld [vmem:[#allocation2 + $0x978] sm:$0xff]
      %v4271 = vld [vmem:[#allocation2 + $0x980] sm:$0xff]
      %v4272 = vld [vmem:[#allocation2 + $0x988] sm:$0xff]
      %v4273 = vld [vmem:[#allocation2 + $0x990] sm:$0xff]
      %v4274 = vld [vmem:[#allocation2 + $0x998] sm:$0xff]
      %v4275 = vld [vmem:[#allocation2 + $0x9a0] sm:$0xff]
      %v4276 = vld [vmem:[#allocation2 + $0x9a8] sm:$0xff]
      %v4277 = vld [vmem:[#allocation2 + $0x9b0] sm:$0xff]
      %v4278 = vld [vmem:[#allocation2 + $0x9b8] sm:$0xff]
      %v4279 = vld [vmem:[#allocation2 + $0x9c0] sm:$0xff]
      %v4280 = vld [vmem:[#allocation2 + $0x9c8] sm:$0xff]
      %v4281 = vld [vmem:[#allocation2 + $0x9d0] sm:$0xff]
      %v4282 = vld [vmem:[#allocation2 + $0x9d8] sm:$0xff]
      %v4283 = vld [vmem:[#allocation2 + $0x9e0] sm:$0xff]
      %v4284 = vld [vmem:[#allocation2 + $0x9e8] sm:$0xff]
      %v4285 = vld [vmem:[#allocation2 + $0x9f0] sm:$0xff]
      %v4286 = vld [vmem:[#allocation2 + $0x9f8] sm:$0xff]
      %v4287 = vld [vmem:[#allocation2 + $0xa00] sm:$0xff]
      %v4288 = vld [vmem:[#allocation2 + $0xa08] sm:$0xff]
      %v4289 = vld [vmem:[#allocation2 + $0xa10] sm:$0xff]
      %v4290 = vld [vmem:[#allocation2 + $0xa18] sm:$0xff]
      %v4291 = vld [vmem:[#allocation2 + $0xa20] sm:$0xff]
      %v4292 = vld [vmem:[#allocation2 + $0xa28] sm:$0xff]
      %v4293 = vld [vmem:[#allocation2 + $0xa30] sm:$0xff]
      %v4294 = vld [vmem:[#allocation2 + $0xa38] sm:$0xff]
      %v4295 = vld [vmem:[#allocation2 + $0xa40] sm:$0xff]
      %v4296 = vld [vmem:[#allocation2 + $0xa48] sm:$0xff]
      %v4297 = vld [vmem:[#allocation2 + $0xa50] sm:$0xff]
      %v4298 = vld [vmem:[#allocation2 + $0xa58] sm:$0xff]
      %v4299 = vld [vmem:[#allocation2 + $0xa60] sm:$0xff]
      %v4300 = vld [vmem:[#allocation2 + $0xa68] sm:$0xff]
      %v4301 = vld [vmem:[#allocation2 + $0xa70] sm:$0xff]
      %v4302 = vld [vmem:[#allocation2 + $0xa78] sm:$0xff]
      %v4303 = vld [vmem:[#allocation2 + $0xa80] sm:$0xff]
      %v4304 = vld [vmem:[#allocation2 + $0xa88] sm:$0xff]
      %v4305 = vld [vmem:[#allocation2 + $0xa90] sm:$0xff]
      %v4306 = vld [vmem:[#allocation2 + $0xa98] sm:$0xff]
      %v4307 = vld [vmem:[#allocation2 + $0xaa0] sm:$0xff]
      %v4308 = vld [vmem:[#allocation2 + $0xaa8] sm:$0xff]
      %v4309 = vld [vmem:[#allocation2 + $0xab0] sm:$0xff]
      %v4310 = vld [vmem:[#allocation2 + $0xab8] sm:$0xff]
      %v4311 = vld [vmem:[#allocation2 + $0xac0] sm:$0xff]
      %v4312 = vld [vmem:[#allocation2 + $0xac8] sm:$0xff]
      %v4313 = vld [vmem:[#allocation2 + $0xad0] sm:$0xff]
      %v4314 = vld [vmem:[#allocation2 + $0xad8] sm:$0xff]
      %v4315 = vld [vmem:[#allocation2 + $0xae0] sm:$0xff]
      %v4316 = vld [vmem:[#allocation2 + $0xae8] sm:$0xff]
      %v4317 = vld [vmem:[#allocation2 + $0xaf0] sm:$0xff]
      %v4318 = vld [vmem:[#allocation2 + $0xaf8] sm:$0xff]
      %v4319 = vld [vmem:[#allocation2 + $0xb00] sm:$0xff]
      %v4320 = vld [vmem:[#allocation2 + $0xb08] sm:$0xff]
      %v4321 = vld [vmem:[#allocation2 + $0xb10] sm:$0xff]
      %v4322 = vld [vmem:[#allocation2 + $0xb18] sm:$0xff]
      %v4323 = vld [vmem:[#allocation2 + $0xb20] sm:$0xff]
      %v4324 = vld [vmem:[#allocation2 + $0xb28] sm:$0xff]
      %v4325 = vld [vmem:[#allocation2 + $0xb30] sm:$0xff]
      %v4326 = vld [vmem:[#allocation2 + $0xb38] sm:$0xff]
      %v4327 = vld [vmem:[#allocation2 + $0xb40] sm:$0xff]
      %v4328 = vld [vmem:[#allocation2 + $0xb48] sm:$0xff]
      %v4329 = vld [vmem:[#allocation2 + $0xb50] sm:$0xff]
      %v4330 = vld [vmem:[#allocation2 + $0xb58] sm:$0xff]
      %v4331 = vld [vmem:[#allocation2 + $0xb60] sm:$0xff]
      %v4332 = vld [vmem:[#allocation2 + $0xb68] sm:$0xff]
      %v4333 = vld [vmem:[#allocation2 + $0xb70] sm:$0xff]
      %v4334 = vld [vmem:[#allocation2 + $0xb78] sm:$0xff]
      %v4335 = vld [vmem:[#allocation2 + $0xb80] sm:$0xff]
      %v4336 = vld [vmem:[#allocation2 + $0xb88] sm:$0xff]
      %v4337 = vld [vmem:[#allocation2 + $0xb90] sm:$0xff]
      %v4338 = vld [vmem:[#allocation2 + $0xb98] sm:$0xff]
      %v4339 = vld [vmem:[#allocation2 + $0xba0] sm:$0xff]
      %v4340 = vld [vmem:[#allocation2 + $0xba8] sm:$0xff]
      %v4341 = vld [vmem:[#allocation2 + $0xbb0] sm:$0xff]
      %v4342 = vld [vmem:[#allocation2 + $0xbb8] sm:$0xff]
      %v4343 = vld [vmem:[#allocation2 + $0xbc0] sm:$0xff]
      %v4344 = vld [vmem:[#allocation2 + $0xbc8] sm:$0xff]
      %v4345 = vld [vmem:[#allocation2 + $0xbd0] sm:$0xff]
      %v4346 = vld [vmem:[#allocation2 + $0xbd8] sm:$0xff]
      %v4347 = vld [vmem:[#allocation2 + $0xbe0] sm:$0xff]
      %v4348 = vld [vmem:[#allocation2 + $0xbe8] sm:$0xff]
      %v4349 = vld [vmem:[#allocation2 + $0xbf0] sm:$0xff]
      %v4350 = vld [vmem:[#allocation2 + $0xbf8] sm:$0xff]
      %v4351 = vld [vmem:[#allocation2 + $0xc00] sm:$0xff]
      %v4352 = vld [vmem:[#allocation2 + $0xc08] sm:$0xff]
      %v4353 = vld [vmem:[#allocation2 + $0xc10] sm:$0xff]
      %v4354 = vld [vmem:[#allocation2 + $0xc18] sm:$0xff]
      %v4355 = vld [vmem:[#allocation2 + $0xc20] sm:$0xff]
      %v4356 = vld [vmem:[#allocation2 + $0xc28] sm:$0xff]
      %v4357 = vld [vmem:[#allocation2 + $0xc30] sm:$0xff]
      %v4358 = vld [vmem:[#allocation2 + $0xc38] sm:$0xff]
      %v4359 = vld [vmem:[#allocation2 + $0xc40] sm:$0xff]
      %v4360 = vld [vmem:[#allocation2 + $0xc48] sm:$0xff]
      %v4361 = vld [vmem:[#allocation2 + $0xc50] sm:$0xff]
      %v4362 = vld [vmem:[#allocation2 + $0xc58] sm:$0xff]
      %v4363 = vld [vmem:[#allocation2 + $0xc60] sm:$0xff]
      %v4364 = vld [vmem:[#allocation2 + $0xc68] sm:$0xff]
      %v4365 = vld [vmem:[#allocation2 + $0xc70] sm:$0xff]
      %v4366 = vld [vmem:[#allocation2 + $0xc78] sm:$0xff]
      %v4367 = vld [vmem:[#allocation2 + $0xc80] sm:$0xff]
      %v4368 = vld [vmem:[#allocation2 + $0xc88] sm:$0xff]
      %v4369 = vld [vmem:[#allocation2 + $0xc90] sm:$0xff]
      %v4370 = vld [vmem:[#allocation2 + $0xc98] sm:$0xff]
      %v4371 = vld [vmem:[#allocation2 + $0xca0] sm:$0xff]
      %v4372 = vld [vmem:[#allocation2 + $0xca8] sm:$0xff]
      %v4373 = vld [vmem:[#allocation2 + $0xcb0] sm:$0xff]
      %v4374 = vld [vmem:[#allocation2 + $0xcb8] sm:$0xff]
      %v4375 = vld [vmem:[#allocation2 + $0xcc0] sm:$0xff]
      %v4376 = vld [vmem:[#allocation2 + $0xcc8] sm:$0xff]
      %v4377 = vld [vmem:[#allocation2 + $0xcd0] sm:$0xff]
      %v4378 = vld [vmem:[#allocation2 + $0xcd8] sm:$0xff]
      %v4379 = vld [vmem:[#allocation2 + $0xce0] sm:$0xff]
      %v4380 = vld [vmem:[#allocation2 + $0xce8] sm:$0xff]
      %v4381 = vld [vmem:[#allocation2 + $0xcf0] sm:$0xff]
      %v4382 = vld [vmem:[#allocation2 + $0xcf8] sm:$0xff]
      %v4383 = vld [vmem:[#allocation2 + $0xd00] sm:$0xff]
      %v4384 = vld [vmem:[#allocation2 + $0xd08] sm:$0xff]
      %v4385 = vld [vmem:[#allocation2 + $0xd10] sm:$0xff]
      %v4386 = vld [vmem:[#allocation2 + $0xd18] sm:$0xff]
      %v4387 = vld [vmem:[#allocation2 + $0xd20] sm:$0xff]
      %v4388 = vld [vmem:[#allocation2 + $0xd28] sm:$0xff]
      %v4389 = vld [vmem:[#allocation2 + $0xd30] sm:$0xff]
      %v4390 = vld [vmem:[#allocation2 + $0xd38] sm:$0xff]
      %v4391 = vld [vmem:[#allocation2 + $0xd40] sm:$0xff]
      %v4392 = vld [vmem:[#allocation2 + $0xd48] sm:$0xff]
      %v4393 = vld [vmem:[#allocation2 + $0xd50] sm:$0xff]
      %v4394 = vld [vmem:[#allocation2 + $0xd58] sm:$0xff]
      %v4395 = vld [vmem:[#allocation2 + $0xd60] sm:$0xff]
      %v4396 = vld [vmem:[#allocation2 + $0xd68] sm:$0xff]
      %v4397 = vld [vmem:[#allocation2 + $0xd70] sm:$0xff]
      %v4398 = vld [vmem:[#allocation2 + $0xd78] sm:$0xff]
      %v4399 = vld [vmem:[#allocation2 + $0xd80] sm:$0xff]
      %v4400 = vld [vmem:[#allocation2 + $0xd88] sm:$0xff]
      %v4401 = vld [vmem:[#allocation2 + $0xd90] sm:$0xff]
      %v4402 = vld [vmem:[#allocation2 + $0xd98] sm:$0xff]
      %v4403 = vld [vmem:[#allocation2 + $0xda0] sm:$0xff]
      %v4404 = vld [vmem:[#allocation2 + $0xda8] sm:$0xff]
      %v4405 = vld [vmem:[#allocation2 + $0xdb0] sm:$0xff]
      %v4406 = vld [vmem:[#allocation2 + $0xdb8] sm:$0xff]
      %v4407 = vld [vmem:[#allocation2 + $0xdc0] sm:$0xff]
      %v4408 = vld [vmem:[#allocation2 + $0xdc8] sm:$0xff]
      %v4409 = vld [vmem:[#allocation2 + $0xdd0] sm:$0xff]
      %v4410 = vld [vmem:[#allocation2 + $0xdd8] sm:$0xff]
      %v4411 = vld [vmem:[#allocation2 + $0xde0] sm:$0xff]
      %v4412 = vld [vmem:[#allocation2 + $0xde8] sm:$0xff]
      %v4413 = vld [vmem:[#allocation2 + $0xdf0] sm:$0xff]
      %v4414 = vld [vmem:[#allocation2 + $0xdf8] sm:$0xff]
      %v4415 = vld [vmem:[#allocation2 + $0xe00] sm:$0xff]
      %v4416 = vld [vmem:[#allocation2 + $0xe08] sm:$0xff]
      %v4417 = vld [vmem:[#allocation2 + $0xe10] sm:$0xff]
      %v4418 = vld [vmem:[#allocation2 + $0xe18] sm:$0xff]
      %v4419 = vld [vmem:[#allocation2 + $0xe20] sm:$0xff]
      %v4420 = vld [vmem:[#allocation2 + $0xe28] sm:$0xff]
      %v4421 = vld [vmem:[#allocation2 + $0xe30] sm:$0xff]
      %v4422 = vld [vmem:[#allocation2 + $0xe38] sm:$0xff]
      %v4423 = vld [vmem:[#allocation2 + $0xe40] sm:$0xff]
      %v4424 = vld [vmem:[#allocation2 + $0xe48] sm:$0xff]
      %v4425 = vld [vmem:[#allocation2 + $0xe50] sm:$0xff]
      %v4426 = vld [vmem:[#allocation2 + $0xe58] sm:$0xff]
      %v4427 = vld [vmem:[#allocation2 + $0xe60] sm:$0xff]
      %v4428 = vld [vmem:[#allocation2 + $0xe68] sm:$0xff]
      %v4429 = vld [vmem:[#allocation2 + $0xe70] sm:$0xff]
      %v4430 = vld [vmem:[#allocation2 + $0xe78] sm:$0xff]
      %v4431 = vld [vmem:[#allocation2 + $0xe80] sm:$0xff]
      %v4432 = vld [vmem:[#allocation2 + $0xe88] sm:$0xff]
      %v4433 = vld [vmem:[#allocation2 + $0xe90] sm:$0xff]
      %v4434 = vld [vmem:[#allocation2 + $0xe98] sm:$0xff]
      %v4435 = vld [vmem:[#allocation2 + $0xea0] sm:$0xff]
      %v4436 = vld [vmem:[#allocation2 + $0xea8] sm:$0xff]
      %v4437 = vld [vmem:[#allocation2 + $0xeb0] sm:$0xff]
      %v4438 = vld [vmem:[#allocation2 + $0xeb8] sm:$0xff]
      %v4439 = vld [vmem:[#allocation2 + $0xec0] sm:$0xff]
      %v4440 = vld [vmem:[#allocation2 + $0xec8] sm:$0xff]
      %v4441 = vld [vmem:[#allocation2 + $0xed0] sm:$0xff]
      %v4442 = vld [vmem:[#allocation2 + $0xed8] sm:$0xff]
      %v4443 = vld [vmem:[#allocation2 + $0xee0] sm:$0xff]
      %v4444 = vld [vmem:[#allocation2 + $0xee8] sm:$0xff]
      %v4445 = vld [vmem:[#allocation2 + $0xef0] sm:$0xff]
      %v4446 = vld [vmem:[#allocation2 + $0xef8] sm:$0xff]
      %v4447 = vld [vmem:[#allocation2 + $0xf00] sm:$0xff]
      %v4448 = vld [vmem:[#allocation2 + $0xf08] sm:$0xff]
      %v4449 = vld [vmem:[#allocation2 + $0xf10] sm:$0xff]
      %v4450 = vld [vmem:[#allocation2 + $0xf18] sm:$0xff]
      %v4451 = vld [vmem:[#allocation2 + $0xf20] sm:$0xff]
      %v4452 = vld [vmem:[#allocation2 + $0xf28] sm:$0xff]
      %v4453 = vld [vmem:[%s4] sm:$0xff]
      %v4454 = vld [vmem:[%s4 + $0x8] sm:$0xff]
      %v4455 = vld [vmem:[%s4 + $0x10] sm:$0xff]
      %v4456 = vld [vmem:[%s4 + $0x18] sm:$0xff]
      %v4457 = vld [vmem:[%s4 + $0x20] sm:$0xff]
      %v4458 = vld [vmem:[%s4 + $0x28] sm:$0xff]
      %v4459 = vld [vmem:[%s4 + $0x30] sm:$0xff]
      %v4460 = vld [vmem:[%s4 + $0x38] sm:$0xff]
      %v4461 = vld [vmem:[%s4 + $0x40] sm:$0xff]
      %v4462 = vld [vmem:[%s4 + $0x48] sm:$0xff]
      %v4463 = vld [vmem:[%s4 + $0x50] sm:$0xff]
      %v4464 = vld [vmem:[%s4 + $0x58] sm:$0xff]
      %v4465 = vld [vmem:[%s4 + $0x60] sm:$0xff]
      %v4466 = vld [vmem:[%s4 + $0x68] sm:$0xff]
      %v4467 = vld [vmem:[%s4 + $0x70] sm:$0xff]
      %v4468 = vld [vmem:[%s4 + $0x78] sm:$0xff]
      %v4469 = vld [vmem:[%s4 + $0x80] sm:$0xff]
      %v4470 = vld [vmem:[%s4 + $0x88] sm:$0xff]
      %v4471 = vld [vmem:[%s4 + $0x90] sm:$0xff]
      %v4472 = vld [vmem:[%s4 + $0x98] sm:$0xff]
      %v4473 = vld [vmem:[%s4 + $0xa0] sm:$0xff]
      %v4474 = vld [vmem:[%s4 + $0xa8] sm:$0xff]
      %v4475 = vld [vmem:[%s4 + $0xb0] sm:$0xff]
      %v4476 = vld [vmem:[%s4 + $0xb8] sm:$0xff]
      %v4477 = vld [vmem:[%s4 + $0xc0] sm:$0xff]
      %v4478 = vld [vmem:[%s4 + $0xc8] sm:$0xff]
      %v4479 = vld [vmem:[%s4 + $0xd0] sm:$0xff]
      %v4480 = vld [vmem:[%s4 + $0xd8] sm:$0xff]
      %v4481 = vld [vmem:[%s4 + $0xe0] sm:$0xff]
      %v4482 = vld [vmem:[%s4 + $0xe8] sm:$0xff]
      %v4483 = vld [vmem:[%s4 + $0xf0] sm:$0xff]
      %v4484 = vld [vmem:[%s4 + $0xf8] sm:$0xff]
      %v4485 = vld [vmem:[%s4 + $0x100] sm:$0xff]
      %v4486 = vld [vmem:[%s4 + $0x108] sm:$0xff]
      %v4487 = vld [vmem:[%s4 + $0x110] sm:$0xff]
      %v4488 = vld [vmem:[%s4 + $0x118] sm:$0xff]
      %v4489 = vld [vmem:[%s4 + $0x120] sm:$0xff]
      %v4490 = vld [vmem:[%s4 + $0x128] sm:$0xff]
      %v4491 = vld [vmem:[%s4 + $0x130] sm:$0xff]
      %v4492 = vld [vmem:[%s4 + $0x138] sm:$0xff]
      %v4493 = vld [vmem:[%s4 + $0x140] sm:$0xff]
      %v4494 = vld [vmem:[%s4 + $0x148] sm:$0xff]
      %v4495 = vld [vmem:[%s4 + $0x150] sm:$0xff]
      %v4496 = vld [vmem:[%s4 + $0x158] sm:$0xff]
      %v4497 = vld [vmem:[%s4 + $0x160] sm:$0xff]
      %v4498 = vld [vmem:[%s4 + $0x168] sm:$0xff]
      %v4499 = vld [vmem:[%s4 + $0x170] sm:$0xff]
      %v4500 = vld [vmem:[%s4 + $0x178] sm:$0xff]
      %v4501 = vld [vmem:[%s4 + $0x180] sm:$0xff]
      %v4502 = vld [vmem:[%s4 + $0x188] sm:$0xff]
      %v4503 = vld [vmem:[%s4 + $0x190] sm:$0xff]
      %v4504 = vld [vmem:[%s4 + $0x198] sm:$0xff]
      %v4505 = vld [vmem:[%s4 + $0x1a0] sm:$0xff]
      %v4506 = vld [vmem:[%s4 + $0x1a8] sm:$0xff]
      %v4507 = vld [vmem:[%s4 + $0x1b0] sm:$0xff]
      %v4508 = vld [vmem:[%s4 + $0x1b8] sm:$0xff]
      %v4509 = vld [vmem:[%s4 + $0x1c0] sm:$0xff]
      %v4510 = vld [vmem:[%s4 + $0x1c8] sm:$0xff]
      %v4511 = vld [vmem:[%s4 + $0x1d0] sm:$0xff]
      %v4512 = vld [vmem:[%s4 + $0x1d8] sm:$0xff]
      %v4513 = vld [vmem:[%s4 + $0x1e0] sm:$0xff]
      %v4514 = vld [vmem:[%s4 + $0x1e8] sm:$0xff]
      %v4515 = vld [vmem:[%s4 + $0x1f0] sm:$0xff]
      %v4516 = vld [vmem:[%s4 + $0x1f8] sm:$0xff]
      %v4517 = vld [vmem:[%s4 + $0x200] sm:$0xff]
      %v4518 = vld [vmem:[%s4 + $0x208] sm:$0xff]
      %v4519 = vld [vmem:[%s4 + $0x210] sm:$0xff]
      %v4520 = vld [vmem:[%s4 + $0x218] sm:$0xff]
      %v4521 = vld [vmem:[%s4 + $0x220] sm:$0xff]
      %v4522 = vld [vmem:[%s4 + $0x228] sm:$0xff]
      %v4523 = vld [vmem:[%s4 + $0x230] sm:$0xff]
      %v4524 = vld [vmem:[%s4 + $0x238] sm:$0xff]
      %v4525 = vld [vmem:[%s4 + $0x240] sm:$0xff]
      %v4526 = vld [vmem:[%s4 + $0x248] sm:$0xff]
      %v4527 = vld [vmem:[%s4 + $0x250] sm:$0xff]
      %v4528 = vld [vmem:[%s4 + $0x258] sm:$0xff]
      %v4529 = vld [vmem:[%s4 + $0x260] sm:$0xff]
      %v4530 = vld [vmem:[%s4 + $0x268] sm:$0xff]
      %v4531 = vld [vmem:[%s4 + $0x270] sm:$0xff]
      %v4532 = vld [vmem:[%s4 + $0x278] sm:$0xff]
      %v4533 = vld [vmem:[%s4 + $0x280] sm:$0xff]
      %v4534 = vld [vmem:[%s4 + $0x288] sm:$0xff]
      %v4535 = vld [vmem:[%s4 + $0x290] sm:$0xff]
      %v4536 = vld [vmem:[%s4 + $0x298] sm:$0xff]
      %v4537 = vld [vmem:[%s4 + $0x2a0] sm:$0xff]
      %v4538 = vld [vmem:[%s4 + $0x2a8] sm:$0xff]
      %v4539 = vld [vmem:[%s4 + $0x2b0] sm:$0xff]
      %v4540 = vld [vmem:[%s4 + $0x2b8] sm:$0xff]
      %v4541 = vld [vmem:[%s4 + $0x2c0] sm:$0xff]
      %v4542 = vld [vmem:[%s4 + $0x2c8] sm:$0xff]
      %v4543 = vld [vmem:[%s4 + $0x2d0] sm:$0xff]
      %v4544 = vld [vmem:[%s4 + $0x2d8] sm:$0xff]
      %v4545 = vld [vmem:[%s4 + $0x2e0] sm:$0xff]
      %v4546 = vld [vmem:[%s4 + $0x2e8] sm:$0xff]
      %v4547 = vld [vmem:[%s4 + $0x2f0] sm:$0xff]
      %v4548 = vld [vmem:[%s4 + $0x2f8] sm:$0xff]
      %v4549 = vld [vmem:[%s4 + $0x300] sm:$0xff]
      %v4550 = vld [vmem:[%s4 + $0x308] sm:$0xff]
      %v4551 = vld [vmem:[%s4 + $0x310] sm:$0xff]
      %v4552 = vld [vmem:[%s4 + $0x318] sm:$0xff]
      %v4553 = vld [vmem:[%s4 + $0x320] sm:$0xff]
      %v4554 = vld [vmem:[%s4 + $0x328] sm:$0xff]
      %v4555 = vld [vmem:[%s4 + $0x330] sm:$0xff]
      %v4556 = vld [vmem:[%s4 + $0x338] sm:$0xff]
      %v4557 = vld [vmem:[%s4 + $0x340] sm:$0xff]
      %v4558 = vld [vmem:[%s4 + $0x348] sm:$0xff]
      %v4559 = vld [vmem:[%s4 + $0x350] sm:$0xff]
      %v4560 = vld [vmem:[%s4 + $0x358] sm:$0xff]
      %v4561 = vld [vmem:[%s4 + $0x360] sm:$0xff]
      %v4562 = vld [vmem:[%s4 + $0x368] sm:$0xff]
      %v4563 = vld [vmem:[%s4 + $0x370] sm:$0xff]
      %v4564 = vld [vmem:[%s4 + $0x378] sm:$0xff]
      %v4565 = vld [vmem:[%s4 + $0x380] sm:$0xff]
      %v4566 = vld [vmem:[%s4 + $0x388] sm:$0xff]
      %v4567 = vld [vmem:[%s4 + $0x390] sm:$0xff]
      %v4568 = vld [vmem:[%s4 + $0x398] sm:$0xff]
      %v4569 = vld [vmem:[%s4 + $0x3a0] sm:$0xff]
      %v4570 = vld [vmem:[%s4 + $0x3a8] sm:$0xff]
      %v4571 = vld [vmem:[%s4 + $0x3b0] sm:$0xff]
      %v4572 = vld [vmem:[%s4 + $0x3b8] sm:$0xff]
      %v4573 = vld [vmem:[%s4 + $0x3c0] sm:$0xff]
      %v4574 = vld [vmem:[%s4 + $0x3c8] sm:$0xff]
      %v4575 = vld [vmem:[%s4 + $0x3d0] sm:$0xff]
      %v4576 = vld [vmem:[%s4 + $0x3d8] sm:$0xff]
      %v4577 = vld [vmem:[%s4 + $0x3e0] sm:$0xff]
      %v4578 = vld [vmem:[%s4 + $0x3e8] sm:$0xff]
      %v4579 = vld [vmem:[%s4 + $0x3f0] sm:$0xff]
      %v4580 = vld [vmem:[%s4 + $0x3f8] sm:$0xff]
      %v4581 = vld [vmem:[%s4 + $0x400] sm:$0xff]
      %v4582 = vld [vmem:[%s4 + $0x408] sm:$0xff]
      %v4583 = vld [vmem:[%s4 + $0x410] sm:$0xff]
      %v4584 = vld [vmem:[%s4 + $0x418] sm:$0xff]
      %v4585 = vld [vmem:[%s4 + $0x420] sm:$0xff]
      %v4586 = vld [vmem:[%s4 + $0x428] sm:$0xff]
      %v4587 = vld [vmem:[%s4 + $0x430] sm:$0xff]
      %v4588 = vld [vmem:[%s4 + $0x438] sm:$0xff]
      %v4589 = vld [vmem:[%s4 + $0x440] sm:$0xff]
      %v4590 = vld [vmem:[%s4 + $0x448] sm:$0xff]
      %v4591 = vld [vmem:[%s4 + $0x450] sm:$0xff]
      %v4592 = vld [vmem:[%s4 + $0x458] sm:$0xff]
      %v4593 = vld [vmem:[%s4 + $0x460] sm:$0xff]
      %v4594 = vld [vmem:[%s4 + $0x468] sm:$0xff]
      %v4595 = vld [vmem:[%s4 + $0x470] sm:$0xff]
      %v4596 = vld [vmem:[%s4 + $0x478] sm:$0xff]
      %v4597 = vld [vmem:[%s5] sm:$0x1]
      %v4599 = vperm.slane %v4597, 0
      %4601 = vmatpush.msra.mxu0 %v4468
      %4602 = vmatpush.msra.mxu0 %v4467
      %4603 = vmatpush.msra.mxu0 %v4466
      %4604 = vmatpush.msra.mxu0 %v4465
      %4605 = vmatpush.msra.mxu0 %v4464
      %4606 = vmatpush.msra.mxu0 %v4463
      %4607 = vmatpush.msra.mxu0 %v4462
      %4608 = vmatpush.msra.mxu0 %v4461
      %4609 = vmatpush.msra.mxu0 %v4460
      %4610 = vmatpush.msra.mxu0 %v4459
      %4611 = vmatpush.msra.mxu0 %v4458
      %4612 = vmatpush.msra.mxu0 %v4457
      %4613 = vmatpush.msra.mxu0 %v4456
      %4614 = vmatpush.msra.mxu0 %v4455
      %4615 = vmatpush.msra.mxu0 %v4454
      %4616 = vmatpush.msra.mxu0 %v4453
      %4617 = vmatmul.f32.gmra.mxu0 %v3967
      %v4618 = vpop.f32.mrf.mxu0
      %v4619 = vadd.f32 %v4599, %v4618
      %4620 = vmatmul.f32.gmra.mxu0 %v3976
      %v4621 = vpop.f32.mrf.mxu0
      %v4622 = vadd.f32 %v4599, %v4621
      %4623 = vmatmul.f32.gmra.mxu0 %v3985
      %v4624 = vpop.f32.mrf.mxu0
      %v4625 = vadd.f32 %v4599, %v4624
      %4626 = vmatmul.f32.gmra.mxu0 %v3994
      %v4627 = vpop.f32.mrf.mxu0
      %v4628 = vadd.f32 %v4599, %v4627
      %4629 = vmatmul.f32.gmra.mxu0 %v4003
      %v4630 = vpop.f32.mrf.mxu0
      %v4631 = vadd.f32 %v4599, %v4630
      %4632 = vmatmul.f32.gmra.mxu0 %v4012
      %v4633 = vpop.f32.mrf.mxu0
      %v4634 = vadd.f32 %v4599, %v4633
      %4635 = vmatmul.f32.gmra.mxu0 %v4021
      %v4636 = vpop.f32.mrf.mxu0
      %v4637 = vadd.f32 %v4599, %v4636
      %4638 = vmatmul.f32.gmra.mxu0 %v4030
      %v4639 = vpop.f32.mrf.mxu0
      %v4640 = vadd.f32 %v4599, %v4639
      %4641 = vmatmul.f32.gmra.mxu0 %v4039
      %v4642 = vpop.f32.mrf.mxu0
      %v4643 = vadd.f32 %v4599, %v4642
      %4644 = vmatmul.f32.gmra.mxu0 %v4048
      %v4645 = vpop.f32.mrf.mxu0
      %v4646 = vadd.f32 %v4599, %v4645
      %4647 = vmatmul.f32.gmra.mxu0 %v4057
      %v4648 = vpop.f32.mrf.mxu0
      %v4649 = vadd.f32 %v4599, %v4648
      %4650 = vmatmul.f32.gmra.mxu0 %v4066
      %v4651 = vpop.f32.mrf.mxu0
      %v4652 = vadd.f32 %v4599, %v4651
      %4653 = vmatmul.f32.gmra.mxu0 %v4075
      %v4654 = vpop.f32.mrf.mxu0
      %v4655 = vadd.f32 %v4599, %v4654
      %4656 = vmatmul.f32.gmra.mxu0 %v4084
      %v4657 = vpop.f32.mrf.mxu0
      %v4658 = vadd.f32 %v4599, %v4657
      %4659 = vmatmul.f32.gmra.mxu0 %v4093
      %v4660 = vpop.f32.mrf.mxu0
      %v4661 = vadd.f32 %v4599, %v4660
      %4662 = vmatmul.f32.gmra.mxu0 %v4102
      %v4663 = vpop.f32.mrf.mxu0
      %v4664 = vadd.f32 %v4599, %v4663
      %4665 = vmatmul.f32.gmra.mxu0 %v4111
      %v4666 = vpop.f32.mrf.mxu0
      %v4667 = vadd.f32 %v4599, %v4666
      %4668 = vmatmul.f32.gmra.mxu0 %v4120
      %v4669 = vpop.f32.mrf.mxu0
      %v4670 = vadd.f32 %v4599, %v4669
      %4671 = vmatmul.f32.gmra.mxu0 %v4129
      %v4672 = vpop.f32.mrf.mxu0
      %v4673 = vadd.f32 %v4599, %v4672
      %4674 = vmatmul.f32.gmra.mxu0 %v4138
      %v4675 = vpop.f32.mrf.mxu0
      %v4676 = vadd.f32 %v4599, %v4675
      %4677 = vmatmul.f32.gmra.mxu0 %v4147
      %v4678 = vpop.f32.mrf.mxu0
      %v4679 = vadd.f32 %v4599, %v4678
      %4680 = vmatmul.f32.gmra.mxu0 %v4156
      %v4681 = vpop.f32.mrf.mxu0
      %v4682 = vadd.f32 %v4599, %v4681
      %4683 = vmatmul.f32.gmra.mxu0 %v4165
      %v4684 = vpop.f32.mrf.mxu0
      %v4685 = vadd.f32 %v4599, %v4684
      %4686 = vmatmul.f32.gmra.mxu0 %v4174
      %v4687 = vpop.f32.mrf.mxu0
      %v4688 = vadd.f32 %v4599, %v4687
      %4689 = vmatmul.f32.gmra.mxu0 %v4183
      %v4690 = vpop.f32.mrf.mxu0
      %v4691 = vadd.f32 %v4599, %v4690
      %4692 = vmatmul.f32.gmra.mxu0 %v4192
      %v4693 = vpop.f32.mrf.mxu0
      %v4694 = vadd.f32 %v4599, %v4693
      %4695 = vmatmul.f32.gmra.mxu0 %v4201
      %v4696 = vpop.f32.mrf.mxu0
      %v4697 = vadd.f32 %v4599, %v4696
      %4698 = vmatmul.f32.gmra.mxu0 %v4210
      %v4699 = vpop.f32.mrf.mxu0
      %v4700 = vadd.f32 %v4599, %v4699
      %4701 = vmatmul.f32.gmra.mxu0 %v4219
      %v4702 = vpop.f32.mrf.mxu0
      %v4703 = vadd.f32 %v4599, %v4702
      %4704 = vmatmul.f32.gmra.mxu0 %v4228
      %v4705 = vpop.f32.mrf.mxu0
      %v4706 = vadd.f32 %v4599, %v4705
      %4707 = vmatmul.f32.gmra.mxu0 %v4237
      %v4708 = vpop.f32.mrf.mxu0
      %v4709 = vadd.f32 %v4599, %v4708
      %4710 = vmatmul.f32.gmra.mxu0 %v4246
      %v4711 = vpop.f32.mrf.mxu0
      %v4712 = vadd.f32 %v4599, %v4711
      %4713 = vmatmul.f32.gmra.mxu0 %v4255
      %v4714 = vpop.f32.mrf.mxu0
      %v4715 = vadd.f32 %v4599, %v4714
      %4716 = vmatmul.f32.gmra.mxu0 %v4264
      %v4717 = vpop.f32.mrf.mxu0
      %v4718 = vadd.f32 %v4599, %v4717
      %4719 = vmatmul.f32.gmra.mxu0 %v4273
      %v4720 = vpop.f32.mrf.mxu0
      %v4721 = vadd.f32 %v4599, %v4720
      %4722 = vmatmul.f32.gmra.mxu0 %v4282
      %v4723 = vpop.f32.mrf.mxu0
      %v4724 = vadd.f32 %v4599, %v4723
      %4725 = vmatmul.f32.gmra.mxu0 %v4291
      %v4726 = vpop.f32.mrf.mxu0
      %v4727 = vadd.f32 %v4599, %v4726
      %4728 = vmatmul.f32.gmra.mxu0 %v4300
      %v4729 = vpop.f32.mrf.mxu0
      %v4730 = vadd.f32 %v4599, %v4729
      %4731 = vmatmul.f32.gmra.mxu0 %v4309
      %v4732 = vpop.f32.mrf.mxu0
      %v4733 = vadd.f32 %v4599, %v4732
      %4734 = vmatmul.f32.gmra.mxu0 %v4318
      %v4735 = vpop.f32.mrf.mxu0
      %v4736 = vadd.f32 %v4599, %v4735
      %4737 = vmatmul.f32.gmra.mxu0 %v4327
      %v4738 = vpop.f32.mrf.mxu0
      %v4739 = vadd.f32 %v4599, %v4738
      %4740 = vmatmul.f32.gmra.mxu0 %v4336
      %v4741 = vpop.f32.mrf.mxu0
      %v4742 = vadd.f32 %v4599, %v4741
      %4743 = vmatmul.f32.gmra.mxu0 %v4345
      %v4744 = vpop.f32.mrf.mxu0
      %v4745 = vadd.f32 %v4599, %v4744
      %4746 = vmatmul.f32.gmra.mxu0 %v4354
      %v4747 = vpop.f32.mrf.mxu0
      %v4748 = vadd.f32 %v4599, %v4747
      %4749 = vmatmul.f32.gmra.mxu0 %v4363
      %v4750 = vpop.f32.mrf.mxu0
      %v4751 = vadd.f32 %v4599, %v4750
      %4752 = vmatmul.f32.gmra.mxu0 %v4372
      %v4753 = vpop.f32.mrf.mxu0
      %v4754 = vadd.f32 %v4599, %v4753
      %4755 = vmatmul.f32.gmra.mxu0 %v4381
      %v4756 = vpop.f32.mrf.mxu0
      %v4757 = vadd.f32 %v4599, %v4756
      %4758 = vmatmul.f32.gmra.mxu0 %v4390
      %v4759 = vpop.f32.mrf.mxu0
      %v4760 = vadd.f32 %v4599, %v4759
      %4761 = vmatmul.f32.gmra.mxu0 %v4399
      %v4762 = vpop.f32.mrf.mxu0
      %v4763 = vadd.f32 %v4599, %v4762
      %4764 = vmatmul.f32.gmra.mxu0 %v4408
      %v4765 = vpop.f32.mrf.mxu0
      %v4766 = vadd.f32 %v4599, %v4765
      %4767 = vmatmul.f32.gmra.mxu0 %v4417
      %v4768 = vpop.f32.mrf.mxu0
      %v4769 = vadd.f32 %v4599, %v4768
      %4770 = vmatmul.f32.gmra.mxu0 %v4426
      %v4771 = vpop.f32.mrf.mxu0
      %v4772 = vadd.f32 %v4599, %v4771
      %4773 = vmatmul.f32.gmra.mxu0 %v4435
      %v4774 = vpop.f32.mrf.mxu0
      %v4775 = vadd.f32 %v4599, %v4774
      %4776 = vmatmul.f32.gmra.mxu0 %v4444
      %v4777 = vpop.f32.mrf.mxu0
      %v4778 = vadd.f32 %v4599, %v4777
      %4779 = vdwg.mxu0
      %4780 = vmatpush.msra.mxu0 %v4484
      %4781 = vmatpush.msra.mxu0 %v4483
      %4782 = vmatpush.msra.mxu0 %v4482
      %4783 = vmatpush.msra.mxu0 %v4481
      %4784 = vmatpush.msra.mxu0 %v4480
      %4785 = vmatpush.msra.mxu0 %v4479
      %4786 = vmatpush.msra.mxu0 %v4478
      %4787 = vmatpush.msra.mxu0 %v4477
      %4788 = vmatpush.msra.mxu0 %v4476
      %4789 = vmatpush.msra.mxu0 %v4475
      %4790 = vmatpush.msra.mxu0 %v4474
      %4791 = vmatpush.msra.mxu0 %v4473
      %4792 = vmatpush.msra.mxu0 %v4472
      %4793 = vmatpush.msra.mxu0 %v4471
      %4794 = vmatpush.msra.mxu0 %v4470
      %4795 = vmatpush.msra.mxu0 %v4469
      %4796 = vmatmul.f32.gmra.mxu0 %v3968
      %v4797 = vpop.f32.mrf.mxu0
      %v4798 = vadd.f32 %v4619, %v4797
      %4799 = vmatmul.f32.gmra.mxu0 %v3977
      %v4800 = vpop.f32.mrf.mxu0
      %v4801 = vadd.f32 %v4622, %v4800
      %4802 = vmatmul.f32.gmra.mxu0 %v3986
      %v4803 = vpop.f32.mrf.mxu0
      %v4804 = vadd.f32 %v4625, %v4803
      %4805 = vmatmul.f32.gmra.mxu0 %v3995
      %v4806 = vpop.f32.mrf.mxu0
      %v4807 = vadd.f32 %v4628, %v4806
      %4808 = vmatmul.f32.gmra.mxu0 %v4004
      %v4809 = vpop.f32.mrf.mxu0
      %v4810 = vadd.f32 %v4631, %v4809
      %4811 = vmatmul.f32.gmra.mxu0 %v4013
      %v4812 = vpop.f32.mrf.mxu0
      %v4813 = vadd.f32 %v4634, %v4812
      %4814 = vmatmul.f32.gmra.mxu0 %v4022
      %v4815 = vpop.f32.mrf.mxu0
      %v4816 = vadd.f32 %v4637, %v4815
      %4817 = vmatmul.f32.gmra.mxu0 %v4031
      %v4818 = vpop.f32.mrf.mxu0
      %v4819 = vadd.f32 %v4640, %v4818
      %4820 = vmatmul.f32.gmra.mxu0 %v4040
      %v4821 = vpop.f32.mrf.mxu0
      %v4822 = vadd.f32 %v4643, %v4821
      %4823 = vmatmul.f32.gmra.mxu0 %v4049
      %v4824 = vpop.f32.mrf.mxu0
      %v4825 = vadd.f32 %v4646, %v4824
      %4826 = vmatmul.f32.gmra.mxu0 %v4058
      %v4827 = vpop.f32.mrf.mxu0
      %v4828 = vadd.f32 %v4649, %v4827
      %4829 = vmatmul.f32.gmra.mxu0 %v4067
      %v4830 = vpop.f32.mrf.mxu0
      %v4831 = vadd.f32 %v4652, %v4830
      %4832 = vmatmul.f32.gmra.mxu0 %v4076
      %v4833 = vpop.f32.mrf.mxu0
      %v4834 = vadd.f32 %v4655, %v4833
      %4835 = vmatmul.f32.gmra.mxu0 %v4085
      %v4836 = vpop.f32.mrf.mxu0
      %v4837 = vadd.f32 %v4658, %v4836
      %4838 = vmatmul.f32.gmra.mxu0 %v4094
      %v4839 = vpop.f32.mrf.mxu0
      %v4840 = vadd.f32 %v4661, %v4839
      %4841 = vmatmul.f32.gmra.mxu0 %v4103
      %v4842 = vpop.f32.mrf.mxu0
      %v4843 = vadd.f32 %v4664, %v4842
      %4844 = vmatmul.f32.gmra.mxu0 %v4112
      %v4845 = vpop.f32.mrf.mxu0
      %v4846 = vadd.f32 %v4667, %v4845
      %4847 = vmatmul.f32.gmra.mxu0 %v4121
      %v4848 = vpop.f32.mrf.mxu0
      %v4849 = vadd.f32 %v4670, %v4848
      %4850 = vmatmul.f32.gmra.mxu0 %v4130
      %v4851 = vpop.f32.mrf.mxu0
      %v4852 = vadd.f32 %v4673, %v4851
      %4853 = vmatmul.f32.gmra.mxu0 %v4139
      %v4854 = vpop.f32.mrf.mxu0
      %v4855 = vadd.f32 %v4676, %v4854
      %4856 = vmatmul.f32.gmra.mxu0 %v4148
      %v4857 = vpop.f32.mrf.mxu0
      %v4858 = vadd.f32 %v4679, %v4857
      %4859 = vmatmul.f32.gmra.mxu0 %v4157
      %v4860 = vpop.f32.mrf.mxu0
      %v4861 = vadd.f32 %v4682, %v4860
      %4862 = vmatmul.f32.gmra.mxu0 %v4166
      %v4863 = vpop.f32.mrf.mxu0
      %v4864 = vadd.f32 %v4685, %v4863
      %4865 = vmatmul.f32.gmra.mxu0 %v4175
      %v4866 = vpop.f32.mrf.mxu0
      %v4867 = vadd.f32 %v4688, %v4866
      %4868 = vmatmul.f32.gmra.mxu0 %v4184
      %v4869 = vpop.f32.mrf.mxu0
      %v4870 = vadd.f32 %v4691, %v4869
      %4871 = vmatmul.f32.gmra.mxu0 %v4193
      %v4872 = vpop.f32.mrf.mxu0
      %v4873 = vadd.f32 %v4694, %v4872
      %4874 = vmatmul.f32.gmra.mxu0 %v4202
      %v4875 = vpop.f32.mrf.mxu0
      %v4876 = vadd.f32 %v4697, %v4875
      %4877 = vmatmul.f32.gmra.mxu0 %v4211
      %v4878 = vpop.f32.mrf.mxu0
      %v4879 = vadd.f32 %v4700, %v4878
      %4880 = vmatmul.f32.gmra.mxu0 %v4220
      %v4881 = vpop.f32.mrf.mxu0
      %v4882 = vadd.f32 %v4703, %v4881
      %4883 = vmatmul.f32.gmra.mxu0 %v4229
      %v4884 = vpop.f32.mrf.mxu0
      %v4885 = vadd.f32 %v4706, %v4884
      %4886 = vmatmul.f32.gmra.mxu0 %v4238
      %v4887 = vpop.f32.mrf.mxu0
      %v4888 = vadd.f32 %v4709, %v4887
      %4889 = vmatmul.f32.gmra.mxu0 %v4247
      %v4890 = vpop.f32.mrf.mxu0
      %v4891 = vadd.f32 %v4712, %v4890
      %4892 = vmatmul.f32.gmra.mxu0 %v4256
      %v4893 = vpop.f32.mrf.mxu0
      %v4894 = vadd.f32 %v4715, %v4893
      %4895 = vmatmul.f32.gmra.mxu0 %v4265
      %v4896 = vpop.f32.mrf.mxu0
      %v4897 = vadd.f32 %v4718, %v4896
      %4898 = vmatmul.f32.gmra.mxu0 %v4274
      %v4899 = vpop.f32.mrf.mxu0
      %v4900 = vadd.f32 %v4721, %v4899
      %4901 = vmatmul.f32.gmra.mxu0 %v4283
      %v4902 = vpop.f32.mrf.mxu0
      %v4903 = vadd.f32 %v4724, %v4902
      %4904 = vmatmul.f32.gmra.mxu0 %v4292
      %v4905 = vpop.f32.mrf.mxu0
      %v4906 = vadd.f32 %v4727, %v4905
      %4907 = vmatmul.f32.gmra.mxu0 %v4301
      %v4908 = vpop.f32.mrf.mxu0
      %v4909 = vadd.f32 %v4730, %v4908
      %4910 = vmatmul.f32.gmra.mxu0 %v4310
      %v4911 = vpop.f32.mrf.mxu0
      %v4912 = vadd.f32 %v4733, %v4911
      %4913 = vmatmul.f32.gmra.mxu0 %v4319
      %v4914 = vpop.f32.mrf.mxu0
      %v4915 = vadd.f32 %v4736, %v4914
      %4916 = vmatmul.f32.gmra.mxu0 %v4328
      %v4917 = vpop.f32.mrf.mxu0
      %v4918 = vadd.f32 %v4739, %v4917
      %4919 = vmatmul.f32.gmra.mxu0 %v4337
      %v4920 = vpop.f32.mrf.mxu0
      %v4921 = vadd.f32 %v4742, %v4920
      %4922 = vmatmul.f32.gmra.mxu0 %v4346
      %v4923 = vpop.f32.mrf.mxu0
      %v4924 = vadd.f32 %v4745, %v4923
      %4925 = vmatmul.f32.gmra.mxu0 %v4355
      %v4926 = vpop.f32.mrf.mxu0
      %v4927 = vadd.f32 %v4748, %v4926
      %4928 = vmatmul.f32.gmra.mxu0 %v4364
      %v4929 = vpop.f32.mrf.mxu0
      %v4930 = vadd.f32 %v4751, %v4929
      %4931 = vmatmul.f32.gmra.mxu0 %v4373
      %v4932 = vpop.f32.mrf.mxu0
      %v4933 = vadd.f32 %v4754, %v4932
      %4934 = vmatmul.f32.gmra.mxu0 %v4382
      %v4935 = vpop.f32.mrf.mxu0
      %v4936 = vadd.f32 %v4757, %v4935
      %4937 = vmatmul.f32.gmra.mxu0 %v4391
      %v4938 = vpop.f32.mrf.mxu0
      %v4939 = vadd.f32 %v4760, %v4938
      %4940 = vmatmul.f32.gmra.mxu0 %v4400
      %v4941 = vpop.f32.mrf.mxu0
      %v4942 = vadd.f32 %v4763, %v4941
      %4943 = vmatmul.f32.gmra.mxu0 %v4409
      %v4944 = vpop.f32.mrf.mxu0
      %v4945 = vadd.f32 %v4766, %v4944
      %4946 = vmatmul.f32.gmra.mxu0 %v4418
      %v4947 = vpop.f32.mrf.mxu0
      %v4948 = vadd.f32 %v4769, %v4947
      %4949 = vmatmul.f32.gmra.mxu0 %v4427
      %v4950 = vpop.f32.mrf.mxu0
      %v4951 = vadd.f32 %v4772, %v4950
      %4952 = vmatmul.f32.gmra.mxu0 %v4436
      %v4953 = vpop.f32.mrf.mxu0
      %v4954 = vadd.f32 %v4775, %v4953
      %4955 = vmatmul.f32.gmra.mxu0 %v4445
      %v4956 = vpop.f32.mrf.mxu0
      %v4957 = vadd.f32 %v4778, %v4956
      %4958 = vdwg.mxu0
      %4959 = vmatpush.msra.mxu0 %v4500
      %4960 = vmatpush.msra.mxu0 %v4499
      %4961 = vmatpush.msra.mxu0 %v4498
      %4962 = vmatpush.msra.mxu0 %v4497
      %4963 = vmatpush.msra.mxu0 %v4496
      %4964 = vmatpush.msra.mxu0 %v4495
      %4965 = vmatpush.msra.mxu0 %v4494
      %4966 = vmatpush.msra.mxu0 %v4493
      %4967 = vmatpush.msra.mxu0 %v4492
      %4968 = vmatpush.msra.mxu0 %v4491
      %4969 = vmatpush.msra.mxu0 %v4490
      %4970 = vmatpush.msra.mxu0 %v4489
      %4971 = vmatpush.msra.mxu0 %v4488
      %4972 = vmatpush.msra.mxu0 %v4487
      %4973 = vmatpush.msra.mxu0 %v4486
      %4974 = vmatpush.msra.mxu0 %v4485
      %4975 = vmatmul.f32.gmra.mxu0 %v3969
      %v4976 = vpop.f32.mrf.mxu0
      %v4977 = vadd.f32 %v4798, %v4976
      %4978 = vmatmul.f32.gmra.mxu0 %v3978
      %v4979 = vpop.f32.mrf.mxu0
      %v4980 = vadd.f32 %v4801, %v4979
      %4981 = vmatmul.f32.gmra.mxu0 %v3987
      %v4982 = vpop.f32.mrf.mxu0
      %v4983 = vadd.f32 %v4804, %v4982
      %4984 = vmatmul.f32.gmra.mxu0 %v3996
      %v4985 = vpop.f32.mrf.mxu0
      %v4986 = vadd.f32 %v4807, %v4985
      %4987 = vmatmul.f32.gmra.mxu0 %v4005
      %v4988 = vpop.f32.mrf.mxu0
      %v4989 = vadd.f32 %v4810, %v4988
      %4990 = vmatmul.f32.gmra.mxu0 %v4014
      %v4991 = vpop.f32.mrf.mxu0
      %v4992 = vadd.f32 %v4813, %v4991
      %4993 = vmatmul.f32.gmra.mxu0 %v4023
      %v4994 = vpop.f32.mrf.mxu0
      %v4995 = vadd.f32 %v4816, %v4994
      %4996 = vmatmul.f32.gmra.mxu0 %v4032
      %v4997 = vpop.f32.mrf.mxu0
      %v4998 = vadd.f32 %v4819, %v4997
      %4999 = vmatmul.f32.gmra.mxu0 %v4041
      %v5000 = vpop.f32.mrf.mxu0
      %v5001 = vadd.f32 %v4822, %v5000
      %5002 = vmatmul.f32.gmra.mxu0 %v4050
      %v5003 = vpop.f32.mrf.mxu0
      %v5004 = vadd.f32 %v4825, %v5003
      %5005 = vmatmul.f32.gmra.mxu0 %v4059
      %v5006 = vpop.f32.mrf.mxu0
      %v5007 = vadd.f32 %v4828, %v5006
      %5008 = vmatmul.f32.gmra.mxu0 %v4068
      %v5009 = vpop.f32.mrf.mxu0
      %v5010 = vadd.f32 %v4831, %v5009
      %5011 = vmatmul.f32.gmra.mxu0 %v4077
      %v5012 = vpop.f32.mrf.mxu0
      %v5013 = vadd.f32 %v4834, %v5012
      %5014 = vmatmul.f32.gmra.mxu0 %v4086
      %v5015 = vpop.f32.mrf.mxu0
      %v5016 = vadd.f32 %v4837, %v5015
      %5017 = vmatmul.f32.gmra.mxu0 %v4095
      %v5018 = vpop.f32.mrf.mxu0
      %v5019 = vadd.f32 %v4840, %v5018
      %5020 = vmatmul.f32.gmra.mxu0 %v4104
      %v5021 = vpop.f32.mrf.mxu0
      %v5022 = vadd.f32 %v4843, %v5021
      %5023 = vmatmul.f32.gmra.mxu0 %v4113
      %v5024 = vpop.f32.mrf.mxu0
      %v5025 = vadd.f32 %v4846, %v5024
      %5026 = vmatmul.f32.gmra.mxu0 %v4122
      %v5027 = vpop.f32.mrf.mxu0
      %v5028 = vadd.f32 %v4849, %v5027
      %5029 = vmatmul.f32.gmra.mxu0 %v4131
      %v5030 = vpop.f32.mrf.mxu0
      %v5031 = vadd.f32 %v4852, %v5030
      %5032 = vmatmul.f32.gmra.mxu0 %v4140
      %v5033 = vpop.f32.mrf.mxu0
      %v5034 = vadd.f32 %v4855, %v5033
      %5035 = vmatmul.f32.gmra.mxu0 %v4149
      %v5036 = vpop.f32.mrf.mxu0
      %v5037 = vadd.f32 %v4858, %v5036
      %5038 = vmatmul.f32.gmra.mxu0 %v4158
      %v5039 = vpop.f32.mrf.mxu0
      %v5040 = vadd.f32 %v4861, %v5039
      %5041 = vmatmul.f32.gmra.mxu0 %v4167
      %v5042 = vpop.f32.mrf.mxu0
      %v5043 = vadd.f32 %v4864, %v5042
      %5044 = vmatmul.f32.gmra.mxu0 %v4176
      %v5045 = vpop.f32.mrf.mxu0
      %v5046 = vadd.f32 %v4867, %v5045
      %5047 = vmatmul.f32.gmra.mxu0 %v4185
      %v5048 = vpop.f32.mrf.mxu0
      %v5049 = vadd.f32 %v4870, %v5048
      %5050 = vmatmul.f32.gmra.mxu0 %v4194
      %v5051 = vpop.f32.mrf.mxu0
      %v5052 = vadd.f32 %v4873, %v5051
      %5053 = vmatmul.f32.gmra.mxu0 %v4203
      %v5054 = vpop.f32.mrf.mxu0
      %v5055 = vadd.f32 %v4876, %v5054
      %5056 = vmatmul.f32.gmra.mxu0 %v4212
      %v5057 = vpop.f32.mrf.mxu0
      %v5058 = vadd.f32 %v4879, %v5057
      %5059 = vmatmul.f32.gmra.mxu0 %v4221
      %v5060 = vpop.f32.mrf.mxu0
      %v5061 = vadd.f32 %v4882, %v5060
      %5062 = vmatmul.f32.gmra.mxu0 %v4230
      %v5063 = vpop.f32.mrf.mxu0
      %v5064 = vadd.f32 %v4885, %v5063
      %5065 = vmatmul.f32.gmra.mxu0 %v4239
      %v5066 = vpop.f32.mrf.mxu0
      %v5067 = vadd.f32 %v4888, %v5066
      %5068 = vmatmul.f32.gmra.mxu0 %v4248
      %v5069 = vpop.f32.mrf.mxu0
      %v5070 = vadd.f32 %v4891, %v5069
      %5071 = vmatmul.f32.gmra.mxu0 %v4257
      %v5072 = vpop.f32.mrf.mxu0
      %v5073 = vadd.f32 %v4894, %v5072
      %5074 = vmatmul.f32.gmra.mxu0 %v4266
      %v5075 = vpop.f32.mrf.mxu0
      %v5076 = vadd.f32 %v4897, %v5075
      %5077 = vmatmul.f32.gmra.mxu0 %v4275
      %v5078 = vpop.f32.mrf.mxu0
      %v5079 = vadd.f32 %v4900, %v5078
      %5080 = vmatmul.f32.gmra.mxu0 %v4284
      %v5081 = vpop.f32.mrf.mxu0
      %v5082 = vadd.f32 %v4903, %v5081
      %5083 = vmatmul.f32.gmra.mxu0 %v4293
      %v5084 = vpop.f32.mrf.mxu0
      %v5085 = vadd.f32 %v4906, %v5084
      %5086 = vmatmul.f32.gmra.mxu0 %v4302
      %v5087 = vpop.f32.mrf.mxu0
      %v5088 = vadd.f32 %v4909, %v5087
      %5089 = vmatmul.f32.gmra.mxu0 %v4311
      %v5090 = vpop.f32.mrf.mxu0
      %v5091 = vadd.f32 %v4912, %v5090
      %5092 = vmatmul.f32.gmra.mxu0 %v4320
      %v5093 = vpop.f32.mrf.mxu0
      %v5094 = vadd.f32 %v4915, %v5093
      %5095 = vmatmul.f32.gmra.mxu0 %v4329
      %v5096 = vpop.f32.mrf.mxu0
      %v5097 = vadd.f32 %v4918, %v5096
      %5098 = vmatmul.f32.gmra.mxu0 %v4338
      %v5099 = vpop.f32.mrf.mxu0
      %v5100 = vadd.f32 %v4921, %v5099
      %5101 = vmatmul.f32.gmra.mxu0 %v4347
      %v5102 = vpop.f32.mrf.mxu0
      %v5103 = vadd.f32 %v4924, %v5102
      %5104 = vmatmul.f32.gmra.mxu0 %v4356
      %v5105 = vpop.f32.mrf.mxu0
      %v5106 = vadd.f32 %v4927, %v5105
      %5107 = vmatmul.f32.gmra.mxu0 %v4365
      %v5108 = vpop.f32.mrf.mxu0
      %v5109 = vadd.f32 %v4930, %v5108
      %5110 = vmatmul.f32.gmra.mxu0 %v4374
      %v5111 = vpop.f32.mrf.mxu0
      %v5112 = vadd.f32 %v4933, %v5111
      %5113 = vmatmul.f32.gmra.mxu0 %v4383
      %v5114 = vpop.f32.mrf.mxu0
      %v5115 = vadd.f32 %v4936, %v5114
      %5116 = vmatmul.f32.gmra.mxu0 %v4392
      %v5117 = vpop.f32.mrf.mxu0
      %v5118 = vadd.f32 %v4939, %v5117
      %5119 = vmatmul.f32.gmra.mxu0 %v4401
      %v5120 = vpop.f32.mrf.mxu0
      %v5121 = vadd.f32 %v4942, %v5120
      %5122 = vmatmul.f32.gmra.mxu0 %v4410
      %v5123 = vpop.f32.mrf.mxu0
      %v5124 = vadd.f32 %v4945, %v5123
      %5125 = vmatmul.f32.gmra.mxu0 %v4419
      %v5126 = vpop.f32.mrf.mxu0
      %v5127 = vadd.f32 %v4948, %v5126
      %5128 = vmatmul.f32.gmra.mxu0 %v4428
      %v5129 = vpop.f32.mrf.mxu0
      %v5130 = vadd.f32 %v4951, %v5129
      %5131 = vmatmul.f32.gmra.mxu0 %v4437
      %v5132 = vpop.f32.mrf.mxu0
      %v5133 = vadd.f32 %v4954, %v5132
      %5134 = vmatmul.f32.gmra.mxu0 %v4446
      %v5135 = vpop.f32.mrf.mxu0
      %v5136 = vadd.f32 %v4957, %v5135
      %5137 = vdwg.mxu0
      %5138 = vmatpush.msra.mxu0 %v4516
      %5139 = vmatpush.msra.mxu0 %v4515
      %5140 = vmatpush.msra.mxu0 %v4514
      %5141 = vmatpush.msra.mxu0 %v4513
      %5142 = vmatpush.msra.mxu0 %v4512
      %5143 = vmatpush.msra.mxu0 %v4511
      %5144 = vmatpush.msra.mxu0 %v4510
      %5145 = vmatpush.msra.mxu0 %v4509
      %5146 = vmatpush.msra.mxu0 %v4508
      %5147 = vmatpush.msra.mxu0 %v4507
      %5148 = vmatpush.msra.mxu0 %v4506
      %5149 = vmatpush.msra.mxu0 %v4505
      %5150 = vmatpush.msra.mxu0 %v4504
      %5151 = vmatpush.msra.mxu0 %v4503
      %5152 = vmatpush.msra.mxu0 %v4502
      %5153 = vmatpush.msra.mxu0 %v4501
      %5154 = vmatmul.f32.gmra.mxu0 %v3970
      %v5155 = vpop.f32.mrf.mxu0
      %v5156 = vadd.f32 %v4977, %v5155
      %5157 = vmatmul.f32.gmra.mxu0 %v3979
      %v5158 = vpop.f32.mrf.mxu0
      %v5159 = vadd.f32 %v4980, %v5158
      %5160 = vmatmul.f32.gmra.mxu0 %v3988
      %v5161 = vpop.f32.mrf.mxu0
      %v5162 = vadd.f32 %v4983, %v5161
      %5163 = vmatmul.f32.gmra.mxu0 %v3997
      %v5164 = vpop.f32.mrf.mxu0
      %v5165 = vadd.f32 %v4986, %v5164
      %5166 = vmatmul.f32.gmra.mxu0 %v4006
      %v5167 = vpop.f32.mrf.mxu0
      %v5168 = vadd.f32 %v4989, %v5167
      %5169 = vmatmul.f32.gmra.mxu0 %v4015
      %v5170 = vpop.f32.mrf.mxu0
      %v5171 = vadd.f32 %v4992, %v5170
      %5172 = vmatmul.f32.gmra.mxu0 %v4024
      %v5173 = vpop.f32.mrf.mxu0
      %v5174 = vadd.f32 %v4995, %v5173
      %5175 = vmatmul.f32.gmra.mxu0 %v4033
      %v5176 = vpop.f32.mrf.mxu0
      %v5177 = vadd.f32 %v4998, %v5176
      %5178 = vmatmul.f32.gmra.mxu0 %v4042
      %v5179 = vpop.f32.mrf.mxu0
      %v5180 = vadd.f32 %v5001, %v5179
      %5181 = vmatmul.f32.gmra.mxu0 %v4051
      %v5182 = vpop.f32.mrf.mxu0
      %v5183 = vadd.f32 %v5004, %v5182
      %5184 = vmatmul.f32.gmra.mxu0 %v4060
      %v5185 = vpop.f32.mrf.mxu0
      %v5186 = vadd.f32 %v5007, %v5185
      %5187 = vmatmul.f32.gmra.mxu0 %v4069
      %v5188 = vpop.f32.mrf.mxu0
      %v5189 = vadd.f32 %v5010, %v5188
      %5190 = vmatmul.f32.gmra.mxu0 %v4078
      %v5191 = vpop.f32.mrf.mxu0
      %v5192 = vadd.f32 %v5013, %v5191
      %5193 = vmatmul.f32.gmra.mxu0 %v4087
      %v5194 = vpop.f32.mrf.mxu0
      %v5195 = vadd.f32 %v5016, %v5194
      %5196 = vmatmul.f32.gmra.mxu0 %v4096
      %v5197 = vpop.f32.mrf.mxu0
      %v5198 = vadd.f32 %v5019, %v5197
      %5199 = vmatmul.f32.gmra.mxu0 %v4105
      %v5200 = vpop.f32.mrf.mxu0
      %v5201 = vadd.f32 %v5022, %v5200
      %5202 = vmatmul.f32.gmra.mxu0 %v4114
      %v5203 = vpop.f32.mrf.mxu0
      %v5204 = vadd.f32 %v5025, %v5203
      %5205 = vmatmul.f32.gmra.mxu0 %v4123
      %v5206 = vpop.f32.mrf.mxu0
      %v5207 = vadd.f32 %v5028, %v5206
      %5208 = vmatmul.f32.gmra.mxu0 %v4132
      %v5209 = vpop.f32.mrf.mxu0
      %v5210 = vadd.f32 %v5031, %v5209
      %5211 = vmatmul.f32.gmra.mxu0 %v4141
      %v5212 = vpop.f32.mrf.mxu0
      %v5213 = vadd.f32 %v5034, %v5212
      %5214 = vmatmul.f32.gmra.mxu0 %v4150
      %v5215 = vpop.f32.mrf.mxu0
      %v5216 = vadd.f32 %v5037, %v5215
      %5217 = vmatmul.f32.gmra.mxu0 %v4159
      %v5218 = vpop.f32.mrf.mxu0
      %v5219 = vadd.f32 %v5040, %v5218
      %5220 = vmatmul.f32.gmra.mxu0 %v4168
      %v5221 = vpop.f32.mrf.mxu0
      %v5222 = vadd.f32 %v5043, %v5221
      %5223 = vmatmul.f32.gmra.mxu0 %v4177
      %v5224 = vpop.f32.mrf.mxu0
      %v5225 = vadd.f32 %v5046, %v5224
      %5226 = vmatmul.f32.gmra.mxu0 %v4186
      %v5227 = vpop.f32.mrf.mxu0
      %v5228 = vadd.f32 %v5049, %v5227
      %5229 = vmatmul.f32.gmra.mxu0 %v4195
      %v5230 = vpop.f32.mrf.mxu0
      %v5231 = vadd.f32 %v5052, %v5230
      %5232 = vmatmul.f32.gmra.mxu0 %v4204
      %v5233 = vpop.f32.mrf.mxu0
      %v5234 = vadd.f32 %v5055, %v5233
      %5235 = vmatmul.f32.gmra.mxu0 %v4213
      %v5236 = vpop.f32.mrf.mxu0
      %v5237 = vadd.f32 %v5058, %v5236
      %5238 = vmatmul.f32.gmra.mxu0 %v4222
      %v5239 = vpop.f32.mrf.mxu0
      %v5240 = vadd.f32 %v5061, %v5239
      %5241 = vmatmul.f32.gmra.mxu0 %v4231
      %v5242 = vpop.f32.mrf.mxu0
      %v5243 = vadd.f32 %v5064, %v5242
      %5244 = vmatmul.f32.gmra.mxu0 %v4240
      %v5245 = vpop.f32.mrf.mxu0
      %v5246 = vadd.f32 %v5067, %v5245
      %5247 = vmatmul.f32.gmra.mxu0 %v4249
      %v5248 = vpop.f32.mrf.mxu0
      %v5249 = vadd.f32 %v5070, %v5248
      %5250 = vmatmul.f32.gmra.mxu0 %v4258
      %v5251 = vpop.f32.mrf.mxu0
      %v5252 = vadd.f32 %v5073, %v5251
      %5253 = vmatmul.f32.gmra.mxu0 %v4267
      %v5254 = vpop.f32.mrf.mxu0
      %v5255 = vadd.f32 %v5076, %v5254
      %5256 = vmatmul.f32.gmra.mxu0 %v4276
      %v5257 = vpop.f32.mrf.mxu0
      %v5258 = vadd.f32 %v5079, %v5257
      %5259 = vmatmul.f32.gmra.mxu0 %v4285
      %v5260 = vpop.f32.mrf.mxu0
      %v5261 = vadd.f32 %v5082, %v5260
      %5262 = vmatmul.f32.gmra.mxu0 %v4294
      %v5263 = vpop.f32.mrf.mxu0
      %v5264 = vadd.f32 %v5085, %v5263
      %5265 = vmatmul.f32.gmra.mxu0 %v4303
      %v5266 = vpop.f32.mrf.mxu0
      %v5267 = vadd.f32 %v5088, %v5266
      %5268 = vmatmul.f32.gmra.mxu0 %v4312
      %v5269 = vpop.f32.mrf.mxu0
      %v5270 = vadd.f32 %v5091, %v5269
      %5271 = vmatmul.f32.gmra.mxu0 %v4321
      %v5272 = vpop.f32.mrf.mxu0
      %v5273 = vadd.f32 %v5094, %v5272
      %5274 = vmatmul.f32.gmra.mxu0 %v4330
      %v5275 = vpop.f32.mrf.mxu0
      %v5276 = vadd.f32 %v5097, %v5275
      %5277 = vmatmul.f32.gmra.mxu0 %v4339
      %v5278 = vpop.f32.mrf.mxu0
      %v5279 = vadd.f32 %v5100, %v5278
      %5280 = vmatmul.f32.gmra.mxu0 %v4348
      %v5281 = vpop.f32.mrf.mxu0
      %v5282 = vadd.f32 %v5103, %v5281
      %5283 = vmatmul.f32.gmra.mxu0 %v4357
      %v5284 = vpop.f32.mrf.mxu0
      %v5285 = vadd.f32 %v5106, %v5284
      %5286 = vmatmul.f32.gmra.mxu0 %v4366
      %v5287 = vpop.f32.mrf.mxu0
      %v5288 = vadd.f32 %v5109, %v5287
      %5289 = vmatmul.f32.gmra.mxu0 %v4375
      %v5290 = vpop.f32.mrf.mxu0
      %v5291 = vadd.f32 %v5112, %v5290
      %5292 = vmatmul.f32.gmra.mxu0 %v4384
      %v5293 = vpop.f32.mrf.mxu0
      %v5294 = vadd.f32 %v5115, %v5293
      %5295 = vmatmul.f32.gmra.mxu0 %v4393
      %v5296 = vpop.f32.mrf.mxu0
      %v5297 = vadd.f32 %v5118, %v5296
      %5298 = vmatmul.f32.gmra.mxu0 %v4402
      %v5299 = vpop.f32.mrf.mxu0
      %v5300 = vadd.f32 %v5121, %v5299
      %5301 = vmatmul.f32.gmra.mxu0 %v4411
      %v5302 = vpop.f32.mrf.mxu0
      %v5303 = vadd.f32 %v5124, %v5302
      %5304 = vmatmul.f32.gmra.mxu0 %v4420
      %v5305 = vpop.f32.mrf.mxu0
      %v5306 = vadd.f32 %v5127, %v5305
      %5307 = vmatmul.f32.gmra.mxu0 %v4429
      %v5308 = vpop.f32.mrf.mxu0
      %v5309 = vadd.f32 %v5130, %v5308
      %5310 = vmatmul.f32.gmra.mxu0 %v4438
      %v5311 = vpop.f32.mrf.mxu0
      %v5312 = vadd.f32 %v5133, %v5311
      %5313 = vmatmul.f32.gmra.mxu0 %v4447
      %v5314 = vpop.f32.mrf.mxu0
      %v5315 = vadd.f32 %v5136, %v5314
      %5316 = vdwg.mxu0
      %5317 = vmatpush.msra.mxu0 %v4532
      %5318 = vmatpush.msra.mxu0 %v4531
      %5319 = vmatpush.msra.mxu0 %v4530
      %5320 = vmatpush.msra.mxu0 %v4529
      %5321 = vmatpush.msra.mxu0 %v4528
      %5322 = vmatpush.msra.mxu0 %v4527
      %5323 = vmatpush.msra.mxu0 %v4526
      %5324 = vmatpush.msra.mxu0 %v4525
      %5325 = vmatpush.msra.mxu0 %v4524
      %5326 = vmatpush.msra.mxu0 %v4523
      %5327 = vmatpush.msra.mxu0 %v4522
      %5328 = vmatpush.msra.mxu0 %v4521
      %5329 = vmatpush.msra.mxu0 %v4520
      %5330 = vmatpush.msra.mxu0 %v4519
      %5331 = vmatpush.msra.mxu0 %v4518
      %5332 = vmatpush.msra.mxu0 %v4517
      %5333 = vmatmul.f32.gmra.mxu0 %v3971
      %v5334 = vpop.f32.mrf.mxu0
      %v5335 = vadd.f32 %v5156, %v5334
      %5336 = vmatmul.f32.gmra.mxu0 %v3980
      %v5337 = vpop.f32.mrf.mxu0
      %v5338 = vadd.f32 %v5159, %v5337
      %5339 = vmatmul.f32.gmra.mxu0 %v3989
      %v5340 = vpop.f32.mrf.mxu0
      %v5341 = vadd.f32 %v5162, %v5340
      %5342 = vmatmul.f32.gmra.mxu0 %v3998
      %v5343 = vpop.f32.mrf.mxu0
      %v5344 = vadd.f32 %v5165, %v5343
      %5345 = vmatmul.f32.gmra.mxu0 %v4007
      %v5346 = vpop.f32.mrf.mxu0
      %v5347 = vadd.f32 %v5168, %v5346
      %5348 = vmatmul.f32.gmra.mxu0 %v4016
      %v5349 = vpop.f32.mrf.mxu0
      %v5350 = vadd.f32 %v5171, %v5349
      %5351 = vmatmul.f32.gmra.mxu0 %v4025
      %v5352 = vpop.f32.mrf.mxu0
      %v5353 = vadd.f32 %v5174, %v5352
      %5354 = vmatmul.f32.gmra.mxu0 %v4034
      %v5355 = vpop.f32.mrf.mxu0
      %v5356 = vadd.f32 %v5177, %v5355
      %5357 = vmatmul.f32.gmra.mxu0 %v4043
      %v5358 = vpop.f32.mrf.mxu0
      %v5359 = vadd.f32 %v5180, %v5358
      %5360 = vmatmul.f32.gmra.mxu0 %v4052
      %v5361 = vpop.f32.mrf.mxu0
      %v5362 = vadd.f32 %v5183, %v5361
      %5363 = vmatmul.f32.gmra.mxu0 %v4061
      %v5364 = vpop.f32.mrf.mxu0
      %v5365 = vadd.f32 %v5186, %v5364
      %5366 = vmatmul.f32.gmra.mxu0 %v4070
      %v5367 = vpop.f32.mrf.mxu0
      %v5368 = vadd.f32 %v5189, %v5367
      %5369 = vmatmul.f32.gmra.mxu0 %v4079
      %v5370 = vpop.f32.mrf.mxu0
      %v5371 = vadd.f32 %v5192, %v5370
      %5372 = vmatmul.f32.gmra.mxu0 %v4088
      %v5373 = vpop.f32.mrf.mxu0
      %v5374 = vadd.f32 %v5195, %v5373
      %5375 = vmatmul.f32.gmra.mxu0 %v4097
      %v5376 = vpop.f32.mrf.mxu0
      %v5377 = vadd.f32 %v5198, %v5376
      %5378 = vmatmul.f32.gmra.mxu0 %v4106
      %v5379 = vpop.f32.mrf.mxu0
      %v5380 = vadd.f32 %v5201, %v5379
      %5381 = vmatmul.f32.gmra.mxu0 %v4115
      %v5382 = vpop.f32.mrf.mxu0
      %v5383 = vadd.f32 %v5204, %v5382
      %5384 = vmatmul.f32.gmra.mxu0 %v4124
      %v5385 = vpop.f32.mrf.mxu0
      %v5386 = vadd.f32 %v5207, %v5385
      %5387 = vmatmul.f32.gmra.mxu0 %v4133
      %v5388 = vpop.f32.mrf.mxu0
      %v5389 = vadd.f32 %v5210, %v5388
      %5390 = vmatmul.f32.gmra.mxu0 %v4142
      %v5391 = vpop.f32.mrf.mxu0
      %v5392 = vadd.f32 %v5213, %v5391
      %5393 = vmatmul.f32.gmra.mxu0 %v4151
      %v5394 = vpop.f32.mrf.mxu0
      %v5395 = vadd.f32 %v5216, %v5394
      %5396 = vmatmul.f32.gmra.mxu0 %v4160
      %v5397 = vpop.f32.mrf.mxu0
      %v5398 = vadd.f32 %v5219, %v5397
      %5399 = vmatmul.f32.gmra.mxu0 %v4169
      %v5400 = vpop.f32.mrf.mxu0
      %v5401 = vadd.f32 %v5222, %v5400
      %5402 = vmatmul.f32.gmra.mxu0 %v4178
      %v5403 = vpop.f32.mrf.mxu0
      %v5404 = vadd.f32 %v5225, %v5403
      %5405 = vmatmul.f32.gmra.mxu0 %v4187
      %v5406 = vpop.f32.mrf.mxu0
      %v5407 = vadd.f32 %v5228, %v5406
      %5408 = vmatmul.f32.gmra.mxu0 %v4196
      %v5409 = vpop.f32.mrf.mxu0
      %v5410 = vadd.f32 %v5231, %v5409
      %5411 = vmatmul.f32.gmra.mxu0 %v4205
      %v5412 = vpop.f32.mrf.mxu0
      %v5413 = vadd.f32 %v5234, %v5412
      %5414 = vmatmul.f32.gmra.mxu0 %v4214
      %v5415 = vpop.f32.mrf.mxu0
      %v5416 = vadd.f32 %v5237, %v5415
      %5417 = vmatmul.f32.gmra.mxu0 %v4223
      %v5418 = vpop.f32.mrf.mxu0
      %v5419 = vadd.f32 %v5240, %v5418
      %5420 = vmatmul.f32.gmra.mxu0 %v4232
      %v5421 = vpop.f32.mrf.mxu0
      %v5422 = vadd.f32 %v5243, %v5421
      %5423 = vmatmul.f32.gmra.mxu0 %v4241
      %v5424 = vpop.f32.mrf.mxu0
      %v5425 = vadd.f32 %v5246, %v5424
      %5426 = vmatmul.f32.gmra.mxu0 %v4250
      %v5427 = vpop.f32.mrf.mxu0
      %v5428 = vadd.f32 %v5249, %v5427
      %5429 = vmatmul.f32.gmra.mxu0 %v4259
      %v5430 = vpop.f32.mrf.mxu0
      %v5431 = vadd.f32 %v5252, %v5430
      %5432 = vmatmul.f32.gmra.mxu0 %v4268
      %v5433 = vpop.f32.mrf.mxu0
      %v5434 = vadd.f32 %v5255, %v5433
      %5435 = vmatmul.f32.gmra.mxu0 %v4277
      %v5436 = vpop.f32.mrf.mxu0
      %v5437 = vadd.f32 %v5258, %v5436
      %5438 = vmatmul.f32.gmra.mxu0 %v4286
      %v5439 = vpop.f32.mrf.mxu0
      %v5440 = vadd.f32 %v5261, %v5439
      %5441 = vmatmul.f32.gmra.mxu0 %v4295
      %v5442 = vpop.f32.mrf.mxu0
      %v5443 = vadd.f32 %v5264, %v5442
      %5444 = vmatmul.f32.gmra.mxu0 %v4304
      %v5445 = vpop.f32.mrf.mxu0
      %v5446 = vadd.f32 %v5267, %v5445
      %5447 = vmatmul.f32.gmra.mxu0 %v4313
      %v5448 = vpop.f32.mrf.mxu0
      %v5449 = vadd.f32 %v5270, %v5448
      %5450 = vmatmul.f32.gmra.mxu0 %v4322
      %v5451 = vpop.f32.mrf.mxu0
      %v5452 = vadd.f32 %v5273, %v5451
      %5453 = vmatmul.f32.gmra.mxu0 %v4331
      %v5454 = vpop.f32.mrf.mxu0
      %v5455 = vadd.f32 %v5276, %v5454
      %5456 = vmatmul.f32.gmra.mxu0 %v4340
      %v5457 = vpop.f32.mrf.mxu0
      %v5458 = vadd.f32 %v5279, %v5457
      %5459 = vmatmul.f32.gmra.mxu0 %v4349
      %v5460 = vpop.f32.mrf.mxu0
      %v5461 = vadd.f32 %v5282, %v5460
      %5462 = vmatmul.f32.gmra.mxu0 %v4358
      %v5463 = vpop.f32.mrf.mxu0
      %v5464 = vadd.f32 %v5285, %v5463
      %5465 = vmatmul.f32.gmra.mxu0 %v4367
      %v5466 = vpop.f32.mrf.mxu0
      %v5467 = vadd.f32 %v5288, %v5466
      %5468 = vmatmul.f32.gmra.mxu0 %v4376
      %v5469 = vpop.f32.mrf.mxu0
      %v5470 = vadd.f32 %v5291, %v5469
      %5471 = vmatmul.f32.gmra.mxu0 %v4385
      %v5472 = vpop.f32.mrf.mxu0
      %v5473 = vadd.f32 %v5294, %v5472
      %5474 = vmatmul.f32.gmra.mxu0 %v4394
      %v5475 = vpop.f32.mrf.mxu0
      %v5476 = vadd.f32 %v5297, %v5475
      %5477 = vmatmul.f32.gmra.mxu0 %v4403
      %v5478 = vpop.f32.mrf.mxu0
      %v5479 = vadd.f32 %v5300, %v5478
      %5480 = vmatmul.f32.gmra.mxu0 %v4412
      %v5481 = vpop.f32.mrf.mxu0
      %v5482 = vadd.f32 %v5303, %v5481
      %5483 = vmatmul.f32.gmra.mxu0 %v4421
      %v5484 = vpop.f32.mrf.mxu0
      %v5485 = vadd.f32 %v5306, %v5484
      %5486 = vmatmul.f32.gmra.mxu0 %v4430
      %v5487 = vpop.f32.mrf.mxu0
      %v5488 = vadd.f32 %v5309, %v5487
      %5489 = vmatmul.f32.gmra.mxu0 %v4439
      %v5490 = vpop.f32.mrf.mxu0
      %v5491 = vadd.f32 %v5312, %v5490
      %5492 = vmatmul.f32.gmra.mxu0 %v4448
      %v5493 = vpop.f32.mrf.mxu0
      %v5494 = vadd.f32 %v5315, %v5493
      %5495 = vdwg.mxu0
      %5496 = vmatpush.msra.mxu0 %v4548
      %5497 = vmatpush.msra.mxu0 %v4547
      %5498 = vmatpush.msra.mxu0 %v4546
      %5499 = vmatpush.msra.mxu0 %v4545
      %5500 = vmatpush.msra.mxu0 %v4544
      %5501 = vmatpush.msra.mxu0 %v4543
      %5502 = vmatpush.msra.mxu0 %v4542
      %5503 = vmatpush.msra.mxu0 %v4541
      %5504 = vmatpush.msra.mxu0 %v4540
      %5505 = vmatpush.msra.mxu0 %v4539
      %5506 = vmatpush.msra.mxu0 %v4538
      %5507 = vmatpush.msra.mxu0 %v4537
      %5508 = vmatpush.msra.mxu0 %v4536
      %5509 = vmatpush.msra.mxu0 %v4535
      %5510 = vmatpush.msra.mxu0 %v4534
      %5511 = vmatpush.msra.mxu0 %v4533
      %5512 = vmatmul.f32.gmra.mxu0 %v3972
      %v5513 = vpop.f32.mrf.mxu0
      %v5514 = vadd.f32 %v5335, %v5513
      %5515 = vmatmul.f32.gmra.mxu0 %v3981
      %v5516 = vpop.f32.mrf.mxu0
      %v5517 = vadd.f32 %v5338, %v5516
      %5518 = vmatmul.f32.gmra.mxu0 %v3990
      %v5519 = vpop.f32.mrf.mxu0
      %v5520 = vadd.f32 %v5341, %v5519
      %5521 = vmatmul.f32.gmra.mxu0 %v3999
      %v5522 = vpop.f32.mrf.mxu0
      %v5523 = vadd.f32 %v5344, %v5522
      %5524 = vmatmul.f32.gmra.mxu0 %v4008
      %v5525 = vpop.f32.mrf.mxu0
      %v5526 = vadd.f32 %v5347, %v5525
      %5527 = vmatmul.f32.gmra.mxu0 %v4017
      %v5528 = vpop.f32.mrf.mxu0
      %v5529 = vadd.f32 %v5350, %v5528
      %5530 = vmatmul.f32.gmra.mxu0 %v4026
      %v5531 = vpop.f32.mrf.mxu0
      %v5532 = vadd.f32 %v5353, %v5531
      %5533 = vmatmul.f32.gmra.mxu0 %v4035
      %v5534 = vpop.f32.mrf.mxu0
      %v5535 = vadd.f32 %v5356, %v5534
      %5536 = vmatmul.f32.gmra.mxu0 %v4044
      %v5537 = vpop.f32.mrf.mxu0
      %v5538 = vadd.f32 %v5359, %v5537
      %5539 = vmatmul.f32.gmra.mxu0 %v4053
      %v5540 = vpop.f32.mrf.mxu0
      %v5541 = vadd.f32 %v5362, %v5540
      %5542 = vmatmul.f32.gmra.mxu0 %v4062
      %v5543 = vpop.f32.mrf.mxu0
      %v5544 = vadd.f32 %v5365, %v5543
      %5545 = vmatmul.f32.gmra.mxu0 %v4071
      %v5546 = vpop.f32.mrf.mxu0
      %v5547 = vadd.f32 %v5368, %v5546
      %5548 = vmatmul.f32.gmra.mxu0 %v4080
      %v5549 = vpop.f32.mrf.mxu0
      %v5550 = vadd.f32 %v5371, %v5549
      %5551 = vmatmul.f32.gmra.mxu0 %v4089
      %v5552 = vpop.f32.mrf.mxu0
      %v5553 = vadd.f32 %v5374, %v5552
      %5554 = vmatmul.f32.gmra.mxu0 %v4098
      %v5555 = vpop.f32.mrf.mxu0
      %v5556 = vadd.f32 %v5377, %v5555
      %5557 = vmatmul.f32.gmra.mxu0 %v4107
      %v5558 = vpop.f32.mrf.mxu0
      %v5559 = vadd.f32 %v5380, %v5558
      %5560 = vmatmul.f32.gmra.mxu0 %v4116
      %v5561 = vpop.f32.mrf.mxu0
      %v5562 = vadd.f32 %v5383, %v5561
      %5563 = vmatmul.f32.gmra.mxu0 %v4125
      %v5564 = vpop.f32.mrf.mxu0
      %v5565 = vadd.f32 %v5386, %v5564
      %5566 = vmatmul.f32.gmra.mxu0 %v4134
      %v5567 = vpop.f32.mrf.mxu0
      %v5568 = vadd.f32 %v5389, %v5567
      %5569 = vmatmul.f32.gmra.mxu0 %v4143
      %v5570 = vpop.f32.mrf.mxu0
      %v5571 = vadd.f32 %v5392, %v5570
      %5572 = vmatmul.f32.gmra.mxu0 %v4152
      %v5573 = vpop.f32.mrf.mxu0
      %v5574 = vadd.f32 %v5395, %v5573
      %5575 = vmatmul.f32.gmra.mxu0 %v4161
      %v5576 = vpop.f32.mrf.mxu0
      %v5577 = vadd.f32 %v5398, %v5576
      %5578 = vmatmul.f32.gmra.mxu0 %v4170
      %v5579 = vpop.f32.mrf.mxu0
      %v5580 = vadd.f32 %v5401, %v5579
      %5581 = vmatmul.f32.gmra.mxu0 %v4179
      %v5582 = vpop.f32.mrf.mxu0
      %v5583 = vadd.f32 %v5404, %v5582
      %5584 = vmatmul.f32.gmra.mxu0 %v4188
      %v5585 = vpop.f32.mrf.mxu0
      %v5586 = vadd.f32 %v5407, %v5585
      %5587 = vmatmul.f32.gmra.mxu0 %v4197
      %v5588 = vpop.f32.mrf.mxu0
      %v5589 = vadd.f32 %v5410, %v5588
      %5590 = vmatmul.f32.gmra.mxu0 %v4206
      %v5591 = vpop.f32.mrf.mxu0
      %v5592 = vadd.f32 %v5413, %v5591
      %5593 = vmatmul.f32.gmra.mxu0 %v4215
      %v5594 = vpop.f32.mrf.mxu0
      %v5595 = vadd.f32 %v5416, %v5594
      %5596 = vmatmul.f32.gmra.mxu0 %v4224
      %v5597 = vpop.f32.mrf.mxu0
      %v5598 = vadd.f32 %v5419, %v5597
      %5599 = vmatmul.f32.gmra.mxu0 %v4233
      %v5600 = vpop.f32.mrf.mxu0
      %v5601 = vadd.f32 %v5422, %v5600
      %5602 = vmatmul.f32.gmra.mxu0 %v4242
      %v5603 = vpop.f32.mrf.mxu0
      %v5604 = vadd.f32 %v5425, %v5603
      %5605 = vmatmul.f32.gmra.mxu0 %v4251
      %v5606 = vpop.f32.mrf.mxu0
      %v5607 = vadd.f32 %v5428, %v5606
      %5608 = vmatmul.f32.gmra.mxu0 %v4260
      %v5609 = vpop.f32.mrf.mxu0
      %v5610 = vadd.f32 %v5431, %v5609
      %5611 = vmatmul.f32.gmra.mxu0 %v4269
      %v5612 = vpop.f32.mrf.mxu0
      %v5613 = vadd.f32 %v5434, %v5612
      %5614 = vmatmul.f32.gmra.mxu0 %v4278
      %v5615 = vpop.f32.mrf.mxu0
      %v5616 = vadd.f32 %v5437, %v5615
      %5617 = vmatmul.f32.gmra.mxu0 %v4287
      %v5618 = vpop.f32.mrf.mxu0
      %v5619 = vadd.f32 %v5440, %v5618
      %5620 = vmatmul.f32.gmra.mxu0 %v4296
      %v5621 = vpop.f32.mrf.mxu0
      %v5622 = vadd.f32 %v5443, %v5621
      %5623 = vmatmul.f32.gmra.mxu0 %v4305
      %v5624 = vpop.f32.mrf.mxu0
      %v5625 = vadd.f32 %v5446, %v5624
      %5626 = vmatmul.f32.gmra.mxu0 %v4314
      %v5627 = vpop.f32.mrf.mxu0
      %v5628 = vadd.f32 %v5449, %v5627
      %5629 = vmatmul.f32.gmra.mxu0 %v4323
      %v5630 = vpop.f32.mrf.mxu0
      %v5631 = vadd.f32 %v5452, %v5630
      %5632 = vmatmul.f32.gmra.mxu0 %v4332
      %v5633 = vpop.f32.mrf.mxu0
      %v5634 = vadd.f32 %v5455, %v5633
      %5635 = vmatmul.f32.gmra.mxu0 %v4341
      %v5636 = vpop.f32.mrf.mxu0
      %v5637 = vadd.f32 %v5458, %v5636
      %5638 = vmatmul.f32.gmra.mxu0 %v4350
      %v5639 = vpop.f32.mrf.mxu0
      %v5640 = vadd.f32 %v5461, %v5639
      %5641 = vmatmul.f32.gmra.mxu0 %v4359
      %v5642 = vpop.f32.mrf.mxu0
      %v5643 = vadd.f32 %v5464, %v5642
      %5644 = vmatmul.f32.gmra.mxu0 %v4368
      %v5645 = vpop.f32.mrf.mxu0
      %v5646 = vadd.f32 %v5467, %v5645
      %5647 = vmatmul.f32.gmra.mxu0 %v4377
      %v5648 = vpop.f32.mrf.mxu0
      %v5649 = vadd.f32 %v5470, %v5648
      %5650 = vmatmul.f32.gmra.mxu0 %v4386
      %v5651 = vpop.f32.mrf.mxu0
      %v5652 = vadd.f32 %v5473, %v5651
      %5653 = vmatmul.f32.gmra.mxu0 %v4395
      %v5654 = vpop.f32.mrf.mxu0
      %v5655 = vadd.f32 %v5476, %v5654
      %5656 = vmatmul.f32.gmra.mxu0 %v4404
      %v5657 = vpop.f32.mrf.mxu0
      %v5658 = vadd.f32 %v5479, %v5657
      %5659 = vmatmul.f32.gmra.mxu0 %v4413
      %v5660 = vpop.f32.mrf.mxu0
      %v5661 = vadd.f32 %v5482, %v5660
      %5662 = vmatmul.f32.gmra.mxu0 %v4422
      %v5663 = vpop.f32.mrf.mxu0
      %v5664 = vadd.f32 %v5485, %v5663
      %5665 = vmatmul.f32.gmra.mxu0 %v4431
      %v5666 = vpop.f32.mrf.mxu0
      %v5667 = vadd.f32 %v5488, %v5666
      %5668 = vmatmul.f32.gmra.mxu0 %v4440
      %v5669 = vpop.f32.mrf.mxu0
      %v5670 = vadd.f32 %v5491, %v5669
      %5671 = vmatmul.f32.gmra.mxu0 %v4449
      %v5672 = vpop.f32.mrf.mxu0
      %v5673 = vadd.f32 %v5494, %v5672
      %5674 = vdwg.mxu0
      %5675 = vmatpush.msra.mxu0 %v4564
      %5676 = vmatpush.msra.mxu0 %v4563
      %5677 = vmatpush.msra.mxu0 %v4562
      %5678 = vmatpush.msra.mxu0 %v4561
      %5679 = vmatpush.msra.mxu0 %v4560
      %5680 = vmatpush.msra.mxu0 %v4559
      %5681 = vmatpush.msra.mxu0 %v4558
      %5682 = vmatpush.msra.mxu0 %v4557
      %5683 = vmatpush.msra.mxu0 %v4556
      %5684 = vmatpush.msra.mxu0 %v4555
      %5685 = vmatpush.msra.mxu0 %v4554
      %5686 = vmatpush.msra.mxu0 %v4553
      %5687 = vmatpush.msra.mxu0 %v4552
      %5688 = vmatpush.msra.mxu0 %v4551
      %5689 = vmatpush.msra.mxu0 %v4550
      %5690 = vmatpush.msra.mxu0 %v4549
      %5691 = vmatmul.f32.gmra.mxu0 %v3973
      %v5692 = vpop.f32.mrf.mxu0
      %v5693 = vadd.f32 %v5514, %v5692
      %5694 = vmatmul.f32.gmra.mxu0 %v3982
      %v5695 = vpop.f32.mrf.mxu0
      %v5696 = vadd.f32 %v5517, %v5695
      %5697 = vmatmul.f32.gmra.mxu0 %v3991
      %v5698 = vpop.f32.mrf.mxu0
      %v5699 = vadd.f32 %v5520, %v5698
      %5700 = vmatmul.f32.gmra.mxu0 %v4000
      %v5701 = vpop.f32.mrf.mxu0
      %v5702 = vadd.f32 %v5523, %v5701
      %5703 = vmatmul.f32.gmra.mxu0 %v4009
      %v5704 = vpop.f32.mrf.mxu0
      %v5705 = vadd.f32 %v5526, %v5704
      %5706 = vmatmul.f32.gmra.mxu0 %v4018
      %v5707 = vpop.f32.mrf.mxu0
      %v5708 = vadd.f32 %v5529, %v5707
      %5709 = vmatmul.f32.gmra.mxu0 %v4027
      %v5710 = vpop.f32.mrf.mxu0
      %v5711 = vadd.f32 %v5532, %v5710
      %5712 = vmatmul.f32.gmra.mxu0 %v4036
      %v5713 = vpop.f32.mrf.mxu0
      %v5714 = vadd.f32 %v5535, %v5713
      %5715 = vmatmul.f32.gmra.mxu0 %v4045
      %v5716 = vpop.f32.mrf.mxu0
      %v5717 = vadd.f32 %v5538, %v5716
      %5718 = vmatmul.f32.gmra.mxu0 %v4054
      %v5719 = vpop.f32.mrf.mxu0
      %v5720 = vadd.f32 %v5541, %v5719
      %5721 = vmatmul.f32.gmra.mxu0 %v4063
      %v5722 = vpop.f32.mrf.mxu0
      %v5723 = vadd.f32 %v5544, %v5722
      %5724 = vmatmul.f32.gmra.mxu0 %v4072
      %v5725 = vpop.f32.mrf.mxu0
      %v5726 = vadd.f32 %v5547, %v5725
      %5727 = vmatmul.f32.gmra.mxu0 %v4081
      %v5728 = vpop.f32.mrf.mxu0
      %v5729 = vadd.f32 %v5550, %v5728
      %5730 = vmatmul.f32.gmra.mxu0 %v4090
      %v5731 = vpop.f32.mrf.mxu0
      %v5732 = vadd.f32 %v5553, %v5731
      %5733 = vmatmul.f32.gmra.mxu0 %v4099
      %v5734 = vpop.f32.mrf.mxu0
      %v5735 = vadd.f32 %v5556, %v5734
      %5736 = vmatmul.f32.gmra.mxu0 %v4108
      %v5737 = vpop.f32.mrf.mxu0
      %v5738 = vadd.f32 %v5559, %v5737
      %5739 = vmatmul.f32.gmra.mxu0 %v4117
      %v5740 = vpop.f32.mrf.mxu0
      %v5741 = vadd.f32 %v5562, %v5740
      %5742 = vmatmul.f32.gmra.mxu0 %v4126
      %v5743 = vpop.f32.mrf.mxu0
      %v5744 = vadd.f32 %v5565, %v5743
      %5745 = vmatmul.f32.gmra.mxu0 %v4135
      %v5746 = vpop.f32.mrf.mxu0
      %v5747 = vadd.f32 %v5568, %v5746
      %5748 = vmatmul.f32.gmra.mxu0 %v4144
      %v5749 = vpop.f32.mrf.mxu0
      %v5750 = vadd.f32 %v5571, %v5749
      %5751 = vmatmul.f32.gmra.mxu0 %v4153
      %v5752 = vpop.f32.mrf.mxu0
      %v5753 = vadd.f32 %v5574, %v5752
      %5754 = vmatmul.f32.gmra.mxu0 %v4162
      %v5755 = vpop.f32.mrf.mxu0
      %v5756 = vadd.f32 %v5577, %v5755
      %5757 = vmatmul.f32.gmra.mxu0 %v4171
      %v5758 = vpop.f32.mrf.mxu0
      %v5759 = vadd.f32 %v5580, %v5758
      %5760 = vmatmul.f32.gmra.mxu0 %v4180
      %v5761 = vpop.f32.mrf.mxu0
      %v5762 = vadd.f32 %v5583, %v5761
      %5763 = vmatmul.f32.gmra.mxu0 %v4189
      %v5764 = vpop.f32.mrf.mxu0
      %v5765 = vadd.f32 %v5586, %v5764
      %5766 = vmatmul.f32.gmra.mxu0 %v4198
      %v5767 = vpop.f32.mrf.mxu0
      %v5768 = vadd.f32 %v5589, %v5767
      %5769 = vmatmul.f32.gmra.mxu0 %v4207
      %v5770 = vpop.f32.mrf.mxu0
      %v5771 = vadd.f32 %v5592, %v5770
      %5772 = vmatmul.f32.gmra.mxu0 %v4216
      %v5773 = vpop.f32.mrf.mxu0
      %v5774 = vadd.f32 %v5595, %v5773
      %5775 = vmatmul.f32.gmra.mxu0 %v4225
      %v5776 = vpop.f32.mrf.mxu0
      %v5777 = vadd.f32 %v5598, %v5776
      %5778 = vmatmul.f32.gmra.mxu0 %v4234
      %v5779 = vpop.f32.mrf.mxu0
      %v5780 = vadd.f32 %v5601, %v5779
      %5781 = vmatmul.f32.gmra.mxu0 %v4243
      %v5782 = vpop.f32.mrf.mxu0
      %v5783 = vadd.f32 %v5604, %v5782
      %5784 = vmatmul.f32.gmra.mxu0 %v4252
      %v5785 = vpop.f32.mrf.mxu0
      %v5786 = vadd.f32 %v5607, %v5785
      %5787 = vmatmul.f32.gmra.mxu0 %v4261
      %v5788 = vpop.f32.mrf.mxu0
      %v5789 = vadd.f32 %v5610, %v5788
      %5790 = vmatmul.f32.gmra.mxu0 %v4270
      %v5791 = vpop.f32.mrf.mxu0
      %v5792 = vadd.f32 %v5613, %v5791
      %5793 = vmatmul.f32.gmra.mxu0 %v4279
      %v5794 = vpop.f32.mrf.mxu0
      %v5795 = vadd.f32 %v5616, %v5794
      %5796 = vmatmul.f32.gmra.mxu0 %v4288
      %v5797 = vpop.f32.mrf.mxu0
      %v5798 = vadd.f32 %v5619, %v5797
      %5799 = vmatmul.f32.gmra.mxu0 %v4297
      %v5800 = vpop.f32.mrf.mxu0
      %v5801 = vadd.f32 %v5622, %v5800
      %5802 = vmatmul.f32.gmra.mxu0 %v4306
      %v5803 = vpop.f32.mrf.mxu0
      %v5804 = vadd.f32 %v5625, %v5803
      %5805 = vmatmul.f32.gmra.mxu0 %v4315
      %v5806 = vpop.f32.mrf.mxu0
      %v5807 = vadd.f32 %v5628, %v5806
      %5808 = vmatmul.f32.gmra.mxu0 %v4324
      %v5809 = vpop.f32.mrf.mxu0
      %v5810 = vadd.f32 %v5631, %v5809
      %5811 = vmatmul.f32.gmra.mxu0 %v4333
      %v5812 = vpop.f32.mrf.mxu0
      %v5813 = vadd.f32 %v5634, %v5812
      %5814 = vmatmul.f32.gmra.mxu0 %v4342
      %v5815 = vpop.f32.mrf.mxu0
      %v5816 = vadd.f32 %v5637, %v5815
      %5817 = vmatmul.f32.gmra.mxu0 %v4351
      %v5818 = vpop.f32.mrf.mxu0
      %v5819 = vadd.f32 %v5640, %v5818
      %5820 = vmatmul.f32.gmra.mxu0 %v4360
      %v5821 = vpop.f32.mrf.mxu0
      %v5822 = vadd.f32 %v5643, %v5821
      %5823 = vmatmul.f32.gmra.mxu0 %v4369
      %v5824 = vpop.f32.mrf.mxu0
      %v5825 = vadd.f32 %v5646, %v5824
      %5826 = vmatmul.f32.gmra.mxu0 %v4378
      %v5827 = vpop.f32.mrf.mxu0
      %v5828 = vadd.f32 %v5649, %v5827
      %5829 = vmatmul.f32.gmra.mxu0 %v4387
      %v5830 = vpop.f32.mrf.mxu0
      %v5831 = vadd.f32 %v5652, %v5830
      %5832 = vmatmul.f32.gmra.mxu0 %v4396
      %v5833 = vpop.f32.mrf.mxu0
      %v5834 = vadd.f32 %v5655, %v5833
      %5835 = vmatmul.f32.gmra.mxu0 %v4405
      %v5836 = vpop.f32.mrf.mxu0
      %v5837 = vadd.f32 %v5658, %v5836
      %5838 = vmatmul.f32.gmra.mxu0 %v4414
      %v5839 = vpop.f32.mrf.mxu0
      %v5840 = vadd.f32 %v5661, %v5839
      %5841 = vmatmul.f32.gmra.mxu0 %v4423
      %v5842 = vpop.f32.mrf.mxu0
      %v5843 = vadd.f32 %v5664, %v5842
      %5844 = vmatmul.f32.gmra.mxu0 %v4432
      %v5845 = vpop.f32.mrf.mxu0
      %v5846 = vadd.f32 %v5667, %v5845
      %5847 = vmatmul.f32.gmra.mxu0 %v4441
      %v5848 = vpop.f32.mrf.mxu0
      %v5849 = vadd.f32 %v5670, %v5848
      %5850 = vmatmul.f32.gmra.mxu0 %v4450
      %v5851 = vpop.f32.mrf.mxu0
      %v5852 = vadd.f32 %v5673, %v5851
      %5853 = vdwg.mxu0
      %5854 = vmatpush.msra.mxu0 %v4580
      %5855 = vmatpush.msra.mxu0 %v4579
      %5856 = vmatpush.msra.mxu0 %v4578
      %5857 = vmatpush.msra.mxu0 %v4577
      %5858 = vmatpush.msra.mxu0 %v4576
      %5859 = vmatpush.msra.mxu0 %v4575
      %5860 = vmatpush.msra.mxu0 %v4574
      %5861 = vmatpush.msra.mxu0 %v4573
      %5862 = vmatpush.msra.mxu0 %v4572
      %5863 = vmatpush.msra.mxu0 %v4571
      %5864 = vmatpush.msra.mxu0 %v4570
      %5865 = vmatpush.msra.mxu0 %v4569
      %5866 = vmatpush.msra.mxu0 %v4568
      %5867 = vmatpush.msra.mxu0 %v4567
      %5868 = vmatpush.msra.mxu0 %v4566
      %5869 = vmatpush.msra.mxu0 %v4565
      %5870 = vmatmul.f32.gmra.mxu0 %v3974
      %v5871 = vpop.f32.mrf.mxu0
      %v5872 = vadd.f32 %v5693, %v5871
      %5873 = vmatmul.f32.gmra.mxu0 %v3983
      %v5874 = vpop.f32.mrf.mxu0
      %v5875 = vadd.f32 %v5696, %v5874
      %5876 = vmatmul.f32.gmra.mxu0 %v3992
      %v5877 = vpop.f32.mrf.mxu0
      %v5878 = vadd.f32 %v5699, %v5877
      %5879 = vmatmul.f32.gmra.mxu0 %v4001
      %v5880 = vpop.f32.mrf.mxu0
      %v5881 = vadd.f32 %v5702, %v5880
      %5882 = vmatmul.f32.gmra.mxu0 %v4010
      %v5883 = vpop.f32.mrf.mxu0
      %v5884 = vadd.f32 %v5705, %v5883
      %5885 = vmatmul.f32.gmra.mxu0 %v4019
      %v5886 = vpop.f32.mrf.mxu0
      %v5887 = vadd.f32 %v5708, %v5886
      %5888 = vmatmul.f32.gmra.mxu0 %v4028
      %v5889 = vpop.f32.mrf.mxu0
      %v5890 = vadd.f32 %v5711, %v5889
      %5891 = vmatmul.f32.gmra.mxu0 %v4037
      %v5892 = vpop.f32.mrf.mxu0
      %v5893 = vadd.f32 %v5714, %v5892
      %5894 = vmatmul.f32.gmra.mxu0 %v4046
      %v5895 = vpop.f32.mrf.mxu0
      %v5896 = vadd.f32 %v5717, %v5895
      %5897 = vmatmul.f32.gmra.mxu0 %v4055
      %v5898 = vpop.f32.mrf.mxu0
      %v5899 = vadd.f32 %v5720, %v5898
      %5900 = vmatmul.f32.gmra.mxu0 %v4064
      %v5901 = vpop.f32.mrf.mxu0
      %v5902 = vadd.f32 %v5723, %v5901
      %5903 = vmatmul.f32.gmra.mxu0 %v4073
      %v5904 = vpop.f32.mrf.mxu0
      %v5905 = vadd.f32 %v5726, %v5904
      %5906 = vmatmul.f32.gmra.mxu0 %v4082
      %v5907 = vpop.f32.mrf.mxu0
      %v5908 = vadd.f32 %v5729, %v5907
      %5909 = vmatmul.f32.gmra.mxu0 %v4091
      %v5910 = vpop.f32.mrf.mxu0
      %v5911 = vadd.f32 %v5732, %v5910
      %5912 = vmatmul.f32.gmra.mxu0 %v4100
      %v5913 = vpop.f32.mrf.mxu0
      %v5914 = vadd.f32 %v5735, %v5913
      %5915 = vmatmul.f32.gmra.mxu0 %v4109
      %v5916 = vpop.f32.mrf.mxu0
      %v5917 = vadd.f32 %v5738, %v5916
      %5918 = vmatmul.f32.gmra.mxu0 %v4118
      %v5919 = vpop.f32.mrf.mxu0
      %v5920 = vadd.f32 %v5741, %v5919
      %5921 = vmatmul.f32.gmra.mxu0 %v4127
      %v5922 = vpop.f32.mrf.mxu0
      %v5923 = vadd.f32 %v5744, %v5922
      %5924 = vmatmul.f32.gmra.mxu0 %v4136
      %v5925 = vpop.f32.mrf.mxu0
      %v5926 = vadd.f32 %v5747, %v5925
      %5927 = vmatmul.f32.gmra.mxu0 %v4145
      %v5928 = vpop.f32.mrf.mxu0
      %v5929 = vadd.f32 %v5750, %v5928
      %5930 = vmatmul.f32.gmra.mxu0 %v4154
      %v5931 = vpop.f32.mrf.mxu0
      %v5932 = vadd.f32 %v5753, %v5931
      %5933 = vmatmul.f32.gmra.mxu0 %v4163
      %v5934 = vpop.f32.mrf.mxu0
      %v5935 = vadd.f32 %v5756, %v5934
      %5936 = vmatmul.f32.gmra.mxu0 %v4172
      %v5937 = vpop.f32.mrf.mxu0
      %v5938 = vadd.f32 %v5759, %v5937
      %5939 = vmatmul.f32.gmra.mxu0 %v4181
      %v5940 = vpop.f32.mrf.mxu0
      %v5941 = vadd.f32 %v5762, %v5940
      %5942 = vmatmul.f32.gmra.mxu0 %v4190
      %v5943 = vpop.f32.mrf.mxu0
      %v5944 = vadd.f32 %v5765, %v5943
      %5945 = vmatmul.f32.gmra.mxu0 %v4199
      %v5946 = vpop.f32.mrf.mxu0
      %v5947 = vadd.f32 %v5768, %v5946
      %5948 = vmatmul.f32.gmra.mxu0 %v4208
      %v5949 = vpop.f32.mrf.mxu0
      %v5950 = vadd.f32 %v5771, %v5949
      %5951 = vmatmul.f32.gmra.mxu0 %v4217
      %v5952 = vpop.f32.mrf.mxu0
      %v5953 = vadd.f32 %v5774, %v5952
      %5954 = vmatmul.f32.gmra.mxu0 %v4226
      %v5955 = vpop.f32.mrf.mxu0
      %v5956 = vadd.f32 %v5777, %v5955
      %5957 = vmatmul.f32.gmra.mxu0 %v4235
      %v5958 = vpop.f32.mrf.mxu0
      %v5959 = vadd.f32 %v5780, %v5958
      %5960 = vmatmul.f32.gmra.mxu0 %v4244
      %v5961 = vpop.f32.mrf.mxu0
      %v5962 = vadd.f32 %v5783, %v5961
      %5963 = vmatmul.f32.gmra.mxu0 %v4253
      %v5964 = vpop.f32.mrf.mxu0
      %v5965 = vadd.f32 %v5786, %v5964
      %5966 = vmatmul.f32.gmra.mxu0 %v4262
      %v5967 = vpop.f32.mrf.mxu0
      %v5968 = vadd.f32 %v5789, %v5967
      %5969 = vmatmul.f32.gmra.mxu0 %v4271
      %v5970 = vpop.f32.mrf.mxu0
      %v5971 = vadd.f32 %v5792, %v5970
      %5972 = vmatmul.f32.gmra.mxu0 %v4280
      %v5973 = vpop.f32.mrf.mxu0
      %v5974 = vadd.f32 %v5795, %v5973
      %5975 = vmatmul.f32.gmra.mxu0 %v4289
      %v5976 = vpop.f32.mrf.mxu0
      %v5977 = vadd.f32 %v5798, %v5976
      %5978 = vmatmul.f32.gmra.mxu0 %v4298
      %v5979 = vpop.f32.mrf.mxu0
      %v5980 = vadd.f32 %v5801, %v5979
      %5981 = vmatmul.f32.gmra.mxu0 %v4307
      %v5982 = vpop.f32.mrf.mxu0
      %v5983 = vadd.f32 %v5804, %v5982
      %5984 = vmatmul.f32.gmra.mxu0 %v4316
      %v5985 = vpop.f32.mrf.mxu0
      %v5986 = vadd.f32 %v5807, %v5985
      %5987 = vmatmul.f32.gmra.mxu0 %v4325
      %v5988 = vpop.f32.mrf.mxu0
      %v5989 = vadd.f32 %v5810, %v5988
      %5990 = vmatmul.f32.gmra.mxu0 %v4334
      %v5991 = vpop.f32.mrf.mxu0
      %v5992 = vadd.f32 %v5813, %v5991
      %5993 = vmatmul.f32.gmra.mxu0 %v4343
      %v5994 = vpop.f32.mrf.mxu0
      %v5995 = vadd.f32 %v5816, %v5994
      %5996 = vmatmul.f32.gmra.mxu0 %v4352
      %v5997 = vpop.f32.mrf.mxu0
      %v5998 = vadd.f32 %v5819, %v5997
      %5999 = vmatmul.f32.gmra.mxu0 %v4361
      %v6000 = vpop.f32.mrf.mxu0
      %v6001 = vadd.f32 %v5822, %v6000
      %6002 = vmatmul.f32.gmra.mxu0 %v4370
      %v6003 = vpop.f32.mrf.mxu0
      %v6004 = vadd.f32 %v5825, %v6003
      %6005 = vmatmul.f32.gmra.mxu0 %v4379
      %v6006 = vpop.f32.mrf.mxu0
      %v6007 = vadd.f32 %v5828, %v6006
      %6008 = vmatmul.f32.gmra.mxu0 %v4388
      %v6009 = vpop.f32.mrf.mxu0
      %v6010 = vadd.f32 %v5831, %v6009
      %6011 = vmatmul.f32.gmra.mxu0 %v4397
      %v6012 = vpop.f32.mrf.mxu0
      %v6013 = vadd.f32 %v5834, %v6012
      %6014 = vmatmul.f32.gmra.mxu0 %v4406
      %v6015 = vpop.f32.mrf.mxu0
      %v6016 = vadd.f32 %v5837, %v6015
      %6017 = vmatmul.f32.gmra.mxu0 %v4415
      %v6018 = vpop.f32.mrf.mxu0
      %v6019 = vadd.f32 %v5840, %v6018
      %6020 = vmatmul.f32.gmra.mxu0 %v4424
      %v6021 = vpop.f32.mrf.mxu0
      %v6022 = vadd.f32 %v5843, %v6021
      %6023 = vmatmul.f32.gmra.mxu0 %v4433
      %v6024 = vpop.f32.mrf.mxu0
      %v6025 = vadd.f32 %v5846, %v6024
      %6026 = vmatmul.f32.gmra.mxu0 %v4442
      %v6027 = vpop.f32.mrf.mxu0
      %v6028 = vadd.f32 %v5849, %v6027
      %6029 = vmatmul.f32.gmra.mxu0 %v4451
      %v6030 = vpop.f32.mrf.mxu0
      %v6031 = vadd.f32 %v5852, %v6030
      %6032 = vdwg.mxu0
      %6033 = vmatpush.msra.mxu0 %v4596
      %6034 = vmatpush.msra.mxu0 %v4595
      %6035 = vmatpush.msra.mxu0 %v4594
      %6036 = vmatpush.msra.mxu0 %v4593
      %6037 = vmatpush.msra.mxu0 %v4592
      %6038 = vmatpush.msra.mxu0 %v4591
      %6039 = vmatpush.msra.mxu0 %v4590
      %6040 = vmatpush.msra.mxu0 %v4589
      %6041 = vmatpush.msra.mxu0 %v4588
      %6042 = vmatpush.msra.mxu0 %v4587
      %6043 = vmatpush.msra.mxu0 %v4586
      %6044 = vmatpush.msra.mxu0 %v4585
      %6045 = vmatpush.msra.mxu0 %v4584
      %6046 = vmatpush.msra.mxu0 %v4583
      %6047 = vmatpush.msra.mxu0 %v4582
      %6048 = vmatpush.msra.mxu0 %v4581
      %6049 = vmatmul.f32.gmra.mxu0 %v3975
      %v6050 = vpop.f32.mrf.mxu0
      %v6051 = vadd.f32 %v5872, %v6050
      %6052 = vmatmul.f32.gmra.mxu0 %v3984
      %v6053 = vpop.f32.mrf.mxu0
      %v6054 = vadd.f32 %v5875, %v6053
      %6055 = vmatmul.f32.gmra.mxu0 %v3993
      %v6056 = vpop.f32.mrf.mxu0
      %v6057 = vadd.f32 %v5878, %v6056
      %6058 = vmatmul.f32.gmra.mxu0 %v4002
      %v6059 = vpop.f32.mrf.mxu0
      %v6060 = vadd.f32 %v5881, %v6059
      %6061 = vmatmul.f32.gmra.mxu0 %v4011
      %v6062 = vpop.f32.mrf.mxu0
      %v6063 = vadd.f32 %v5884, %v6062
      %6064 = vmatmul.f32.gmra.mxu0 %v4020
      %v6065 = vpop.f32.mrf.mxu0
      %v6066 = vadd.f32 %v5887, %v6065
      %6067 = vmatmul.f32.gmra.mxu0 %v4029
      %v6068 = vpop.f32.mrf.mxu0
      %v6069 = vadd.f32 %v5890, %v6068
      %6070 = vmatmul.f32.gmra.mxu0 %v4038
      %v6071 = vpop.f32.mrf.mxu0
      %v6072 = vadd.f32 %v5893, %v6071
      %6073 = vmatmul.f32.gmra.mxu0 %v4047
      %v6074 = vpop.f32.mrf.mxu0
      %v6075 = vadd.f32 %v5896, %v6074
      %6076 = vmatmul.f32.gmra.mxu0 %v4056
      %v6077 = vpop.f32.mrf.mxu0
      %v6078 = vadd.f32 %v5899, %v6077
      %6079 = vmatmul.f32.gmra.mxu0 %v4065
      %v6080 = vpop.f32.mrf.mxu0
      %v6081 = vadd.f32 %v5902, %v6080
      %6082 = vmatmul.f32.gmra.mxu0 %v4074
      %v6083 = vpop.f32.mrf.mxu0
      %v6084 = vadd.f32 %v5905, %v6083
      %6085 = vmatmul.f32.gmra.mxu0 %v4083
      %v6086 = vpop.f32.mrf.mxu0
      %v6087 = vadd.f32 %v5908, %v6086
      %6088 = vmatmul.f32.gmra.mxu0 %v4092
      %v6089 = vpop.f32.mrf.mxu0
      %v6090 = vadd.f32 %v5911, %v6089
      %6091 = vmatmul.f32.gmra.mxu0 %v4101
      %v6092 = vpop.f32.mrf.mxu0
      %v6093 = vadd.f32 %v5914, %v6092
      %6094 = vmatmul.f32.gmra.mxu0 %v4110
      %v6095 = vpop.f32.mrf.mxu0
      %v6096 = vadd.f32 %v5917, %v6095
      %6097 = vmatmul.f32.gmra.mxu0 %v4119
      %v6098 = vpop.f32.mrf.mxu0
      %v6099 = vadd.f32 %v5920, %v6098
      %6100 = vmatmul.f32.gmra.mxu0 %v4128
      %v6101 = vpop.f32.mrf.mxu0
      %v6102 = vadd.f32 %v5923, %v6101
      %6103 = vmatmul.f32.gmra.mxu0 %v4137
      %v6104 = vpop.f32.mrf.mxu0
      %v6105 = vadd.f32 %v5926, %v6104
      %6106 = vmatmul.f32.gmra.mxu0 %v4146
      %v6107 = vpop.f32.mrf.mxu0
      %v6108 = vadd.f32 %v5929, %v6107
      %6109 = vmatmul.f32.gmra.mxu0 %v4155
      %v6110 = vpop.f32.mrf.mxu0
      %v6111 = vadd.f32 %v5932, %v6110
      %6112 = vmatmul.f32.gmra.mxu0 %v4164
      %v6113 = vpop.f32.mrf.mxu0
      %v6114 = vadd.f32 %v5935, %v6113
      %6115 = vmatmul.f32.gmra.mxu0 %v4173
      %v6116 = vpop.f32.mrf.mxu0
      %v6117 = vadd.f32 %v5938, %v6116
      %6118 = vmatmul.f32.gmra.mxu0 %v4182
      %v6119 = vpop.f32.mrf.mxu0
      %v6120 = vadd.f32 %v5941, %v6119
      %6121 = vmatmul.f32.gmra.mxu0 %v4191
      %v6122 = vpop.f32.mrf.mxu0
      %v6123 = vadd.f32 %v5944, %v6122
      %6124 = vmatmul.f32.gmra.mxu0 %v4200
      %v6125 = vpop.f32.mrf.mxu0
      %v6126 = vadd.f32 %v5947, %v6125
      %6127 = vmatmul.f32.gmra.mxu0 %v4209
      %v6128 = vpop.f32.mrf.mxu0
      %v6129 = vadd.f32 %v5950, %v6128
      %6130 = vmatmul.f32.gmra.mxu0 %v4218
      %v6131 = vpop.f32.mrf.mxu0
      %v6132 = vadd.f32 %v5953, %v6131
      %6133 = vmatmul.f32.gmra.mxu0 %v4227
      %v6134 = vpop.f32.mrf.mxu0
      %v6135 = vadd.f32 %v5956, %v6134
      %6136 = vmatmul.f32.gmra.mxu0 %v4236
      %v6137 = vpop.f32.mrf.mxu0
      %v6138 = vadd.f32 %v5959, %v6137
      %6139 = vmatmul.f32.gmra.mxu0 %v4245
      %v6140 = vpop.f32.mrf.mxu0
      %v6141 = vadd.f32 %v5962, %v6140
      %6142 = vmatmul.f32.gmra.mxu0 %v4254
      %v6143 = vpop.f32.mrf.mxu0
      %v6144 = vadd.f32 %v5965, %v6143
      %6145 = vmatmul.f32.gmra.mxu0 %v4263
      %v6146 = vpop.f32.mrf.mxu0
      %v6147 = vadd.f32 %v5968, %v6146
      %6148 = vmatmul.f32.gmra.mxu0 %v4272
      %v6149 = vpop.f32.mrf.mxu0
      %v6150 = vadd.f32 %v5971, %v6149
      %6151 = vmatmul.f32.gmra.mxu0 %v4281
      %v6152 = vpop.f32.mrf.mxu0
      %v6153 = vadd.f32 %v5974, %v6152
      %6154 = vmatmul.f32.gmra.mxu0 %v4290
      %v6155 = vpop.f32.mrf.mxu0
      %v6156 = vadd.f32 %v5977, %v6155
      %6157 = vmatmul.f32.gmra.mxu0 %v4299
      %v6158 = vpop.f32.mrf.mxu0
      %v6159 = vadd.f32 %v5980, %v6158
      %6160 = vmatmul.f32.gmra.mxu0 %v4308
      %v6161 = vpop.f32.mrf.mxu0
      %v6162 = vadd.f32 %v5983, %v6161
      %6163 = vmatmul.f32.gmra.mxu0 %v4317
      %v6164 = vpop.f32.mrf.mxu0
      %v6165 = vadd.f32 %v5986, %v6164
      %6166 = vmatmul.f32.gmra.mxu0 %v4326
      %v6167 = vpop.f32.mrf.mxu0
      %v6168 = vadd.f32 %v5989, %v6167
      %6169 = vmatmul.f32.gmra.mxu0 %v4335
      %v6170 = vpop.f32.mrf.mxu0
      %v6171 = vadd.f32 %v5992, %v6170
      %6172 = vmatmul.f32.gmra.mxu0 %v4344
      %v6173 = vpop.f32.mrf.mxu0
      %v6174 = vadd.f32 %v5995, %v6173
      %6175 = vmatmul.f32.gmra.mxu0 %v4353
      %v6176 = vpop.f32.mrf.mxu0
      %v6177 = vadd.f32 %v5998, %v6176
      %6178 = vmatmul.f32.gmra.mxu0 %v4362
      %v6179 = vpop.f32.mrf.mxu0
      %v6180 = vadd.f32 %v6001, %v6179
      %6181 = vmatmul.f32.gmra.mxu0 %v4371
      %v6182 = vpop.f32.mrf.mxu0
      %v6183 = vadd.f32 %v6004, %v6182
      %6184 = vmatmul.f32.gmra.mxu0 %v4380
      %v6185 = vpop.f32.mrf.mxu0
      %v6186 = vadd.f32 %v6007, %v6185
      %6187 = vmatmul.f32.gmra.mxu0 %v4389
      %v6188 = vpop.f32.mrf.mxu0
      %v6189 = vadd.f32 %v6010, %v6188
      %6190 = vmatmul.f32.gmra.mxu0 %v4398
      %v6191 = vpop.f32.mrf.mxu0
      %v6192 = vadd.f32 %v6013, %v6191
      %6193 = vmatmul.f32.gmra.mxu0 %v4407
      %v6194 = vpop.f32.mrf.mxu0
      %v6195 = vadd.f32 %v6016, %v6194
      %6196 = vmatmul.f32.gmra.mxu0 %v4416
      %v6197 = vpop.f32.mrf.mxu0
      %v6198 = vadd.f32 %v6019, %v6197
      %6199 = vmatmul.f32.gmra.mxu0 %v4425
      %v6200 = vpop.f32.mrf.mxu0
      %v6201 = vadd.f32 %v6022, %v6200
      %6202 = vmatmul.f32.gmra.mxu0 %v4434
      %v6203 = vpop.f32.mrf.mxu0
      %v6204 = vadd.f32 %v6025, %v6203
      %6205 = vmatmul.f32.gmra.mxu0 %v4443
      %v6206 = vpop.f32.mrf.mxu0
      %v6207 = vadd.f32 %v6028, %v6206
      %6208 = vmatmul.f32.gmra.mxu0 %v4452
      %v6209 = vpop.f32.mrf.mxu0
      %v6210 = vadd.f32 %v6031, %v6209
      %6211 = vdwg.mxu0
      %6212 = vst [vmem:[#allocation3] sm:$0xff] %v6051
      %6213 = vst [vmem:[#allocation3 + $0x8] sm:$0xff] %v6054
      %6214 = vst [vmem:[#allocation3 + $0x10] sm:$0xff] %v6057
      %6215 = vst [vmem:[#allocation3 + $0x18] sm:$0xff] %v6060
      %6216 = vst [vmem:[#allocation3 + $0x20] sm:$0xff] %v6063
      %6217 = vst [vmem:[#allocation3 + $0x28] sm:$0xff] %v6066
      %6218 = vst [vmem:[#allocation3 + $0x30] sm:$0xff] %v6069
      %6219 = vst [vmem:[#allocation3 + $0x38] sm:$0xff] %v6072
      %6220 = vst [vmem:[#allocation3 + $0x40] sm:$0xff] %v6075
      %6221 = vst [vmem:[#allocation3 + $0x48] sm:$0xff] %v6078
      %6222 = vst [vmem:[#allocation3 + $0x50] sm:$0xff] %v6081
      %6223 = vst [vmem:[#allocation3 + $0x58] sm:$0xff] %v6084
      %6224 = vst [vmem:[#allocation3 + $0x60] sm:$0xff] %v6087
      %6225 = vst [vmem:[#allocation3 + $0x68] sm:$0xff] %v6090
      %6226 = vst [vmem:[#allocation3 + $0x70] sm:$0xff] %v6093
      %6227 = vst [vmem:[#allocation3 + $0x78] sm:$0xff] %v6096
      %6228 = vst [vmem:[#allocation3 + $0x80] sm:$0xff] %v6099
      %6229 = vst [vmem:[#allocation3 + $0x88] sm:$0xff] %v6102
      %6230 = vst [vmem:[#allocation3 + $0x90] sm:$0xff] %v6105
      %6231 = vst [vmem:[#allocation3 + $0x98] sm:$0xff] %v6108
      %6232 = vst [vmem:[#allocation3 + $0xa0] sm:$0xff] %v6111
      %6233 = vst [vmem:[#allocation3 + $0xa8] sm:$0xff] %v6114
      %6234 = vst [vmem:[#allocation3 + $0xb0] sm:$0xff] %v6117
      %6235 = vst [vmem:[#allocation3 + $0xb8] sm:$0xff] %v6120
      %6236 = vst [vmem:[#allocation3 + $0xc0] sm:$0xff] %v6123
      %6237 = vst [vmem:[#allocation3 + $0xc8] sm:$0xff] %v6126
      %6238 = vst [vmem:[#allocation3 + $0xd0] sm:$0xff] %v6129
      %6239 = vst [vmem:[#allocation3 + $0xd8] sm:$0xff] %v6132
      %6240 = vst [vmem:[#allocation3 + $0xe0] sm:$0xff] %v6135
      %6241 = vst [vmem:[#allocation3 + $0xe8] sm:$0xff] %v6138
      %6242 = vst [vmem:[#allocation3 + $0xf0] sm:$0xff] %v6141
      %6243 = vst [vmem:[#allocation3 + $0xf8] sm:$0xff] %v6144
      %6244 = vst [vmem:[#allocation3 + $0x100] sm:$0xff] %v6147
      %6245 = vst [vmem:[#allocation3 + $0x108] sm:$0xff] %v6150
      %6246 = vst [vmem:[#allocation3 + $0x110] sm:$0xff] %v6153
      %6247 = vst [vmem:[#allocation3 + $0x118] sm:$0xff] %v6156
      %6248 = vst [vmem:[#allocation3 + $0x120] sm:$0xff] %v6159
      %6249 = vst [vmem:[#allocation3 + $0x128] sm:$0xff] %v6162
      %6250 = vst [vmem:[#allocation3 + $0x130] sm:$0xff] %v6165
      %6251 = vst [vmem:[#allocation3 + $0x138] sm:$0xff] %v6168
      %6252 = vst [vmem:[#allocation3 + $0x140] sm:$0xff] %v6171
      %6253 = vst [vmem:[#allocation3 + $0x148] sm:$0xff] %v6174
      %6254 = vst [vmem:[#allocation3 + $0x150] sm:$0xff] %v6177
      %6255 = vst [vmem:[#allocation3 + $0x158] sm:$0xff] %v6180
      %6256 = vst [vmem:[#allocation3 + $0x160] sm:$0xff] %v6183
      %6257 = vst [vmem:[#allocation3 + $0x168] sm:$0xff] %v6186
      %6258 = vst [vmem:[#allocation3 + $0x170] sm:$0xff] %v6189
      %6259 = vst [vmem:[#allocation3 + $0x178] sm:$0xff] %v6192
      %6260 = vst [vmem:[#allocation3 + $0x180] sm:$0xff] %v6195
      %6261 = vst [vmem:[#allocation3 + $0x188] sm:$0xff] %v6198
      %6262 = vst [vmem:[#allocation3 + $0x190] sm:$0xff] %v6201
      %6263 = vst [vmem:[#allocation3 + $0x198] sm:$0xff] %v6204
      %6264 = vst [vmem:[#allocation3 + $0x1a0] sm:$0xff] %v6207
      %6265 = vst [vmem:[#allocation3 + $0x1a8] sm:$0xff] %v6210
      %v6266 = vld [vmem:[#allocation3] sm:$0xff]
      %v6267 = vld [vmem:[#allocation3 + $0x8] sm:$0xff]
      %v6268 = vld [vmem:[#allocation3 + $0x10] sm:$0xff]
      %v6269 = vld [vmem:[#allocation3 + $0x18] sm:$0xff]
      %v6270 = vld [vmem:[#allocation3 + $0x20] sm:$0xff]
      %v6271 = vld [vmem:[#allocation3 + $0x28] sm:$0xff]
      %v6272 = vld [vmem:[#allocation3 + $0x30] sm:$0xff]
      %v6273 = vld [vmem:[#allocation3 + $0x38] sm:$0xff]
      %v6274 = vld [vmem:[#allocation3 + $0x40] sm:$0xff]
      %v6275 = vld [vmem:[#allocation3 + $0x48] sm:$0xff]
      %v6276 = vld [vmem:[#allocation3 + $0x50] sm:$0xff]
      %v6277 = vld [vmem:[#allocation3 + $0x58] sm:$0xff]
      %v6278 = vld [vmem:[#allocation3 + $0x60] sm:$0xff]
      %v6279 = vld [vmem:[#allocation3 + $0x68] sm:$0xff]
      %v6280 = vld [vmem:[#allocation3 + $0x70] sm:$0xff]
      %v6281 = vld [vmem:[#allocation3 + $0x78] sm:$0xff]
      %v6282 = vld [vmem:[#allocation3 + $0x80] sm:$0xff]
      %v6283 = vld [vmem:[#allocation3 + $0x88] sm:$0xff]
      %v6284 = vld [vmem:[#allocation3 + $0x90] sm:$0xff]
      %v6285 = vld [vmem:[#allocation3 + $0x98] sm:$0xff]
      %v6286 = vld [vmem:[#allocation3 + $0xa0] sm:$0xff]
      %v6287 = vld [vmem:[#allocation3 + $0xa8] sm:$0xff]
      %v6288 = vld [vmem:[#allocation3 + $0xb0] sm:$0xff]
      %v6289 = vld [vmem:[#allocation3 + $0xb8] sm:$0xff]
      %v6290 = vld [vmem:[#allocation3 + $0xc0] sm:$0xff]
      %v6291 = vld [vmem:[#allocation3 + $0xc8] sm:$0xff]
      %v6292 = vld [vmem:[#allocation3 + $0xd0] sm:$0xff]
      %v6293 = vld [vmem:[#allocation3 + $0xd8] sm:$0xff]
      %v6294 = vld [vmem:[#allocation3 + $0xe0] sm:$0xff]
      %v6295 = vld [vmem:[#allocation3 + $0xe8] sm:$0xff]
      %v6296 = vld [vmem:[#allocation3 + $0xf0] sm:$0xff]
      %v6297 = vld [vmem:[#allocation3 + $0xf8] sm:$0xff]
      %v6298 = vld [vmem:[#allocation3 + $0x100] sm:$0xff]
      %v6299 = vld [vmem:[#allocation3 + $0x108] sm:$0xff]
      %v6300 = vld [vmem:[#allocation3 + $0x110] sm:$0xff]
      %v6301 = vld [vmem:[#allocation3 + $0x118] sm:$0xff]
      %v6302 = vld [vmem:[#allocation3 + $0x120] sm:$0xff]
      %v6303 = vld [vmem:[#allocation3 + $0x128] sm:$0xff]
      %v6304 = vld [vmem:[#allocation3 + $0x130] sm:$0xff]
      %v6305 = vld [vmem:[#allocation3 + $0x138] sm:$0xff]
      %v6306 = vld [vmem:[#allocation3 + $0x140] sm:$0xff]
      %v6307 = vld [vmem:[#allocation3 + $0x148] sm:$0xff]
      %v6308 = vld [vmem:[#allocation3 + $0x150] sm:$0xff]
      %v6309 = vld [vmem:[#allocation3 + $0x158] sm:$0xff]
      %v6310 = vld [vmem:[#allocation3 + $0x160] sm:$0xff]
      %v6311 = vld [vmem:[#allocation3 + $0x168] sm:$0xff]
      %v6312 = vld [vmem:[#allocation3 + $0x170] sm:$0xff]
      %v6313 = vld [vmem:[#allocation3 + $0x178] sm:$0xff]
      %v6314 = vld [vmem:[#allocation3 + $0x180] sm:$0xff]
      %v6315 = vld [vmem:[#allocation3 + $0x188] sm:$0xff]
      %v6316 = vld [vmem:[#allocation3 + $0x190] sm:$0xff]
      %v6317 = vld [vmem:[#allocation3 + $0x198] sm:$0xff]
      %v6318 = vld [vmem:[#allocation3 + $0x1a0] sm:$0xff]
      %v6319 = vld [vmem:[#allocation3 + $0x1a8] sm:$0xff]
      %v6320 = vld [vmem:[%s6] sm:$0xff]
      %v6321 = vld [vmem:[%s6 + $0x8] sm:$0xff]
      %v6322 = vld [vmem:[%s6 + $0x10] sm:$0xff]
      %v6323 = vld [vmem:[%s6 + $0x18] sm:$0xff]
      %v6324 = vld [vmem:[%s6 + $0x20] sm:$0xff]
      %v6325 = vld [vmem:[%s6 + $0x28] sm:$0xff]
      %v6326 = vld [vmem:[%s6 + $0x30] sm:$0xff]
      %v6327 = vld [vmem:[%s6 + $0x38] sm:$0xff]
      %v6328 = vld [vmem:[%s6 + $0x40] sm:$0xff]
      %v6329 = vld [vmem:[%s6 + $0x48] sm:$0xff]
      %v6330 = vld [vmem:[%s6 + $0x50] sm:$0xff]
      %v6331 = vld [vmem:[%s6 + $0x58] sm:$0xff]
      %v6332 = vld [vmem:[%s6 + $0x60] sm:$0xff]
      %v6333 = vld [vmem:[%s6 + $0x68] sm:$0xff]
      %v6334 = vld [vmem:[%s6 + $0x70] sm:$0xff]
      %v6335 = vld [vmem:[%s6 + $0x78] sm:$0xff]
      %6336 = vmatpush.msra.mxu0 %v6335
      %6337 = vmatpush.msra.mxu0 %v6334
      %6338 = vmatpush.msra.mxu0 %v6333
      %6339 = vmatpush.msra.mxu0 %v6332
      %6340 = vmatpush.msra.mxu0 %v6331
      %6341 = vmatpush.msra.mxu0 %v6330
      %6342 = vmatpush.msra.mxu0 %v6329
      %6343 = vmatpush.msra.mxu0 %v6328
      %6344 = vmatpush.msra.mxu0 %v6327
      %6345 = vmatpush.msra.mxu0 %v6326
      %6346 = vmatpush.msra.mxu0 %v6325
      %6347 = vmatpush.msra.mxu0 %v6324
      %6348 = vmatpush.msra.mxu0 %v6323
      %6349 = vmatpush.msra.mxu0 %v6322
      %6350 = vmatpush.msra.mxu0 %v6321
      %6351 = vmatpush.msra.mxu0 %v6320
      %6352 = vmatmul.f32.gmra.mxu0 %v6266
      %v6353 = vpop.f32.mrf.mxu0
      %v6354 = vadd.f32 0.0, %v6353
      %6355 = vmatmul.f32.gmra.mxu0 %v6267
      %v6356 = vpop.f32.mrf.mxu0
      %v6357 = vadd.f32 0.0, %v6356
      %6358 = vmatmul.f32.gmra.mxu0 %v6268
      %v6359 = vpop.f32.mrf.mxu0
      %6360 = vmatmul.f32.gmra.mxu0 %v6269
      %v6361 = vpop.f32.mrf.mxu0
      %v6362 = vadd.f32 0.0, %v6361
      %6363 = vmatmul.f32.gmra.mxu0 %v6270
      %v6364 = vpop.f32.mrf.mxu0
      %v6365 = vadd.f32 0.0, %v6364
      %6366 = vmatmul.f32.gmra.mxu0 %v6271
      %v6367 = vpop.f32.mrf.mxu0
      %6368 = vmatmul.f32.gmra.mxu0 %v6272
      %v6369 = vpop.f32.mrf.mxu0
      %v6370 = vadd.f32 0.0, %v6369
      %6371 = vmatmul.f32.gmra.mxu0 %v6273
      %v6372 = vpop.f32.mrf.mxu0
      %v6373 = vadd.f32 0.0, %v6372
      %6374 = vmatmul.f32.gmra.mxu0 %v6274
      %v6375 = vpop.f32.mrf.mxu0
      %6376 = vmatmul.f32.gmra.mxu0 %v6275
      %v6377 = vpop.f32.mrf.mxu0
      %v6378 = vadd.f32 0.0, %v6377
      %6379 = vmatmul.f32.gmra.mxu0 %v6276
      %v6380 = vpop.f32.mrf.mxu0
      %v6381 = vadd.f32 0.0, %v6380
      %6382 = vmatmul.f32.gmra.mxu0 %v6277
      %v6383 = vpop.f32.mrf.mxu0
      %6384 = vmatmul.f32.gmra.mxu0 %v6278
      %v6385 = vpop.f32.mrf.mxu0
      %v6386 = vadd.f32 0.0, %v6385
      %6387 = vmatmul.f32.gmra.mxu0 %v6279
      %v6388 = vpop.f32.mrf.mxu0
      %v6389 = vadd.f32 0.0, %v6388
      %6390 = vmatmul.f32.gmra.mxu0 %v6280
      %v6391 = vpop.f32.mrf.mxu0
      %6392 = vmatmul.f32.gmra.mxu0 %v6281
      %v6393 = vpop.f32.mrf.mxu0
      %v6394 = vadd.f32 0.0, %v6393
      %6395 = vmatmul.f32.gmra.mxu0 %v6282
      %v6396 = vpop.f32.mrf.mxu0
      %v6397 = vadd.f32 0.0, %v6396
      %6398 = vmatmul.f32.gmra.mxu0 %v6283
      %v6399 = vpop.f32.mrf.mxu0
      %6400 = vmatmul.f32.gmra.mxu0 %v6284
      %v6401 = vpop.f32.mrf.mxu0
      %v6402 = vadd.f32 0.0, %v6401
      %6403 = vmatmul.f32.gmra.mxu0 %v6285
      %v6404 = vpop.f32.mrf.mxu0
      %v6405 = vadd.f32 0.0, %v6404
      %6406 = vmatmul.f32.gmra.mxu0 %v6286
      %v6407 = vpop.f32.mrf.mxu0
      %6408 = vmatmul.f32.gmra.mxu0 %v6287
      %v6409 = vpop.f32.mrf.mxu0
      %v6410 = vadd.f32 0.0, %v6409
      %6411 = vmatmul.f32.gmra.mxu0 %v6288
      %v6412 = vpop.f32.mrf.mxu0
      %v6413 = vadd.f32 0.0, %v6412
      %6414 = vmatmul.f32.gmra.mxu0 %v6289
      %v6415 = vpop.f32.mrf.mxu0
      %6416 = vmatmul.f32.gmra.mxu0 %v6290
      %v6417 = vpop.f32.mrf.mxu0
      %v6418 = vadd.f32 0.0, %v6417
      %6419 = vmatmul.f32.gmra.mxu0 %v6291
      %v6420 = vpop.f32.mrf.mxu0
      %v6421 = vadd.f32 0.0, %v6420
      %6422 = vmatmul.f32.gmra.mxu0 %v6292
      %v6423 = vpop.f32.mrf.mxu0
      %6424 = vmatmul.f32.gmra.mxu0 %v6293
      %v6425 = vpop.f32.mrf.mxu0
      %v6426 = vadd.f32 0.0, %v6425
      %6427 = vmatmul.f32.gmra.mxu0 %v6294
      %v6428 = vpop.f32.mrf.mxu0
      %v6429 = vadd.f32 0.0, %v6428
      %6430 = vmatmul.f32.gmra.mxu0 %v6295
      %v6431 = vpop.f32.mrf.mxu0
      %6432 = vmatmul.f32.gmra.mxu0 %v6296
      %v6433 = vpop.f32.mrf.mxu0
      %v6434 = vadd.f32 0.0, %v6433
      %6435 = vmatmul.f32.gmra.mxu0 %v6297
      %v6436 = vpop.f32.mrf.mxu0
      %v6437 = vadd.f32 0.0, %v6436
      %6438 = vmatmul.f32.gmra.mxu0 %v6298
      %v6439 = vpop.f32.mrf.mxu0
      %6440 = vmatmul.f32.gmra.mxu0 %v6299
      %v6441 = vpop.f32.mrf.mxu0
      %v6442 = vadd.f32 0.0, %v6441
      %6443 = vmatmul.f32.gmra.mxu0 %v6300
      %v6444 = vpop.f32.mrf.mxu0
      %v6445 = vadd.f32 0.0, %v6444
      %6446 = vmatmul.f32.gmra.mxu0 %v6301
      %v6447 = vpop.f32.mrf.mxu0
      %6448 = vmatmul.f32.gmra.mxu0 %v6302
      %v6449 = vpop.f32.mrf.mxu0
      %v6450 = vadd.f32 0.0, %v6449
      %6451 = vmatmul.f32.gmra.mxu0 %v6303
      %v6452 = vpop.f32.mrf.mxu0
      %v6453 = vadd.f32 0.0, %v6452
      %6454 = vmatmul.f32.gmra.mxu0 %v6304
      %v6455 = vpop.f32.mrf.mxu0
      %6456 = vmatmul.f32.gmra.mxu0 %v6305
      %v6457 = vpop.f32.mrf.mxu0
      %v6458 = vadd.f32 0.0, %v6457
      %6459 = vmatmul.f32.gmra.mxu0 %v6306
      %v6460 = vpop.f32.mrf.mxu0
      %v6461 = vadd.f32 0.0, %v6460
      %6462 = vmatmul.f32.gmra.mxu0 %v6307
      %v6463 = vpop.f32.mrf.mxu0
      %6464 = vmatmul.f32.gmra.mxu0 %v6308
      %v6465 = vpop.f32.mrf.mxu0
      %v6466 = vadd.f32 0.0, %v6465
      %6467 = vmatmul.f32.gmra.mxu0 %v6309
      %v6468 = vpop.f32.mrf.mxu0
      %v6469 = vadd.f32 0.0, %v6468
      %6470 = vmatmul.f32.gmra.mxu0 %v6310
      %v6471 = vpop.f32.mrf.mxu0
      %6472 = vmatmul.f32.gmra.mxu0 %v6311
      %v6473 = vpop.f32.mrf.mxu0
      %v6474 = vadd.f32 0.0, %v6473
      %6475 = vmatmul.f32.gmra.mxu0 %v6312
      %v6476 = vpop.f32.mrf.mxu0
      %v6477 = vadd.f32 0.0, %v6476
      %6478 = vmatmul.f32.gmra.mxu0 %v6313
      %v6479 = vpop.f32.mrf.mxu0
      %6480 = vmatmul.f32.gmra.mxu0 %v6314
      %v6481 = vpop.f32.mrf.mxu0
      %6482 = vmatmul.f32.gmra.mxu0 %v6315
      %v6483 = vpop.f32.mrf.mxu0
      %6484 = vmatmul.f32.gmra.mxu0 %v6316
      %v6485 = vpop.f32.mrf.mxu0
      %6486 = vmatmul.f32.gmra.mxu0 %v6317
      %v6487 = vpop.f32.mrf.mxu0
      %6488 = vmatmul.f32.gmra.mxu0 %v6318
      %v6489 = vpop.f32.mrf.mxu0
      %6490 = vmatmul.f32.gmra.mxu0 %v6319
      %v6491 = vpop.f32.mrf.mxu0
      %6492 = vdwg.mxu0
      %v6493 = vadd.f32 %v6266, %v6354
      %v6494 = vadd.f32 %v6267, %v6357
      %v6495 = vadd.f32 %v6269, %v6362
      %v6496 = vadd.f32 %v6270, %v6365
      %v6497 = vadd.f32 %v6272, %v6370
      %v6498 = vadd.f32 %v6273, %v6373
      %v6499 = vadd.f32 %v6275, %v6378
      %v6500 = vadd.f32 %v6276, %v6381
      %v6501 = vadd.f32 %v6278, %v6386
      %v6502 = vadd.f32 %v6279, %v6389
      %v6503 = vadd.f32 %v6281, %v6394
      %v6504 = vadd.f32 %v6282, %v6397
      %v6505 = vadd.f32 %v6284, %v6402
      %v6506 = vadd.f32 %v6285, %v6405
      %v6507 = vadd.f32 %v6287, %v6410
      %v6508 = vadd.f32 %v6288, %v6413
      %v6509 = vadd.f32 %v6290, %v6418
      %v6510 = vadd.f32 %v6291, %v6421
      %v6511 = vadd.f32 %v6293, %v6426
      %v6512 = vadd.f32 %v6294, %v6429
      %v6513 = vadd.f32 %v6296, %v6434
      %v6514 = vadd.f32 %v6297, %v6437
      %v6515 = vadd.f32 %v6299, %v6442
      %v6516 = vadd.f32 %v6300, %v6445
      %v6517 = vadd.f32 %v6302, %v6450
      %v6518 = vadd.f32 %v6303, %v6453
      %v6519 = vadd.f32 %v6305, %v6458
      %v6520 = vadd.f32 %v6306, %v6461
      %v6521 = vadd.f32 %v6308, %v6466
      %v6522 = vadd.f32 %v6309, %v6469
      %v6523 = vadd.f32 %v6311, %v6474
      %v6524 = vadd.f32 %v6312, %v6477
      %v6525 = vld [vmem:[%s7] sm:$0x1]
      %v6527 = vperm.slane %v6525, 0
      %v6529 = vadd.f32 %v6493, %v6527
      %v6530 = vadd.f32 %v6494, %v6527
      %v6531 = vadd.f32 %v6495, %v6527
      %v6532 = vadd.f32 %v6496, %v6527
      %v6533 = vadd.f32 %v6497, %v6527
      %v6534 = vadd.f32 %v6498, %v6527
      %v6535 = vadd.f32 %v6499, %v6527
      %v6536 = vadd.f32 %v6500, %v6527
      %v6537 = vadd.f32 %v6501, %v6527
      %v6538 = vadd.f32 %v6502, %v6527
      %v6539 = vadd.f32 %v6503, %v6527
      %v6540 = vadd.f32 %v6504, %v6527
      %v6541 = vadd.f32 %v6505, %v6527
      %v6542 = vadd.f32 %v6506, %v6527
      %v6543 = vadd.f32 %v6507, %v6527
      %v6544 = vadd.f32 %v6508, %v6527
      %v6545 = vadd.f32 %v6509, %v6527
      %v6546 = vadd.f32 %v6510, %v6527
      %v6547 = vadd.f32 %v6511, %v6527
      %v6548 = vadd.f32 %v6512, %v6527
      %v6549 = vadd.f32 %v6513, %v6527
      %v6550 = vadd.f32 %v6514, %v6527
      %v6551 = vadd.f32 %v6515, %v6527
      %v6552 = vadd.f32 %v6516, %v6527
      %v6553 = vadd.f32 %v6517, %v6527
      %v6554 = vadd.f32 %v6518, %v6527
      %v6555 = vadd.f32 %v6519, %v6527
      %v6556 = vadd.f32 %v6520, %v6527
      %v6557 = vadd.f32 %v6521, %v6527
      %v6558 = vadd.f32 %v6522, %v6527
      %v6559 = vadd.f32 %v6523, %v6527
      %v6560 = vadd.f32 %v6524, %v6527
      %v6561 = vmax.f32 %v6529, 0.0
      %v6562 = vmax.f32 %v6530, 0.0
      %v6563 = vmax.f32 %v6531, 0.0
      %v6564 = vmax.f32 %v6532, 0.0
      %v6565 = vmax.f32 %v6533, 0.0
      %v6566 = vmax.f32 %v6534, 0.0
      %v6567 = vmax.f32 %v6535, 0.0
      %v6568 = vmax.f32 %v6536, 0.0
      %v6569 = vmax.f32 %v6537, 0.0
      %v6570 = vmax.f32 %v6538, 0.0
      %v6571 = vmax.f32 %v6539, 0.0
      %v6572 = vmax.f32 %v6540, 0.0
      %v6573 = vmax.f32 %v6541, 0.0
      %v6574 = vmax.f32 %v6542, 0.0
      %v6575 = vmax.f32 %v6543, 0.0
      %v6576 = vmax.f32 %v6544, 0.0
      %v6577 = vmax.f32 %v6545, 0.0
      %v6578 = vmax.f32 %v6546, 0.0
      %v6579 = vmax.f32 %v6547, 0.0
      %v6580 = vmax.f32 %v6548, 0.0
      %v6581 = vmax.f32 %v6549, 0.0
      %v6582 = vmax.f32 %v6550, 0.0
      %v6583 = vmax.f32 %v6551, 0.0
      %v6584 = vmax.f32 %v6552, 0.0
      %v6585 = vmax.f32 %v6553, 0.0
      %v6586 = vmax.f32 %v6554, 0.0
      %v6587 = vmax.f32 %v6555, 0.0
      %v6588 = vmax.f32 %v6556, 0.0
      %v6589 = vmax.f32 %v6557, 0.0
      %v6590 = vmax.f32 %v6558, 0.0
      %v6591 = vmax.f32 %v6559, 0.0
      %v6592 = vmax.f32 %v6560, 0.0
      %6593 = vst.msk [vmem:[%s305] sm:$0xff] %vm2093, %v6561
      %6594 = vst.msk [vmem:[%s305 + $0x8] sm:$0xff] %vm2093, %v6562
      %s6595 = scalar_lea.vmem %s305, 16
      %6596 = vst.msk [vmem:[%s6595] sm:$0xff] %vm2093, %v6563
      %6597 = vst.msk [vmem:[%s6595 + $0x8] sm:$0xff] %vm2093, %v6564
      %s6598 = scalar_lea.vmem %s305, 32
      %6599 = vst.msk [vmem:[%s6598] sm:$0xff] %vm2093, %v6565
      %6600 = vst.msk [vmem:[%s6598 + $0x8] sm:$0xff] %vm2093, %v6566
      %s6601 = scalar_lea.vmem %s305, 48
      %6602 = vst.msk [vmem:[%s6601] sm:$0xff] %vm2093, %v6567
      %6603 = vst.msk [vmem:[%s6601 + $0x8] sm:$0xff] %vm2093, %v6568
      %s6604 = scalar_lea.vmem %s305, 64
      %6605 = vst.msk [vmem:[%s6604] sm:$0xff] %vm2093, %v6569
      %6606 = vst.msk [vmem:[%s6604 + $0x8] sm:$0xff] %vm2093, %v6570
      %s6607 = scalar_lea.vmem %s305, 80
      %6608 = vst.msk [vmem:[%s6607] sm:$0xff] %vm2093, %v6571
      %6609 = vst.msk [vmem:[%s6607 + $0x8] sm:$0xff] %vm2093, %v6572
      %s6610 = scalar_lea.vmem %s305, 96
      %6611 = vst.msk [vmem:[%s6610] sm:$0xff] %vm2093, %v6573
      %6612 = vst.msk [vmem:[%s6610 + $0x8] sm:$0xff] %vm2093, %v6574
      %s6613 = scalar_lea.vmem %s305, 112
      %6614 = vst.msk [vmem:[%s6613] sm:$0xff] %vm2093, %v6575
      %6615 = vst.msk [vmem:[%s6613 + $0x8] sm:$0xff] %vm2093, %v6576
      %s6616 = scalar_lea.vmem %s305, 128
      %6617 = vst.msk [vmem:[%s6616] sm:$0xff] %vm2093, %v6577
      %6618 = vst.msk [vmem:[%s6616 + $0x8] sm:$0xff] %vm2093, %v6578
      %s6619 = scalar_lea.vmem %s305, 144
      %6620 = vst.msk [vmem:[%s6619] sm:$0xff] %vm2093, %v6579
      %6621 = vst.msk [vmem:[%s6619 + $0x8] sm:$0xff] %vm2093, %v6580
      %s6622 = scalar_lea.vmem %s305, 160
      %6623 = vst.msk [vmem:[%s6622] sm:$0xff] %vm2093, %v6581
      %6624 = vst.msk [vmem:[%s6622 + $0x8] sm:$0xff] %vm2093, %v6582
      %s6625 = scalar_lea.vmem %s305, 176
      %6626 = vst.msk [vmem:[%s6625] sm:$0xff] %vm2093, %v6583
      %6627 = vst.msk [vmem:[%s6625 + $0x8] sm:$0xff] %vm2093, %v6584
      %s6628 = scalar_lea.vmem %s305, 192
      %6629 = vst.msk [vmem:[%s6628] sm:$0xff] %vm2093, %v6585
      %6630 = vst.msk [vmem:[%s6628 + $0x8] sm:$0xff] %vm2093, %v6586
      %s6631 = scalar_lea.vmem %s305, 208
      %6632 = vst.msk [vmem:[%s6631] sm:$0xff] %vm2093, %v6587
      %6633 = vst.msk [vmem:[%s6631 + $0x8] sm:$0xff] %vm2093, %v6588
      %s6634 = scalar_lea.vmem %s305, 224
      %6635 = vst.msk [vmem:[%s6634] sm:$0xff] %vm2093, %v6589
      %6636 = vst.msk [vmem:[%s6634 + $0x8] sm:$0xff] %vm2093, %v6590
      %s6637 = scalar_lea.vmem %s305, 240
      %6638 = vst.msk [vmem:[%s6637] sm:$0xff] %vm2093, %v6591
      %6639 = vst.msk [vmem:[%s6637 + $0x8] sm:$0xff] %vm2093, %v6592
      %p6640 = scmp.lt.s32.totalorder %s19, 1
      %s6641 = scalar_select %p6640, %s19, 1
      %s6642 = smul.addr %s6641, 32
      %s6643 = smul.addr %s6642, 8
      %s6644 = scalar_lea.vmem %s8, %s6643
      // Predicated region
      $region53: #{double_conv_forward.1} parent=51 // pred_check
        %p6645 = pneg %p210
      $region54: #{double_conv_forward.1} parent=51 // pred_check_branch
        %6647 = sbr.rel (%p6645) target = $region56
      $region55: #{double_conv_forward.1} parent=51 // pred_region
        _
      $region56: #{double_conv_forward.1} parent=51 // pred_fallthru
        _
    $region52: #{double_conv_forward.1} parent=5 // pred_fallthru
      _
    %p6648 = scmp.le.s32.totalorder 2, %s14
    // Predicated region
    $region57: #{double_conv_forward.1} parent=5 // pred_check
      %p6649 = pneg %p6648
    $region58: #{double_conv_forward.1} parent=5 // pred_check_branch
      %6651 = sbr.rel (%p6649) target = $region60
    $region59: #{double_conv_forward.1} parent=5 // pred_region
      %s6652 = ssub.s32 %s14, 2
      // Predicated region
      $region61: #{double_conv_forward.1} parent=59 // pred_check
        %p6653 = pneg %p216
      $region62: #{double_conv_forward.1} parent=59 // pred_check_branch
        %6655 = sbr.rel (%p6653) target = $region64
      $region63: #{double_conv_forward.1} parent=59 // pred_region
        %p6656 = scmp.lt.s32.totalorder %s20, 1
        %s6657 = scalar_select %p6656, %s20, 1
        %s6658 = smul.addr %s6657, 32
        %s6659 = smul.addr %s6658, 8
        %s6660 = scalar_lea.vmem %s8, %s6659
      $region64: #{double_conv_forward.1} parent=59 // pred_fallthru
        _
    $region60: #{double_conv_forward.1} parent=5 // pred_fallthru
      _
  $region6: #{double_conv_forward.1} parent=0 // loop_footer
    %s18 = sadd.s32 1, %s14
  $region7: #{double_conv_forward.1} parent=0 // loop_footer_branch
    %13 = sbr.rel target = $region3
  $region8: #{double_conv_forward.1} parent=0 // loop_exit
    _

</llo_original>
